<compile_context>
chip_gen: v7x
topology: tpu7x:2x2x1
jax: 0.10.0
libtpu: 0.0.40
codegen_flags: <defaults>
</compile_context>

<pallas_src>
import functools
import math

import jax
import jax.numpy as jnp
from jax.experimental import pallas as pl
from jax.experimental.pallas import tpu as pltpu

# ----------------------------- synthetic config ------------------------------
BASE = 16                              # reduced width (real ResNet-18 uses 64)
LAYER_CHANNELS = [BASE, BASE * 2, BASE * 4, BASE * 8]   # 16, 32, 64, 128
BLOCKS = [2, 2, 2, 2]                  # ResNet-18 style BasicBlock counts
DECONV_FILTERS = [32, 32, 32]          # config.MODEL.NUM_DECONV_FILTERS
DECONV_KERNELS = [4, 4, 4]             # config.MODEL.NUM_DECONV_KERNELS
DECONV_WITH_BIAS = False               # config.MODEL.DECONV_WITH_BIAS
NUM_JOINTS = 16                        # config.DATA.NUM_JOINTS
FINAL_CONV_KERNEL = 1                  # config.MODEL.FINAL_CONV_KERNEL
BN_EPS = 1e-5

LANE = 128
ROW_TILE = 16                          # bf16-friendly sublane multiple for M tiles


def _round_up(x, m):
    return ((x + m - 1) // m) * m


def _num_tensorcores():
    """2 TensorCores per chip only on v7x; v5e/v6e are single-TC."""
    try:
        kind = jax.devices()[0].device_kind.lower()
        if "7" in kind:
            return 2
    except Exception:
        pass
    return 1


_NUM_TC = _num_tensorcores()


def _pick_tm(M):
    """Large M tiles (amortize ~0.35us/step).  On 1-TC chips the grid is a sequential
    loop, so use a single tile whenever it fits; on 2-TC (v7x) keep >=2 grid steps."""
    Mr = _round_up(M, ROW_TILE)
    if _NUM_TC <= 1:
        return min(Mr, 1024)
    if M >= 2048:
        return 1024
    if M >= 1024:
        return 512
    if M >= 2 * ROW_TILE:
        return _round_up(pl.cdiv(M, 2), ROW_TILE)
    return Mr


# ------------------------------ Pallas kernels -------------------------------
def _gemm_kernel(a_ref, b_ref, t_ref, o_ref, *, relu):
    # bf16 (tm, K) @ bf16 (K, N) on the MXU with f32 accumulation; epilogue in f32.
    y = jnp.dot(a_ref[...], b_ref[...], preferred_element_type=jnp.float32) + t_ref[...]
    if relu:
        y = jnp.maximum(y, 0.0)
    o_ref[...] = y.astype(o_ref.dtype)


def _gemm_res_kernel(a_ref, b_ref, t_ref, r_ref, o_ref, *, relu):
    # Fuses the BasicBlock residual add (bf16 residual, f32 add) before the ReLU.
    y = (jnp.dot(a_ref[...], b_ref[...], preferred_element_type=jnp.float32)
         + t_ref[...] + r_ref[...].astype(jnp.float32))
    if relu:
        y = jnp.maximum(y, 0.0)
    o_ref[...] = y.astype(o_ref.dtype)


def _gemm_mask_kernel(a_ref, b_ref, t_ref, m_ref, o_ref):
    # Per-channel ReLU mask (1.0 -> ReLU, 0.0 -> linear) for the fused conv1+downsample
    # GEMM of transition blocks.
    y = jnp.dot(a_ref[...], b_ref[...], preferred_element_type=jnp.float32) + t_ref[...]
    m = m_ref[...]
    y = jnp.maximum(y, 0.0) * m + y * (1.0 - m)
    o_ref[...] = y.astype(o_ref.dtype)


def fused_gemm(a, packed, relu=True, residual=None):
    """y = epilogue( a @ B + shift ), all Pallas.

    a        : (M, K) bf16 im2col activations.
    packed   : dict from _pack_gemm -- B (Kp, Np) bf16 with BN scale folded,
               shift (1, Np) f32, true N, optional per-channel relu 'mask'.
    residual : optional (M, N) bf16, fused before the ReLU.
    Returns (M, N) bf16.
    """
    M, K = a.shape
    b = packed['b']
    t = packed['t']
    Kp, Np = b.shape
    N = packed['n']
    tm = _pick_tm(M)
    Mp = _round_up(M, tm)

    a_p = jnp.pad(a.astype(jnp.bfloat16), ((0, Mp - M), (0, Kp - K)))

    in_specs = [
        pl.BlockSpec((tm, Kp), lambda i: (i, 0)),
        pl.BlockSpec((Kp, Np), lambda i: (0, 0)),
        pl.BlockSpec((1, Np), lambda i: (0, 0)),
    ]
    args = [a_p, b, t]
    if 'mask' in packed:
        in_specs.append(pl.BlockSpec((1, Np), lambda i: (0, 0)))
        args.append(packed['mask'])
        kernel = _gemm_mask_kernel
    elif residual is not None:
        r_p = jnp.pad(residual.astype(jnp.bfloat16), ((0, Mp - M), (0, Np - N)))
        in_specs.append(pl.BlockSpec((tm, Np), lambda i: (i, 0)))
        args.append(r_p)
        kernel = functools.partial(_gemm_res_kernel, relu=relu)
    else:
        kernel = functools.partial(_gemm_kernel, relu=relu)

    out = pl.pallas_call(
        kernel,
        out_shape=jax.ShapeDtypeStruct((Mp, Np), jnp.bfloat16),
        grid=(Mp // tm,),
        in_specs=in_specs,
        out_specs=pl.BlockSpec((tm, Np), lambda i: (i, 0)),
        compiler_params=pltpu.CompilerParams(
            dimension_semantics=("parallel",),
            vmem_limit_bytes=32 * 1024 * 1024),
    )(*args)
    return out[:M, :N]


# ------------------------------- glue (JAX) ----------------------------------
def im2col_nhwc(x, kh, kw, stride, padding):
    """x: NHWC -> (N*OH*OW, kh*kw*C); column order = kernel-pos major, channel minor."""
    N, H, W, C = x.shape
    xp = jnp.pad(x, ((0, 0), (padding, padding), (padding, padding), (0, 0)))
    OH = (H + 2 * padding - kh) // stride + 1
    OW = (W + 2 * padding - kw) // stride + 1
    cols = []
    for i in range(kh):
        for j in range(kw):
            cols.append(xp[:, i:i + stride * OH:stride, j:j + stride * OW:stride, :])
    col = jnp.stack(cols, axis=3)                       # (N, OH, OW, kh*kw, C)
    return col.reshape(N * OH * OW, kh * kw * C), OH, OW


def maxpool2d(x, k=3, stride=2, padding=1):
    # TODO(synk): maxpool window reduction stays in plain jnp (cheap vs the GEMMs).
    N, H, W, C = x.shape
    xp = jnp.pad(x, ((0, 0), (padding, padding), (padding, padding), (0, 0)),
                 constant_values=-jnp.inf)
    OH = (H + 2 * padding - k) // stride + 1
    OW = (W + 2 * padding - k) // stride + 1
    out = jnp.full((N, OH, OW, C), -jnp.inf, x.dtype)
    for i in range(k):
        for j in range(k):
            out = jnp.maximum(out, xp[:, i:i + stride * OH:stride, j:j + stride * OW:stride, :])
    return out


def bn_fold(gamma, beta, mean, var):
    scale = gamma / jnp.sqrt(var + BN_EPS)
    shift = beta - mean * scale
    return scale, shift


# --------------------------- one-time weight packing -------------------------
def _conv_weight_mat(w):
    """(OC, IC, KH, KW) torch layout -> (KH*KW*IC, OC), matching im2col column order."""
    OC, IC, KH, KW = w.shape
    return w.transpose(2, 3, 1, 0).reshape(KH * KW * IC, OC)


def _pack_gemm(bmat, scale, shift):
    """Fold BN scale, pad K/N to 128, cast weights to bf16.  Runs once per layer."""
    K, N = bmat.shape
    Kp = _round_up(K, LANE)
    Np = _round_up(N, LANE)
    b = jnp.pad(bmat * scale.reshape(1, N), ((0, Kp - K), (0, Np - N))).astype(jnp.bfloat16)
    t = jnp.pad(shift.astype(jnp.float32), (0, Np - N)).reshape(1, Np)
    return {'b': b, 't': t, 'n': N}


def prepare_params(params):
    """One-time pre-packing of all weights into GEMM-ready form (off the hot path)."""
    packed = {}
    s, t = bn_fold(**params['bn1'])
    packed['stem'] = _pack_gemm(_conv_weight_mat(params['conv1_w']), s, t)

    layers = []
    for blocks in params['layers']:
        pblocks = []
        for blk in blocks:
            p = {}
            s1, t1 = bn_fold(**blk['bn1'])
            w1 = _conv_weight_mat(blk['conv1_w'])                    # (9*IC, planes)
            if 'down_w' in blk:
                # Fuse the 1x1 downsample conv into conv1's GEMM: embed it as the
                # center tap of a zeroed 3x3 kernel and concatenate along OC.
                planes, IC = blk['conv1_w'].shape[0], blk['conv1_w'].shape[1]
                sd, td = bn_fold(**blk['down_bn'])
                wd3 = jnp.zeros((planes, IC, 3, 3), jnp.float32).at[:, :, 1, 1].set(
                    blk['down_w'][:, :, 0, 0])
                wd = _conv_weight_mat(wd3)                           # (9*IC, planes)
                bmat = jnp.concatenate([w1, wd], axis=1)             # (9*IC, 2*planes)
                scale = jnp.concatenate([s1, sd])
                shift = jnp.concatenate([t1, td])
                pk = _pack_gemm(bmat, scale, shift)
                Np = pk['b'].shape[1]
                pk['mask'] = jnp.zeros((1, Np), jnp.float32).at[0, :planes].set(1.0)
                pk['planes'] = planes
                p['conv1down'] = pk
            else:
                p['conv1'] = _pack_gemm(w1, s1, t1)
            s2, t2 = bn_fold(**blk['bn2'])
            p['conv2'] = _pack_gemm(_conv_weight_mat(blk['conv2_w']), s2, t2)
            pblocks.append(p)
        layers.append(pblocks)
    packed['layers'] = layers

    # Deconv head: k=4 / stride=2 / pad=1 via sub-pixel decomposition packed into one
    # GEMM over a 3x3 im2col window (lane dim = 4*OC).
    deconvs = []
    for dc, k in zip(params['deconvs'], DECONV_KERNELS):
        assert k == 4  # TODO(synk): generic k in {2,3} fallback not needed for this config
        w = dc['w']                                   # (IC, OC, 4, 4)
        IC, OC = w.shape[0], w.shape[1]
        s, t = bn_fold(**dc['bn'])
        # row/col parity -> {3x3 window position : deconv kernel tap}
        kmap = ({0: 3, 1: 1}, {1: 2, 2: 0})
        wc = jnp.zeros((3, 3, IC, 2, 2, OC), jnp.float32)
        for r in range(2):
            for c in range(2):
                for ph, kh in kmap[r].items():
                    for pw, kw_ in kmap[c].items():
                        wc = wc.at[ph, pw, :, r, c, :].set(w[:, :, kh, kw_])
        wmat = wc.reshape(9 * IC, 4 * OC)
        scale4 = jnp.broadcast_to(s, (2, 2, OC)).reshape(-1)
        shift4 = jnp.broadcast_to(t, (2, 2, OC)).reshape(-1)
        pk = _pack_gemm(wmat, scale4, shift4)
        pk['oc'] = OC
        deconvs.append(pk)
    packed['deconvs'] = deconvs

    # Final 1x1 conv with bias, no BN, no activation.
    OC = params['final_w'].shape[0]
    packed['final'] = _pack_gemm(_conv_weight_mat(params['final_w']),
                                 jnp.ones((OC,), jnp.float32), params['final_b'])
    return packed


# --------------------------- parameter construction --------------------------
class ParamGen:
    def __init__(self, key):
        self.key = key

    def _next(self):
        self.key, k = jax.random.split(self.key)
        return k

    def conv(self, oc, ic, kh, kw):
        fan = ic * kh * kw
        return jax.random.normal(self._next(), (oc, ic, kh, kw), jnp.float32) / math.sqrt(fan)

    def deconv(self, ic, oc, kh, kw):
        fan = ic * kh * kw
        return jax.random.normal(self._next(), (ic, oc, kh, kw), jnp.float32) / math.sqrt(fan)

    def bn(self, c):
        return dict(
            gamma=1.0 + 0.1 * jax.random.normal(self._next(), (c,), jnp.float32),
            beta=0.1 * jax.random.normal(self._next(), (c,), jnp.float32),
            mean=0.1 * jax.random.normal(self._next(), (c,), jnp.float32),
            var=1.0 + 0.1 * jnp.abs(jax.random.normal(self._next(), (c,), jnp.float32)),
        )

    def bias(self, c):
        return 0.1 * jax.random.normal(self._next(), (c,), jnp.float32)


def init_params(key):
    g = ParamGen(key)
    params = {'conv1_w': g.conv(BASE, 3, 7, 7), 'bn1': g.bn(BASE)}
    inplanes = BASE
    layers = []
    for li, (planes, nblocks) in enumerate(zip(LAYER_CHANNELS, BLOCKS)):
        blocks = []
        for bi in range(nblocks):
            stride = 2 if (li > 0 and bi == 0) else 1
            blk = {
                'conv1_w': g.conv(planes, inplanes, 3, 3), 'bn1': g.bn(planes),
                'conv2_w': g.conv(planes, planes, 3, 3), 'bn2': g.bn(planes),
            }
            if stride != 1 or inplanes != planes:
                blk['down_w'] = g.conv(planes, inplanes, 1, 1)
                blk['down_bn'] = g.bn(planes)
            blocks.append(blk)
            inplanes = planes
        layers.append(blocks)
    params['layers'] = layers
    deconvs = []
    for planes, k in zip(DECONV_FILTERS, DECONV_KERNELS):
        deconvs.append({'w': g.deconv(inplanes, planes, k, k), 'bn': g.bn(planes)})
        inplanes = planes
    params['final_w'] = g.conv(NUM_JOINTS, inplanes, FINAL_CONV_KERNEL, FINAL_CONV_KERNEL)
    params['final_b'] = g.bias(NUM_JOINTS)
    params['deconvs'] = deconvs
    return params


# --------------------------------- forward -----------------------------------
def basic_block(x, pblk, stride):
    N, H, W, C = x.shape
    if 'conv1down' in pblk:
        pk = pblk['conv1down']
        planes = pk['planes']
        col, OH, OW = im2col_nhwc(x, 3, 3, stride, 1)
        y = fused_gemm(col, pk)                     # masked epilogue: relu on conv1 half only
        out = y[:, :planes]
        identity = y[:, planes:]
    else:
        pk = pblk['conv1']
        planes = pk['n']
        col, OH, OW = im2col_nhwc(x, 3, 3, stride, 1)
        out = fused_gemm(col, pk, relu=True)
        identity = x.reshape(N * OH * OW, C)        # stride == 1, C == planes here
    out = out.reshape(N, OH, OW, planes)
    # conv2 + BN2 + residual add + ReLU fused into one Pallas kernel
    col2, _, _ = im2col_nhwc(out, 3, 3, 1, 1)
    y = fused_gemm(col2, pblk['conv2'], relu=True, residual=identity)
    return y.reshape(N, OH, OW, planes)


def pose_resnet_forward(packed, x_nchw):
    # External interface is NCHW (PyTorch); internally everything is NHWC bf16.
    x = x_nchw.transpose(0, 2, 3, 1).astype(jnp.bfloat16)
    N = x.shape[0]

    # ResNet stem: 7x7 s2 p3 conv + BN + ReLU, then 3x3 s2 maxpool
    col, OH, OW = im2col_nhwc(x, 7, 7, 2, 3)
    x = fused_gemm(col, packed['stem'], relu=True).reshape(N, OH, OW, -1)
    x = maxpool2d(x, 3, 2, 1)

    # Residual stages
    for li, pblocks in enumerate(packed['layers']):
        for bi, pblk in enumerate(pblocks):
            stride = 2 if (li > 0 and bi == 0) else 1
            x = basic_block(x, pblk, stride)

    # Deconv head: ConvTranspose2d(k4,s2,p1) -> BN -> ReLU via sub-pixel GEMM
    for pk in packed['deconvs']:
        Nn, H, W, _ = x.shape
        OC = pk['oc']
        col, _, _ = im2col_nhwc(x, 3, 3, 1, 1)
        y = fused_gemm(col, pk, relu=True)          # (N*H*W, 4*OC)
        y = y.reshape(Nn, H, W, 2, 2, OC).transpose(0, 1, 3, 2, 4, 5)
        x = y.reshape(Nn, 2 * H, 2 * W, OC)
        # (DECONV_WITH_BIAS is False, so no deconv bias term)

    # Final 1x1 conv with bias, no activation
    Nn, H, W, C = x.shape
    y = fused_gemm(x.reshape(Nn * H * W, C), packed['final'], relu=False)
    y = y.reshape(Nn, H, W, -1).astype(jnp.float32)
    return y.transpose(0, 3, 1, 2)                  # back to NCHW


# ----------------------------------- main -------------------------------------
if __name__ == "__main__":
    key = jax.random.PRNGKey(0)
    pkey, xkey = jax.random.split(key)
    params = init_params(pkey)
    packed = prepare_params(params)     # one-time weight packing, off the hot path
    x = jax.random.normal(xkey, (2, 3, 64, 64), jnp.float32)   # NCHW, like PyTorch

    fwd = jax.jit(functools.partial(pose_resnet_forward, packed))
    out = fwd(x)
    jax.block_until_ready(out)
    assert out.shape == (2, NUM_JOINTS, 16, 16), out.shape
    print("KERNEL_OK")
</pallas_src>

<mosaic_0001>
module attributes {stable_mosaic.version = 11 : i64} {
  func.func @_gemm_kernel(%arg0: i32, %arg1: memref<1024x256xbf16, #tpu.memory_space<vmem>>, %arg2: memref<256x128xbf16, #tpu.memory_space<vmem>>, %arg3: memref<1x128xf32, #tpu.memory_space<vmem>>, %arg4: memref<1024x128xbf16, #tpu.memory_space<vmem>>) attributes {dimension_semantics = [#tpu.dimension_semantics<parallel>], iteration_bounds = array<i64: 2>, scalar_prefetch = 0 : i64, scratch_operands = 0 : i64, tpu.core_type = #tpu.core_type<tc>, window_params = [{transform_indices = @transform_0, window_bounds = array<i64: 1024, 256>}, {pipeline_mode = #tpu.pipeline_mode<synchronous>, transform_indices = @transform_1, window_bounds = array<i64: 256, 128>}, {pipeline_mode = #tpu.pipeline_mode<synchronous>, transform_indices = @transform_2, window_bounds = array<i64: 1, 128>}, {transform_indices = @transform_3, window_bounds = array<i64: 1024, 128>}]} {
    %c0 = arith.constant 0 : index
    %c0_0 = arith.constant 0 : index
    %0 = vector.load %arg1[%c0, %c0_0] : memref<1024x256xbf16, #tpu.memory_space<vmem>>, vector<1024x256xbf16>
    %c0_1 = arith.constant 0 : index
    %c0_2 = arith.constant 0 : index
    %1 = vector.load %arg2[%c0_1, %c0_2] : memref<256x128xbf16, #tpu.memory_space<vmem>>, vector<256x128xbf16>
    %cst = arith.constant dense<0.000000e+00> : vector<1024x128xf32>
    %2 = tpu.matmul %0, %1, %cst {dimension_numbers = #tpu.dot_dimension_numbers<[1], [0], [0], [1], [0, 0, 1, 1], [], []>} : vector<1024x256xbf16>, vector<256x128xbf16>, vector<1024x128xf32> -> vector<1024x128xf32>
    %c0_3 = arith.constant 0 : index
    %c0_4 = arith.constant 0 : index
    %3 = vector.load %arg3[%c0_3, %c0_4] : memref<1x128xf32, #tpu.memory_space<vmem>>, vector<1x128xf32>
    %4 = vector.broadcast %3 : vector<1x128xf32> to vector<1024x128xf32>
    %5 = arith.addf %2, %4 : vector<1024x128xf32>
    %cst_5 = arith.constant 0.000000e+00 : f32
    %6 = vector.broadcast %cst_5 : f32 to vector<1024x128xf32>
    %7 = arith.maximumf %5, %6 : vector<1024x128xf32>
    %8 = arith.truncf %7 : vector<1024x128xf32> to vector<1024x128xbf16>
    %c0_6 = arith.constant 0 : index
    %c0_7 = arith.constant 0 : index
    %9 = vector.load %arg4[%c0_6, %c0_7] : memref<1024x128xbf16, #tpu.memory_space<vmem>>, vector<1024x128xbf16>
    tpu.vector_store %arg4[%c0_6, %c0_7], %8 {strides = array<i32>} : memref<1024x128xbf16, #tpu.memory_space<vmem>>, vector<1024x128xbf16>,
    return
  }
  func.func @transform_0(%arg0: i32) -> (i32, i32) {
    %c0_i32 = arith.constant 0 : i32
    %c0_i32_0 = arith.constant 0 : i32
    return %arg0, %c0_i32 : i32, i32
  }
  func.func @transform_1(%arg0: i32) -> (i32, i32) {
    %c0_i32 = arith.constant 0 : i32
    %c0_i32_0 = arith.constant 0 : i32
    %c0_i32_1 = arith.constant 0 : i32
    return %c0_i32, %c0_i32_0 : i32, i32
  }
  func.func @transform_2(%arg0: i32) -> (i32, i32) {
    %c0_i32 = arith.constant 0 : i32
    %c0_i32_0 = arith.constant 0 : i32
    %c0_i32_1 = arith.constant 0 : i32
    return %c0_i32, %c0_i32_0 : i32, i32
  }
  func.func @transform_3(%arg0: i32) -> (i32, i32) {
    %c0_i32 = arith.constant 0 : i32
    %c0_i32_0 = arith.constant 0 : i32
    return %arg0, %c0_i32 : i32, i32
  }
}

module attributes {stable_mosaic.version = 11 : i64} {
  func.func @_gemm_kernel(%arg0: i32, %arg1: memref<512x256xbf16, #tpu.memory_space<vmem>>, %arg2: memref<256x128xbf16, #tpu.memory_space<vmem>>, %arg3: memref<1x128xf32, #tpu.memory_space<vmem>>, %arg4: memref<512x128xbf16, #tpu.memory_space<vmem>>) attributes {dimension_semantics = [#tpu.dimension_semantics<parallel>], iteration_bounds = array<i64: 1>, scalar_prefetch = 0 : i64, scratch_operands = 0 : i64, tpu.core_type = #tpu.core_type<tc>, window_params = [{transform_indices = @transform_0, window_bounds = array<i64: 512, 256>}, {pipeline_mode = #tpu.pipeline_mode<synchronous>, transform_indices = @transform_1, window_bounds = array<i64: 256, 128>}, {pipeline_mode = #tpu.pipeline_mode<synchronous>, transform_indices = @transform_2, window_bounds = array<i64: 1, 128>}, {transform_indices = @transform_3, window_bounds = array<i64: 512, 128>}]} {
    %c0 = arith.constant 0 : index
    %c0_0 = arith.constant 0 : index
    %0 = vector.load %arg1[%c0, %c0_0] : memref<512x256xbf16, #tpu.memory_space<vmem>>, vector<512x256xbf16>
    %c0_1 = arith.constant 0 : index
    %c0_2 = arith.constant 0 : index
    %1 = vector.load %arg2[%c0_1, %c0_2] : memref<256x128xbf16, #tpu.memory_space<vmem>>, vector<256x128xbf16>
    %cst = arith.constant dense<0.000000e+00> : vector<512x128xf32>
    %2 = tpu.matmul %0, %1, %cst {dimension_numbers = #tpu.dot_dimension_numbers<[1], [0], [0], [1], [0, 0, 1, 1], [], []>} : vector<512x256xbf16>, vector<256x128xbf16>, vector<512x128xf32> -> vector<512x128xf32>
    %c0_3 = arith.constant 0 : index
    %c0_4 = arith.constant 0 : index
    %3 = vector.load %arg3[%c0_3, %c0_4] : memref<1x128xf32, #tpu.memory_space<vmem>>, vector<1x128xf32>
    %4 = vector.broadcast %3 : vector<1x128xf32> to vector<512x128xf32>
    %5 = arith.addf %2, %4 : vector<512x128xf32>
    %cst_5 = arith.constant 0.000000e+00 : f32
    %6 = vector.broadcast %cst_5 : f32 to vector<512x128xf32>
    %7 = arith.maximumf %5, %6 : vector<512x128xf32>
    %8 = arith.truncf %7 : vector<512x128xf32> to vector<512x128xbf16>
    %c0_6 = arith.constant 0 : index
    %c0_7 = arith.constant 0 : index
    %9 = vector.load %arg4[%c0_6, %c0_7] : memref<512x128xbf16, #tpu.memory_space<vmem>>, vector<512x128xbf16>
    tpu.vector_store %arg4[%c0_6, %c0_7], %8 {strides = array<i32>} : memref<512x128xbf16, #tpu.memory_space<vmem>>, vector<512x128xbf16>,
    return
  }
  func.func @transform_0(%arg0: i32) -> (i32, i32) {
    %c0_i32 = arith.constant 0 : i32
    %c0_i32_0 = arith.constant 0 : i32
    return %arg0, %c0_i32 : i32, i32
  }
  func.func @transform_1(%arg0: i32) -> (i32, i32) {
    %c0_i32 = arith.constant 0 : i32
    %c0_i32_0 = arith.constant 0 : i32
    %c0_i32_1 = arith.constant 0 : i32
    return %c0_i32, %c0_i32_0 : i32, i32
  }
  func.func @transform_2(%arg0: i32) -> (i32, i32) {
    %c0_i32 = arith.constant 0 : i32
    %c0_i32_0 = arith.constant 0 : i32
    %c0_i32_1 = arith.constant 0 : i32
    return %c0_i32, %c0_i32_0 : i32, i32
  }
  func.func @transform_3(%arg0: i32) -> (i32, i32) {
    %c0_i32 = arith.constant 0 : i32
    %c0_i32_0 = arith.constant 0 : i32
    return %arg0, %c0_i32 : i32, i32
  }
}

module attributes {stable_mosaic.version = 11 : i64} {
  func.func @_gemm_res_kernel(%arg0: i32, %arg1: memref<512x256xbf16, #tpu.memory_space<vmem>>, %arg2: memref<256x128xbf16, #tpu.memory_space<vmem>>, %arg3: memref<1x128xf32, #tpu.memory_space<vmem>>, %arg4: memref<512x128xbf16, #tpu.memory_space<vmem>>, %arg5: memref<512x128xbf16, #tpu.memory_space<vmem>>) attributes {dimension_semantics = [#tpu.dimension_semantics<parallel>], iteration_bounds = array<i64: 1>, scalar_prefetch = 0 : i64, scratch_operands = 0 : i64, tpu.core_type = #tpu.core_type<tc>, window_params = [{transform_indices = @transform_0, window_bounds = array<i64: 512, 256>}, {pipeline_mode = #tpu.pipeline_mode<synchronous>, transform_indices = @transform_1, window_bounds = array<i64: 256, 128>}, {pipeline_mode = #tpu.pipeline_mode<synchronous>, transform_indices = @transform_2, window_bounds = array<i64: 1, 128>}, {transform_indices = @transform_3, window_bounds = array<i64: 512, 128>}, {transform_indices = @transform_4, window_bounds = array<i64: 512, 128>}]} {
    %c0 = arith.constant 0 : index
    %c0_0 = arith.constant 0 : index
    %0 = vector.load %arg1[%c0, %c0_0] : memref<512x256xbf16, #tpu.memory_space<vmem>>, vector<512x256xbf16>
    %c0_1 = arith.constant 0 : index
    %c0_2 = arith.constant 0 : index
    %1 = vector.load %arg2[%c0_1, %c0_2] : memref<256x128xbf16, #tpu.memory_space<vmem>>, vector<256x128xbf16>
    %cst = arith.constant dense<0.000000e+00> : vector<512x128xf32>
    %2 = tpu.matmul %0, %1, %cst {dimension_numbers = #tpu.dot_dimension_numbers<[1], [0], [0], [1], [0, 0, 1, 1], [], []>} : vector<512x256xbf16>, vector<256x128xbf16>, vector<512x128xf32> -> vector<512x128xf32>
    %c0_3 = arith.constant 0 : index
    %c0_4 = arith.constant 0 : index
    %3 = vector.load %arg3[%c0_3, %c0_4] : memref<1x128xf32, #tpu.memory_space<vmem>>, vector<1x128xf32>
    %4 = vector.broadcast %3 : vector<1x128xf32> to vector<512x128xf32>
    %5 = arith.addf %2, %4 : vector<512x128xf32>
    %c0_5 = arith.constant 0 : index
    %c0_6 = arith.constant 0 : index
    %6 = vector.load %arg4[%c0_5, %c0_6] : memref<512x128xbf16, #tpu.memory_space<vmem>>, vector<512x128xbf16>
    %7 = arith.extf %6 : vector<512x128xbf16> to vector<512x128xf32>
    %8 = arith.addf %5, %7 : vector<512x128xf32>
    %cst_7 = arith.constant 0.000000e+00 : f32
    %9 = vector.broadcast %cst_7 : f32 to vector<512x128xf32>
    %10 = arith.maximumf %8, %9 : vector<512x128xf32>
    %11 = arith.truncf %10 : vector<512x128xf32> to vector<512x128xbf16>
    %c0_8 = arith.constant 0 : index
    %c0_9 = arith.constant 0 : index
    %12 = vector.load %arg5[%c0_8, %c0_9] : memref<512x128xbf16, #tpu.memory_space<vmem>>, vector<512x128xbf16>
    tpu.vector_store %arg5[%c0_8, %c0_9], %11 {strides = array<i32>} : memref<512x128xbf16, #tpu.memory_space<vmem>>, vector<512x128xbf16>,
    return
  }
  func.func @transform_0(%arg0: i32) -> (i32, i32) {
    %c0_i32 = arith.constant 0 : i32
    %c0_i32_0 = arith.constant 0 : i32
    return %arg0, %c0_i32 : i32, i32
  }
  func.func @transform_1(%arg0: i32) -> (i32, i32) {
    %c0_i32 = arith.constant 0 : i32
    %c0_i32_0 = arith.constant 0 : i32
    %c0_i32_1 = arith.constant 0 : i32
    return %c0_i32, %c0_i32_0 : i32, i32
  }
  func.func @transform_2(%arg0: i32) -> (i32, i32) {
    %c0_i32 = arith.constant 0 : i32
    %c0_i32_0 = arith.constant 0 : i32
    %c0_i32_1 = arith.constant 0 : i32
    return %c0_i32, %c0_i32_0 : i32, i32
  }
  func.func @transform_3(%arg0: i32) -> (i32, i32) {
    %c0_i32 = arith.constant 0 : i32
    %c0_i32_0 = arith.constant 0 : i32
    return %arg0, %c0_i32 : i32, i32
  }
  func.func @transform_4(%arg0: i32) -> (i32, i32) {
    %c0_i32 = arith.constant 0 : i32
    %c0_i32_0 = arith.constant 0 : i32
    return %arg0, %c0_i32 : i32, i32
  }
}

module attributes {stable_mosaic.version = 11 : i64} {
  func.func @_gemm_mask_kernel(%arg0: i32, %arg1: memref<128x256xbf16, #tpu.memory_space<vmem>>, %arg2: memref<256x128xbf16, #tpu.memory_space<vmem>>, %arg3: memref<1x128xf32, #tpu.memory_space<vmem>>, %arg4: memref<1x128xf32, #tpu.memory_space<vmem>>, %arg5: memref<128x128xbf16, #tpu.memory_space<vmem>>) attributes {dimension_semantics = [#tpu.dimension_semantics<parallel>], iteration_bounds = array<i64: 1>, scalar_prefetch = 0 : i64, scratch_operands = 0 : i64, tpu.core_type = #tpu.core_type<tc>, window_params = [{transform_indices = @transform_0, window_bounds = array<i64: 128, 256>}, {pipeline_mode = #tpu.pipeline_mode<synchronous>, transform_indices = @transform_1, window_bounds = array<i64: 256, 128>}, {pipeline_mode = #tpu.pipeline_mode<synchronous>, transform_indices = @transform_2, window_bounds = array<i64: 1, 128>}, {pipeline_mode = #tpu.pipeline_mode<synchronous>, transform_indices = @transform_3, window_bounds = array<i64: 1, 128>}, {transform_indices = @transform_4, window_bounds = array<i64: 128, 128>}]} {
    %c0 = arith.constant 0 : index
    %c0_0 = arith.constant 0 : index
    %0 = vector.load %arg1[%c0, %c0_0] : memref<128x256xbf16, #tpu.memory_space<vmem>>, vector<128x256xbf16>
    %c0_1 = arith.constant 0 : index
    %c0_2 = arith.constant 0 : index
    %1 = vector.load %arg2[%c0_1, %c0_2] : memref<256x128xbf16, #tpu.memory_space<vmem>>, vector<256x128xbf16>
    %cst = arith.constant dense<0.000000e+00> : vector<128x128xf32>
    %2 = tpu.matmul %0, %1, %cst {dimension_numbers = #tpu.dot_dimension_numbers<[1], [0], [0], [1], [0, 0, 1, 1], [], []>} : vector<128x256xbf16>, vector<256x128xbf16>, vector<128x128xf32> -> vector<128x128xf32>
    %c0_3 = arith.constant 0 : index
    %c0_4 = arith.constant 0 : index
    %3 = vector.load %arg3[%c0_3, %c0_4] : memref<1x128xf32, #tpu.memory_space<vmem>>, vector<1x128xf32>
    %4 = vector.broadcast %3 : vector<1x128xf32> to vector<128x128xf32>
    %5 = arith.addf %2, %4 : vector<128x128xf32>
    %c0_5 = arith.constant 0 : index
    %c0_6 = arith.constant 0 : index
    %6 = vector.load %arg4[%c0_5, %c0_6] : memref<1x128xf32, #tpu.memory_space<vmem>>, vector<1x128xf32>
    %cst_7 = arith.constant 0.000000e+00 : f32
    %7 = vector.broadcast %cst_7 : f32 to vector<128x128xf32>
    %8 = arith.maximumf %5, %7 : vector<128x128xf32>
    %9 = vector.broadcast %6 : vector<1x128xf32> to vector<128x128xf32>
    %10 = arith.mulf %8, %9 : vector<128x128xf32>
    %cst_8 = arith.constant 1.000000e+00 : f32
    %11 = vector.broadcast %cst_8 : f32 to vector<1x128xf32>
    %12 = arith.subf %11, %6 : vector<1x128xf32>
    %13 = vector.broadcast %12 : vector<1x128xf32> to vector<128x128xf32>
    %14 = arith.mulf %5, %13 : vector<128x128xf32>
    %15 = arith.addf %10, %14 : vector<128x128xf32>
    %16 = arith.truncf %15 : vector<128x128xf32> to vector<128x128xbf16>
    %c0_9 = arith.constant 0 : index
    %c0_10 = arith.constant 0 : index
    %17 = vector.load %arg5[%c0_9, %c0_10] : memref<128x128xbf16, #tpu.memory_space<vmem>>, vector<128x128xbf16>
    tpu.vector_store %arg5[%c0_9, %c0_10], %16 {strides = array<i32>} : memref<128x128xbf16, #tpu.memory_space<vmem>>, vector<128x128xbf16>,
    return
  }
  func.func @transform_0(%arg0: i32) -> (i32, i32) {
    %c0_i32 = arith.constant 0 : i32
    %c0_i32_0 = arith.constant 0 : i32
    return %arg0, %c0_i32 : i32, i32
  }
  func.func @transform_1(%arg0: i32) -> (i32, i32) {
    %c0_i32 = arith.constant 0 : i32
    %c0_i32_0 = arith.constant 0 : i32
    %c0_i32_1 = arith.constant 0 : i32
    return %c0_i32, %c0_i32_0 : i32, i32
  }
  func.func @transform_2(%arg0: i32) -> (i32, i32) {
    %c0_i32 = arith.constant 0 : i32
    %c0_i32_0 = arith.constant 0 : i32
    %c0_i32_1 = arith.constant 0 : i32
    return %c0_i32, %c0_i32_0 : i32, i32
  }
  func.func @transform_3(%arg0: i32) -> (i32, i32) {
    %c0_i32 = arith.constant 0 : i32
    %c0_i32_0 = arith.constant 0 : i32
    %c0_i32_1 = arith.constant 0 : i32
    return %c0_i32, %c0_i32_0 : i32, i32
  }
  func.func @transform_4(%arg0: i32) -> (i32, i32) {
    %c0_i32 = arith.constant 0 : i32
    %c0_i32_0 = arith.constant 0 : i32
    return %arg0, %c0_i32 : i32, i32
  }
}

module attributes {stable_mosaic.version = 11 : i64} {
  func.func @_gemm_res_kernel(%arg0: i32, %arg1: memref<128x384xbf16, #tpu.memory_space<vmem>>, %arg2: memref<384x128xbf16, #tpu.memory_space<vmem>>, %arg3: memref<1x128xf32, #tpu.memory_space<vmem>>, %arg4: memref<128x128xbf16, #tpu.memory_space<vmem>>, %arg5: memref<128x128xbf16, #tpu.memory_space<vmem>>) attributes {dimension_semantics = [#tpu.dimension_semantics<parallel>], iteration_bounds = array<i64: 1>, scalar_prefetch = 0 : i64, scratch_operands = 0 : i64, tpu.core_type = #tpu.core_type<tc>, window_params = [{transform_indices = @transform_0, window_bounds = array<i64: 128, 384>}, {pipeline_mode = #tpu.pipeline_mode<synchronous>, transform_indices = @transform_1, window_bounds = array<i64: 384, 128>}, {pipeline_mode = #tpu.pipeline_mode<synchronous>, transform_indices = @transform_2, window_bounds = array<i64: 1, 128>}, {transform_indices = @transform_3, window_bounds = array<i64: 128, 128>}, {transform_indices = @transform_4, window_bounds = array<i64: 128, 128>}]} {
    %c0 = arith.constant 0 : index
    %c0_0 = arith.constant 0 : index
    %0 = vector.load %arg1[%c0, %c0_0] : memref<128x384xbf16, #tpu.memory_space<vmem>>, vector<128x384xbf16>
    %c0_1 = arith.constant 0 : index
    %c0_2 = arith.constant 0 : index
    %1 = vector.load %arg2[%c0_1, %c0_2] : memref<384x128xbf16, #tpu.memory_space<vmem>>, vector<384x128xbf16>
    %cst = arith.constant dense<0.000000e+00> : vector<128x128xf32>
    %2 = tpu.matmul %0, %1, %cst {dimension_numbers = #tpu.dot_dimension_numbers<[1], [0], [0], [1], [0, 0, 1, 1], [], []>} : vector<128x384xbf16>, vector<384x128xbf16>, vector<128x128xf32> -> vector<128x128xf32>
    %c0_3 = arith.constant 0 : index
    %c0_4 = arith.constant 0 : index
    %3 = vector.load %arg3[%c0_3, %c0_4] : memref<1x128xf32, #tpu.memory_space<vmem>>, vector<1x128xf32>
    %4 = vector.broadcast %3 : vector<1x128xf32> to vector<128x128xf32>
    %5 = arith.addf %2, %4 : vector<128x128xf32>
    %c0_5 = arith.constant 0 : index
    %c0_6 = arith.constant 0 : index
    %6 = vector.load %arg4[%c0_5, %c0_6] : memref<128x128xbf16, #tpu.memory_space<vmem>>, vector<128x128xbf16>
    %7 = arith.extf %6 : vector<128x128xbf16> to vector<128x128xf32>
    %8 = arith.addf %5, %7 : vector<128x128xf32>
    %cst_7 = arith.constant 0.000000e+00 : f32
    %9 = vector.broadcast %cst_7 : f32 to vector<128x128xf32>
    %10 = arith.maximumf %8, %9 : vector<128x128xf32>
    %11 = arith.truncf %10 : vector<128x128xf32> to vector<128x128xbf16>
    %c0_8 = arith.constant 0 : index
    %c0_9 = arith.constant 0 : index
    %12 = vector.load %arg5[%c0_8, %c0_9] : memref<128x128xbf16, #tpu.memory_space<vmem>>, vector<128x128xbf16>
    tpu.vector_store %arg5[%c0_8, %c0_9], %11 {strides = array<i32>} : memref<128x128xbf16, #tpu.memory_space<vmem>>, vector<128x128xbf16>,
    return
  }
  func.func @transform_0(%arg0: i32) -> (i32, i32) {
    %c0_i32 = arith.constant 0 : i32
    %c0_i32_0 = arith.constant 0 : i32
    return %arg0, %c0_i32 : i32, i32
  }
  func.func @transform_1(%arg0: i32) -> (i32, i32) {
    %c0_i32 = arith.constant 0 : i32
    %c0_i32_0 = arith.constant 0 : i32
    %c0_i32_1 = arith.constant 0 : i32
    return %c0_i32, %c0_i32_0 : i32, i32
  }
  func.func @transform_2(%arg0: i32) -> (i32, i32) {
    %c0_i32 = arith.constant 0 : i32
    %c0_i32_0 = arith.constant 0 : i32
    %c0_i32_1 = arith.constant 0 : i32
    return %c0_i32, %c0_i32_0 : i32, i32
  }
  func.func @transform_3(%arg0: i32) -> (i32, i32) {
    %c0_i32 = arith.constant 0 : i32
    %c0_i32_0 = arith.constant 0 : i32
    return %arg0, %c0_i32 : i32, i32
  }
  func.func @transform_4(%arg0: i32) -> (i32, i32) {
    %c0_i32 = arith.constant 0 : i32
    %c0_i32_0 = arith.constant 0 : i32
    return %arg0, %c0_i32 : i32, i32
  }
}

module attributes {stable_mosaic.version = 11 : i64} {
  func.func @_gemm_kernel(%arg0: i32, %arg1: memref<128x384xbf16, #tpu.memory_space<vmem>>, %arg2: memref<384x128xbf16, #tpu.memory_space<vmem>>, %arg3: memref<1x128xf32, #tpu.memory_space<vmem>>, %arg4: memref<128x128xbf16, #tpu.memory_space<vmem>>) attributes {dimension_semantics = [#tpu.dimension_semantics<parallel>], iteration_bounds = array<i64: 1>, scalar_prefetch = 0 : i64, scratch_operands = 0 : i64, tpu.core_type = #tpu.core_type<tc>, window_params = [{transform_indices = @transform_0, window_bounds = array<i64: 128, 384>}, {pipeline_mode = #tpu.pipeline_mode<synchronous>, transform_indices = @transform_1, window_bounds = array<i64: 384, 128>}, {pipeline_mode = #tpu.pipeline_mode<synchronous>, transform_indices = @transform_2, window_bounds = array<i64: 1, 128>}, {transform_indices = @transform_3, window_bounds = array<i64: 128, 128>}]} {
    %c0 = arith.constant 0 : index
    %c0_0 = arith.constant 0 : index
    %0 = vector.load %arg1[%c0, %c0_0] : memref<128x384xbf16, #tpu.memory_space<vmem>>, vector<128x384xbf16>
    %c0_1 = arith.constant 0 : index
    %c0_2 = arith.constant 0 : index
    %1 = vector.load %arg2[%c0_1, %c0_2] : memref<384x128xbf16, #tpu.memory_space<vmem>>, vector<384x128xbf16>
    %cst = arith.constant dense<0.000000e+00> : vector<128x128xf32>
    %2 = tpu.matmul %0, %1, %cst {dimension_numbers = #tpu.dot_dimension_numbers<[1], [0], [0], [1], [0, 0, 1, 1], [], []>} : vector<128x384xbf16>, vector<384x128xbf16>, vector<128x128xf32> -> vector<128x128xf32>
    %c0_3 = arith.constant 0 : index
    %c0_4 = arith.constant 0 : index
    %3 = vector.load %arg3[%c0_3, %c0_4] : memref<1x128xf32, #tpu.memory_space<vmem>>, vector<1x128xf32>
    %4 = vector.broadcast %3 : vector<1x128xf32> to vector<128x128xf32>
    %5 = arith.addf %2, %4 : vector<128x128xf32>
    %cst_5 = arith.constant 0.000000e+00 : f32
    %6 = vector.broadcast %cst_5 : f32 to vector<128x128xf32>
    %7 = arith.maximumf %5, %6 : vector<128x128xf32>
    %8 = arith.truncf %7 : vector<128x128xf32> to vector<128x128xbf16>
    %c0_6 = arith.constant 0 : index
    %c0_7 = arith.constant 0 : index
    %9 = vector.load %arg4[%c0_6, %c0_7] : memref<128x128xbf16, #tpu.memory_space<vmem>>, vector<128x128xbf16>
    tpu.vector_store %arg4[%c0_6, %c0_7], %8 {strides = array<i32>} : memref<128x128xbf16, #tpu.memory_space<vmem>>, vector<128x128xbf16>,
    return
  }
  func.func @transform_0(%arg0: i32) -> (i32, i32) {
    %c0_i32 = arith.constant 0 : i32
    %c0_i32_0 = arith.constant 0 : i32
    return %arg0, %c0_i32 : i32, i32
  }
  func.func @transform_1(%arg0: i32) -> (i32, i32) {
    %c0_i32 = arith.constant 0 : i32
    %c0_i32_0 = arith.constant 0 : i32
    %c0_i32_1 = arith.constant 0 : i32
    return %c0_i32, %c0_i32_0 : i32, i32
  }
  func.func @transform_2(%arg0: i32) -> (i32, i32) {
    %c0_i32 = arith.constant 0 : i32
    %c0_i32_0 = arith.constant 0 : i32
    %c0_i32_1 = arith.constant 0 : i32
    return %c0_i32, %c0_i32_0 : i32, i32
  }
  func.func @transform_3(%arg0: i32) -> (i32, i32) {
    %c0_i32 = arith.constant 0 : i32
    %c0_i32_0 = arith.constant 0 : i32
    return %arg0, %c0_i32 : i32, i32
  }
}

module attributes {stable_mosaic.version = 11 : i64} {
  func.func @_gemm_mask_kernel(%arg0: i32, %arg1: memref<32x384xbf16, #tpu.memory_space<vmem>>, %arg2: memref<384x128xbf16, #tpu.memory_space<vmem>>, %arg3: memref<1x128xf32, #tpu.memory_space<vmem>>, %arg4: memref<1x128xf32, #tpu.memory_space<vmem>>, %arg5: memref<32x128xbf16, #tpu.memory_space<vmem>>) attributes {dimension_semantics = [#tpu.dimension_semantics<parallel>], iteration_bounds = array<i64: 1>, scalar_prefetch = 0 : i64, scratch_operands = 0 : i64, tpu.core_type = #tpu.core_type<tc>, window_params = [{transform_indices = @transform_0, window_bounds = array<i64: 32, 384>}, {pipeline_mode = #tpu.pipeline_mode<synchronous>, transform_indices = @transform_1, window_bounds = array<i64: 384, 128>}, {pipeline_mode = #tpu.pipeline_mode<synchronous>, transform_indices = @transform_2, window_bounds = array<i64: 1, 128>}, {pipeline_mode = #tpu.pipeline_mode<synchronous>, transform_indices = @transform_3, window_bounds = array<i64: 1, 128>}, {transform_indices = @transform_4, window_bounds = array<i64: 32, 128>}]} {
    %c0 = arith.constant 0 : index
    %c0_0 = arith.constant 0 : index
    %0 = vector.load %arg1[%c0, %c0_0] : memref<32x384xbf16, #tpu.memory_space<vmem>>, vector<32x384xbf16>
    %c0_1 = arith.constant 0 : index
    %c0_2 = arith.constant 0 : index
    %1 = vector.load %arg2[%c0_1, %c0_2] : memref<384x128xbf16, #tpu.memory_space<vmem>>, vector<384x128xbf16>
    %cst = arith.constant dense<0.000000e+00> : vector<32x128xf32>
    %2 = tpu.matmul %0, %1, %cst {dimension_numbers = #tpu.dot_dimension_numbers<[1], [0], [0], [1], [0, 0, 1, 1], [], []>} : vector<32x384xbf16>, vector<384x128xbf16>, vector<32x128xf32> -> vector<32x128xf32>
    %c0_3 = arith.constant 0 : index
    %c0_4 = arith.constant 0 : index
    %3 = vector.load %arg3[%c0_3, %c0_4] : memref<1x128xf32, #tpu.memory_space<vmem>>, vector<1x128xf32>
    %4 = vector.broadcast %3 : vector<1x128xf32> to vector<32x128xf32>
    %5 = arith.addf %2, %4 : vector<32x128xf32>
    %c0_5 = arith.constant 0 : index
    %c0_6 = arith.constant 0 : index
    %6 = vector.load %arg4[%c0_5, %c0_6] : memref<1x128xf32, #tpu.memory_space<vmem>>, vector<1x128xf32>
    %cst_7 = arith.constant 0.000000e+00 : f32
    %7 = vector.broadcast %cst_7 : f32 to vector<32x128xf32>
    %8 = arith.maximumf %5, %7 : vector<32x128xf32>
    %9 = vector.broadcast %6 : vector<1x128xf32> to vector<32x128xf32>
    %10 = arith.mulf %8, %9 : vector<32x128xf32>
    %cst_8 = arith.constant 1.000000e+00 : f32
    %11 = vector.broadcast %cst_8 : f32 to vector<1x128xf32>
    %12 = arith.subf %11, %6 : vector<1x128xf32>
    %13 = vector.broadcast %12 : vector<1x128xf32> to vector<32x128xf32>
    %14 = arith.mulf %5, %13 : vector<32x128xf32>
    %15 = arith.addf %10, %14 : vector<32x128xf32>
    %16 = arith.truncf %15 : vector<32x128xf32> to vector<32x128xbf16>
    %c0_9 = arith.constant 0 : index
    %c0_10 = arith.constant 0 : index
    %17 = vector.load %arg5[%c0_9, %c0_10] : memref<32x128xbf16, #tpu.memory_space<vmem>>, vector<32x128xbf16>
    tpu.vector_store %arg5[%c0_9, %c0_10], %16 {strides = array<i32>} : memref<32x128xbf16, #tpu.memory_space<vmem>>, vector<32x128xbf16>,
    return
  }
  func.func @transform_0(%arg0: i32) -> (i32, i32) {
    %c0_i32 = arith.constant 0 : i32
    %c0_i32_0 = arith.constant 0 : i32
    return %arg0, %c0_i32 : i32, i32
  }
  func.func @transform_1(%arg0: i32) -> (i32, i32) {
    %c0_i32 = arith.constant 0 : i32
    %c0_i32_0 = arith.constant 0 : i32
    %c0_i32_1 = arith.constant 0 : i32
    return %c0_i32, %c0_i32_0 : i32, i32
  }
  func.func @transform_2(%arg0: i32) -> (i32, i32) {
    %c0_i32 = arith.constant 0 : i32
    %c0_i32_0 = arith.constant 0 : i32
    %c0_i32_1 = arith.constant 0 : i32
    return %c0_i32, %c0_i32_0 : i32, i32
  }
  func.func @transform_3(%arg0: i32) -> (i32, i32) {
    %c0_i32 = arith.constant 0 : i32
    %c0_i32_0 = arith.constant 0 : i32
    %c0_i32_1 = arith.constant 0 : i32
    return %c0_i32, %c0_i32_0 : i32, i32
  }
  func.func @transform_4(%arg0: i32) -> (i32, i32) {
    %c0_i32 = arith.constant 0 : i32
    %c0_i32_0 = arith.constant 0 : i32
    return %arg0, %c0_i32 : i32, i32
  }
}

module attributes {stable_mosaic.version = 11 : i64} {
  func.func @_gemm_res_kernel(%arg0: i32, %arg1: memref<32x640xbf16, #tpu.memory_space<vmem>>, %arg2: memref<640x128xbf16, #tpu.memory_space<vmem>>, %arg3: memref<1x128xf32, #tpu.memory_space<vmem>>, %arg4: memref<32x128xbf16, #tpu.memory_space<vmem>>, %arg5: memref<32x128xbf16, #tpu.memory_space<vmem>>) attributes {dimension_semantics = [#tpu.dimension_semantics<parallel>], iteration_bounds = array<i64: 1>, scalar_prefetch = 0 : i64, scratch_operands = 0 : i64, tpu.core_type = #tpu.core_type<tc>, window_params = [{transform_indices = @transform_0, window_bounds = array<i64: 32, 640>}, {pipeline_mode = #tpu.pipeline_mode<synchronous>, transform_indices = @transform_1, window_bounds = array<i64: 640, 128>}, {pipeline_mode = #tpu.pipeline_mode<synchronous>, transform_indices = @transform_2, window_bounds = array<i64: 1, 128>}, {transform_indices = @transform_3, window_bounds = array<i64: 32, 128>}, {transform_indices = @transform_4, window_bounds = array<i64: 32, 128>}]} {
    %c0 = arith.constant 0 : index
    %c0_0 = arith.constant 0 : index
    %0 = vector.load %arg1[%c0, %c0_0] : memref<32x640xbf16, #tpu.memory_space<vmem>>, vector<32x640xbf16>
    %c0_1 = arith.constant 0 : index
    %c0_2 = arith.constant 0 : index
    %1 = vector.load %arg2[%c0_1, %c0_2] : memref<640x128xbf16, #tpu.memory_space<vmem>>, vector<640x128xbf16>
    %cst = arith.constant dense<0.000000e+00> : vector<32x128xf32>
    %2 = tpu.matmul %0, %1, %cst {dimension_numbers = #tpu.dot_dimension_numbers<[1], [0], [0], [1], [0, 0, 1, 1], [], []>} : vector<32x640xbf16>, vector<640x128xbf16>, vector<32x128xf32> -> vector<32x128xf32>
    %c0_3 = arith.constant 0 : index
    %c0_4 = arith.constant 0 : index
    %3 = vector.load %arg3[%c0_3, %c0_4] : memref<1x128xf32, #tpu.memory_space<vmem>>, vector<1x128xf32>
    %4 = vector.broadcast %3 : vector<1x128xf32> to vector<32x128xf32>
    %5 = arith.addf %2, %4 : vector<32x128xf32>
    %c0_5 = arith.constant 0 : index
    %c0_6 = arith.constant 0 : index
    %6 = vector.load %arg4[%c0_5, %c0_6] : memref<32x128xbf16, #tpu.memory_space<vmem>>, vector<32x128xbf16>
    %7 = arith.extf %6 : vector<32x128xbf16> to vector<32x128xf32>
    %8 = arith.addf %5, %7 : vector<32x128xf32>
    %cst_7 = arith.constant 0.000000e+00 : f32
    %9 = vector.broadcast %cst_7 : f32 to vector<32x128xf32>
    %10 = arith.maximumf %8, %9 : vector<32x128xf32>
    %11 = arith.truncf %10 : vector<32x128xf32> to vector<32x128xbf16>
    %c0_8 = arith.constant 0 : index
    %c0_9 = arith.constant 0 : index
    %12 = vector.load %arg5[%c0_8, %c0_9] : memref<32x128xbf16, #tpu.memory_space<vmem>>, vector<32x128xbf16>
    tpu.vector_store %arg5[%c0_8, %c0_9], %11 {strides = array<i32>} : memref<32x128xbf16, #tpu.memory_space<vmem>>, vector<32x128xbf16>,
    return
  }
  func.func @transform_0(%arg0: i32) -> (i32, i32) {
    %c0_i32 = arith.constant 0 : i32
    %c0_i32_0 = arith.constant 0 : i32
    return %arg0, %c0_i32 : i32, i32
  }
  func.func @transform_1(%arg0: i32) -> (i32, i32) {
    %c0_i32 = arith.constant 0 : i32
    %c0_i32_0 = arith.constant 0 : i32
    %c0_i32_1 = arith.constant 0 : i32
    return %c0_i32, %c0_i32_0 : i32, i32
  }
  func.func @transform_2(%arg0: i32) -> (i32, i32) {
    %c0_i32 = arith.constant 0 : i32
    %c0_i32_0 = arith.constant 0 : i32
    %c0_i32_1 = arith.constant 0 : i32
    return %c0_i32, %c0_i32_0 : i32, i32
  }
  func.func @transform_3(%arg0: i32) -> (i32, i32) {
    %c0_i32 = arith.constant 0 : i32
    %c0_i32_0 = arith.constant 0 : i32
    return %arg0, %c0_i32 : i32, i32
  }
  func.func @transform_4(%arg0: i32) -> (i32, i32) {
    %c0_i32 = arith.constant 0 : i32
    %c0_i32_0 = arith.constant 0 : i32
    return %arg0, %c0_i32 : i32, i32
  }
}

module attributes {stable_mosaic.version = 11 : i64} {
  func.func @_gemm_kernel(%arg0: i32, %arg1: memref<32x640xbf16, #tpu.memory_space<vmem>>, %arg2: memref<640x128xbf16, #tpu.memory_space<vmem>>, %arg3: memref<1x128xf32, #tpu.memory_space<vmem>>, %arg4: memref<32x128xbf16, #tpu.memory_space<vmem>>) attributes {dimension_semantics = [#tpu.dimension_semantics<parallel>], iteration_bounds = array<i64: 1>, scalar_prefetch = 0 : i64, scratch_operands = 0 : i64, tpu.core_type = #tpu.core_type<tc>, window_params = [{transform_indices = @transform_0, window_bounds = array<i64: 32, 640>}, {pipeline_mode = #tpu.pipeline_mode<synchronous>, transform_indices = @transform_1, window_bounds = array<i64: 640, 128>}, {pipeline_mode = #tpu.pipeline_mode<synchronous>, transform_indices = @transform_2, window_bounds = array<i64: 1, 128>}, {transform_indices = @transform_3, window_bounds = array<i64: 32, 128>}]} {
    %c0 = arith.constant 0 : index
    %c0_0 = arith.constant 0 : index
    %0 = vector.load %arg1[%c0, %c0_0] : memref<32x640xbf16, #tpu.memory_space<vmem>>, vector<32x640xbf16>
    %c0_1 = arith.constant 0 : index
    %c0_2 = arith.constant 0 : index
    %1 = vector.load %arg2[%c0_1, %c0_2] : memref<640x128xbf16, #tpu.memory_space<vmem>>, vector<640x128xbf16>
    %cst = arith.constant dense<0.000000e+00> : vector<32x128xf32>
    %2 = tpu.matmul %0, %1, %cst {dimension_numbers = #tpu.dot_dimension_numbers<[1], [0], [0], [1], [0, 0, 1, 1], [], []>} : vector<32x640xbf16>, vector<640x128xbf16>, vector<32x128xf32> -> vector<32x128xf32>
    %c0_3 = arith.constant 0 : index
    %c0_4 = arith.constant 0 : index
    %3 = vector.load %arg3[%c0_3, %c0_4] : memref<1x128xf32, #tpu.memory_space<vmem>>, vector<1x128xf32>
    %4 = vector.broadcast %3 : vector<1x128xf32> to vector<32x128xf32>
    %5 = arith.addf %2, %4 : vector<32x128xf32>
    %cst_5 = arith.constant 0.000000e+00 : f32
    %6 = vector.broadcast %cst_5 : f32 to vector<32x128xf32>
    %7 = arith.maximumf %5, %6 : vector<32x128xf32>
    %8 = arith.truncf %7 : vector<32x128xf32> to vector<32x128xbf16>
    %c0_6 = arith.constant 0 : index
    %c0_7 = arith.constant 0 : index
    %9 = vector.load %arg4[%c0_6, %c0_7] : memref<32x128xbf16, #tpu.memory_space<vmem>>, vector<32x128xbf16>
    tpu.vector_store %arg4[%c0_6, %c0_7], %8 {strides = array<i32>} : memref<32x128xbf16, #tpu.memory_space<vmem>>, vector<32x128xbf16>,
    return
  }
  func.func @transform_0(%arg0: i32) -> (i32, i32) {
    %c0_i32 = arith.constant 0 : i32
    %c0_i32_0 = arith.constant 0 : i32
    return %arg0, %c0_i32 : i32, i32
  }
  func.func @transform_1(%arg0: i32) -> (i32, i32) {
    %c0_i32 = arith.constant 0 : i32
    %c0_i32_0 = arith.constant 0 : i32
    %c0_i32_1 = arith.constant 0 : i32
    return %c0_i32, %c0_i32_0 : i32, i32
  }
  func.func @transform_2(%arg0: i32) -> (i32, i32) {
    %c0_i32 = arith.constant 0 : i32
    %c0_i32_0 = arith.constant 0 : i32
    %c0_i32_1 = arith.constant 0 : i32
    return %c0_i32, %c0_i32_0 : i32, i32
  }
  func.func @transform_3(%arg0: i32) -> (i32, i32) {
    %c0_i32 = arith.constant 0 : i32
    %c0_i32_0 = arith.constant 0 : i32
    return %arg0, %c0_i32 : i32, i32
  }
}

module attributes {stable_mosaic.version = 11 : i64} {
  func.func @_gemm_mask_kernel(%arg0: i32, %arg1: memref<16x640xbf16, #tpu.memory_space<vmem>>, %arg2: memref<640x256xbf16, #tpu.memory_space<vmem>>, %arg3: memref<1x256xf32, #tpu.memory_space<vmem>>, %arg4: memref<1x256xf32, #tpu.memory_space<vmem>>, %arg5: memref<16x256xbf16, #tpu.memory_space<vmem>>) attributes {dimension_semantics = [#tpu.dimension_semantics<parallel>], iteration_bounds = array<i64: 1>, scalar_prefetch = 0 : i64, scratch_operands = 0 : i64, tpu.core_type = #tpu.core_type<tc>, window_params = [{transform_indices = @transform_0, window_bounds = array<i64: 16, 640>}, {pipeline_mode = #tpu.pipeline_mode<synchronous>, transform_indices = @transform_1, window_bounds = array<i64: 640, 256>}, {pipeline_mode = #tpu.pipeline_mode<synchronous>, transform_indices = @transform_2, window_bounds = array<i64: 1, 256>}, {pipeline_mode = #tpu.pipeline_mode<synchronous>, transform_indices = @transform_3, window_bounds = array<i64: 1, 256>}, {transform_indices = @transform_4, window_bounds = array<i64: 16, 256>}]} {
    %c0 = arith.constant 0 : index
    %c0_0 = arith.constant 0 : index
    %0 = vector.load %arg1[%c0, %c0_0] : memref<16x640xbf16, #tpu.memory_space<vmem>>, vector<16x640xbf16>
    %c0_1 = arith.constant 0 : index
    %c0_2 = arith.constant 0 : index
    %1 = vector.load %arg2[%c0_1, %c0_2] : memref<640x256xbf16, #tpu.memory_space<vmem>>, vector<640x256xbf16>
    %cst = arith.constant dense<0.000000e+00> : vector<16x256xf32>
    %2 = tpu.matmul %0, %1, %cst {dimension_numbers = #tpu.dot_dimension_numbers<[1], [0], [0], [1], [0, 0, 1, 1], [], []>} : vector<16x640xbf16>, vector<640x256xbf16>, vector<16x256xf32> -> vector<16x256xf32>
    %c0_3 = arith.constant 0 : index
    %c0_4 = arith.constant 0 : index
    %3 = vector.load %arg3[%c0_3, %c0_4] : memref<1x256xf32, #tpu.memory_space<vmem>>, vector<1x256xf32>
    %4 = vector.broadcast %3 : vector<1x256xf32> to vector<16x256xf32>
    %5 = arith.addf %2, %4 : vector<16x256xf32>
    %c0_5 = arith.constant 0 : index
    %c0_6 = arith.constant 0 : index
    %6 = vector.load %arg4[%c0_5, %c0_6] : memref<1x256xf32, #tpu.memory_space<vmem>>, vector<1x256xf32>
    %cst_7 = arith.constant 0.000000e+00 : f32
    %7 = vector.broadcast %cst_7 : f32 to vector<16x256xf32>
    %8 = arith.maximumf %5, %7 : vector<16x256xf32>
    %9 = vector.broadcast %6 : vector<1x256xf32> to vector<16x256xf32>
    %10 = arith.mulf %8, %9 : vector<16x256xf32>
    %cst_8 = arith.constant 1.000000e+00 : f32
    %11 = vector.broadcast %cst_8 : f32 to vector<1x256xf32>
    %12 = arith.subf %11, %6 : vector<1x256xf32>
    %13 = vector.broadcast %12 : vector<1x256xf32> to vector<16x256xf32>
    %14 = arith.mulf %5, %13 : vector<16x256xf32>
    %15 = arith.addf %10, %14 : vector<16x256xf32>
    %16 = arith.truncf %15 : vector<16x256xf32> to vector<16x256xbf16>
    %c0_9 = arith.constant 0 : index
    %c0_10 = arith.constant 0 : index
    %17 = vector.load %arg5[%c0_9, %c0_10] : memref<16x256xbf16, #tpu.memory_space<vmem>>, vector<16x256xbf16>
    tpu.vector_store %arg5[%c0_9, %c0_10], %16 {strides = array<i32>} : memref<16x256xbf16, #tpu.memory_space<vmem>>, vector<16x256xbf16>,
    return
  }
  func.func @transform_0(%arg0: i32) -> (i32, i32) {
    %c0_i32 = arith.constant 0 : i32
    %c0_i32_0 = arith.constant 0 : i32
    return %arg0, %c0_i32 : i32, i32
  }
  func.func @transform_1(%arg0: i32) -> (i32, i32) {
    %c0_i32 = arith.constant 0 : i32
    %c0_i32_0 = arith.constant 0 : i32
    %c0_i32_1 = arith.constant 0 : i32
    return %c0_i32, %c0_i32_0 : i32, i32
  }
  func.func @transform_2(%arg0: i32) -> (i32, i32) {
    %c0_i32 = arith.constant 0 : i32
    %c0_i32_0 = arith.constant 0 : i32
    %c0_i32_1 = arith.constant 0 : i32
    return %c0_i32, %c0_i32_0 : i32, i32
  }
  func.func @transform_3(%arg0: i32) -> (i32, i32) {
    %c0_i32 = arith.constant 0 : i32
    %c0_i32_0 = arith.constant 0 : i32
    %c0_i32_1 = arith.constant 0 : i32
    return %c0_i32, %c0_i32_0 : i32, i32
  }
  func.func @transform_4(%arg0: i32) -> (i32, i32) {
    %c0_i32 = arith.constant 0 : i32
    %c0_i32_0 = arith.constant 0 : i32
    return %arg0, %c0_i32 : i32, i32
  }
}

module attributes {stable_mosaic.version = 11 : i64} {
  func.func @_gemm_res_kernel(%arg0: i32, %arg1: memref<16x1152xbf16, #tpu.memory_space<vmem>>, %arg2: memref<1152x128xbf16, #tpu.memory_space<vmem>>, %arg3: memref<1x128xf32, #tpu.memory_space<vmem>>, %arg4: memref<16x128xbf16, #tpu.memory_space<vmem>>, %arg5: memref<16x128xbf16, #tpu.memory_space<vmem>>) attributes {dimension_semantics = [#tpu.dimension_semantics<parallel>], iteration_bounds = array<i64: 1>, scalar_prefetch = 0 : i64, scratch_operands = 0 : i64, tpu.core_type = #tpu.core_type<tc>, window_params = [{transform_indices = @transform_0, window_bounds = array<i64: 16, 1152>}, {pipeline_mode = #tpu.pipeline_mode<synchronous>, transform_indices = @transform_1, window_bounds = array<i64: 1152, 128>}, {pipeline_mode = #tpu.pipeline_mode<synchronous>, transform_indices = @transform_2, window_bounds = array<i64: 1, 128>}, {transform_indices = @transform_3, window_bounds = array<i64: 16, 128>}, {transform_indices = @transform_4, window_bounds = array<i64: 16, 128>}]} {
    %c0 = arith.constant 0 : index
    %c0_0 = arith.constant 0 : index
    %0 = vector.load %arg1[%c0, %c0_0] : memref<16x1152xbf16, #tpu.memory_space<vmem>>, vector<16x1152xbf16>
    %c0_1 = arith.constant 0 : index
    %c0_2 = arith.constant 0 : index
    %1 = vector.load %arg2[%c0_1, %c0_2] : memref<1152x128xbf16, #tpu.memory_space<vmem>>, vector<1152x128xbf16>
    %cst = arith.constant dense<0.000000e+00> : vector<16x128xf32>
    %2 = tpu.matmul %0, %1, %cst {dimension_numbers = #tpu.dot_dimension_numbers<[1], [0], [0], [1], [0, 0, 1, 1], [], []>} : vector<16x1152xbf16>, vector<1152x128xbf16>, vector<16x128xf32> -> vector<16x128xf32>
    %c0_3 = arith.constant 0 : index
    %c0_4 = arith.constant 0 : index
    %3 = vector.load %arg3[%c0_3, %c0_4] : memref<1x128xf32, #tpu.memory_space<vmem>>, vector<1x128xf32>
    %4 = vector.broadcast %3 : vector<1x128xf32> to vector<16x128xf32>
    %5 = arith.addf %2, %4 : vector<16x128xf32>
    %c0_5 = arith.constant 0 : index
    %c0_6 = arith.constant 0 : index
    %6 = vector.load %arg4[%c0_5, %c0_6] : memref<16x128xbf16, #tpu.memory_space<vmem>>, vector<16x128xbf16>
    %7 = arith.extf %6 : vector<16x128xbf16> to vector<16x128xf32>
    %8 = arith.addf %5, %7 : vector<16x128xf32>
    %cst_7 = arith.constant 0.000000e+00 : f32
    %9 = vector.broadcast %cst_7 : f32 to vector<16x128xf32>
    %10 = arith.maximumf %8, %9 : vector<16x128xf32>
    %11 = arith.truncf %10 : vector<16x128xf32> to vector<16x128xbf16>
    %c0_8 = arith.constant 0 : index
    %c0_9 = arith.constant 0 : index
    %12 = vector.load %arg5[%c0_8, %c0_9] : memref<16x128xbf16, #tpu.memory_space<vmem>>, vector<16x128xbf16>
    tpu.vector_store %arg5[%c0_8, %c0_9], %11 {strides = array<i32>} : memref<16x128xbf16, #tpu.memory_space<vmem>>, vector<16x128xbf16>,
    return
  }
  func.func @transform_0(%arg0: i32) -> (i32, i32) {
    %c0_i32 = arith.constant 0 : i32
    %c0_i32_0 = arith.constant 0 : i32
    return %arg0, %c0_i32 : i32, i32
  }
  func.func @transform_1(%arg0: i32) -> (i32, i32) {
    %c0_i32 = arith.constant 0 : i32
    %c0_i32_0 = arith.constant 0 : i32
    %c0_i32_1 = arith.constant 0 : i32
    return %c0_i32, %c0_i32_0 : i32, i32
  }
  func.func @transform_2(%arg0: i32) -> (i32, i32) {
    %c0_i32 = arith.constant 0 : i32
    %c0_i32_0 = arith.constant 0 : i32
    %c0_i32_1 = arith.constant 0 : i32
    return %c0_i32, %c0_i32_0 : i32, i32
  }
  func.func @transform_3(%arg0: i32) -> (i32, i32) {
    %c0_i32 = arith.constant 0 : i32
    %c0_i32_0 = arith.constant 0 : i32
    return %arg0, %c0_i32 : i32, i32
  }
  func.func @transform_4(%arg0: i32) -> (i32, i32) {
    %c0_i32 = arith.constant 0 : i32
    %c0_i32_0 = arith.constant 0 : i32
    return %arg0, %c0_i32 : i32, i32
  }
}

module attributes {stable_mosaic.version = 11 : i64} {
  func.func @_gemm_kernel(%arg0: i32, %arg1: memref<16x1152xbf16, #tpu.memory_space<vmem>>, %arg2: memref<1152x128xbf16, #tpu.memory_space<vmem>>, %arg3: memref<1x128xf32, #tpu.memory_space<vmem>>, %arg4: memref<16x128xbf16, #tpu.memory_space<vmem>>) attributes {dimension_semantics = [#tpu.dimension_semantics<parallel>], iteration_bounds = array<i64: 1>, scalar_prefetch = 0 : i64, scratch_operands = 0 : i64, tpu.core_type = #tpu.core_type<tc>, window_params = [{transform_indices = @transform_0, window_bounds = array<i64: 16, 1152>}, {pipeline_mode = #tpu.pipeline_mode<synchronous>, transform_indices = @transform_1, window_bounds = array<i64: 1152, 128>}, {pipeline_mode = #tpu.pipeline_mode<synchronous>, transform_indices = @transform_2, window_bounds = array<i64: 1, 128>}, {transform_indices = @transform_3, window_bounds = array<i64: 16, 128>}]} {
    %c0 = arith.constant 0 : index
    %c0_0 = arith.constant 0 : index
    %0 = vector.load %arg1[%c0, %c0_0] : memref<16x1152xbf16, #tpu.memory_space<vmem>>, vector<16x1152xbf16>
    %c0_1 = arith.constant 0 : index
    %c0_2 = arith.constant 0 : index
    %1 = vector.load %arg2[%c0_1, %c0_2] : memref<1152x128xbf16, #tpu.memory_space<vmem>>, vector<1152x128xbf16>
    %cst = arith.constant dense<0.000000e+00> : vector<16x128xf32>
    %2 = tpu.matmul %0, %1, %cst {dimension_numbers = #tpu.dot_dimension_numbers<[1], [0], [0], [1], [0, 0, 1, 1], [], []>} : vector<16x1152xbf16>, vector<1152x128xbf16>, vector<16x128xf32> -> vector<16x128xf32>
    %c0_3 = arith.constant 0 : index
    %c0_4 = arith.constant 0 : index
    %3 = vector.load %arg3[%c0_3, %c0_4] : memref<1x128xf32, #tpu.memory_space<vmem>>, vector<1x128xf32>
    %4 = vector.broadcast %3 : vector<1x128xf32> to vector<16x128xf32>
    %5 = arith.addf %2, %4 : vector<16x128xf32>
    %cst_5 = arith.constant 0.000000e+00 : f32
    %6 = vector.broadcast %cst_5 : f32 to vector<16x128xf32>
    %7 = arith.maximumf %5, %6 : vector<16x128xf32>
    %8 = arith.truncf %7 : vector<16x128xf32> to vector<16x128xbf16>
    %c0_6 = arith.constant 0 : index
    %c0_7 = arith.constant 0 : index
    %9 = vector.load %arg4[%c0_6, %c0_7] : memref<16x128xbf16, #tpu.memory_space<vmem>>, vector<16x128xbf16>
    tpu.vector_store %arg4[%c0_6, %c0_7], %8 {strides = array<i32>} : memref<16x128xbf16, #tpu.memory_space<vmem>>, vector<16x128xbf16>,
    return
  }
  func.func @transform_0(%arg0: i32) -> (i32, i32) {
    %c0_i32 = arith.constant 0 : i32
    %c0_i32_0 = arith.constant 0 : i32
    return %arg0, %c0_i32 : i32, i32
  }
  func.func @transform_1(%arg0: i32) -> (i32, i32) {
    %c0_i32 = arith.constant 0 : i32
    %c0_i32_0 = arith.constant 0 : i32
    %c0_i32_1 = arith.constant 0 : i32
    return %c0_i32, %c0_i32_0 : i32, i32
  }
  func.func @transform_2(%arg0: i32) -> (i32, i32) {
    %c0_i32 = arith.constant 0 : i32
    %c0_i32_0 = arith.constant 0 : i32
    %c0_i32_1 = arith.constant 0 : i32
    return %c0_i32, %c0_i32_0 : i32, i32
  }
  func.func @transform_3(%arg0: i32) -> (i32, i32) {
    %c0_i32 = arith.constant 0 : i32
    %c0_i32_0 = arith.constant 0 : i32
    return %arg0, %c0_i32 : i32, i32
  }
}

module attributes {stable_mosaic.version = 11 : i64} {
  func.func @_gemm_kernel(%arg0: i32, %arg1: memref<32x384xbf16, #tpu.memory_space<vmem>>, %arg2: memref<384x128xbf16, #tpu.memory_space<vmem>>, %arg3: memref<1x128xf32, #tpu.memory_space<vmem>>, %arg4: memref<32x128xbf16, #tpu.memory_space<vmem>>) attributes {dimension_semantics = [#tpu.dimension_semantics<parallel>], iteration_bounds = array<i64: 1>, scalar_prefetch = 0 : i64, scratch_operands = 0 : i64, tpu.core_type = #tpu.core_type<tc>, window_params = [{transform_indices = @transform_0, window_bounds = array<i64: 32, 384>}, {pipeline_mode = #tpu.pipeline_mode<synchronous>, transform_indices = @transform_1, window_bounds = array<i64: 384, 128>}, {pipeline_mode = #tpu.pipeline_mode<synchronous>, transform_indices = @transform_2, window_bounds = array<i64: 1, 128>}, {transform_indices = @transform_3, window_bounds = array<i64: 32, 128>}]} {
    %c0 = arith.constant 0 : index
    %c0_0 = arith.constant 0 : index
    %0 = vector.load %arg1[%c0, %c0_0] : memref<32x384xbf16, #tpu.memory_space<vmem>>, vector<32x384xbf16>
    %c0_1 = arith.constant 0 : index
    %c0_2 = arith.constant 0 : index
    %1 = vector.load %arg2[%c0_1, %c0_2] : memref<384x128xbf16, #tpu.memory_space<vmem>>, vector<384x128xbf16>
    %cst = arith.constant dense<0.000000e+00> : vector<32x128xf32>
    %2 = tpu.matmul %0, %1, %cst {dimension_numbers = #tpu.dot_dimension_numbers<[1], [0], [0], [1], [0, 0, 1, 1], [], []>} : vector<32x384xbf16>, vector<384x128xbf16>, vector<32x128xf32> -> vector<32x128xf32>
    %c0_3 = arith.constant 0 : index
    %c0_4 = arith.constant 0 : index
    %3 = vector.load %arg3[%c0_3, %c0_4] : memref<1x128xf32, #tpu.memory_space<vmem>>, vector<1x128xf32>
    %4 = vector.broadcast %3 : vector<1x128xf32> to vector<32x128xf32>
    %5 = arith.addf %2, %4 : vector<32x128xf32>
    %cst_5 = arith.constant 0.000000e+00 : f32
    %6 = vector.broadcast %cst_5 : f32 to vector<32x128xf32>
    %7 = arith.maximumf %5, %6 : vector<32x128xf32>
    %8 = arith.truncf %7 : vector<32x128xf32> to vector<32x128xbf16>
    %c0_6 = arith.constant 0 : index
    %c0_7 = arith.constant 0 : index
    %9 = vector.load %arg4[%c0_6, %c0_7] : memref<32x128xbf16, #tpu.memory_space<vmem>>, vector<32x128xbf16>
    tpu.vector_store %arg4[%c0_6, %c0_7], %8 {strides = array<i32>} : memref<32x128xbf16, #tpu.memory_space<vmem>>, vector<32x128xbf16>,
    return
  }
  func.func @transform_0(%arg0: i32) -> (i32, i32) {
    %c0_i32 = arith.constant 0 : i32
    %c0_i32_0 = arith.constant 0 : i32
    return %arg0, %c0_i32 : i32, i32
  }
  func.func @transform_1(%arg0: i32) -> (i32, i32) {
    %c0_i32 = arith.constant 0 : i32
    %c0_i32_0 = arith.constant 0 : i32
    %c0_i32_1 = arith.constant 0 : i32
    return %c0_i32, %c0_i32_0 : i32, i32
  }
  func.func @transform_2(%arg0: i32) -> (i32, i32) {
    %c0_i32 = arith.constant 0 : i32
    %c0_i32_0 = arith.constant 0 : i32
    %c0_i32_1 = arith.constant 0 : i32
    return %c0_i32, %c0_i32_0 : i32, i32
  }
  func.func @transform_3(%arg0: i32) -> (i32, i32) {
    %c0_i32 = arith.constant 0 : i32
    %c0_i32_0 = arith.constant 0 : i32
    return %arg0, %c0_i32 : i32, i32
  }
}

module attributes {stable_mosaic.version = 11 : i64} {
  func.func @_gemm_kernel(%arg0: i32, %arg1: memref<512x128xbf16, #tpu.memory_space<vmem>>, %arg2: memref<128x128xbf16, #tpu.memory_space<vmem>>, %arg3: memref<1x128xf32, #tpu.memory_space<vmem>>, %arg4: memref<512x128xbf16, #tpu.memory_space<vmem>>) attributes {dimension_semantics = [#tpu.dimension_semantics<parallel>], iteration_bounds = array<i64: 1>, scalar_prefetch = 0 : i64, scratch_operands = 0 : i64, tpu.core_type = #tpu.core_type<tc>, window_params = [{transform_indices = @transform_0, window_bounds = array<i64: 512, 128>}, {pipeline_mode = #tpu.pipeline_mode<synchronous>, transform_indices = @transform_1, window_bounds = array<i64: 128, 128>}, {pipeline_mode = #tpu.pipeline_mode<synchronous>, transform_indices = @transform_2, window_bounds = array<i64: 1, 128>}, {transform_indices = @transform_3, window_bounds = array<i64: 512, 128>}]} {
    %c0 = arith.constant 0 : index
    %c0_0 = arith.constant 0 : index
    %0 = vector.load %arg1[%c0, %c0_0] : memref<512x128xbf16, #tpu.memory_space<vmem>>, vector<512x128xbf16>
    %c0_1 = arith.constant 0 : index
    %c0_2 = arith.constant 0 : index
    %1 = vector.load %arg2[%c0_1, %c0_2] : memref<128x128xbf16, #tpu.memory_space<vmem>>, vector<128x128xbf16>
    %cst = arith.constant dense<0.000000e+00> : vector<512x128xf32>
    %2 = tpu.matmul %0, %1, %cst {dimension_numbers = #tpu.dot_dimension_numbers<[1], [0], [0], [1], [0, 0, 1, 1], [], []>} : vector<512x128xbf16>, vector<128x128xbf16>, vector<512x128xf32> -> vector<512x128xf32>
    %c0_3 = arith.constant 0 : index
    %c0_4 = arith.constant 0 : index
    %3 = vector.load %arg3[%c0_3, %c0_4] : memref<1x128xf32, #tpu.memory_space<vmem>>, vector<1x128xf32>
    %4 = vector.broadcast %3 : vector<1x128xf32> to vector<512x128xf32>
    %5 = arith.addf %2, %4 : vector<512x128xf32>
    %6 = arith.truncf %5 : vector<512x128xf32> to vector<512x128xbf16>
    %c0_5 = arith.constant 0 : index
    %c0_6 = arith.constant 0 : index
    %7 = vector.load %arg4[%c0_5, %c0_6] : memref<512x128xbf16, #tpu.memory_space<vmem>>, vector<512x128xbf16>
    tpu.vector_store %arg4[%c0_5, %c0_6], %6 {strides = array<i32>} : memref<512x128xbf16, #tpu.memory_space<vmem>>, vector<512x128xbf16>,
    return
  }
  func.func @transform_0(%arg0: i32) -> (i32, i32) {
    %c0_i32 = arith.constant 0 : i32
    %c0_i32_0 = arith.constant 0 : i32
    return %arg0, %c0_i32 : i32, i32
  }
  func.func @transform_1(%arg0: i32) -> (i32, i32) {
    %c0_i32 = arith.constant 0 : i32
    %c0_i32_0 = arith.constant 0 : i32
    %c0_i32_1 = arith.constant 0 : i32
    return %c0_i32, %c0_i32_0 : i32, i32
  }
  func.func @transform_2(%arg0: i32) -> (i32, i32) {
    %c0_i32 = arith.constant 0 : i32
    %c0_i32_0 = arith.constant 0 : i32
    %c0_i32_1 = arith.constant 0 : i32
    return %c0_i32, %c0_i32_0 : i32, i32
  }
  func.func @transform_3(%arg0: i32) -> (i32, i32) {
    %c0_i32 = arith.constant 0 : i32
    %c0_i32_0 = arith.constant 0 : i32
    return %arg0, %c0_i32 : i32, i32
  }
}

</mosaic_0001>

<llo_original>
// kernel: pose_resnet_forward.21
$region0: #{pose_resnet_forward.21}
  #allocation0 [shape = 'u32[]', space=smem, size = 0x4, offset = 0x4, fixed_abs, tag = 'smem constant byte address 0x4 - core index']
  #allocation1 [shape = 'u32[144,128]{1,0:T(1,128)}', space=vmem, size = 0x12000, scoped, tag = 'internal scratch']
  %s0 = inlined_call_operand.vmem [shape: bf16[2048,256], index: 0, kind: input, shape index: {}]
  %s1 = inlined_call_operand.vmem [shape: bf16[256,128], index: 1, kind: input, shape index: {}]
  %s2 = inlined_call_operand.vmem [shape: f32[1,128], index: 2, kind: input, shape index: {}]
  %s3 = inlined_call_operand.vmem [shape: bf16[2048,128], index: 3, kind: output, shape index: {}]
  %s4 = sld [smem:[#allocation0]]
  $region45: #{pose_resnet_forward.21} parent=0
    _
  %s6 = ssub.s32 1, %s4
  %s7 = scalar_select 0, %s6, %s4
  loop: start=0, step=1, limit=4
  $region2: #{pose_resnet_forward.21} parent=0 // loop_pre_header
    _
  $region3: #{pose_resnet_forward.21} parent=0 // loop_header
    %s9 = sphi 0, %s13
    %p10 = scmp.ge.s32.totalorder %s9, 4
    %s19 = sphi 0, %s21
    %s22 = sphi 0, %s19
    %s23 = sphi 0, %s22
    %s39 = sphi 0, %s23
    %s43 = sphi 0, %s43
    %s45 = sphi 0, %s43
    %s46 = sphi 0, %s45
    %s60 = sphi 0, %s46
    %s64 = sphi 0, %s64
    %s66 = sphi 0, %s64
    %s67 = sphi 0, %s66
    %s81 = sphi 0, %s67
    %s87 = sphi 0, %s89
    %s90 = sphi 0, %s87
    %s91 = sphi 0, %s90
    %s107 = sphi 0, %s91
  $region4: #{pose_resnet_forward.21} parent=0 // loop_header_branch
    %12 = sbr.rel (%p10) target = $region8
  $region5: #{pose_resnet_forward.21} parent=0 // loop_body
    %s14 = ssub.s32 %s9, 1
    %s15 = ssub.s32 %s9, 2
    %s16 = sadd.s32 %s9, 1
    %s17 = ssub.s32 %s9, %s16
    %p18 = scmp.eq.s32.totalorder %s17, 0
    %s20 = sadd.s32 %s19, 1
    %s21 = scalar_select %p18, %s19, %s20
    %p24 = pneg %p18
    %p25 = scmp.eq.s32.totalorder %s9, 1
    %p26 = por %p24, %p25
    %p27 = scmp.ne.s32.totalorder %s19, %s22
    %p28 = scmp.eq.s32.totalorder %s9, 0
    %p29 = por %p27, %p28
    %p30 = scmp.ne.s32.totalorder %s19, %s22
    %p31 = scmp.eq.s32.totalorder %s14, 1
    %p32 = por %p30, %p31
    %p33 = scmp.ne.s32.totalorder %s22, %s23
    %p34 = scmp.eq.s32.totalorder %s14, 0
    %p35 = por %p33, %p34
    %p36 = scmp.ne.s32.totalorder %s22, %s23
    %p37 = scmp.eq.s32.totalorder %s15, 1
    %p38 = por %p36, %p37
    %p40 = scmp.ne.s32.totalorder %s23, %s39
    %p41 = scmp.eq.s32.totalorder %s15, 0
    %p42 = por %p40, %p41
    %s44 = sadd.s32 %s43, 1
    %p47 = scmp.eq.s32.totalorder %s9, 1
    %p48 = scmp.ne.s32.totalorder %s43, %s45
    %p49 = scmp.eq.s32.totalorder %s9, 0
    %p50 = por %p48, %p49
    %p51 = scmp.ne.s32.totalorder %s43, %s45
    %p52 = scmp.eq.s32.totalorder %s14, 1
    %p53 = por %p51, %p52
    %p54 = scmp.ne.s32.totalorder %s45, %s46
    %p55 = scmp.eq.s32.totalorder %s14, 0
    %p56 = por %p54, %p55
    %p57 = scmp.ne.s32.totalorder %s45, %s46
    %p58 = scmp.eq.s32.totalorder %s15, 1
    %p59 = por %p57, %p58
    %p61 = scmp.ne.s32.totalorder %s46, %s60
    %p62 = scmp.eq.s32.totalorder %s15, 0
    %p63 = por %p61, %p62
    %s65 = sadd.s32 %s64, 1
    %p68 = scmp.eq.s32.totalorder %s9, 1
    %p69 = scmp.ne.s32.totalorder %s64, %s66
    %p70 = scmp.eq.s32.totalorder %s9, 0
    %p71 = por %p69, %p70
    %p72 = scmp.ne.s32.totalorder %s64, %s66
    %p73 = scmp.eq.s32.totalorder %s14, 1
    %p74 = por %p72, %p73
    %p75 = scmp.ne.s32.totalorder %s66, %s67
    %p76 = scmp.eq.s32.totalorder %s14, 0
    %p77 = por %p75, %p76
    %p78 = scmp.ne.s32.totalorder %s66, %s67
    %p79 = scmp.eq.s32.totalorder %s15, 1
    %p80 = por %p78, %p79
    %p82 = scmp.ne.s32.totalorder %s67, %s81
    %p83 = scmp.eq.s32.totalorder %s15, 0
    %p84 = por %p82, %p83
    %s85 = ssub.s32 %s9, %s16
    %p86 = scmp.eq.s32.totalorder %s85, 0
    %s88 = sadd.s32 %s87, 1
    %s89 = scalar_select %p86, %s87, %s88
    %p92 = pneg %p86
    %p93 = scmp.eq.s32.totalorder %s9, 1
    %p94 = por %p92, %p93
    %p95 = scmp.ne.s32.totalorder %s87, %s90
    %p96 = scmp.eq.s32.totalorder %s9, 0
    %p97 = por %p95, %p96
    %p98 = scmp.ne.s32.totalorder %s87, %s90
    %p99 = scmp.eq.s32.totalorder %s14, 1
    %p100 = por %p98, %p99
    %p101 = scmp.ne.s32.totalorder %s90, %s91
    %p102 = scmp.eq.s32.totalorder %s14, 0
    %p103 = por %p101, %p102
    %p104 = scmp.ne.s32.totalorder %s90, %s91
    %p105 = scmp.eq.s32.totalorder %s15, 1
    %p106 = por %p104, %p105
    %p108 = scmp.ne.s32.totalorder %s91, %s107
    %p109 = scmp.eq.s32.totalorder %s15, 0
    %p110 = por %p108, %p109
    %p111 = scmp.le.s32.totalorder 1, %s9
    %p112 = scmp.lt.s32.totalorder %s9, 3
    %p113 = pnand %p111, %p112
    %p114 = pneg %p113
    // Predicated region
    $region9: #{pose_resnet_forward.21} parent=5 // pred_check
      _
    $region10: #{pose_resnet_forward.21} parent=5 // pred_check_branch
      %116 = sbr.rel (%p113) target = $region12
    $region11: #{pose_resnet_forward.21} parent=5 // pred_region
      %s117 = ssub.s32 %s9, 1
      // Predicated region
      $region13: #{pose_resnet_forward.21} parent=11 // pred_check
        %p118 = pneg %p56
      $region14: #{pose_resnet_forward.21} parent=11 // pred_check_branch
        %120 = sbr.rel (%p118) target = $region16
      $region15: #{pose_resnet_forward.21} parent=11 // pred_region
        _
      $region16: #{pose_resnet_forward.21} parent=11 // pred_fallthru
        _
      // Predicated region
      $region17: #{pose_resnet_forward.21} parent=11 // pred_check
        %p121 = pneg %p77
      $region18: #{pose_resnet_forward.21} parent=11 // pred_check_branch
        %123 = sbr.rel (%p121) target = $region20
      $region19: #{pose_resnet_forward.21} parent=11 // pred_region
        _
      $region20: #{pose_resnet_forward.21} parent=11 // pred_fallthru
        _
    $region12: #{pose_resnet_forward.21} parent=5 // pred_fallthru
      _
    %p124 = scmp.lt.s32.totalorder %s9, 2
    // Predicated region
    $region21: #{pose_resnet_forward.21} parent=5 // pred_check
      %p125 = pneg %p124
    $region22: #{pose_resnet_forward.21} parent=5 // pred_check_branch
      %127 = sbr.rel (%p125) target = $region24
    $region23: #{pose_resnet_forward.21} parent=5 // pred_region
      // Predicated region
      $region25: #{pose_resnet_forward.21} parent=23 // pred_check
        %p128 = pneg %p29
      $region26: #{pose_resnet_forward.21} parent=23 // pred_check_branch
        %130 = sbr.rel (%p128) target = $region28
      $region27: #{pose_resnet_forward.21} parent=23 // pred_region
        %s131 = smul.u32 128, %s9
        %p132 = scmp.lt.s32.totalorder %s131, 255
        %s133 = scalar_select %p132, %s131, 255
        %s134 = smul.addr %s133, 2
        %s135 = smul.addr %s134, 4
        %s136 = scalar_lea.vmem %s0, %s135
        %s137 = smul.u32 128, %s9
      $region28: #{pose_resnet_forward.21} parent=23 // pred_fallthru
        _
    $region24: #{pose_resnet_forward.21} parent=5 // pred_fallthru
      _
    %p138 = scmp.le.s32.totalorder 1, %s9
    %p139 = scmp.lt.s32.totalorder %s9, 3
    %p140 = pnand %p138, %p139
    %p141 = pneg %p140
    // Predicated region
    $region29: #{pose_resnet_forward.21} parent=5 // pred_check
      _
    $region30: #{pose_resnet_forward.21} parent=5 // pred_check_branch
      %143 = sbr.rel (%p140) target = $region32
    $region31: #{pose_resnet_forward.21} parent=5 // pred_region
      %s144 = ssub.s32 %s9, 1
      %s145 = smul.u32 128, %s14
      %p146 = scmp.lt.s32.totalorder %s145, 255
      %s147 = scalar_select %p146, %s145, 255
      %s148 = smul.addr %s147, 2
      %s149 = smul.addr %s148, 4
      %s150 = scalar_lea.vmem %s0, %s149
      %p151 = pneg %p35
      %p152 = pneg %p32
      %p153 = pneg %p56
      %p154 = pneg %p53
      %p155 = pneg %p77
      %p156 = pneg %p74
      %p157 = pneg %p103
      %p158 = pneg %p100
      %s159 = smul.u32 128, %s14
      %p160 = scmp.lt.s32.totalorder %s159, 255
      %s161 = scalar_select %p160, %s159, 255
      %s162 = smul.addr %s161, 4
      %s163 = scalar_lea.vmem %s3, %s162
      %s164 = smul.u32 128, %s14
      %p165 = scmp.lt.s32.totalorder %s164, 255
      %s166 = scalar_select %p165, %s164, 255
      %s167 = smul.addr %s166, 2
      %s168 = smul.addr %s167, 4
      %s169 = scalar_lea.vmem %s0, %s168
      %s170 = smul.u32 128, %s14
      %s171 = smul.u32 128, %s14
      %p172 = scmp.lt.s32.totalorder %s171, 255
      %s173 = scalar_select %p172, %s171, 255
      %s174 = smul.addr %s173, 4
      %s175 = scalar_lea.vmem %s3, %s174
      %s176 = smul.u32 128, %s14
      %v178 = vld [vmem:[%s169] sm:$0xff]
      %v179 = vld [vmem:[%s169 + $0x8] sm:$0xff]
      %v180 = vld [vmem:[%s169 + $0x10] sm:$0xff]
      %v181 = vld [vmem:[%s169 + $0x18] sm:$0xff]
      %v182 = vld [vmem:[%s169 + $0x20] sm:$0xff]
      %v183 = vld [vmem:[%s169 + $0x28] sm:$0xff]
      %v184 = vld [vmem:[%s169 + $0x30] sm:$0xff]
      %v185 = vld [vmem:[%s169 + $0x38] sm:$0xff]
      %v186 = vld [vmem:[%s169 + $0x40] sm:$0xff]
      %v187 = vld [vmem:[%s169 + $0x48] sm:$0xff]
      %v188 = vld [vmem:[%s169 + $0x50] sm:$0xff]
      %v189 = vld [vmem:[%s169 + $0x58] sm:$0xff]
      %v190 = vld [vmem:[%s169 + $0x60] sm:$0xff]
      %v191 = vld [vmem:[%s169 + $0x68] sm:$0xff]
      %v192 = vld [vmem:[%s169 + $0x70] sm:$0xff]
      %v193 = vld [vmem:[%s169 + $0x78] sm:$0xff]
      %v194 = vld [vmem:[%s169 + $0x80] sm:$0xff]
      %v195 = vld [vmem:[%s169 + $0x88] sm:$0xff]
      %v196 = vld [vmem:[%s169 + $0x90] sm:$0xff]
      %v197 = vld [vmem:[%s169 + $0x98] sm:$0xff]
      %v198 = vld [vmem:[%s169 + $0xa0] sm:$0xff]
      %v199 = vld [vmem:[%s169 + $0xa8] sm:$0xff]
      %v200 = vld [vmem:[%s169 + $0xb0] sm:$0xff]
      %v201 = vld [vmem:[%s169 + $0xb8] sm:$0xff]
      %v202 = vld [vmem:[%s169 + $0xc0] sm:$0xff]
      %v203 = vld [vmem:[%s169 + $0xc8] sm:$0xff]
      %v204 = vld [vmem:[%s169 + $0xd0] sm:$0xff]
      %v205 = vld [vmem:[%s169 + $0xd8] sm:$0xff]
      %v206 = vld [vmem:[%s169 + $0xe0] sm:$0xff]
      %v207 = vld [vmem:[%s169 + $0xe8] sm:$0xff]
      %v208 = vld [vmem:[%s169 + $0xf0] sm:$0xff]
      %v209 = vld [vmem:[%s169 + $0xf8] sm:$0xff]
      %v210 = vld [vmem:[%s169 + $0x100] sm:$0xff]
      %v211 = vld [vmem:[%s169 + $0x108] sm:$0xff]
      %v212 = vld [vmem:[%s169 + $0x110] sm:$0xff]
      %v213 = vld [vmem:[%s169 + $0x118] sm:$0xff]
      %v214 = vld [vmem:[%s169 + $0x120] sm:$0xff]
      %v215 = vld [vmem:[%s169 + $0x128] sm:$0xff]
      %v216 = vld [vmem:[%s169 + $0x130] sm:$0xff]
      %v217 = vld [vmem:[%s169 + $0x138] sm:$0xff]
      %v218 = vld [vmem:[%s169 + $0x140] sm:$0xff]
      %v219 = vld [vmem:[%s169 + $0x148] sm:$0xff]
      %v220 = vld [vmem:[%s169 + $0x150] sm:$0xff]
      %v221 = vld [vmem:[%s169 + $0x158] sm:$0xff]
      %v222 = vld [vmem:[%s169 + $0x160] sm:$0xff]
      %v223 = vld [vmem:[%s169 + $0x168] sm:$0xff]
      %v224 = vld [vmem:[%s169 + $0x170] sm:$0xff]
      %v225 = vld [vmem:[%s169 + $0x178] sm:$0xff]
      %v226 = vld [vmem:[%s169 + $0x180] sm:$0xff]
      %v227 = vld [vmem:[%s169 + $0x188] sm:$0xff]
      %v228 = vld [vmem:[%s169 + $0x190] sm:$0xff]
      %v229 = vld [vmem:[%s169 + $0x198] sm:$0xff]
      %v230 = vld [vmem:[%s169 + $0x1a0] sm:$0xff]
      %v231 = vld [vmem:[%s169 + $0x1a8] sm:$0xff]
      %v232 = vld [vmem:[%s169 + $0x1b0] sm:$0xff]
      %v233 = vld [vmem:[%s169 + $0x1b8] sm:$0xff]
      %v234 = vld [vmem:[%s169 + $0x1c0] sm:$0xff]
      %v235 = vld [vmem:[%s169 + $0x1c8] sm:$0xff]
      %v236 = vld [vmem:[%s169 + $0x1d0] sm:$0xff]
      %v237 = vld [vmem:[%s169 + $0x1d8] sm:$0xff]
      %v238 = vld [vmem:[%s169 + $0x1e0] sm:$0xff]
      %v239 = vld [vmem:[%s169 + $0x1e8] sm:$0xff]
      %v240 = vld [vmem:[%s169 + $0x1f0] sm:$0xff]
      %v241 = vld [vmem:[%s169 + $0x1f8] sm:$0xff]
      %v242 = vld [vmem:[%s169 + $0x200] sm:$0xff]
      %v243 = vld [vmem:[%s169 + $0x208] sm:$0xff]
      %v244 = vld [vmem:[%s169 + $0x210] sm:$0xff]
      %v245 = vld [vmem:[%s169 + $0x218] sm:$0xff]
      %v246 = vld [vmem:[%s169 + $0x220] sm:$0xff]
      %v247 = vld [vmem:[%s169 + $0x228] sm:$0xff]
      %v248 = vld [vmem:[%s169 + $0x230] sm:$0xff]
      %v249 = vld [vmem:[%s169 + $0x238] sm:$0xff]
      %v250 = vld [vmem:[%s169 + $0x240] sm:$0xff]
      %v251 = vld [vmem:[%s169 + $0x248] sm:$0xff]
      %v252 = vld [vmem:[%s169 + $0x250] sm:$0xff]
      %v253 = vld [vmem:[%s169 + $0x258] sm:$0xff]
      %v254 = vld [vmem:[%s169 + $0x260] sm:$0xff]
      %v255 = vld [vmem:[%s169 + $0x268] sm:$0xff]
      %v256 = vld [vmem:[%s169 + $0x270] sm:$0xff]
      %v257 = vld [vmem:[%s169 + $0x278] sm:$0xff]
      %v258 = vld [vmem:[%s169 + $0x280] sm:$0xff]
      %v259 = vld [vmem:[%s169 + $0x288] sm:$0xff]
      %v260 = vld [vmem:[%s169 + $0x290] sm:$0xff]
      %v261 = vld [vmem:[%s169 + $0x298] sm:$0xff]
      %v262 = vld [vmem:[%s169 + $0x2a0] sm:$0xff]
      %v263 = vld [vmem:[%s169 + $0x2a8] sm:$0xff]
      %v264 = vld [vmem:[%s169 + $0x2b0] sm:$0xff]
      %v265 = vld [vmem:[%s169 + $0x2b8] sm:$0xff]
      %v266 = vld [vmem:[%s169 + $0x2c0] sm:$0xff]
      %v267 = vld [vmem:[%s169 + $0x2c8] sm:$0xff]
      %v268 = vld [vmem:[%s169 + $0x2d0] sm:$0xff]
      %v269 = vld [vmem:[%s169 + $0x2d8] sm:$0xff]
      %v270 = vld [vmem:[%s169 + $0x2e0] sm:$0xff]
      %v271 = vld [vmem:[%s169 + $0x2e8] sm:$0xff]
      %v272 = vld [vmem:[%s169 + $0x2f0] sm:$0xff]
      %v273 = vld [vmem:[%s169 + $0x2f8] sm:$0xff]
      %v274 = vld [vmem:[%s169 + $0x300] sm:$0xff]
      %v275 = vld [vmem:[%s169 + $0x308] sm:$0xff]
      %v276 = vld [vmem:[%s169 + $0x310] sm:$0xff]
      %v277 = vld [vmem:[%s169 + $0x318] sm:$0xff]
      %v278 = vld [vmem:[%s169 + $0x320] sm:$0xff]
      %v279 = vld [vmem:[%s169 + $0x328] sm:$0xff]
      %v280 = vld [vmem:[%s169 + $0x330] sm:$0xff]
      %v281 = vld [vmem:[%s169 + $0x338] sm:$0xff]
      %v282 = vld [vmem:[%s169 + $0x340] sm:$0xff]
      %v283 = vld [vmem:[%s169 + $0x348] sm:$0xff]
      %v284 = vld [vmem:[%s169 + $0x350] sm:$0xff]
      %v285 = vld [vmem:[%s169 + $0x358] sm:$0xff]
      %v286 = vld [vmem:[%s169 + $0x360] sm:$0xff]
      %v287 = vld [vmem:[%s169 + $0x368] sm:$0xff]
      %v288 = vld [vmem:[%s169 + $0x370] sm:$0xff]
      %v289 = vld [vmem:[%s169 + $0x378] sm:$0xff]
      %v290 = vld [vmem:[%s169 + $0x380] sm:$0xff]
      %v291 = vld [vmem:[%s169 + $0x388] sm:$0xff]
      %v292 = vld [vmem:[%s169 + $0x390] sm:$0xff]
      %v293 = vld [vmem:[%s169 + $0x398] sm:$0xff]
      %v294 = vld [vmem:[%s169 + $0x3a0] sm:$0xff]
      %v295 = vld [vmem:[%s169 + $0x3a8] sm:$0xff]
      %v296 = vld [vmem:[%s169 + $0x3b0] sm:$0xff]
      %v297 = vld [vmem:[%s169 + $0x3b8] sm:$0xff]
      %v298 = vld [vmem:[%s169 + $0x3c0] sm:$0xff]
      %v299 = vld [vmem:[%s169 + $0x3c8] sm:$0xff]
      %v300 = vld [vmem:[%s169 + $0x3d0] sm:$0xff]
      %v301 = vld [vmem:[%s169 + $0x3d8] sm:$0xff]
      %v302 = vld [vmem:[%s169 + $0x3e0] sm:$0xff]
      %v303 = vld [vmem:[%s169 + $0x3e8] sm:$0xff]
      %v304 = vld [vmem:[%s169 + $0x3f0] sm:$0xff]
      %v305 = vld [vmem:[%s169 + $0x3f8] sm:$0xff]
      %v306 = vld [vmem:[%s1] sm:$0xf]
      %v307 = vld [vmem:[%s1 + $0x4] sm:$0xf]
      %v308 = vld [vmem:[%s1 + $0x8] sm:$0xf]
      %v309 = vld [vmem:[%s1 + $0xc] sm:$0xf]
      %v310 = vld [vmem:[%s1 + $0x10] sm:$0xf]
      %v311 = vld [vmem:[%s1 + $0x14] sm:$0xf]
      %v312 = vld [vmem:[%s1 + $0x18] sm:$0xf]
      %v313 = vld [vmem:[%s1 + $0x1c] sm:$0xf]
      %v314 = vld [vmem:[%s1 + $0x20] sm:$0xf]
      %v315 = vld [vmem:[%s1 + $0x24] sm:$0xf]
      %v316 = vld [vmem:[%s1 + $0x28] sm:$0xf]
      %v317 = vld [vmem:[%s1 + $0x2c] sm:$0xf]
      %v318 = vld [vmem:[%s1 + $0x30] sm:$0xf]
      %v319 = vld [vmem:[%s1 + $0x34] sm:$0xf]
      %v320 = vld [vmem:[%s1 + $0x38] sm:$0xf]
      %v321 = vld [vmem:[%s1 + $0x3c] sm:$0xf]
      %v322 = vld [vmem:[%s1 + $0x40] sm:$0xf]
      %v323 = vld [vmem:[%s1 + $0x44] sm:$0xf]
      %v324 = vld [vmem:[%s1 + $0x48] sm:$0xf]
      %v325 = vld [vmem:[%s1 + $0x4c] sm:$0xf]
      %v326 = vld [vmem:[%s1 + $0x50] sm:$0xf]
      %v327 = vld [vmem:[%s1 + $0x54] sm:$0xf]
      %v328 = vld [vmem:[%s1 + $0x58] sm:$0xf]
      %v329 = vld [vmem:[%s1 + $0x5c] sm:$0xf]
      %v330 = vld [vmem:[%s1 + $0x60] sm:$0xf]
      %v331 = vld [vmem:[%s1 + $0x64] sm:$0xf]
      %v332 = vld [vmem:[%s1 + $0x68] sm:$0xf]
      %v333 = vld [vmem:[%s1 + $0x6c] sm:$0xf]
      %v334 = vld [vmem:[%s1 + $0x70] sm:$0xf]
      %v335 = vld [vmem:[%s1 + $0x74] sm:$0xf]
      %v336 = vld [vmem:[%s1 + $0x78] sm:$0xf]
      %v337 = vld [vmem:[%s1 + $0x7c] sm:$0xf]
      %v338 = vld [vmem:[%s2] sm:$0x1]
      %v340 = vlaneseq
      %v341 = vshrl.u32 %v340, 7
      %v342 = vsub.s32 0, %v341
      %v343 = vrot.slane %v338, %v342
      %v473 = vunpack.c.l.b16 %v178
      %v474 = vunpack.c.h.b16 %v178
      %v475 = vunpack.c.l.b16 %v179
      %v476 = vunpack.c.h.b16 %v179
      %v477 = vunpack.c.l.b16 %v180
      %v478 = vunpack.c.h.b16 %v180
      %v479 = vunpack.c.l.b16 %v181
      %v480 = vunpack.c.h.b16 %v181
      %v481 = vunpack.c.l.b16 %v182
      %v482 = vunpack.c.h.b16 %v182
      %v483 = vunpack.c.l.b16 %v183
      %v484 = vunpack.c.h.b16 %v183
      %v485 = vunpack.c.l.b16 %v184
      %v486 = vunpack.c.h.b16 %v184
      %v487 = vunpack.c.l.b16 %v185
      %v488 = vunpack.c.h.b16 %v185
      %v489 = vunpack.c.l.b16 %v186
      %v490 = vunpack.c.h.b16 %v186
      %v491 = vunpack.c.l.b16 %v187
      %v492 = vunpack.c.h.b16 %v187
      %v493 = vunpack.c.l.b16 %v188
      %v494 = vunpack.c.h.b16 %v188
      %v495 = vunpack.c.l.b16 %v189
      %v496 = vunpack.c.h.b16 %v189
      %v497 = vunpack.c.l.b16 %v190
      %v498 = vunpack.c.h.b16 %v190
      %v499 = vunpack.c.l.b16 %v191
      %v500 = vunpack.c.h.b16 %v191
      %v501 = vunpack.c.l.b16 %v192
      %v502 = vunpack.c.h.b16 %v192
      %v503 = vunpack.c.l.b16 %v193
      %v504 = vunpack.c.h.b16 %v193
      %v505 = vunpack.c.l.b16 %v194
      %v506 = vunpack.c.h.b16 %v194
      %v507 = vunpack.c.l.b16 %v195
      %v508 = vunpack.c.h.b16 %v195
      %v509 = vunpack.c.l.b16 %v196
      %v510 = vunpack.c.h.b16 %v196
      %v511 = vunpack.c.l.b16 %v197
      %v512 = vunpack.c.h.b16 %v197
      %v513 = vunpack.c.l.b16 %v198
      %v514 = vunpack.c.h.b16 %v198
      %v515 = vunpack.c.l.b16 %v199
      %v516 = vunpack.c.h.b16 %v199
      %v517 = vunpack.c.l.b16 %v200
      %v518 = vunpack.c.h.b16 %v200
      %v519 = vunpack.c.l.b16 %v201
      %v520 = vunpack.c.h.b16 %v201
      %v521 = vunpack.c.l.b16 %v202
      %v522 = vunpack.c.h.b16 %v202
      %v523 = vunpack.c.l.b16 %v203
      %v524 = vunpack.c.h.b16 %v203
      %v525 = vunpack.c.l.b16 %v204
      %v526 = vunpack.c.h.b16 %v204
      %v527 = vunpack.c.l.b16 %v205
      %v528 = vunpack.c.h.b16 %v205
      %v529 = vunpack.c.l.b16 %v206
      %v530 = vunpack.c.h.b16 %v206
      %v531 = vunpack.c.l.b16 %v207
      %v532 = vunpack.c.h.b16 %v207
      %v533 = vunpack.c.l.b16 %v208
      %v534 = vunpack.c.h.b16 %v208
      %v535 = vunpack.c.l.b16 %v209
      %v536 = vunpack.c.h.b16 %v209
      %v537 = vunpack.c.l.b16 %v210
      %v538 = vunpack.c.h.b16 %v210
      %v539 = vunpack.c.l.b16 %v211
      %v540 = vunpack.c.h.b16 %v211
      %v541 = vunpack.c.l.b16 %v212
      %v542 = vunpack.c.h.b16 %v212
      %v543 = vunpack.c.l.b16 %v213
      %v544 = vunpack.c.h.b16 %v213
      %v545 = vunpack.c.l.b16 %v214
      %v546 = vunpack.c.h.b16 %v214
      %v547 = vunpack.c.l.b16 %v215
      %v548 = vunpack.c.h.b16 %v215
      %v549 = vunpack.c.l.b16 %v216
      %v550 = vunpack.c.h.b16 %v216
      %v551 = vunpack.c.l.b16 %v217
      %v552 = vunpack.c.h.b16 %v217
      %v553 = vunpack.c.l.b16 %v218
      %v554 = vunpack.c.h.b16 %v218
      %v555 = vunpack.c.l.b16 %v219
      %v556 = vunpack.c.h.b16 %v219
      %v557 = vunpack.c.l.b16 %v220
      %v558 = vunpack.c.h.b16 %v220
      %v559 = vunpack.c.l.b16 %v221
      %v560 = vunpack.c.h.b16 %v221
      %v561 = vunpack.c.l.b16 %v222
      %v562 = vunpack.c.h.b16 %v222
      %v563 = vunpack.c.l.b16 %v223
      %v564 = vunpack.c.h.b16 %v223
      %v565 = vunpack.c.l.b16 %v224
      %v566 = vunpack.c.h.b16 %v224
      %v567 = vunpack.c.l.b16 %v225
      %v568 = vunpack.c.h.b16 %v225
      %v569 = vunpack.c.l.b16 %v226
      %v570 = vunpack.c.h.b16 %v226
      %v571 = vunpack.c.l.b16 %v227
      %v572 = vunpack.c.h.b16 %v227
      %v573 = vunpack.c.l.b16 %v228
      %v574 = vunpack.c.h.b16 %v228
      %v575 = vunpack.c.l.b16 %v229
      %v576 = vunpack.c.h.b16 %v229
      %v577 = vunpack.c.l.b16 %v230
      %v578 = vunpack.c.h.b16 %v230
      %v579 = vunpack.c.l.b16 %v231
      %v580 = vunpack.c.h.b16 %v231
      %v581 = vunpack.c.l.b16 %v232
      %v582 = vunpack.c.h.b16 %v232
      %v583 = vunpack.c.l.b16 %v233
      %v584 = vunpack.c.h.b16 %v233
      %v585 = vunpack.c.l.b16 %v234
      %v586 = vunpack.c.h.b16 %v234
      %v587 = vunpack.c.l.b16 %v235
      %v588 = vunpack.c.h.b16 %v235
      %v589 = vunpack.c.l.b16 %v236
      %v590 = vunpack.c.h.b16 %v236
      %v591 = vunpack.c.l.b16 %v237
      %v592 = vunpack.c.h.b16 %v237
      %v593 = vunpack.c.l.b16 %v238
      %v594 = vunpack.c.h.b16 %v238
      %v595 = vunpack.c.l.b16 %v239
      %v596 = vunpack.c.h.b16 %v239
      %v597 = vunpack.c.l.b16 %v240
      %v598 = vunpack.c.h.b16 %v240
      %v599 = vunpack.c.l.b16 %v241
      %v600 = vunpack.c.h.b16 %v241
      %v601 = vunpack.c.l.b16 %v242
      %v602 = vunpack.c.h.b16 %v242
      %v603 = vunpack.c.l.b16 %v243
      %v604 = vunpack.c.h.b16 %v243
      %v605 = vunpack.c.l.b16 %v244
      %v606 = vunpack.c.h.b16 %v244
      %v607 = vunpack.c.l.b16 %v245
      %v608 = vunpack.c.h.b16 %v245
      %v609 = vunpack.c.l.b16 %v246
      %v610 = vunpack.c.h.b16 %v246
      %v611 = vunpack.c.l.b16 %v247
      %v612 = vunpack.c.h.b16 %v247
      %v613 = vunpack.c.l.b16 %v248
      %v614 = vunpack.c.h.b16 %v248
      %v615 = vunpack.c.l.b16 %v249
      %v616 = vunpack.c.h.b16 %v249
      %v617 = vunpack.c.l.b16 %v250
      %v618 = vunpack.c.h.b16 %v250
      %v619 = vunpack.c.l.b16 %v251
      %v620 = vunpack.c.h.b16 %v251
      %v621 = vunpack.c.l.b16 %v252
      %v622 = vunpack.c.h.b16 %v252
      %v623 = vunpack.c.l.b16 %v253
      %v624 = vunpack.c.h.b16 %v253
      %v625 = vunpack.c.l.b16 %v254
      %v626 = vunpack.c.h.b16 %v254
      %v627 = vunpack.c.l.b16 %v255
      %v628 = vunpack.c.h.b16 %v255
      %v629 = vunpack.c.l.b16 %v256
      %v630 = vunpack.c.h.b16 %v256
      %v631 = vunpack.c.l.b16 %v257
      %v632 = vunpack.c.h.b16 %v257
      %v633 = vunpack.c.l.b16 %v258
      %v634 = vunpack.c.h.b16 %v258
      %v635 = vunpack.c.l.b16 %v259
      %v636 = vunpack.c.h.b16 %v259
      %v637 = vunpack.c.l.b16 %v260
      %v638 = vunpack.c.h.b16 %v260
      %v639 = vunpack.c.l.b16 %v261
      %v640 = vunpack.c.h.b16 %v261
      %v641 = vunpack.c.l.b16 %v262
      %v642 = vunpack.c.h.b16 %v262
      %v643 = vunpack.c.l.b16 %v263
      %v644 = vunpack.c.h.b16 %v263
      %v645 = vunpack.c.l.b16 %v264
      %v646 = vunpack.c.h.b16 %v264
      %v647 = vunpack.c.l.b16 %v265
      %v648 = vunpack.c.h.b16 %v265
      %v649 = vunpack.c.l.b16 %v266
      %v650 = vunpack.c.h.b16 %v266
      %v651 = vunpack.c.l.b16 %v267
      %v652 = vunpack.c.h.b16 %v267
      %v653 = vunpack.c.l.b16 %v268
      %v654 = vunpack.c.h.b16 %v268
      %v655 = vunpack.c.l.b16 %v269
      %v656 = vunpack.c.h.b16 %v269
      %v657 = vunpack.c.l.b16 %v270
      %v658 = vunpack.c.h.b16 %v270
      %v659 = vunpack.c.l.b16 %v271
      %v660 = vunpack.c.h.b16 %v271
      %v661 = vunpack.c.l.b16 %v272
      %v662 = vunpack.c.h.b16 %v272
      %v663 = vunpack.c.l.b16 %v273
      %v664 = vunpack.c.h.b16 %v273
      %v665 = vunpack.c.l.b16 %v274
      %v666 = vunpack.c.h.b16 %v274
      %v667 = vunpack.c.l.b16 %v275
      %v668 = vunpack.c.h.b16 %v275
      %v669 = vunpack.c.l.b16 %v276
      %v670 = vunpack.c.h.b16 %v276
      %v671 = vunpack.c.l.b16 %v277
      %v672 = vunpack.c.h.b16 %v277
      %v673 = vunpack.c.l.b16 %v278
      %v674 = vunpack.c.h.b16 %v278
      %v675 = vunpack.c.l.b16 %v279
      %v676 = vunpack.c.h.b16 %v279
      %v677 = vunpack.c.l.b16 %v280
      %v678 = vunpack.c.h.b16 %v280
      %v679 = vunpack.c.l.b16 %v281
      %v680 = vunpack.c.h.b16 %v281
      %v681 = vunpack.c.l.b16 %v282
      %v682 = vunpack.c.h.b16 %v282
      %v683 = vunpack.c.l.b16 %v283
      %v684 = vunpack.c.h.b16 %v283
      %v685 = vunpack.c.l.b16 %v284
      %v686 = vunpack.c.h.b16 %v284
      %v687 = vunpack.c.l.b16 %v285
      %v688 = vunpack.c.h.b16 %v285
      %v689 = vunpack.c.l.b16 %v286
      %v690 = vunpack.c.h.b16 %v286
      %v691 = vunpack.c.l.b16 %v287
      %v692 = vunpack.c.h.b16 %v287
      %v693 = vunpack.c.l.b16 %v288
      %v694 = vunpack.c.h.b16 %v288
      %v695 = vunpack.c.l.b16 %v289
      %v696 = vunpack.c.h.b16 %v289
      %v697 = vunpack.c.l.b16 %v290
      %v698 = vunpack.c.h.b16 %v290
      %v699 = vunpack.c.l.b16 %v291
      %v700 = vunpack.c.h.b16 %v291
      %v701 = vunpack.c.l.b16 %v292
      %v702 = vunpack.c.h.b16 %v292
      %v703 = vunpack.c.l.b16 %v293
      %v704 = vunpack.c.h.b16 %v293
      %v705 = vunpack.c.l.b16 %v294
      %v706 = vunpack.c.h.b16 %v294
      %v707 = vunpack.c.l.b16 %v295
      %v708 = vunpack.c.h.b16 %v295
      %v709 = vunpack.c.l.b16 %v296
      %v710 = vunpack.c.h.b16 %v296
      %v711 = vunpack.c.l.b16 %v297
      %v712 = vunpack.c.h.b16 %v297
      %v713 = vunpack.c.l.b16 %v298
      %v714 = vunpack.c.h.b16 %v298
      %v715 = vunpack.c.l.b16 %v299
      %v716 = vunpack.c.h.b16 %v299
      %v717 = vunpack.c.l.b16 %v300
      %v718 = vunpack.c.h.b16 %v300
      %v719 = vunpack.c.l.b16 %v301
      %v720 = vunpack.c.h.b16 %v301
      %v721 = vunpack.c.l.b16 %v302
      %v722 = vunpack.c.h.b16 %v302
      %v723 = vunpack.c.l.b16 %v303
      %v724 = vunpack.c.h.b16 %v303
      %v725 = vunpack.c.l.b16 %v304
      %v726 = vunpack.c.h.b16 %v304
      %v727 = vunpack.c.l.b16 %v305
      %v728 = vunpack.c.h.b16 %v305
      %v729 = vpack.c.b16 %v475, %v473
      %v730 = vpack.c.b16 %v476, %v474
      %v731 = vpack.c.b16 %v479, %v477
      %v732 = vpack.c.b16 %v480, %v478
      %v733 = vpack.c.b16 %v483, %v481
      %v734 = vpack.c.b16 %v484, %v482
      %v735 = vpack.c.b16 %v487, %v485
      %v736 = vpack.c.b16 %v488, %v486
      %v737 = vpack.c.b16 %v491, %v489
      %v738 = vpack.c.b16 %v492, %v490
      %v739 = vpack.c.b16 %v495, %v493
      %v740 = vpack.c.b16 %v496, %v494
      %v741 = vpack.c.b16 %v499, %v497
      %v742 = vpack.c.b16 %v500, %v498
      %v743 = vpack.c.b16 %v503, %v501
      %v744 = vpack.c.b16 %v504, %v502
      %v745 = vpack.c.b16 %v507, %v505
      %v746 = vpack.c.b16 %v508, %v506
      %v747 = vpack.c.b16 %v511, %v509
      %v748 = vpack.c.b16 %v512, %v510
      %v749 = vpack.c.b16 %v515, %v513
      %v750 = vpack.c.b16 %v516, %v514
      %v751 = vpack.c.b16 %v519, %v517
      %v752 = vpack.c.b16 %v520, %v518
      %v753 = vpack.c.b16 %v523, %v521
      %v754 = vpack.c.b16 %v524, %v522
      %v755 = vpack.c.b16 %v527, %v525
      %v756 = vpack.c.b16 %v528, %v526
      %v757 = vpack.c.b16 %v531, %v529
      %v758 = vpack.c.b16 %v532, %v530
      %v759 = vpack.c.b16 %v535, %v533
      %v760 = vpack.c.b16 %v536, %v534
      %v761 = vpack.c.b16 %v539, %v537
      %v762 = vpack.c.b16 %v540, %v538
      %v763 = vpack.c.b16 %v543, %v541
      %v764 = vpack.c.b16 %v544, %v542
      %v765 = vpack.c.b16 %v547, %v545
      %v766 = vpack.c.b16 %v548, %v546
      %v767 = vpack.c.b16 %v551, %v549
      %v768 = vpack.c.b16 %v552, %v550
      %v769 = vpack.c.b16 %v555, %v553
      %v770 = vpack.c.b16 %v556, %v554
      %v771 = vpack.c.b16 %v559, %v557
      %v772 = vpack.c.b16 %v560, %v558
      %v773 = vpack.c.b16 %v563, %v561
      %v774 = vpack.c.b16 %v564, %v562
      %v775 = vpack.c.b16 %v567, %v565
      %v776 = vpack.c.b16 %v568, %v566
      %v777 = vpack.c.b16 %v571, %v569
      %v778 = vpack.c.b16 %v572, %v570
      %v779 = vpack.c.b16 %v575, %v573
      %v780 = vpack.c.b16 %v576, %v574
      %v781 = vpack.c.b16 %v579, %v577
      %v782 = vpack.c.b16 %v580, %v578
      %v783 = vpack.c.b16 %v583, %v581
      %v784 = vpack.c.b16 %v584, %v582
      %v785 = vpack.c.b16 %v587, %v585
      %v786 = vpack.c.b16 %v588, %v586
      %v787 = vpack.c.b16 %v591, %v589
      %v788 = vpack.c.b16 %v592, %v590
      %v789 = vpack.c.b16 %v595, %v593
      %v790 = vpack.c.b16 %v596, %v594
      %v791 = vpack.c.b16 %v599, %v597
      %v792 = vpack.c.b16 %v600, %v598
      %v793 = vpack.c.b16 %v603, %v601
      %v794 = vpack.c.b16 %v604, %v602
      %v795 = vpack.c.b16 %v607, %v605
      %v796 = vpack.c.b16 %v608, %v606
      %v797 = vpack.c.b16 %v611, %v609
      %v798 = vpack.c.b16 %v612, %v610
      %v799 = vpack.c.b16 %v615, %v613
      %v800 = vpack.c.b16 %v616, %v614
      %v801 = vpack.c.b16 %v619, %v617
      %v802 = vpack.c.b16 %v620, %v618
      %v803 = vpack.c.b16 %v623, %v621
      %v804 = vpack.c.b16 %v624, %v622
      %v805 = vpack.c.b16 %v627, %v625
      %v806 = vpack.c.b16 %v628, %v626
      %v807 = vpack.c.b16 %v631, %v629
      %v808 = vpack.c.b16 %v632, %v630
      %v809 = vpack.c.b16 %v635, %v633
      %v810 = vpack.c.b16 %v636, %v634
      %v811 = vpack.c.b16 %v639, %v637
      %v812 = vpack.c.b16 %v640, %v638
      %v813 = vpack.c.b16 %v643, %v641
      %v814 = vpack.c.b16 %v644, %v642
      %v815 = vpack.c.b16 %v647, %v645
      %v816 = vpack.c.b16 %v648, %v646
      %v817 = vpack.c.b16 %v651, %v649
      %v818 = vpack.c.b16 %v652, %v650
      %v819 = vpack.c.b16 %v655, %v653
      %v820 = vpack.c.b16 %v656, %v654
      %v821 = vpack.c.b16 %v659, %v657
      %v822 = vpack.c.b16 %v660, %v658
      %v823 = vpack.c.b16 %v663, %v661
      %v824 = vpack.c.b16 %v664, %v662
      %v825 = vpack.c.b16 %v667, %v665
      %v826 = vpack.c.b16 %v668, %v666
      %v827 = vpack.c.b16 %v671, %v669
      %v828 = vpack.c.b16 %v672, %v670
      %v829 = vpack.c.b16 %v675, %v673
      %v830 = vpack.c.b16 %v676, %v674
      %v831 = vpack.c.b16 %v679, %v677
      %v832 = vpack.c.b16 %v680, %v678
      %v833 = vpack.c.b16 %v683, %v681
      %v834 = vpack.c.b16 %v684, %v682
      %v835 = vpack.c.b16 %v687, %v685
      %v836 = vpack.c.b16 %v688, %v686
      %v837 = vpack.c.b16 %v691, %v689
      %v838 = vpack.c.b16 %v692, %v690
      %v839 = vpack.c.b16 %v695, %v693
      %v840 = vpack.c.b16 %v696, %v694
      %v841 = vpack.c.b16 %v699, %v697
      %v842 = vpack.c.b16 %v700, %v698
      %v843 = vpack.c.b16 %v703, %v701
      %v844 = vpack.c.b16 %v704, %v702
      %v845 = vpack.c.b16 %v707, %v705
      %v846 = vpack.c.b16 %v708, %v706
      %v847 = vpack.c.b16 %v711, %v709
      %v848 = vpack.c.b16 %v712, %v710
      %v849 = vpack.c.b16 %v715, %v713
      %v850 = vpack.c.b16 %v716, %v714
      %v851 = vpack.c.b16 %v719, %v717
      %v852 = vpack.c.b16 %v720, %v718
      %v853 = vpack.c.b16 %v723, %v721
      %v854 = vpack.c.b16 %v724, %v722
      %v855 = vpack.c.b16 %v727, %v725
      %v856 = vpack.c.b16 %v728, %v726
      %v1017 = vunpack.c.l.b16 %v306
      %v1018 = vunpack.c.l.b16 %v307
      %v1019 = vunpack.c.l.b16 %v308
      %v1020 = vunpack.c.l.b16 %v309
      %v1021 = vunpack.c.l.b16 %v310
      %v1022 = vunpack.c.l.b16 %v311
      %v1023 = vunpack.c.l.b16 %v312
      %v1024 = vunpack.c.l.b16 %v313
      %v1025 = vunpack.c.l.b16 %v314
      %v1026 = vunpack.c.l.b16 %v315
      %v1027 = vunpack.c.l.b16 %v316
      %v1028 = vunpack.c.l.b16 %v317
      %v1029 = vunpack.c.l.b16 %v318
      %v1030 = vunpack.c.l.b16 %v319
      %v1031 = vunpack.c.l.b16 %v320
      %v1032 = vunpack.c.l.b16 %v321
      %v1033 = vunpack.c.l.b16 %v322
      %v1034 = vunpack.c.l.b16 %v323
      %v1035 = vunpack.c.l.b16 %v324
      %v1036 = vunpack.c.l.b16 %v325
      %v1037 = vunpack.c.l.b16 %v326
      %v1038 = vunpack.c.l.b16 %v327
      %v1039 = vunpack.c.l.b16 %v328
      %v1040 = vunpack.c.l.b16 %v329
      %v1041 = vunpack.c.l.b16 %v330
      %v1042 = vunpack.c.l.b16 %v331
      %v1043 = vunpack.c.l.b16 %v332
      %v1044 = vunpack.c.l.b16 %v333
      %v1045 = vunpack.c.l.b16 %v334
      %v1046 = vunpack.c.l.b16 %v335
      %v1047 = vunpack.c.l.b16 %v336
      %v1048 = vunpack.c.l.b16 %v337
      %v1049 = vpack.c.b16 %v1018, %v1017
      %v1050 = vpack.c.b16 %v1020, %v1019
      %v1051 = vpack.c.b16 %v1022, %v1021
      %v1052 = vpack.c.b16 %v1024, %v1023
      %v1053 = vpack.c.b16 %v1026, %v1025
      %v1054 = vpack.c.b16 %v1028, %v1027
      %v1055 = vpack.c.b16 %v1030, %v1029
      %v1056 = vpack.c.b16 %v1032, %v1031
      %v1057 = vpack.c.b16 %v1034, %v1033
      %v1058 = vpack.c.b16 %v1036, %v1035
      %v1059 = vpack.c.b16 %v1038, %v1037
      %v1060 = vpack.c.b16 %v1040, %v1039
      %v1061 = vpack.c.b16 %v1042, %v1041
      %v1062 = vpack.c.b16 %v1044, %v1043
      %v1063 = vpack.c.b16 %v1046, %v1045
      %v1064 = vpack.c.b16 %v1048, %v1047
      %1081 = vmatprep.subr.bf16.mxu0 0
      %1082 = vmatpush1.bf16.msra.mxu0 %v1049
      %1083 = vmatprep.subr.bf16.mxu0 0
      %1084 = vmatpush1.bf16.msra.mxu0 %v1050
      %1085 = vmatprep.subr.bf16.mxu0 0
      %1086 = vmatpush1.bf16.msra.mxu0 %v1051
      %1087 = vmatprep.subr.bf16.mxu0 0
      %1088 = vmatpush1.bf16.msra.mxu0 %v1052
      %1089 = vmatprep.subr.bf16.mxu0 0
      %1090 = vmatpush1.bf16.msra.mxu0 %v1053
      %1091 = vmatprep.subr.bf16.mxu0 0
      %1092 = vmatpush1.bf16.msra.mxu0 %v1054
      %1093 = vmatprep.subr.bf16.mxu0 0
      %1094 = vmatpush1.bf16.msra.mxu0 %v1055
      %1095 = vmatprep.subr.bf16.mxu0 0
      %1096 = vmatpush1.bf16.msra.mxu0 %v1056
      %1097 = vmatprep.subr.bf16.mxu0 0
      %1098 = vmatpush1.bf16.msra.mxu0 %v1057
      %1099 = vmatprep.subr.bf16.mxu0 0
      %1100 = vmatpush1.bf16.msra.mxu0 %v1058
      %1101 = vmatprep.subr.bf16.mxu0 0
      %1102 = vmatpush1.bf16.msra.mxu0 %v1059
      %1103 = vmatprep.subr.bf16.mxu0 0
      %1104 = vmatpush1.bf16.msra.mxu0 %v1060
      %1105 = vmatprep.subr.bf16.mxu0 0
      %1106 = vmatpush1.bf16.msra.mxu0 %v1061
      %1107 = vmatprep.subr.bf16.mxu0 0
      %1108 = vmatpush1.bf16.msra.mxu0 %v1062
      %1109 = vmatprep.subr.bf16.mxu0 0
      %1110 = vmatpush1.bf16.msra.mxu0 %v1063
      %1111 = vmatprep.subr.bf16.mxu0 0
      %1112 = vmatpush1.bf16.msra.mxu0 %v1064
      %1113 = vmatprep.mubr.bf16.mxu0 %v730
      %1114 = vmatmul.mubr.bf16.gmra.mrb[0].mxu0 %v729
      %v1115 = vpop.f32.mrb[0].mxu0
      %v1116 = vadd.f32 %v343, %v1115
      %v1117 = vpop.f32.mrb[0].mxu0
      %v1118 = vpop.f32.mrb[0].mxu0
      %v1119 = vadd.f32 %v343, %v1118
      %v1120 = vpop.f32.mrb[0].mxu0
      %1121 = vmatprep.mubr.bf16.mxu0 %v732
      %1122 = vmatmul.mubr.bf16.gmra.mrb[0].mxu0 %v731
      %v1123 = vpop.f32.mrb[0].mxu0
      %v1124 = vadd.f32 %v343, %v1123
      %v1125 = vpop.f32.mrb[0].mxu0
      %v1126 = vpop.f32.mrb[0].mxu0
      %v1127 = vadd.f32 %v343, %v1126
      %v1128 = vpop.f32.mrb[0].mxu0
      %1129 = vmatprep.mubr.bf16.mxu0 %v734
      %1130 = vmatmul.mubr.bf16.gmra.mrb[0].mxu0 %v733
      %v1131 = vpop.f32.mrb[0].mxu0
      %v1132 = vadd.f32 %v343, %v1131
      %v1133 = vpop.f32.mrb[0].mxu0
      %v1134 = vpop.f32.mrb[0].mxu0
      %v1135 = vadd.f32 %v343, %v1134
      %v1136 = vpop.f32.mrb[0].mxu0
      %1137 = vmatprep.mubr.bf16.mxu0 %v736
      %1138 = vmatmul.mubr.bf16.gmra.mrb[0].mxu0 %v735
      %v1139 = vpop.f32.mrb[0].mxu0
      %v1140 = vadd.f32 %v343, %v1139
      %v1141 = vpop.f32.mrb[0].mxu0
      %v1142 = vpop.f32.mrb[0].mxu0
      %v1143 = vadd.f32 %v343, %v1142
      %v1144 = vpop.f32.mrb[0].mxu0
      %1145 = vmatprep.mubr.bf16.mxu0 %v738
      %1146 = vmatmul.mubr.bf16.gmra.mrb[0].mxu0 %v737
      %v1147 = vpop.f32.mrb[0].mxu0
      %v1148 = vadd.f32 %v343, %v1147
      %v1149 = vpop.f32.mrb[0].mxu0
      %v1150 = vpop.f32.mrb[0].mxu0
      %v1151 = vadd.f32 %v343, %v1150
      %v1152 = vpop.f32.mrb[0].mxu0
      %1153 = vmatprep.mubr.bf16.mxu0 %v740
      %1154 = vmatmul.mubr.bf16.gmra.mrb[0].mxu0 %v739
      %v1155 = vpop.f32.mrb[0].mxu0
      %v1156 = vadd.f32 %v343, %v1155
      %v1157 = vpop.f32.mrb[0].mxu0
      %v1158 = vpop.f32.mrb[0].mxu0
      %v1159 = vadd.f32 %v343, %v1158
      %v1160 = vpop.f32.mrb[0].mxu0
      %1161 = vmatprep.mubr.bf16.mxu0 %v742
      %1162 = vmatmul.mubr.bf16.gmra.mrb[0].mxu0 %v741
      %v1163 = vpop.f32.mrb[0].mxu0
      %v1164 = vadd.f32 %v343, %v1163
      %v1165 = vpop.f32.mrb[0].mxu0
      %v1166 = vpop.f32.mrb[0].mxu0
      %v1167 = vadd.f32 %v343, %v1166
      %v1168 = vpop.f32.mrb[0].mxu0
      %1169 = vmatprep.mubr.bf16.mxu0 %v744
      %1170 = vmatmul.mubr.bf16.gmra.mrb[0].mxu0 %v743
      %v1171 = vpop.f32.mrb[0].mxu0
      %v1172 = vadd.f32 %v343, %v1171
      %v1173 = vpop.f32.mrb[0].mxu0
      %v1174 = vpop.f32.mrb[0].mxu0
      %v1175 = vadd.f32 %v343, %v1174
      %v1176 = vpop.f32.mrb[0].mxu0
      %1177 = vmatprep.mubr.bf16.mxu0 %v746
      %1178 = vmatmul.mubr.bf16.gmra.mrb[0].mxu0 %v745
      %v1179 = vpop.f32.mrb[0].mxu0
      %v1180 = vadd.f32 %v343, %v1179
      %v1181 = vpop.f32.mrb[0].mxu0
      %v1182 = vpop.f32.mrb[0].mxu0
      %v1183 = vadd.f32 %v343, %v1182
      %v1184 = vpop.f32.mrb[0].mxu0
      %1185 = vmatprep.mubr.bf16.mxu0 %v748
      %1186 = vmatmul.mubr.bf16.gmra.mrb[0].mxu0 %v747
      %v1187 = vpop.f32.mrb[0].mxu0
      %v1188 = vadd.f32 %v343, %v1187
      %v1189 = vpop.f32.mrb[0].mxu0
      %v1190 = vpop.f32.mrb[0].mxu0
      %v1191 = vadd.f32 %v343, %v1190
      %v1192 = vpop.f32.mrb[0].mxu0
      %1193 = vmatprep.mubr.bf16.mxu0 %v750
      %1194 = vmatmul.mubr.bf16.gmra.mrb[0].mxu0 %v749
      %v1195 = vpop.f32.mrb[0].mxu0
      %v1196 = vadd.f32 %v343, %v1195
      %v1197 = vpop.f32.mrb[0].mxu0
      %v1198 = vpop.f32.mrb[0].mxu0
      %v1199 = vadd.f32 %v343, %v1198
      %v1200 = vpop.f32.mrb[0].mxu0
      %1201 = vmatprep.mubr.bf16.mxu0 %v752
      %1202 = vmatmul.mubr.bf16.gmra.mrb[0].mxu0 %v751
      %v1203 = vpop.f32.mrb[0].mxu0
      %v1204 = vadd.f32 %v343, %v1203
      %v1205 = vpop.f32.mrb[0].mxu0
      %v1206 = vpop.f32.mrb[0].mxu0
      %v1207 = vadd.f32 %v343, %v1206
      %v1208 = vpop.f32.mrb[0].mxu0
      %1209 = vmatprep.mubr.bf16.mxu0 %v754
      %1210 = vmatmul.mubr.bf16.gmra.mrb[0].mxu0 %v753
      %v1211 = vpop.f32.mrb[0].mxu0
      %v1212 = vadd.f32 %v343, %v1211
      %v1213 = vpop.f32.mrb[0].mxu0
      %v1214 = vpop.f32.mrb[0].mxu0
      %v1215 = vadd.f32 %v343, %v1214
      %v1216 = vpop.f32.mrb[0].mxu0
      %1217 = vmatprep.mubr.bf16.mxu0 %v756
      %1218 = vmatmul.mubr.bf16.gmra.mrb[0].mxu0 %v755
      %v1219 = vpop.f32.mrb[0].mxu0
      %v1220 = vadd.f32 %v343, %v1219
      %v1221 = vpop.f32.mrb[0].mxu0
      %v1222 = vpop.f32.mrb[0].mxu0
      %v1223 = vadd.f32 %v343, %v1222
      %v1224 = vpop.f32.mrb[0].mxu0
      %1225 = vmatprep.mubr.bf16.mxu0 %v758
      %1226 = vmatmul.mubr.bf16.gmra.mrb[0].mxu0 %v757
      %v1227 = vpop.f32.mrb[0].mxu0
      %v1228 = vadd.f32 %v343, %v1227
      %v1229 = vpop.f32.mrb[0].mxu0
      %v1230 = vpop.f32.mrb[0].mxu0
      %v1231 = vadd.f32 %v343, %v1230
      %v1232 = vpop.f32.mrb[0].mxu0
      %1233 = vmatprep.mubr.bf16.mxu0 %v760
      %1234 = vmatmul.mubr.bf16.gmra.mrb[0].mxu0 %v759
      %v1235 = vpop.f32.mrb[0].mxu0
      %v1236 = vadd.f32 %v343, %v1235
      %v1237 = vpop.f32.mrb[0].mxu0
      %v1238 = vpop.f32.mrb[0].mxu0
      %v1239 = vadd.f32 %v343, %v1238
      %v1240 = vpop.f32.mrb[0].mxu0
      %1241 = vmatprep.mubr.bf16.mxu0 %v762
      %1242 = vmatmul.mubr.bf16.gmra.mrb[0].mxu0 %v761
      %v1243 = vpop.f32.mrb[0].mxu0
      %v1244 = vadd.f32 %v343, %v1243
      %v1245 = vpop.f32.mrb[0].mxu0
      %v1246 = vpop.f32.mrb[0].mxu0
      %v1247 = vadd.f32 %v343, %v1246
      %v1248 = vpop.f32.mrb[0].mxu0
      %1249 = vmatprep.mubr.bf16.mxu0 %v764
      %1250 = vmatmul.mubr.bf16.gmra.mrb[0].mxu0 %v763
      %v1251 = vpop.f32.mrb[0].mxu0
      %v1252 = vadd.f32 %v343, %v1251
      %v1253 = vpop.f32.mrb[0].mxu0
      %v1254 = vpop.f32.mrb[0].mxu0
      %v1255 = vadd.f32 %v343, %v1254
      %v1256 = vpop.f32.mrb[0].mxu0
      %1257 = vmatprep.mubr.bf16.mxu0 %v766
      %1258 = vmatmul.mubr.bf16.gmra.mrb[0].mxu0 %v765
      %v1259 = vpop.f32.mrb[0].mxu0
      %v1260 = vadd.f32 %v343, %v1259
      %v1261 = vpop.f32.mrb[0].mxu0
      %v1262 = vpop.f32.mrb[0].mxu0
      %v1263 = vadd.f32 %v343, %v1262
      %v1264 = vpop.f32.mrb[0].mxu0
      %1265 = vmatprep.mubr.bf16.mxu0 %v768
      %1266 = vmatmul.mubr.bf16.gmra.mrb[0].mxu0 %v767
      %v1267 = vpop.f32.mrb[0].mxu0
      %v1268 = vadd.f32 %v343, %v1267
      %v1269 = vpop.f32.mrb[0].mxu0
      %v1270 = vpop.f32.mrb[0].mxu0
      %v1271 = vadd.f32 %v343, %v1270
      %v1272 = vpop.f32.mrb[0].mxu0
      %1273 = vmatprep.mubr.bf16.mxu0 %v770
      %1274 = vmatmul.mubr.bf16.gmra.mrb[0].mxu0 %v769
      %v1275 = vpop.f32.mrb[0].mxu0
      %v1276 = vadd.f32 %v343, %v1275
      %v1277 = vpop.f32.mrb[0].mxu0
      %v1278 = vpop.f32.mrb[0].mxu0
      %v1279 = vadd.f32 %v343, %v1278
      %v1280 = vpop.f32.mrb[0].mxu0
      %1281 = vmatprep.mubr.bf16.mxu0 %v772
      %1282 = vmatmul.mubr.bf16.gmra.mrb[0].mxu0 %v771
      %v1283 = vpop.f32.mrb[0].mxu0
      %v1284 = vadd.f32 %v343, %v1283
      %v1285 = vpop.f32.mrb[0].mxu0
      %v1286 = vpop.f32.mrb[0].mxu0
      %v1287 = vadd.f32 %v343, %v1286
      %v1288 = vpop.f32.mrb[0].mxu0
      %1289 = vmatprep.mubr.bf16.mxu0 %v774
      %1290 = vmatmul.mubr.bf16.gmra.mrb[0].mxu0 %v773
      %v1291 = vpop.f32.mrb[0].mxu0
      %v1292 = vadd.f32 %v343, %v1291
      %v1293 = vpop.f32.mrb[0].mxu0
      %v1294 = vpop.f32.mrb[0].mxu0
      %v1295 = vadd.f32 %v343, %v1294
      %v1296 = vpop.f32.mrb[0].mxu0
      %1297 = vmatprep.mubr.bf16.mxu0 %v776
      %1298 = vmatmul.mubr.bf16.gmra.mrb[0].mxu0 %v775
      %v1299 = vpop.f32.mrb[0].mxu0
      %v1300 = vadd.f32 %v343, %v1299
      %v1301 = vpop.f32.mrb[0].mxu0
      %v1302 = vpop.f32.mrb[0].mxu0
      %v1303 = vadd.f32 %v343, %v1302
      %v1304 = vpop.f32.mrb[0].mxu0
      %1305 = vmatprep.mubr.bf16.mxu0 %v778
      %1306 = vmatmul.mubr.bf16.gmra.mrb[0].mxu0 %v777
      %v1307 = vpop.f32.mrb[0].mxu0
      %v1308 = vadd.f32 %v343, %v1307
      %v1309 = vpop.f32.mrb[0].mxu0
      %v1310 = vpop.f32.mrb[0].mxu0
      %v1311 = vadd.f32 %v343, %v1310
      %v1312 = vpop.f32.mrb[0].mxu0
      %1313 = vmatprep.mubr.bf16.mxu0 %v780
      %1314 = vmatmul.mubr.bf16.gmra.mrb[0].mxu0 %v779
      %v1315 = vpop.f32.mrb[0].mxu0
      %v1316 = vadd.f32 %v343, %v1315
      %v1317 = vpop.f32.mrb[0].mxu0
      %v1318 = vpop.f32.mrb[0].mxu0
      %v1319 = vadd.f32 %v343, %v1318
      %v1320 = vpop.f32.mrb[0].mxu0
      %1321 = vmatprep.mubr.bf16.mxu0 %v782
      %1322 = vmatmul.mubr.bf16.gmra.mrb[0].mxu0 %v781
      %v1323 = vpop.f32.mrb[0].mxu0
      %v1324 = vadd.f32 %v343, %v1323
      %v1325 = vpop.f32.mrb[0].mxu0
      %v1326 = vpop.f32.mrb[0].mxu0
      %v1327 = vadd.f32 %v343, %v1326
      %v1328 = vpop.f32.mrb[0].mxu0
      %1329 = vmatprep.mubr.bf16.mxu0 %v784
      %1330 = vmatmul.mubr.bf16.gmra.mrb[0].mxu0 %v783
      %v1331 = vpop.f32.mrb[0].mxu0
      %v1332 = vadd.f32 %v343, %v1331
      %v1333 = vpop.f32.mrb[0].mxu0
      %v1334 = vpop.f32.mrb[0].mxu0
      %v1335 = vadd.f32 %v343, %v1334
      %v1336 = vpop.f32.mrb[0].mxu0
      %1337 = vmatprep.mubr.bf16.mxu0 %v786
      %1338 = vmatmul.mubr.bf16.gmra.mrb[0].mxu0 %v785
      %v1339 = vpop.f32.mrb[0].mxu0
      %v1340 = vadd.f32 %v343, %v1339
      %v1341 = vpop.f32.mrb[0].mxu0
      %v1342 = vpop.f32.mrb[0].mxu0
      %v1343 = vadd.f32 %v343, %v1342
      %v1344 = vpop.f32.mrb[0].mxu0
      %1345 = vmatprep.mubr.bf16.mxu0 %v788
      %1346 = vmatmul.mubr.bf16.gmra.mrb[0].mxu0 %v787
      %v1347 = vpop.f32.mrb[0].mxu0
      %v1348 = vadd.f32 %v343, %v1347
      %v1349 = vpop.f32.mrb[0].mxu0
      %v1350 = vpop.f32.mrb[0].mxu0
      %v1351 = vadd.f32 %v343, %v1350
      %v1352 = vpop.f32.mrb[0].mxu0
      %1353 = vmatprep.mubr.bf16.mxu0 %v790
      %1354 = vmatmul.mubr.bf16.gmra.mrb[0].mxu0 %v789
      %v1355 = vpop.f32.mrb[0].mxu0
      %v1356 = vadd.f32 %v343, %v1355
      %v1357 = vpop.f32.mrb[0].mxu0
      %v1358 = vpop.f32.mrb[0].mxu0
      %v1359 = vadd.f32 %v343, %v1358
      %v1360 = vpop.f32.mrb[0].mxu0
      %1361 = vmatprep.mubr.bf16.mxu0 %v792
      %1362 = vmatmul.mubr.bf16.gmra.mrb[0].mxu0 %v791
      %v1363 = vpop.f32.mrb[0].mxu0
      %v1364 = vadd.f32 %v343, %v1363
      %v1365 = vpop.f32.mrb[0].mxu0
      %v1366 = vpop.f32.mrb[0].mxu0
      %v1367 = vadd.f32 %v343, %v1366
      %v1368 = vpop.f32.mrb[0].mxu0
      %1369 = vmatprep.mubr.bf16.mxu0 %v794
      %1370 = vmatmul.mubr.bf16.gmra.mrb[0].mxu0 %v793
      %v1371 = vpop.f32.mrb[0].mxu0
      %v1372 = vadd.f32 %v343, %v1371
      %v1373 = vpop.f32.mrb[0].mxu0
      %v1374 = vpop.f32.mrb[0].mxu0
      %v1375 = vadd.f32 %v343, %v1374
      %v1376 = vpop.f32.mrb[0].mxu0
      %1377 = vmatprep.mubr.bf16.mxu0 %v796
      %1378 = vmatmul.mubr.bf16.gmra.mrb[0].mxu0 %v795
      %v1379 = vpop.f32.mrb[0].mxu0
      %v1380 = vadd.f32 %v343, %v1379
      %v1381 = vpop.f32.mrb[0].mxu0
      %v1382 = vpop.f32.mrb[0].mxu0
      %v1383 = vadd.f32 %v343, %v1382
      %v1384 = vpop.f32.mrb[0].mxu0
      %1385 = vmatprep.mubr.bf16.mxu0 %v798
      %1386 = vmatmul.mubr.bf16.gmra.mrb[0].mxu0 %v797
      %v1387 = vpop.f32.mrb[0].mxu0
      %v1388 = vadd.f32 %v343, %v1387
      %v1389 = vpop.f32.mrb[0].mxu0
      %v1390 = vpop.f32.mrb[0].mxu0
      %v1391 = vadd.f32 %v343, %v1390
      %v1392 = vpop.f32.mrb[0].mxu0
      %1393 = vmatprep.mubr.bf16.mxu0 %v800
      %1394 = vmatmul.mubr.bf16.gmra.mrb[0].mxu0 %v799
      %v1395 = vpop.f32.mrb[0].mxu0
      %v1396 = vadd.f32 %v343, %v1395
      %v1397 = vpop.f32.mrb[0].mxu0
      %v1398 = vpop.f32.mrb[0].mxu0
      %v1399 = vadd.f32 %v343, %v1398
      %v1400 = vpop.f32.mrb[0].mxu0
      %1401 = vmatprep.mubr.bf16.mxu0 %v802
      %1402 = vmatmul.mubr.bf16.gmra.mrb[0].mxu0 %v801
      %v1403 = vpop.f32.mrb[0].mxu0
      %v1404 = vadd.f32 %v343, %v1403
      %v1405 = vpop.f32.mrb[0].mxu0
      %v1406 = vpop.f32.mrb[0].mxu0
      %v1407 = vadd.f32 %v343, %v1406
      %v1408 = vpop.f32.mrb[0].mxu0
      %1409 = vmatprep.mubr.bf16.mxu0 %v804
      %1410 = vmatmul.mubr.bf16.gmra.mrb[0].mxu0 %v803
      %v1411 = vpop.f32.mrb[0].mxu0
      %v1412 = vadd.f32 %v343, %v1411
      %v1413 = vpop.f32.mrb[0].mxu0
      %v1414 = vpop.f32.mrb[0].mxu0
      %v1415 = vadd.f32 %v343, %v1414
      %v1416 = vpop.f32.mrb[0].mxu0
      %1417 = vmatprep.mubr.bf16.mxu0 %v806
      %1418 = vmatmul.mubr.bf16.gmra.mrb[0].mxu0 %v805
      %v1419 = vpop.f32.mrb[0].mxu0
      %v1420 = vadd.f32 %v343, %v1419
      %v1421 = vpop.f32.mrb[0].mxu0
      %v1422 = vpop.f32.mrb[0].mxu0
      %v1423 = vadd.f32 %v343, %v1422
      %v1424 = vpop.f32.mrb[0].mxu0
      %1425 = vmatprep.mubr.bf16.mxu0 %v808
      %1426 = vmatmul.mubr.bf16.gmra.mrb[0].mxu0 %v807
      %v1427 = vpop.f32.mrb[0].mxu0
      %v1428 = vadd.f32 %v343, %v1427
      %v1429 = vpop.f32.mrb[0].mxu0
      %v1430 = vpop.f32.mrb[0].mxu0
      %v1431 = vadd.f32 %v343, %v1430
      %v1432 = vpop.f32.mrb[0].mxu0
      %1433 = vmatprep.mubr.bf16.mxu0 %v810
      %1434 = vmatmul.mubr.bf16.gmra.mrb[0].mxu0 %v809
      %v1435 = vpop.f32.mrb[0].mxu0
      %v1436 = vadd.f32 %v343, %v1435
      %v1437 = vpop.f32.mrb[0].mxu0
      %v1438 = vpop.f32.mrb[0].mxu0
      %v1439 = vadd.f32 %v343, %v1438
      %v1440 = vpop.f32.mrb[0].mxu0
      %1441 = vmatprep.mubr.bf16.mxu0 %v812
      %1442 = vmatmul.mubr.bf16.gmra.mrb[0].mxu0 %v811
      %v1443 = vpop.f32.mrb[0].mxu0
      %v1444 = vadd.f32 %v343, %v1443
      %v1445 = vpop.f32.mrb[0].mxu0
      %v1446 = vpop.f32.mrb[0].mxu0
      %v1447 = vadd.f32 %v343, %v1446
      %v1448 = vpop.f32.mrb[0].mxu0
      %1449 = vmatprep.mubr.bf16.mxu0 %v814
      %1450 = vmatmul.mubr.bf16.gmra.mrb[0].mxu0 %v813
      %v1451 = vpop.f32.mrb[0].mxu0
      %v1452 = vadd.f32 %v343, %v1451
      %v1453 = vpop.f32.mrb[0].mxu0
      %v1454 = vpop.f32.mrb[0].mxu0
      %v1455 = vadd.f32 %v343, %v1454
      %v1456 = vpop.f32.mrb[0].mxu0
      %1457 = vmatprep.mubr.bf16.mxu0 %v816
      %1458 = vmatmul.mubr.bf16.gmra.mrb[0].mxu0 %v815
      %v1459 = vpop.f32.mrb[0].mxu0
      %v1460 = vadd.f32 %v343, %v1459
      %v1461 = vpop.f32.mrb[0].mxu0
      %v1462 = vpop.f32.mrb[0].mxu0
      %v1463 = vadd.f32 %v343, %v1462
      %v1464 = vpop.f32.mrb[0].mxu0
      %1465 = vmatprep.mubr.bf16.mxu0 %v818
      %1466 = vmatmul.mubr.bf16.gmra.mrb[0].mxu0 %v817
      %v1467 = vpop.f32.mrb[0].mxu0
      %v1468 = vadd.f32 %v343, %v1467
      %v1469 = vpop.f32.mrb[0].mxu0
      %v1470 = vpop.f32.mrb[0].mxu0
      %v1471 = vadd.f32 %v343, %v1470
      %v1472 = vpop.f32.mrb[0].mxu0
      %1473 = vmatprep.mubr.bf16.mxu0 %v820
      %1474 = vmatmul.mubr.bf16.gmra.mrb[0].mxu0 %v819
      %v1475 = vpop.f32.mrb[0].mxu0
      %v1476 = vadd.f32 %v343, %v1475
      %v1477 = vpop.f32.mrb[0].mxu0
      %v1478 = vpop.f32.mrb[0].mxu0
      %v1479 = vadd.f32 %v343, %v1478
      %v1480 = vpop.f32.mrb[0].mxu0
      %1481 = vmatprep.mubr.bf16.mxu0 %v822
      %1482 = vmatmul.mubr.bf16.gmra.mrb[0].mxu0 %v821
      %v1483 = vpop.f32.mrb[0].mxu0
      %v1484 = vadd.f32 %v343, %v1483
      %v1485 = vpop.f32.mrb[0].mxu0
      %v1486 = vpop.f32.mrb[0].mxu0
      %v1487 = vadd.f32 %v343, %v1486
      %v1488 = vpop.f32.mrb[0].mxu0
      %1489 = vmatprep.mubr.bf16.mxu0 %v824
      %1490 = vmatmul.mubr.bf16.gmra.mrb[0].mxu0 %v823
      %v1491 = vpop.f32.mrb[0].mxu0
      %v1492 = vadd.f32 %v343, %v1491
      %v1493 = vpop.f32.mrb[0].mxu0
      %v1494 = vpop.f32.mrb[0].mxu0
      %v1495 = vadd.f32 %v343, %v1494
      %v1496 = vpop.f32.mrb[0].mxu0
      %1497 = vmatprep.mubr.bf16.mxu0 %v826
      %1498 = vmatmul.mubr.bf16.gmra.mrb[0].mxu0 %v825
      %v1499 = vpop.f32.mrb[0].mxu0
      %v1500 = vadd.f32 %v343, %v1499
      %v1501 = vpop.f32.mrb[0].mxu0
      %v1502 = vpop.f32.mrb[0].mxu0
      %v1503 = vadd.f32 %v343, %v1502
      %v1504 = vpop.f32.mrb[0].mxu0
      %1505 = vmatprep.mubr.bf16.mxu0 %v828
      %1506 = vmatmul.mubr.bf16.gmra.mrb[0].mxu0 %v827
      %v1507 = vpop.f32.mrb[0].mxu0
      %v1508 = vadd.f32 %v343, %v1507
      %v1509 = vpop.f32.mrb[0].mxu0
      %v1510 = vpop.f32.mrb[0].mxu0
      %v1511 = vadd.f32 %v343, %v1510
      %v1512 = vpop.f32.mrb[0].mxu0
      %1513 = vmatprep.mubr.bf16.mxu0 %v830
      %1514 = vmatmul.mubr.bf16.gmra.mrb[0].mxu0 %v829
      %v1515 = vpop.f32.mrb[0].mxu0
      %v1516 = vadd.f32 %v343, %v1515
      %v1517 = vpop.f32.mrb[0].mxu0
      %v1518 = vpop.f32.mrb[0].mxu0
      %v1519 = vadd.f32 %v343, %v1518
      %v1520 = vpop.f32.mrb[0].mxu0
      %1521 = vmatprep.mubr.bf16.mxu0 %v832
      %1522 = vmatmul.mubr.bf16.gmra.mrb[0].mxu0 %v831
      %v1523 = vpop.f32.mrb[0].mxu0
      %v1524 = vadd.f32 %v343, %v1523
      %v1525 = vpop.f32.mrb[0].mxu0
      %v1526 = vpop.f32.mrb[0].mxu0
      %v1527 = vadd.f32 %v343, %v1526
      %v1528 = vpop.f32.mrb[0].mxu0
      %1529 = vmatprep.mubr.bf16.mxu0 %v834
      %1530 = vmatmul.mubr.bf16.gmra.mrb[0].mxu0 %v833
      %v1531 = vpop.f32.mrb[0].mxu0
      %v1532 = vadd.f32 %v343, %v1531
      %v1533 = vpop.f32.mrb[0].mxu0
      %v1534 = vpop.f32.mrb[0].mxu0
      %v1535 = vadd.f32 %v343, %v1534
      %v1536 = vpop.f32.mrb[0].mxu0
      %1537 = vmatprep.mubr.bf16.mxu0 %v836
      %1538 = vmatmul.mubr.bf16.gmra.mrb[0].mxu0 %v835
      %v1539 = vpop.f32.mrb[0].mxu0
      %v1540 = vadd.f32 %v343, %v1539
      %v1541 = vpop.f32.mrb[0].mxu0
      %v1542 = vpop.f32.mrb[0].mxu0
      %v1543 = vadd.f32 %v343, %v1542
      %v1544 = vpop.f32.mrb[0].mxu0
      %1545 = vmatprep.mubr.bf16.mxu0 %v838
      %1546 = vmatmul.mubr.bf16.gmra.mrb[0].mxu0 %v837
      %v1547 = vpop.f32.mrb[0].mxu0
      %v1548 = vadd.f32 %v343, %v1547
      %v1549 = vpop.f32.mrb[0].mxu0
      %v1550 = vpop.f32.mrb[0].mxu0
      %v1551 = vadd.f32 %v343, %v1550
      %v1552 = vpop.f32.mrb[0].mxu0
      %1553 = vmatprep.mubr.bf16.mxu0 %v840
      %1554 = vmatmul.mubr.bf16.gmra.mrb[0].mxu0 %v839
      %v1555 = vpop.f32.mrb[0].mxu0
      %v1556 = vadd.f32 %v343, %v1555
      %v1557 = vpop.f32.mrb[0].mxu0
      %v1558 = vpop.f32.mrb[0].mxu0
      %v1559 = vadd.f32 %v343, %v1558
      %v1560 = vpop.f32.mrb[0].mxu0
      %1561 = vmatprep.mubr.bf16.mxu0 %v842
      %1562 = vmatmul.mubr.bf16.gmra.mrb[0].mxu0 %v841
      %v1563 = vpop.f32.mrb[0].mxu0
      %v1564 = vadd.f32 %v343, %v1563
      %v1565 = vpop.f32.mrb[0].mxu0
      %v1566 = vpop.f32.mrb[0].mxu0
      %v1567 = vadd.f32 %v343, %v1566
      %v1568 = vpop.f32.mrb[0].mxu0
      %1569 = vmatprep.mubr.bf16.mxu0 %v844
      %1570 = vmatmul.mubr.bf16.gmra.mrb[0].mxu0 %v843
      %v1571 = vpop.f32.mrb[0].mxu0
      %v1572 = vadd.f32 %v343, %v1571
      %v1573 = vpop.f32.mrb[0].mxu0
      %v1574 = vpop.f32.mrb[0].mxu0
      %v1575 = vadd.f32 %v343, %v1574
      %v1576 = vpop.f32.mrb[0].mxu0
      %1577 = vmatprep.mubr.bf16.mxu0 %v846
      %1578 = vmatmul.mubr.bf16.gmra.mrb[0].mxu0 %v845
      %v1579 = vpop.f32.mrb[0].mxu0
      %v1580 = vadd.f32 %v343, %v1579
      %v1581 = vpop.f32.mrb[0].mxu0
      %v1582 = vpop.f32.mrb[0].mxu0
      %v1583 = vadd.f32 %v343, %v1582
      %v1584 = vpop.f32.mrb[0].mxu0
      %1585 = vmatprep.mubr.bf16.mxu0 %v848
      %1586 = vmatmul.mubr.bf16.gmra.mrb[0].mxu0 %v847
      %v1587 = vpop.f32.mrb[0].mxu0
      %v1588 = vadd.f32 %v343, %v1587
      %v1589 = vpop.f32.mrb[0].mxu0
      %v1590 = vpop.f32.mrb[0].mxu0
      %v1591 = vadd.f32 %v343, %v1590
      %v1592 = vpop.f32.mrb[0].mxu0
      %1593 = vmatprep.mubr.bf16.mxu0 %v850
      %1594 = vmatmul.mubr.bf16.gmra.mrb[0].mxu0 %v849
      %v1595 = vpop.f32.mrb[0].mxu0
      %v1596 = vadd.f32 %v343, %v1595
      %v1597 = vpop.f32.mrb[0].mxu0
      %v1598 = vpop.f32.mrb[0].mxu0
      %v1599 = vadd.f32 %v343, %v1598
      %v1600 = vpop.f32.mrb[0].mxu0
      %1601 = vmatprep.mubr.bf16.mxu0 %v852
      %1602 = vmatmul.mubr.bf16.gmra.mrb[0].mxu0 %v851
      %v1603 = vpop.f32.mrb[0].mxu0
      %v1604 = vadd.f32 %v343, %v1603
      %v1605 = vpop.f32.mrb[0].mxu0
      %v1606 = vpop.f32.mrb[0].mxu0
      %v1607 = vadd.f32 %v343, %v1606
      %v1608 = vpop.f32.mrb[0].mxu0
      %1609 = vmatprep.mubr.bf16.mxu0 %v854
      %1610 = vmatmul.mubr.bf16.gmra.mrb[0].mxu0 %v853
      %v1611 = vpop.f32.mrb[0].mxu0
      %v1612 = vadd.f32 %v343, %v1611
      %v1613 = vpop.f32.mrb[0].mxu0
      %v1614 = vpop.f32.mrb[0].mxu0
      %v1615 = vadd.f32 %v343, %v1614
      %v1616 = vpop.f32.mrb[0].mxu0
      %1617 = vmatprep.mubr.bf16.mxu0 %v856
      %1618 = vmatmul.mubr.bf16.gmra.mrb[0].mxu0 %v855
      %v1619 = vpop.f32.mrb[0].mxu0
      %v1620 = vadd.f32 %v343, %v1619
      %v1621 = vpop.f32.mrb[0].mxu0
      %v1622 = vpop.f32.mrb[0].mxu0
      %v1623 = vadd.f32 %v343, %v1622
      %v1624 = vpop.f32.mrb[0].mxu0
      %1625 = vdwg.mxu0
      %v1626 = vmax.f32 %v1116, 0.0
      %v1627 = vmax.f32 %v1119, 0.0
      %v1628 = vmax.f32 %v1124, 0.0
      %v1629 = vmax.f32 %v1127, 0.0
      %v1630 = vmax.f32 %v1132, 0.0
      %v1631 = vmax.f32 %v1135, 0.0
      %v1632 = vmax.f32 %v1140, 0.0
      %v1633 = vmax.f32 %v1143, 0.0
      %v1634 = vmax.f32 %v1148, 0.0
      %v1635 = vmax.f32 %v1151, 0.0
      %v1636 = vmax.f32 %v1156, 0.0
      %v1637 = vmax.f32 %v1159, 0.0
      %v1638 = vmax.f32 %v1164, 0.0
      %v1639 = vmax.f32 %v1167, 0.0
      %v1640 = vmax.f32 %v1172, 0.0
      %v1641 = vmax.f32 %v1175, 0.0
      %v1642 = vmax.f32 %v1180, 0.0
      %v1643 = vmax.f32 %v1183, 0.0
      %v1644 = vmax.f32 %v1188, 0.0
      %v1645 = vmax.f32 %v1191, 0.0
      %v1646 = vmax.f32 %v1196, 0.0
      %v1647 = vmax.f32 %v1199, 0.0
      %v1648 = vmax.f32 %v1204, 0.0
      %v1649 = vmax.f32 %v1207, 0.0
      %v1650 = vmax.f32 %v1212, 0.0
      %v1651 = vmax.f32 %v1215, 0.0
      %v1652 = vmax.f32 %v1220, 0.0
      %v1653 = vmax.f32 %v1223, 0.0
      %v1654 = vmax.f32 %v1228, 0.0
      %v1655 = vmax.f32 %v1231, 0.0
      %v1656 = vmax.f32 %v1236, 0.0
      %v1657 = vmax.f32 %v1239, 0.0
      %v1658 = vmax.f32 %v1244, 0.0
      %v1659 = vmax.f32 %v1247, 0.0
      %v1660 = vmax.f32 %v1252, 0.0
      %v1661 = vmax.f32 %v1255, 0.0
      %v1662 = vmax.f32 %v1260, 0.0
      %v1663 = vmax.f32 %v1263, 0.0
      %v1664 = vmax.f32 %v1268, 0.0
      %v1665 = vmax.f32 %v1271, 0.0
      %v1666 = vmax.f32 %v1276, 0.0
      %v1667 = vmax.f32 %v1279, 0.0
      %v1668 = vmax.f32 %v1284, 0.0
      %v1669 = vmax.f32 %v1287, 0.0
      %v1670 = vmax.f32 %v1292, 0.0
      %v1671 = vmax.f32 %v1295, 0.0
      %v1672 = vmax.f32 %v1300, 0.0
      %v1673 = vmax.f32 %v1303, 0.0
      %v1674 = vmax.f32 %v1308, 0.0
      %v1675 = vmax.f32 %v1311, 0.0
      %v1676 = vmax.f32 %v1316, 0.0
      %v1677 = vmax.f32 %v1319, 0.0
      %v1678 = vmax.f32 %v1324, 0.0
      %v1679 = vmax.f32 %v1327, 0.0
      %v1680 = vmax.f32 %v1332, 0.0
      %v1681 = vmax.f32 %v1335, 0.0
      %v1682 = vmax.f32 %v1340, 0.0
      %v1683 = vmax.f32 %v1343, 0.0
      %v1684 = vmax.f32 %v1348, 0.0
      %v1685 = vmax.f32 %v1351, 0.0
      %v1686 = vmax.f32 %v1356, 0.0
      %v1687 = vmax.f32 %v1359, 0.0
      %v1688 = vmax.f32 %v1364, 0.0
      %v1689 = vmax.f32 %v1367, 0.0
      %v1690 = vmax.f32 %v1372, 0.0
      %v1691 = vmax.f32 %v1375, 0.0
      %v1692 = vmax.f32 %v1380, 0.0
      %v1693 = vmax.f32 %v1383, 0.0
      %v1694 = vmax.f32 %v1388, 0.0
      %v1695 = vmax.f32 %v1391, 0.0
      %v1696 = vmax.f32 %v1396, 0.0
      %v1697 = vmax.f32 %v1399, 0.0
      %v1698 = vmax.f32 %v1404, 0.0
      %v1699 = vmax.f32 %v1407, 0.0
      %v1700 = vmax.f32 %v1412, 0.0
      %v1701 = vmax.f32 %v1415, 0.0
      %v1702 = vmax.f32 %v1420, 0.0
      %v1703 = vmax.f32 %v1423, 0.0
      %v1704 = vmax.f32 %v1428, 0.0
      %v1705 = vmax.f32 %v1431, 0.0
      %v1706 = vmax.f32 %v1436, 0.0
      %v1707 = vmax.f32 %v1439, 0.0
      %v1708 = vmax.f32 %v1444, 0.0
      %v1709 = vmax.f32 %v1447, 0.0
      %v1710 = vmax.f32 %v1452, 0.0
      %v1711 = vmax.f32 %v1455, 0.0
      %v1712 = vmax.f32 %v1460, 0.0
      %v1713 = vmax.f32 %v1463, 0.0
      %v1714 = vmax.f32 %v1468, 0.0
      %v1715 = vmax.f32 %v1471, 0.0
      %v1716 = vmax.f32 %v1476, 0.0
      %v1717 = vmax.f32 %v1479, 0.0
      %v1718 = vmax.f32 %v1484, 0.0
      %v1719 = vmax.f32 %v1487, 0.0
      %v1720 = vmax.f32 %v1492, 0.0
      %v1721 = vmax.f32 %v1495, 0.0
      %v1722 = vmax.f32 %v1500, 0.0
      %v1723 = vmax.f32 %v1503, 0.0
      %v1724 = vmax.f32 %v1508, 0.0
      %v1725 = vmax.f32 %v1511, 0.0
      %v1726 = vmax.f32 %v1516, 0.0
      %v1727 = vmax.f32 %v1519, 0.0
      %v1728 = vmax.f32 %v1524, 0.0
      %v1729 = vmax.f32 %v1527, 0.0
      %v1730 = vmax.f32 %v1532, 0.0
      %v1731 = vmax.f32 %v1535, 0.0
      %v1732 = vmax.f32 %v1540, 0.0
      %v1733 = vmax.f32 %v1543, 0.0
      %v1734 = vmax.f32 %v1548, 0.0
      %v1735 = vmax.f32 %v1551, 0.0
      %v1736 = vmax.f32 %v1556, 0.0
      %v1737 = vmax.f32 %v1559, 0.0
      %v1738 = vmax.f32 %v1564, 0.0
      %v1739 = vmax.f32 %v1567, 0.0
      %v1740 = vmax.f32 %v1572, 0.0
      %v1741 = vmax.f32 %v1575, 0.0
      %v1742 = vmax.f32 %v1580, 0.0
      %v1743 = vmax.f32 %v1583, 0.0
      %v1744 = vmax.f32 %v1588, 0.0
      %v1745 = vmax.f32 %v1591, 0.0
      %v1746 = vmax.f32 %v1596, 0.0
      %v1747 = vmax.f32 %v1599, 0.0
      %v1748 = vmax.f32 %v1604, 0.0
      %v1749 = vmax.f32 %v1607, 0.0
      %v1750 = vmax.f32 %v1612, 0.0
      %v1751 = vmax.f32 %v1615, 0.0
      %v1752 = vmax.f32 %v1620, 0.0
      %v1753 = vmax.f32 %v1623, 0.0
      %v1754 = vpack.c.bf16 %v1627, %v1626
      %v1755 = vpack.c.bf16 %v1629, %v1628
      %v1756 = vpack.c.bf16 %v1631, %v1630
      %v1757 = vpack.c.bf16 %v1633, %v1632
      %v1758 = vpack.c.bf16 %v1635, %v1634
      %v1759 = vpack.c.bf16 %v1637, %v1636
      %v1760 = vpack.c.bf16 %v1639, %v1638
      %v1761 = vpack.c.bf16 %v1641, %v1640
      %v1762 = vpack.c.bf16 %v1643, %v1642
      %v1763 = vpack.c.bf16 %v1645, %v1644
      %v1764 = vpack.c.bf16 %v1647, %v1646
      %v1765 = vpack.c.bf16 %v1649, %v1648
      %v1766 = vpack.c.bf16 %v1651, %v1650
      %v1767 = vpack.c.bf16 %v1653, %v1652
      %v1768 = vpack.c.bf16 %v1655, %v1654
      %v1769 = vpack.c.bf16 %v1657, %v1656
      %v1770 = vpack.c.bf16 %v1659, %v1658
      %v1771 = vpack.c.bf16 %v1661, %v1660
      %v1772 = vpack.c.bf16 %v1663, %v1662
      %v1773 = vpack.c.bf16 %v1665, %v1664
      %v1774 = vpack.c.bf16 %v1667, %v1666
      %v1775 = vpack.c.bf16 %v1669, %v1668
      %v1776 = vpack.c.bf16 %v1671, %v1670
      %v1777 = vpack.c.bf16 %v1673, %v1672
      %v1778 = vpack.c.bf16 %v1675, %v1674
      %v1779 = vpack.c.bf16 %v1677, %v1676
      %v1780 = vpack.c.bf16 %v1679, %v1678
      %v1781 = vpack.c.bf16 %v1681, %v1680
      %v1782 = vpack.c.bf16 %v1683, %v1682
      %v1783 = vpack.c.bf16 %v1685, %v1684
      %v1784 = vpack.c.bf16 %v1687, %v1686
      %v1785 = vpack.c.bf16 %v1689, %v1688
      %v1786 = vpack.c.bf16 %v1691, %v1690
      %v1787 = vpack.c.bf16 %v1693, %v1692
      %v1788 = vpack.c.bf16 %v1695, %v1694
      %v1789 = vpack.c.bf16 %v1697, %v1696
      %v1790 = vpack.c.bf16 %v1699, %v1698
      %v1791 = vpack.c.bf16 %v1701, %v1700
      %v1792 = vpack.c.bf16 %v1703, %v1702
      %v1793 = vpack.c.bf16 %v1705, %v1704
      %v1794 = vpack.c.bf16 %v1707, %v1706
      %v1795 = vpack.c.bf16 %v1709, %v1708
      %v1796 = vpack.c.bf16 %v1711, %v1710
      %v1797 = vpack.c.bf16 %v1713, %v1712
      %v1798 = vpack.c.bf16 %v1715, %v1714
      %v1799 = vpack.c.bf16 %v1717, %v1716
      %v1800 = vpack.c.bf16 %v1719, %v1718
      %v1801 = vpack.c.bf16 %v1721, %v1720
      %v1802 = vpack.c.bf16 %v1723, %v1722
      %v1803 = vpack.c.bf16 %v1725, %v1724
      %v1804 = vpack.c.bf16 %v1727, %v1726
      %v1805 = vpack.c.bf16 %v1729, %v1728
      %v1806 = vpack.c.bf16 %v1731, %v1730
      %v1807 = vpack.c.bf16 %v1733, %v1732
      %v1808 = vpack.c.bf16 %v1735, %v1734
      %v1809 = vpack.c.bf16 %v1737, %v1736
      %v1810 = vpack.c.bf16 %v1739, %v1738
      %v1811 = vpack.c.bf16 %v1741, %v1740
      %v1812 = vpack.c.bf16 %v1743, %v1742
      %v1813 = vpack.c.bf16 %v1745, %v1744
      %v1814 = vpack.c.bf16 %v1747, %v1746
      %v1815 = vpack.c.bf16 %v1749, %v1748
      %v1816 = vpack.c.bf16 %v1751, %v1750
      %v1817 = vpack.c.bf16 %v1753, %v1752
      %v1882 = vunpack.c.l.b16 %v1754
      %v1883 = vunpack.c.h.b16 %v1754
      %v1884 = vunpack.c.l.b16 %v1755
      %v1885 = vunpack.c.h.b16 %v1755
      %v1886 = vunpack.c.l.b16 %v1756
      %v1887 = vunpack.c.h.b16 %v1756
      %v1888 = vunpack.c.l.b16 %v1757
      %v1889 = vunpack.c.h.b16 %v1757
      %v1890 = vunpack.c.l.b16 %v1758
      %v1891 = vunpack.c.h.b16 %v1758
      %v1892 = vunpack.c.l.b16 %v1759
      %v1893 = vunpack.c.h.b16 %v1759
      %v1894 = vunpack.c.l.b16 %v1760
      %v1895 = vunpack.c.h.b16 %v1760
      %v1896 = vunpack.c.l.b16 %v1761
      %v1897 = vunpack.c.h.b16 %v1761
      %v1898 = vunpack.c.l.b16 %v1762
      %v1899 = vunpack.c.h.b16 %v1762
      %v1900 = vunpack.c.l.b16 %v1763
      %v1901 = vunpack.c.h.b16 %v1763
      %v1902 = vunpack.c.l.b16 %v1764
      %v1903 = vunpack.c.h.b16 %v1764
      %v1904 = vunpack.c.l.b16 %v1765
      %v1905 = vunpack.c.h.b16 %v1765
      %v1906 = vunpack.c.l.b16 %v1766
      %v1907 = vunpack.c.h.b16 %v1766
      %v1908 = vunpack.c.l.b16 %v1767
      %v1909 = vunpack.c.h.b16 %v1767
      %v1910 = vunpack.c.l.b16 %v1768
      %v1911 = vunpack.c.h.b16 %v1768
      %v1912 = vunpack.c.l.b16 %v1769
      %v1913 = vunpack.c.h.b16 %v1769
      %v1914 = vunpack.c.l.b16 %v1770
      %v1915 = vunpack.c.h.b16 %v1770
      %v1916 = vunpack.c.l.b16 %v1771
      %v1917 = vunpack.c.h.b16 %v1771
      %v1918 = vunpack.c.l.b16 %v1772
      %v1919 = vunpack.c.h.b16 %v1772
      %v1920 = vunpack.c.l.b16 %v1773
      %v1921 = vunpack.c.h.b16 %v1773
      %v1922 = vunpack.c.l.b16 %v1774
      %v1923 = vunpack.c.h.b16 %v1774
      %v1924 = vunpack.c.l.b16 %v1775
      %v1925 = vunpack.c.h.b16 %v1775
      %v1926 = vunpack.c.l.b16 %v1776
      %v1927 = vunpack.c.h.b16 %v1776
      %v1928 = vunpack.c.l.b16 %v1777
      %v1929 = vunpack.c.h.b16 %v1777
      %v1930 = vunpack.c.l.b16 %v1778
      %v1931 = vunpack.c.h.b16 %v1778
      %v1932 = vunpack.c.l.b16 %v1779
      %v1933 = vunpack.c.h.b16 %v1779
      %v1934 = vunpack.c.l.b16 %v1780
      %v1935 = vunpack.c.h.b16 %v1780
      %v1936 = vunpack.c.l.b16 %v1781
      %v1937 = vunpack.c.h.b16 %v1781
      %v1938 = vunpack.c.l.b16 %v1782
      %v1939 = vunpack.c.h.b16 %v1782
      %v1940 = vunpack.c.l.b16 %v1783
      %v1941 = vunpack.c.h.b16 %v1783
      %v1942 = vunpack.c.l.b16 %v1784
      %v1943 = vunpack.c.h.b16 %v1784
      %v1944 = vunpack.c.l.b16 %v1785
      %v1945 = vunpack.c.h.b16 %v1785
      %v1946 = vunpack.c.l.b16 %v1786
      %v1947 = vunpack.c.h.b16 %v1786
      %v1948 = vunpack.c.l.b16 %v1787
      %v1949 = vunpack.c.h.b16 %v1787
      %v1950 = vunpack.c.l.b16 %v1788
      %v1951 = vunpack.c.h.b16 %v1788
      %v1952 = vunpack.c.l.b16 %v1789
      %v1953 = vunpack.c.h.b16 %v1789
      %v1954 = vunpack.c.l.b16 %v1790
      %v1955 = vunpack.c.h.b16 %v1790
      %v1956 = vunpack.c.l.b16 %v1791
      %v1957 = vunpack.c.h.b16 %v1791
      %v1958 = vunpack.c.l.b16 %v1792
      %v1959 = vunpack.c.h.b16 %v1792
      %v1960 = vunpack.c.l.b16 %v1793
      %v1961 = vunpack.c.h.b16 %v1793
      %v1962 = vunpack.c.l.b16 %v1794
      %v1963 = vunpack.c.h.b16 %v1794
      %v1964 = vunpack.c.l.b16 %v1795
      %v1965 = vunpack.c.h.b16 %v1795
      %v1966 = vunpack.c.l.b16 %v1796
      %v1967 = vunpack.c.h.b16 %v1796
      %v1968 = vunpack.c.l.b16 %v1797
      %v1969 = vunpack.c.h.b16 %v1797
      %v1970 = vunpack.c.l.b16 %v1798
      %v1971 = vunpack.c.h.b16 %v1798
      %v1972 = vunpack.c.l.b16 %v1799
      %v1973 = vunpack.c.h.b16 %v1799
      %v1974 = vunpack.c.l.b16 %v1800
      %v1975 = vunpack.c.h.b16 %v1800
      %v1976 = vunpack.c.l.b16 %v1801
      %v1977 = vunpack.c.h.b16 %v1801
      %v1978 = vunpack.c.l.b16 %v1802
      %v1979 = vunpack.c.h.b16 %v1802
      %v1980 = vunpack.c.l.b16 %v1803
      %v1981 = vunpack.c.h.b16 %v1803
      %v1982 = vunpack.c.l.b16 %v1804
      %v1983 = vunpack.c.h.b16 %v1804
      %v1984 = vunpack.c.l.b16 %v1805
      %v1985 = vunpack.c.h.b16 %v1805
      %v1986 = vunpack.c.l.b16 %v1806
      %v1987 = vunpack.c.h.b16 %v1806
      %v1988 = vunpack.c.l.b16 %v1807
      %v1989 = vunpack.c.h.b16 %v1807
      %v1990 = vunpack.c.l.b16 %v1808
      %v1991 = vunpack.c.h.b16 %v1808
      %v1992 = vunpack.c.l.b16 %v1809
      %v1993 = vunpack.c.h.b16 %v1809
      %v1994 = vunpack.c.l.b16 %v1810
      %v1995 = vunpack.c.h.b16 %v1810
      %v1996 = vunpack.c.l.b16 %v1811
      %v1997 = vunpack.c.h.b16 %v1811
      %v1998 = vunpack.c.l.b16 %v1812
      %v1999 = vunpack.c.h.b16 %v1812
      %v2000 = vunpack.c.l.b16 %v1813
      %v2001 = vunpack.c.h.b16 %v1813
      %v2002 = vunpack.c.l.b16 %v1814
      %v2003 = vunpack.c.h.b16 %v1814
      %v2004 = vunpack.c.l.b16 %v1815
      %v2005 = vunpack.c.h.b16 %v1815
      %v2006 = vunpack.c.l.b16 %v1816
      %v2007 = vunpack.c.h.b16 %v1816
      %v2008 = vunpack.c.l.b16 %v1817
      %v2009 = vunpack.c.h.b16 %v1817
      %v2010 = vpack.c.b16 %v1882, %v1882
      %v2011 = vpack.c.b16 %v1883, %v1883
      %v2012 = vpack.c.b16 %v1884, %v1884
      %v2013 = vpack.c.b16 %v1885, %v1885
      %v2014 = vpack.c.b16 %v1886, %v1886
      %v2015 = vpack.c.b16 %v1887, %v1887
      %v2016 = vpack.c.b16 %v1888, %v1888
      %v2017 = vpack.c.b16 %v1889, %v1889
      %v2018 = vpack.c.b16 %v1890, %v1890
      %v2019 = vpack.c.b16 %v1891, %v1891
      %v2020 = vpack.c.b16 %v1892, %v1892
      %v2021 = vpack.c.b16 %v1893, %v1893
      %v2022 = vpack.c.b16 %v1894, %v1894
      %v2023 = vpack.c.b16 %v1895, %v1895
      %v2024 = vpack.c.b16 %v1896, %v1896
      %v2025 = vpack.c.b16 %v1897, %v1897
      %v2026 = vpack.c.b16 %v1898, %v1898
      %v2027 = vpack.c.b16 %v1899, %v1899
      %v2028 = vpack.c.b16 %v1900, %v1900
      %v2029 = vpack.c.b16 %v1901, %v1901
      %v2030 = vpack.c.b16 %v1902, %v1902
      %v2031 = vpack.c.b16 %v1903, %v1903
      %v2032 = vpack.c.b16 %v1904, %v1904
      %v2033 = vpack.c.b16 %v1905, %v1905
      %v2034 = vpack.c.b16 %v1906, %v1906
      %v2035 = vpack.c.b16 %v1907, %v1907
      %v2036 = vpack.c.b16 %v1908, %v1908
      %v2037 = vpack.c.b16 %v1909, %v1909
      %v2038 = vpack.c.b16 %v1910, %v1910
      %v2039 = vpack.c.b16 %v1911, %v1911
      %v2040 = vpack.c.b16 %v1912, %v1912
      %v2041 = vpack.c.b16 %v1913, %v1913
      %v2042 = vpack.c.b16 %v1914, %v1914
      %v2043 = vpack.c.b16 %v1915, %v1915
      %v2044 = vpack.c.b16 %v1916, %v1916
      %v2045 = vpack.c.b16 %v1917, %v1917
      %v2046 = vpack.c.b16 %v1918, %v1918
      %v2047 = vpack.c.b16 %v1919, %v1919
      %v2048 = vpack.c.b16 %v1920, %v1920
      %v2049 = vpack.c.b16 %v1921, %v1921
      %v2050 = vpack.c.b16 %v1922, %v1922
      %v2051 = vpack.c.b16 %v1923, %v1923
      %v2052 = vpack.c.b16 %v1924, %v1924
      %v2053 = vpack.c.b16 %v1925, %v1925
      %v2054 = vpack.c.b16 %v1926, %v1926
      %v2055 = vpack.c.b16 %v1927, %v1927
      %v2056 = vpack.c.b16 %v1928, %v1928
      %v2057 = vpack.c.b16 %v1929, %v1929
      %v2058 = vpack.c.b16 %v1930, %v1930
      %v2059 = vpack.c.b16 %v1931, %v1931
      %v2060 = vpack.c.b16 %v1932, %v1932
      %v2061 = vpack.c.b16 %v1933, %v1933
      %v2062 = vpack.c.b16 %v1934, %v1934
      %v2063 = vpack.c.b16 %v1935, %v1935
      %v2064 = vpack.c.b16 %v1936, %v1936
      %v2065 = vpack.c.b16 %v1937, %v1937
      %v2066 = vpack.c.b16 %v1938, %v1938
      %v2067 = vpack.c.b16 %v1939, %v1939
      %v2068 = vpack.c.b16 %v1940, %v1940
      %v2069 = vpack.c.b16 %v1941, %v1941
      %v2070 = vpack.c.b16 %v1942, %v1942
      %v2071 = vpack.c.b16 %v1943, %v1943
      %v2072 = vpack.c.b16 %v1944, %v1944
      %v2073 = vpack.c.b16 %v1945, %v1945
      %v2074 = vpack.c.b16 %v1946, %v1946
      %v2075 = vpack.c.b16 %v1947, %v1947
      %v2076 = vpack.c.b16 %v1948, %v1948
      %v2077 = vpack.c.b16 %v1949, %v1949
      %v2078 = vpack.c.b16 %v1950, %v1950
      %v2079 = vpack.c.b16 %v1951, %v1951
      %v2080 = vpack.c.b16 %v1952, %v1952
      %v2081 = vpack.c.b16 %v1953, %v1953
      %v2082 = vpack.c.b16 %v1954, %v1954
      %v2083 = vpack.c.b16 %v1955, %v1955
      %v2084 = vpack.c.b16 %v1956, %v1956
      %v2085 = vpack.c.b16 %v1957, %v1957
      %v2086 = vpack.c.b16 %v1958, %v1958
      %v2087 = vpack.c.b16 %v1959, %v1959
      %v2088 = vpack.c.b16 %v1960, %v1960
      %v2089 = vpack.c.b16 %v1961, %v1961
      %v2090 = vpack.c.b16 %v1962, %v1962
      %v2091 = vpack.c.b16 %v1963, %v1963
      %v2092 = vpack.c.b16 %v1964, %v1964
      %v2093 = vpack.c.b16 %v1965, %v1965
      %v2094 = vpack.c.b16 %v1966, %v1966
      %v2095 = vpack.c.b16 %v1967, %v1967
      %v2096 = vpack.c.b16 %v1968, %v1968
      %v2097 = vpack.c.b16 %v1969, %v1969
      %v2098 = vpack.c.b16 %v1970, %v1970
      %v2099 = vpack.c.b16 %v1971, %v1971
      %v2100 = vpack.c.b16 %v1972, %v1972
      %v2101 = vpack.c.b16 %v1973, %v1973
      %v2102 = vpack.c.b16 %v1974, %v1974
      %v2103 = vpack.c.b16 %v1975, %v1975
      %v2104 = vpack.c.b16 %v1976, %v1976
      %v2105 = vpack.c.b16 %v1977, %v1977
      %v2106 = vpack.c.b16 %v1978, %v1978
      %v2107 = vpack.c.b16 %v1979, %v1979
      %v2108 = vpack.c.b16 %v1980, %v1980
      %v2109 = vpack.c.b16 %v1981, %v1981
      %v2110 = vpack.c.b16 %v1982, %v1982
      %v2111 = vpack.c.b16 %v1983, %v1983
      %v2112 = vpack.c.b16 %v1984, %v1984
      %v2113 = vpack.c.b16 %v1985, %v1985
      %v2114 = vpack.c.b16 %v1986, %v1986
      %v2115 = vpack.c.b16 %v1987, %v1987
      %v2116 = vpack.c.b16 %v1988, %v1988
      %v2117 = vpack.c.b16 %v1989, %v1989
      %v2118 = vpack.c.b16 %v1990, %v1990
      %v2119 = vpack.c.b16 %v1991, %v1991
      %v2120 = vpack.c.b16 %v1992, %v1992
      %v2121 = vpack.c.b16 %v1993, %v1993
      %v2122 = vpack.c.b16 %v1994, %v1994
      %v2123 = vpack.c.b16 %v1995, %v1995
      %v2124 = vpack.c.b16 %v1996, %v1996
      %v2125 = vpack.c.b16 %v1997, %v1997
      %v2126 = vpack.c.b16 %v1998, %v1998
      %v2127 = vpack.c.b16 %v1999, %v1999
      %v2128 = vpack.c.b16 %v2000, %v2000
      %v2129 = vpack.c.b16 %v2001, %v2001
      %v2130 = vpack.c.b16 %v2002, %v2002
      %v2131 = vpack.c.b16 %v2003, %v2003
      %v2132 = vpack.c.b16 %v2004, %v2004
      %v2133 = vpack.c.b16 %v2005, %v2005
      %v2134 = vpack.c.b16 %v2006, %v2006
      %v2135 = vpack.c.b16 %v2007, %v2007
      %v2136 = vpack.c.b16 %v2008, %v2008
      %v2137 = vpack.c.b16 %v2009, %v2009
      %2266 = vst [vmem:[%s175] sm:$0xf] %v2010
      %2267 = vst [vmem:[%s175 + $0x4] sm:$0xf] %v2011
      %2268 = vst [vmem:[%s175 + $0x8] sm:$0xf] %v2012
      %2269 = vst [vmem:[%s175 + $0xc] sm:$0xf] %v2013
      %2270 = vst [vmem:[%s175 + $0x10] sm:$0xf] %v2014
      %2271 = vst [vmem:[%s175 + $0x14] sm:$0xf] %v2015
      %2272 = vst [vmem:[%s175 + $0x18] sm:$0xf] %v2016
      %2273 = vst [vmem:[%s175 + $0x1c] sm:$0xf] %v2017
      %2274 = vst [vmem:[%s175 + $0x20] sm:$0xf] %v2018
      %2275 = vst [vmem:[%s175 + $0x24] sm:$0xf] %v2019
      %2276 = vst [vmem:[%s175 + $0x28] sm:$0xf] %v2020
      %2277 = vst [vmem:[%s175 + $0x2c] sm:$0xf] %v2021
      %2278 = vst [vmem:[%s175 + $0x30] sm:$0xf] %v2022
      %2279 = vst [vmem:[%s175 + $0x34] sm:$0xf] %v2023
      %2280 = vst [vmem:[%s175 + $0x38] sm:$0xf] %v2024
      %2281 = vst [vmem:[%s175 + $0x3c] sm:$0xf] %v2025
      %2282 = vst [vmem:[%s175 + $0x40] sm:$0xf] %v2026
      %2283 = vst [vmem:[%s175 + $0x44] sm:$0xf] %v2027
      %2284 = vst [vmem:[%s175 + $0x48] sm:$0xf] %v2028
      %2285 = vst [vmem:[%s175 + $0x4c] sm:$0xf] %v2029
      %2286 = vst [vmem:[%s175 + $0x50] sm:$0xf] %v2030
      %2287 = vst [vmem:[%s175 + $0x54] sm:$0xf] %v2031
      %2288 = vst [vmem:[%s175 + $0x58] sm:$0xf] %v2032
      %2289 = vst [vmem:[%s175 + $0x5c] sm:$0xf] %v2033
      %2290 = vst [vmem:[%s175 + $0x60] sm:$0xf] %v2034
      %2291 = vst [vmem:[%s175 + $0x64] sm:$0xf] %v2035
      %2292 = vst [vmem:[%s175 + $0x68] sm:$0xf] %v2036
      %2293 = vst [vmem:[%s175 + $0x6c] sm:$0xf] %v2037
      %2294 = vst [vmem:[%s175 + $0x70] sm:$0xf] %v2038
      %2295 = vst [vmem:[%s175 + $0x74] sm:$0xf] %v2039
      %2296 = vst [vmem:[%s175 + $0x78] sm:$0xf] %v2040
      %2297 = vst [vmem:[%s175 + $0x7c] sm:$0xf] %v2041
      %2298 = vst [vmem:[%s175 + $0x80] sm:$0xf] %v2042
      %2299 = vst [vmem:[%s175 + $0x84] sm:$0xf] %v2043
      %2300 = vst [vmem:[%s175 + $0x88] sm:$0xf] %v2044
      %2301 = vst [vmem:[%s175 + $0x8c] sm:$0xf] %v2045
      %2302 = vst [vmem:[%s175 + $0x90] sm:$0xf] %v2046
      %2303 = vst [vmem:[%s175 + $0x94] sm:$0xf] %v2047
      %2304 = vst [vmem:[%s175 + $0x98] sm:$0xf] %v2048
      %2305 = vst [vmem:[%s175 + $0x9c] sm:$0xf] %v2049
      %2306 = vst [vmem:[%s175 + $0xa0] sm:$0xf] %v2050
      %2307 = vst [vmem:[%s175 + $0xa4] sm:$0xf] %v2051
      %2308 = vst [vmem:[%s175 + $0xa8] sm:$0xf] %v2052
      %2309 = vst [vmem:[%s175 + $0xac] sm:$0xf] %v2053
      %2310 = vst [vmem:[%s175 + $0xb0] sm:$0xf] %v2054
      %2311 = vst [vmem:[%s175 + $0xb4] sm:$0xf] %v2055
      %2312 = vst [vmem:[%s175 + $0xb8] sm:$0xf] %v2056
      %2313 = vst [vmem:[%s175 + $0xbc] sm:$0xf] %v2057
      %2314 = vst [vmem:[%s175 + $0xc0] sm:$0xf] %v2058
      %2315 = vst [vmem:[%s175 + $0xc4] sm:$0xf] %v2059
      %2316 = vst [vmem:[%s175 + $0xc8] sm:$0xf] %v2060
      %2317 = vst [vmem:[%s175 + $0xcc] sm:$0xf] %v2061
      %2318 = vst [vmem:[%s175 + $0xd0] sm:$0xf] %v2062
      %2319 = vst [vmem:[%s175 + $0xd4] sm:$0xf] %v2063
      %2320 = vst [vmem:[%s175 + $0xd8] sm:$0xf] %v2064
      %2321 = vst [vmem:[%s175 + $0xdc] sm:$0xf] %v2065
      %2322 = vst [vmem:[%s175 + $0xe0] sm:$0xf] %v2066
      %2323 = vst [vmem:[%s175 + $0xe4] sm:$0xf] %v2067
      %2324 = vst [vmem:[%s175 + $0xe8] sm:$0xf] %v2068
      %2325 = vst [vmem:[%s175 + $0xec] sm:$0xf] %v2069
      %2326 = vst [vmem:[%s175 + $0xf0] sm:$0xf] %v2070
      %2327 = vst [vmem:[%s175 + $0xf4] sm:$0xf] %v2071
      %2328 = vst [vmem:[%s175 + $0xf8] sm:$0xf] %v2072
      %2329 = vst [vmem:[%s175 + $0xfc] sm:$0xf] %v2073
      %2330 = vst [vmem:[%s175 + $0x100] sm:$0xf] %v2074
      %2331 = vst [vmem:[%s175 + $0x104] sm:$0xf] %v2075
      %2332 = vst [vmem:[%s175 + $0x108] sm:$0xf] %v2076
      %2333 = vst [vmem:[%s175 + $0x10c] sm:$0xf] %v2077
      %2334 = vst [vmem:[%s175 + $0x110] sm:$0xf] %v2078
      %2335 = vst [vmem:[%s175 + $0x114] sm:$0xf] %v2079
      %2336 = vst [vmem:[%s175 + $0x118] sm:$0xf] %v2080
      %2337 = vst [vmem:[%s175 + $0x11c] sm:$0xf] %v2081
      %2338 = vst [vmem:[%s175 + $0x120] sm:$0xf] %v2082
      %2339 = vst [vmem:[%s175 + $0x124] sm:$0xf] %v2083
      %2340 = vst [vmem:[%s175 + $0x128] sm:$0xf] %v2084
      %2341 = vst [vmem:[%s175 + $0x12c] sm:$0xf] %v2085
      %2342 = vst [vmem:[%s175 + $0x130] sm:$0xf] %v2086
      %2343 = vst [vmem:[%s175 + $0x134] sm:$0xf] %v2087
      %2344 = vst [vmem:[%s175 + $0x138] sm:$0xf] %v2088
      %2345 = vst [vmem:[%s175 + $0x13c] sm:$0xf] %v2089
      %2346 = vst [vmem:[%s175 + $0x140] sm:$0xf] %v2090
      %2347 = vst [vmem:[%s175 + $0x144] sm:$0xf] %v2091
      %2348 = vst [vmem:[%s175 + $0x148] sm:$0xf] %v2092
      %2349 = vst [vmem:[%s175 + $0x14c] sm:$0xf] %v2093
      %2350 = vst [vmem:[%s175 + $0x150] sm:$0xf] %v2094
      %2351 = vst [vmem:[%s175 + $0x154] sm:$0xf] %v2095
      %2352 = vst [vmem:[%s175 + $0x158] sm:$0xf] %v2096
      %2353 = vst [vmem:[%s175 + $0x15c] sm:$0xf] %v2097
      %2354 = vst [vmem:[%s175 + $0x160] sm:$0xf] %v2098
      %2355 = vst [vmem:[%s175 + $0x164] sm:$0xf] %v2099
      %2356 = vst [vmem:[%s175 + $0x168] sm:$0xf] %v2100
      %2357 = vst [vmem:[%s175 + $0x16c] sm:$0xf] %v2101
      %2358 = vst [vmem:[%s175 + $0x170] sm:$0xf] %v2102
      %2359 = vst [vmem:[%s175 + $0x174] sm:$0xf] %v2103
      %2360 = vst [vmem:[%s175 + $0x178] sm:$0xf] %v2104
      %2361 = vst [vmem:[%s175 + $0x17c] sm:$0xf] %v2105
      %2362 = vst [vmem:[%s175 + $0x180] sm:$0xf] %v2106
      %2363 = vst [vmem:[%s175 + $0x184] sm:$0xf] %v2107
      %2364 = vst [vmem:[%s175 + $0x188] sm:$0xf] %v2108
      %2365 = vst [vmem:[%s175 + $0x18c] sm:$0xf] %v2109
      %2366 = vst [vmem:[%s175 + $0x190] sm:$0xf] %v2110
      %2367 = vst [vmem:[%s175 + $0x194] sm:$0xf] %v2111
      %2368 = vst [vmem:[%s175 + $0x198] sm:$0xf] %v2112
      %2369 = vst [vmem:[%s175 + $0x19c] sm:$0xf] %v2113
      %2370 = vst [vmem:[%s175 + $0x1a0] sm:$0xf] %v2114
      %2371 = vst [vmem:[%s175 + $0x1a4] sm:$0xf] %v2115
      %2372 = vst [vmem:[%s175 + $0x1a8] sm:$0xf] %v2116
      %2373 = vst [vmem:[%s175 + $0x1ac] sm:$0xf] %v2117
      %2374 = vst [vmem:[%s175 + $0x1b0] sm:$0xf] %v2118
      %2375 = vst [vmem:[%s175 + $0x1b4] sm:$0xf] %v2119
      %2376 = vst [vmem:[%s175 + $0x1b8] sm:$0xf] %v2120
      %2377 = vst [vmem:[%s175 + $0x1bc] sm:$0xf] %v2121
      %2378 = vst [vmem:[%s175 + $0x1c0] sm:$0xf] %v2122
      %2379 = vst [vmem:[%s175 + $0x1c4] sm:$0xf] %v2123
      %2380 = vst [vmem:[%s175 + $0x1c8] sm:$0xf] %v2124
      %2381 = vst [vmem:[%s175 + $0x1cc] sm:$0xf] %v2125
      %2382 = vst [vmem:[%s175 + $0x1d0] sm:$0xf] %v2126
      %2383 = vst [vmem:[%s175 + $0x1d4] sm:$0xf] %v2127
      %2384 = vst [vmem:[%s175 + $0x1d8] sm:$0xf] %v2128
      %2385 = vst [vmem:[%s175 + $0x1dc] sm:$0xf] %v2129
      %2386 = vst [vmem:[%s175 + $0x1e0] sm:$0xf] %v2130
      %2387 = vst [vmem:[%s175 + $0x1e4] sm:$0xf] %v2131
      %2388 = vst [vmem:[%s175 + $0x1e8] sm:$0xf] %v2132
      %2389 = vst [vmem:[%s175 + $0x1ec] sm:$0xf] %v2133
      %2390 = vst [vmem:[%s175 + $0x1f0] sm:$0xf] %v2134
      %2391 = vst [vmem:[%s175 + $0x1f4] sm:$0xf] %v2135
      %2392 = vst [vmem:[%s175 + $0x1f8] sm:$0xf] %v2136
      %2393 = vst [vmem:[%s175 + $0x1fc] sm:$0xf] %v2137
      %s2394 = smul.u32 128, %s14
      %p2395 = scmp.lt.s32.totalorder %s2394, 255
      %s2396 = scalar_select %p2395, %s2394, 255
      %s2397 = smul.addr %s2396, 4
      %s2398 = scalar_lea.vmem %s3, %s2397
      // Predicated region
      $region33: #{pose_resnet_forward.21} parent=31 // pred_check
        %p2399 = pneg %p100
      $region34: #{pose_resnet_forward.21} parent=31 // pred_check_branch
        %2401 = sbr.rel (%p2399) target = $region36
      $region35: #{pose_resnet_forward.21} parent=31 // pred_region
        %s2402 = smul.u32 128, %s14
      $region36: #{pose_resnet_forward.21} parent=31 // pred_fallthru
        _
    $region32: #{pose_resnet_forward.21} parent=5 // pred_fallthru
      _
    %p2403 = scmp.le.s32.totalorder 2, %s9
    // Predicated region
    $region37: #{pose_resnet_forward.21} parent=5 // pred_check
      %p2404 = pneg %p2403
    $region38: #{pose_resnet_forward.21} parent=5 // pred_check_branch
      %2406 = sbr.rel (%p2404) target = $region40
    $region39: #{pose_resnet_forward.21} parent=5 // pred_region
      %s2407 = ssub.s32 %s9, 2
      // Predicated region
      $region41: #{pose_resnet_forward.21} parent=39 // pred_check
        %p2408 = pneg %p106
      $region42: #{pose_resnet_forward.21} parent=39 // pred_check_branch
        %2410 = sbr.rel (%p2408) target = $region44
      $region43: #{pose_resnet_forward.21} parent=39 // pred_region
        %s2411 = smul.u32 128, %s15
        %p2412 = scmp.lt.s32.totalorder %s2411, 255
        %s2413 = scalar_select %p2412, %s2411, 255
        %s2414 = smul.addr %s2413, 4
        %s2415 = scalar_lea.vmem %s3, %s2414
      $region44: #{pose_resnet_forward.21} parent=39 // pred_fallthru
        _
    $region40: #{pose_resnet_forward.21} parent=5 // pred_fallthru
      _
  $region6: #{pose_resnet_forward.21} parent=0 // loop_footer
    %s13 = sadd.s32 1, %s9
  $region7: #{pose_resnet_forward.21} parent=0 // loop_footer_branch
    %8 = sbr.rel target = $region3
  $region8: #{pose_resnet_forward.21} parent=0 // loop_exit
    _

// kernel: pose_resnet_forward.22
$region0: #{pose_resnet_forward.22}
  #allocation0 [shape = 'u32[]', space=smem, size = 0x4, offset = 0x4, fixed_abs, tag = 'smem constant byte address 0x4 - core index']
  #allocation1 [shape = 'u32[144,128]{1,0:T(1,128)}', space=vmem, size = 0x12000, scoped, tag = 'internal scratch']
  %s0 = inlined_call_operand.vmem [shape: bf16[512,256], index: 0, kind: input, shape index: {}]
  %s1 = inlined_call_operand.vmem [shape: bf16[256,128], index: 1, kind: input, shape index: {}]
  %s2 = inlined_call_operand.vmem [shape: f32[1,128], index: 2, kind: input, shape index: {}]
  %s3 = inlined_call_operand.vmem [shape: bf16[512,128], index: 3, kind: output, shape index: {}]
  %s4 = sld [smem:[#allocation0]]
  $region22: #{pose_resnet_forward.22} parent=0
    _
  %s6 = ssub.s32 1, %s4
  %s7 = scalar_select 0, %s6, %s4
  // Predicated region
  $region2: #{pose_resnet_forward.22} parent=0 // pred_check
    _
  $region3: #{pose_resnet_forward.22} parent=0 // pred_check_branch
    %9 = sbr.rel (0) target = $region5
  $region4: #{pose_resnet_forward.22} parent=0 // pred_region
    _
  $region5: #{pose_resnet_forward.22} parent=0 // pred_fallthru
    _
  // Predicated region
  $region6: #{pose_resnet_forward.22} parent=0 // pred_check
    _
  $region7: #{pose_resnet_forward.22} parent=0 // pred_check_branch
    %11 = sbr.rel (0) target = $region9
  $region8: #{pose_resnet_forward.22} parent=0 // pred_region
    _
  $region9: #{pose_resnet_forward.22} parent=0 // pred_fallthru
    _
  // Predicated region
  $region10: #{pose_resnet_forward.22} parent=0 // pred_check
    _
  $region11: #{pose_resnet_forward.22} parent=0 // pred_check_branch
    %13 = sbr.rel (0) target = $region13
  $region12: #{pose_resnet_forward.22} parent=0 // pred_region
    _
  $region13: #{pose_resnet_forward.22} parent=0 // pred_fallthru
    _
  %v15 = vld [vmem:[%s0] sm:$0xff]
  %v16 = vld [vmem:[%s0 + $0x8] sm:$0xff]
  %v17 = vld [vmem:[%s0 + $0x10] sm:$0xff]
  %v18 = vld [vmem:[%s0 + $0x18] sm:$0xff]
  %v19 = vld [vmem:[%s0 + $0x20] sm:$0xff]
  %v20 = vld [vmem:[%s0 + $0x28] sm:$0xff]
  %v21 = vld [vmem:[%s0 + $0x30] sm:$0xff]
  %v22 = vld [vmem:[%s0 + $0x38] sm:$0xff]
  %v23 = vld [vmem:[%s0 + $0x40] sm:$0xff]
  %v24 = vld [vmem:[%s0 + $0x48] sm:$0xff]
  %v25 = vld [vmem:[%s0 + $0x50] sm:$0xff]
  %v26 = vld [vmem:[%s0 + $0x58] sm:$0xff]
  %v27 = vld [vmem:[%s0 + $0x60] sm:$0xff]
  %v28 = vld [vmem:[%s0 + $0x68] sm:$0xff]
  %v29 = vld [vmem:[%s0 + $0x70] sm:$0xff]
  %v30 = vld [vmem:[%s0 + $0x78] sm:$0xff]
  %v31 = vld [vmem:[%s0 + $0x80] sm:$0xff]
  %v32 = vld [vmem:[%s0 + $0x88] sm:$0xff]
  %v33 = vld [vmem:[%s0 + $0x90] sm:$0xff]
  %v34 = vld [vmem:[%s0 + $0x98] sm:$0xff]
  %v35 = vld [vmem:[%s0 + $0xa0] sm:$0xff]
  %v36 = vld [vmem:[%s0 + $0xa8] sm:$0xff]
  %v37 = vld [vmem:[%s0 + $0xb0] sm:$0xff]
  %v38 = vld [vmem:[%s0 + $0xb8] sm:$0xff]
  %v39 = vld [vmem:[%s0 + $0xc0] sm:$0xff]
  %v40 = vld [vmem:[%s0 + $0xc8] sm:$0xff]
  %v41 = vld [vmem:[%s0 + $0xd0] sm:$0xff]
  %v42 = vld [vmem:[%s0 + $0xd8] sm:$0xff]
  %v43 = vld [vmem:[%s0 + $0xe0] sm:$0xff]
  %v44 = vld [vmem:[%s0 + $0xe8] sm:$0xff]
  %v45 = vld [vmem:[%s0 + $0xf0] sm:$0xff]
  %v46 = vld [vmem:[%s0 + $0xf8] sm:$0xff]
  %v47 = vld [vmem:[%s0 + $0x100] sm:$0xff]
  %v48 = vld [vmem:[%s0 + $0x108] sm:$0xff]
  %v49 = vld [vmem:[%s0 + $0x110] sm:$0xff]
  %v50 = vld [vmem:[%s0 + $0x118] sm:$0xff]
  %v51 = vld [vmem:[%s0 + $0x120] sm:$0xff]
  %v52 = vld [vmem:[%s0 + $0x128] sm:$0xff]
  %v53 = vld [vmem:[%s0 + $0x130] sm:$0xff]
  %v54 = vld [vmem:[%s0 + $0x138] sm:$0xff]
  %v55 = vld [vmem:[%s0 + $0x140] sm:$0xff]
  %v56 = vld [vmem:[%s0 + $0x148] sm:$0xff]
  %v57 = vld [vmem:[%s0 + $0x150] sm:$0xff]
  %v58 = vld [vmem:[%s0 + $0x158] sm:$0xff]
  %v59 = vld [vmem:[%s0 + $0x160] sm:$0xff]
  %v60 = vld [vmem:[%s0 + $0x168] sm:$0xff]
  %v61 = vld [vmem:[%s0 + $0x170] sm:$0xff]
  %v62 = vld [vmem:[%s0 + $0x178] sm:$0xff]
  %v63 = vld [vmem:[%s0 + $0x180] sm:$0xff]
  %v64 = vld [vmem:[%s0 + $0x188] sm:$0xff]
  %v65 = vld [vmem:[%s0 + $0x190] sm:$0xff]
  %v66 = vld [vmem:[%s0 + $0x198] sm:$0xff]
  %v67 = vld [vmem:[%s0 + $0x1a0] sm:$0xff]
  %v68 = vld [vmem:[%s0 + $0x1a8] sm:$0xff]
  %v69 = vld [vmem:[%s0 + $0x1b0] sm:$0xff]
  %v70 = vld [vmem:[%s0 + $0x1b8] sm:$0xff]
  %v71 = vld [vmem:[%s0 + $0x1c0] sm:$0xff]
  %v72 = vld [vmem:[%s0 + $0x1c8] sm:$0xff]
  %v73 = vld [vmem:[%s0 + $0x1d0] sm:$0xff]
  %v74 = vld [vmem:[%s0 + $0x1d8] sm:$0xff]
  %v75 = vld [vmem:[%s0 + $0x1e0] sm:$0xff]
  %v76 = vld [vmem:[%s0 + $0x1e8] sm:$0xff]
  %v77 = vld [vmem:[%s0 + $0x1f0] sm:$0xff]
  %v78 = vld [vmem:[%s0 + $0x1f8] sm:$0xff]
  %v79 = vld [vmem:[%s1] sm:$0xf]
  %v80 = vld [vmem:[%s1 + $0x4] sm:$0xf]
  %v81 = vld [vmem:[%s1 + $0x8] sm:$0xf]
  %v82 = vld [vmem:[%s1 + $0xc] sm:$0xf]
  %v83 = vld [vmem:[%s1 + $0x10] sm:$0xf]
  %v84 = vld [vmem:[%s1 + $0x14] sm:$0xf]
  %v85 = vld [vmem:[%s1 + $0x18] sm:$0xf]
  %v86 = vld [vmem:[%s1 + $0x1c] sm:$0xf]
  %v87 = vld [vmem:[%s1 + $0x20] sm:$0xf]
  %v88 = vld [vmem:[%s1 + $0x24] sm:$0xf]
  %v89 = vld [vmem:[%s1 + $0x28] sm:$0xf]
  %v90 = vld [vmem:[%s1 + $0x2c] sm:$0xf]
  %v91 = vld [vmem:[%s1 + $0x30] sm:$0xf]
  %v92 = vld [vmem:[%s1 + $0x34] sm:$0xf]
  %v93 = vld [vmem:[%s1 + $0x38] sm:$0xf]
  %v94 = vld [vmem:[%s1 + $0x3c] sm:$0xf]
  %v95 = vld [vmem:[%s1 + $0x40] sm:$0xf]
  %v96 = vld [vmem:[%s1 + $0x44] sm:$0xf]
  %v97 = vld [vmem:[%s1 + $0x48] sm:$0xf]
  %v98 = vld [vmem:[%s1 + $0x4c] sm:$0xf]
  %v99 = vld [vmem:[%s1 + $0x50] sm:$0xf]
  %v100 = vld [vmem:[%s1 + $0x54] sm:$0xf]
  %v101 = vld [vmem:[%s1 + $0x58] sm:$0xf]
  %v102 = vld [vmem:[%s1 + $0x5c] sm:$0xf]
  %v103 = vld [vmem:[%s1 + $0x60] sm:$0xf]
  %v104 = vld [vmem:[%s1 + $0x64] sm:$0xf]
  %v105 = vld [vmem:[%s1 + $0x68] sm:$0xf]
  %v106 = vld [vmem:[%s1 + $0x6c] sm:$0xf]
  %v107 = vld [vmem:[%s1 + $0x70] sm:$0xf]
  %v108 = vld [vmem:[%s1 + $0x74] sm:$0xf]
  %v109 = vld [vmem:[%s1 + $0x78] sm:$0xf]
  %v110 = vld [vmem:[%s1 + $0x7c] sm:$0xf]
  %v111 = vld [vmem:[%s2] sm:$0x1]
  %v113 = vlaneseq
  %v114 = vshrl.u32 %v113, 7
  %v115 = vsub.s32 0, %v114
  %v116 = vrot.slane %v111, %v115
  %v182 = vunpack.c.l.b16 %v15
  %v183 = vunpack.c.h.b16 %v15
  %v184 = vunpack.c.l.b16 %v16
  %v185 = vunpack.c.h.b16 %v16
  %v186 = vunpack.c.l.b16 %v17
  %v187 = vunpack.c.h.b16 %v17
  %v188 = vunpack.c.l.b16 %v18
  %v189 = vunpack.c.h.b16 %v18
  %v190 = vunpack.c.l.b16 %v19
  %v191 = vunpack.c.h.b16 %v19
  %v192 = vunpack.c.l.b16 %v20
  %v193 = vunpack.c.h.b16 %v20
  %v194 = vunpack.c.l.b16 %v21
  %v195 = vunpack.c.h.b16 %v21
  %v196 = vunpack.c.l.b16 %v22
  %v197 = vunpack.c.h.b16 %v22
  %v198 = vunpack.c.l.b16 %v23
  %v199 = vunpack.c.h.b16 %v23
  %v200 = vunpack.c.l.b16 %v24
  %v201 = vunpack.c.h.b16 %v24
  %v202 = vunpack.c.l.b16 %v25
  %v203 = vunpack.c.h.b16 %v25
  %v204 = vunpack.c.l.b16 %v26
  %v205 = vunpack.c.h.b16 %v26
  %v206 = vunpack.c.l.b16 %v27
  %v207 = vunpack.c.h.b16 %v27
  %v208 = vunpack.c.l.b16 %v28
  %v209 = vunpack.c.h.b16 %v28
  %v210 = vunpack.c.l.b16 %v29
  %v211 = vunpack.c.h.b16 %v29
  %v212 = vunpack.c.l.b16 %v30
  %v213 = vunpack.c.h.b16 %v30
  %v214 = vunpack.c.l.b16 %v31
  %v215 = vunpack.c.h.b16 %v31
  %v216 = vunpack.c.l.b16 %v32
  %v217 = vunpack.c.h.b16 %v32
  %v218 = vunpack.c.l.b16 %v33
  %v219 = vunpack.c.h.b16 %v33
  %v220 = vunpack.c.l.b16 %v34
  %v221 = vunpack.c.h.b16 %v34
  %v222 = vunpack.c.l.b16 %v35
  %v223 = vunpack.c.h.b16 %v35
  %v224 = vunpack.c.l.b16 %v36
  %v225 = vunpack.c.h.b16 %v36
  %v226 = vunpack.c.l.b16 %v37
  %v227 = vunpack.c.h.b16 %v37
  %v228 = vunpack.c.l.b16 %v38
  %v229 = vunpack.c.h.b16 %v38
  %v230 = vunpack.c.l.b16 %v39
  %v231 = vunpack.c.h.b16 %v39
  %v232 = vunpack.c.l.b16 %v40
  %v233 = vunpack.c.h.b16 %v40
  %v234 = vunpack.c.l.b16 %v41
  %v235 = vunpack.c.h.b16 %v41
  %v236 = vunpack.c.l.b16 %v42
  %v237 = vunpack.c.h.b16 %v42
  %v238 = vunpack.c.l.b16 %v43
  %v239 = vunpack.c.h.b16 %v43
  %v240 = vunpack.c.l.b16 %v44
  %v241 = vunpack.c.h.b16 %v44
  %v242 = vunpack.c.l.b16 %v45
  %v243 = vunpack.c.h.b16 %v45
  %v244 = vunpack.c.l.b16 %v46
  %v245 = vunpack.c.h.b16 %v46
  %v246 = vunpack.c.l.b16 %v47
  %v247 = vunpack.c.h.b16 %v47
  %v248 = vunpack.c.l.b16 %v48
  %v249 = vunpack.c.h.b16 %v48
  %v250 = vunpack.c.l.b16 %v49
  %v251 = vunpack.c.h.b16 %v49
  %v252 = vunpack.c.l.b16 %v50
  %v253 = vunpack.c.h.b16 %v50
  %v254 = vunpack.c.l.b16 %v51
  %v255 = vunpack.c.h.b16 %v51
  %v256 = vunpack.c.l.b16 %v52
  %v257 = vunpack.c.h.b16 %v52
  %v258 = vunpack.c.l.b16 %v53
  %v259 = vunpack.c.h.b16 %v53
  %v260 = vunpack.c.l.b16 %v54
  %v261 = vunpack.c.h.b16 %v54
  %v262 = vunpack.c.l.b16 %v55
  %v263 = vunpack.c.h.b16 %v55
  %v264 = vunpack.c.l.b16 %v56
  %v265 = vunpack.c.h.b16 %v56
  %v266 = vunpack.c.l.b16 %v57
  %v267 = vunpack.c.h.b16 %v57
  %v268 = vunpack.c.l.b16 %v58
  %v269 = vunpack.c.h.b16 %v58
  %v270 = vunpack.c.l.b16 %v59
  %v271 = vunpack.c.h.b16 %v59
  %v272 = vunpack.c.l.b16 %v60
  %v273 = vunpack.c.h.b16 %v60
  %v274 = vunpack.c.l.b16 %v61
  %v275 = vunpack.c.h.b16 %v61
  %v276 = vunpack.c.l.b16 %v62
  %v277 = vunpack.c.h.b16 %v62
  %v278 = vunpack.c.l.b16 %v63
  %v279 = vunpack.c.h.b16 %v63
  %v280 = vunpack.c.l.b16 %v64
  %v281 = vunpack.c.h.b16 %v64
  %v282 = vunpack.c.l.b16 %v65
  %v283 = vunpack.c.h.b16 %v65
  %v284 = vunpack.c.l.b16 %v66
  %v285 = vunpack.c.h.b16 %v66
  %v286 = vunpack.c.l.b16 %v67
  %v287 = vunpack.c.h.b16 %v67
  %v288 = vunpack.c.l.b16 %v68
  %v289 = vunpack.c.h.b16 %v68
  %v290 = vunpack.c.l.b16 %v69
  %v291 = vunpack.c.h.b16 %v69
  %v292 = vunpack.c.l.b16 %v70
  %v293 = vunpack.c.h.b16 %v70
  %v294 = vunpack.c.l.b16 %v71
  %v295 = vunpack.c.h.b16 %v71
  %v296 = vunpack.c.l.b16 %v72
  %v297 = vunpack.c.h.b16 %v72
  %v298 = vunpack.c.l.b16 %v73
  %v299 = vunpack.c.h.b16 %v73
  %v300 = vunpack.c.l.b16 %v74
  %v301 = vunpack.c.h.b16 %v74
  %v302 = vunpack.c.l.b16 %v75
  %v303 = vunpack.c.h.b16 %v75
  %v304 = vunpack.c.l.b16 %v76
  %v305 = vunpack.c.h.b16 %v76
  %v306 = vunpack.c.l.b16 %v77
  %v307 = vunpack.c.h.b16 %v77
  %v308 = vunpack.c.l.b16 %v78
  %v309 = vunpack.c.h.b16 %v78
  %v310 = vpack.c.b16 %v184, %v182
  %v311 = vpack.c.b16 %v185, %v183
  %v312 = vpack.c.b16 %v188, %v186
  %v313 = vpack.c.b16 %v189, %v187
  %v314 = vpack.c.b16 %v192, %v190
  %v315 = vpack.c.b16 %v193, %v191
  %v316 = vpack.c.b16 %v196, %v194
  %v317 = vpack.c.b16 %v197, %v195
  %v318 = vpack.c.b16 %v200, %v198
  %v319 = vpack.c.b16 %v201, %v199
  %v320 = vpack.c.b16 %v204, %v202
  %v321 = vpack.c.b16 %v205, %v203
  %v322 = vpack.c.b16 %v208, %v206
  %v323 = vpack.c.b16 %v209, %v207
  %v324 = vpack.c.b16 %v212, %v210
  %v325 = vpack.c.b16 %v213, %v211
  %v326 = vpack.c.b16 %v216, %v214
  %v327 = vpack.c.b16 %v217, %v215
  %v328 = vpack.c.b16 %v220, %v218
  %v329 = vpack.c.b16 %v221, %v219
  %v330 = vpack.c.b16 %v224, %v222
  %v331 = vpack.c.b16 %v225, %v223
  %v332 = vpack.c.b16 %v228, %v226
  %v333 = vpack.c.b16 %v229, %v227
  %v334 = vpack.c.b16 %v232, %v230
  %v335 = vpack.c.b16 %v233, %v231
  %v336 = vpack.c.b16 %v236, %v234
  %v337 = vpack.c.b16 %v237, %v235
  %v338 = vpack.c.b16 %v240, %v238
  %v339 = vpack.c.b16 %v241, %v239
  %v340 = vpack.c.b16 %v244, %v242
  %v341 = vpack.c.b16 %v245, %v243
  %v342 = vpack.c.b16 %v248, %v246
  %v343 = vpack.c.b16 %v249, %v247
  %v344 = vpack.c.b16 %v252, %v250
  %v345 = vpack.c.b16 %v253, %v251
  %v346 = vpack.c.b16 %v256, %v254
  %v347 = vpack.c.b16 %v257, %v255
  %v348 = vpack.c.b16 %v260, %v258
  %v349 = vpack.c.b16 %v261, %v259
  %v350 = vpack.c.b16 %v264, %v262
  %v351 = vpack.c.b16 %v265, %v263
  %v352 = vpack.c.b16 %v268, %v266
  %v353 = vpack.c.b16 %v269, %v267
  %v354 = vpack.c.b16 %v272, %v270
  %v355 = vpack.c.b16 %v273, %v271
  %v356 = vpack.c.b16 %v276, %v274
  %v357 = vpack.c.b16 %v277, %v275
  %v358 = vpack.c.b16 %v280, %v278
  %v359 = vpack.c.b16 %v281, %v279
  %v360 = vpack.c.b16 %v284, %v282
  %v361 = vpack.c.b16 %v285, %v283
  %v362 = vpack.c.b16 %v288, %v286
  %v363 = vpack.c.b16 %v289, %v287
  %v364 = vpack.c.b16 %v292, %v290
  %v365 = vpack.c.b16 %v293, %v291
  %v366 = vpack.c.b16 %v296, %v294
  %v367 = vpack.c.b16 %v297, %v295
  %v368 = vpack.c.b16 %v300, %v298
  %v369 = vpack.c.b16 %v301, %v299
  %v370 = vpack.c.b16 %v304, %v302
  %v371 = vpack.c.b16 %v305, %v303
  %v372 = vpack.c.b16 %v308, %v306
  %v373 = vpack.c.b16 %v309, %v307
  %v470 = vunpack.c.l.b16 %v79
  %v471 = vunpack.c.l.b16 %v80
  %v472 = vunpack.c.l.b16 %v81
  %v473 = vunpack.c.l.b16 %v82
  %v474 = vunpack.c.l.b16 %v83
  %v475 = vunpack.c.l.b16 %v84
  %v476 = vunpack.c.l.b16 %v85
  %v477 = vunpack.c.l.b16 %v86
  %v478 = vunpack.c.l.b16 %v87
  %v479 = vunpack.c.l.b16 %v88
  %v480 = vunpack.c.l.b16 %v89
  %v481 = vunpack.c.l.b16 %v90
  %v482 = vunpack.c.l.b16 %v91
  %v483 = vunpack.c.l.b16 %v92
  %v484 = vunpack.c.l.b16 %v93
  %v485 = vunpack.c.l.b16 %v94
  %v486 = vunpack.c.l.b16 %v95
  %v487 = vunpack.c.l.b16 %v96
  %v488 = vunpack.c.l.b16 %v97
  %v489 = vunpack.c.l.b16 %v98
  %v490 = vunpack.c.l.b16 %v99
  %v491 = vunpack.c.l.b16 %v100
  %v492 = vunpack.c.l.b16 %v101
  %v493 = vunpack.c.l.b16 %v102
  %v494 = vunpack.c.l.b16 %v103
  %v495 = vunpack.c.l.b16 %v104
  %v496 = vunpack.c.l.b16 %v105
  %v497 = vunpack.c.l.b16 %v106
  %v498 = vunpack.c.l.b16 %v107
  %v499 = vunpack.c.l.b16 %v108
  %v500 = vunpack.c.l.b16 %v109
  %v501 = vunpack.c.l.b16 %v110
  %v502 = vpack.c.b16 %v471, %v470
  %v503 = vpack.c.b16 %v473, %v472
  %v504 = vpack.c.b16 %v475, %v474
  %v505 = vpack.c.b16 %v477, %v476
  %v506 = vpack.c.b16 %v479, %v478
  %v507 = vpack.c.b16 %v481, %v480
  %v508 = vpack.c.b16 %v483, %v482
  %v509 = vpack.c.b16 %v485, %v484
  %v510 = vpack.c.b16 %v487, %v486
  %v511 = vpack.c.b16 %v489, %v488
  %v512 = vpack.c.b16 %v491, %v490
  %v513 = vpack.c.b16 %v493, %v492
  %v514 = vpack.c.b16 %v495, %v494
  %v515 = vpack.c.b16 %v497, %v496
  %v516 = vpack.c.b16 %v499, %v498
  %v517 = vpack.c.b16 %v501, %v500
  %534 = vmatprep.subr.bf16.mxu0 0
  %535 = vmatpush1.bf16.msra.mxu0 %v502
  %536 = vmatprep.subr.bf16.mxu0 0
  %537 = vmatpush1.bf16.msra.mxu0 %v503
  %538 = vmatprep.subr.bf16.mxu0 0
  %539 = vmatpush1.bf16.msra.mxu0 %v504
  %540 = vmatprep.subr.bf16.mxu0 0
  %541 = vmatpush1.bf16.msra.mxu0 %v505
  %542 = vmatprep.subr.bf16.mxu0 0
  %543 = vmatpush1.bf16.msra.mxu0 %v506
  %544 = vmatprep.subr.bf16.mxu0 0
  %545 = vmatpush1.bf16.msra.mxu0 %v507
  %546 = vmatprep.subr.bf16.mxu0 0
  %547 = vmatpush1.bf16.msra.mxu0 %v508
  %548 = vmatprep.subr.bf16.mxu0 0
  %549 = vmatpush1.bf16.msra.mxu0 %v509
  %550 = vmatprep.subr.bf16.mxu0 0
  %551 = vmatpush1.bf16.msra.mxu0 %v510
  %552 = vmatprep.subr.bf16.mxu0 0
  %553 = vmatpush1.bf16.msra.mxu0 %v511
  %554 = vmatprep.subr.bf16.mxu0 0
  %555 = vmatpush1.bf16.msra.mxu0 %v512
  %556 = vmatprep.subr.bf16.mxu0 0
  %557 = vmatpush1.bf16.msra.mxu0 %v513
  %558 = vmatprep.subr.bf16.mxu0 0
  %559 = vmatpush1.bf16.msra.mxu0 %v514
  %560 = vmatprep.subr.bf16.mxu0 0
  %561 = vmatpush1.bf16.msra.mxu0 %v515
  %562 = vmatprep.subr.bf16.mxu0 0
  %563 = vmatpush1.bf16.msra.mxu0 %v516
  %564 = vmatprep.subr.bf16.mxu0 0
  %565 = vmatpush1.bf16.msra.mxu0 %v517
  %566 = vmatprep.mubr.bf16.mxu0 %v311
  %567 = vmatmul.mubr.bf16.gmra.mrb[0].mxu0 %v310
  %v568 = vpop.f32.mrb[0].mxu0
  %v569 = vadd.f32 %v116, %v568
  %v570 = vpop.f32.mrb[0].mxu0
  %v571 = vpop.f32.mrb[0].mxu0
  %v572 = vadd.f32 %v116, %v571
  %v573 = vpop.f32.mrb[0].mxu0
  %574 = vmatprep.mubr.bf16.mxu0 %v313
  %575 = vmatmul.mubr.bf16.gmra.mrb[0].mxu0 %v312
  %v576 = vpop.f32.mrb[0].mxu0
  %v577 = vadd.f32 %v116, %v576
  %v578 = vpop.f32.mrb[0].mxu0
  %v579 = vpop.f32.mrb[0].mxu0
  %v580 = vadd.f32 %v116, %v579
  %v581 = vpop.f32.mrb[0].mxu0
  %582 = vmatprep.mubr.bf16.mxu0 %v315
  %583 = vmatmul.mubr.bf16.gmra.mrb[0].mxu0 %v314
  %v584 = vpop.f32.mrb[0].mxu0
  %v585 = vadd.f32 %v116, %v584
  %v586 = vpop.f32.mrb[0].mxu0
  %v587 = vpop.f32.mrb[0].mxu0
  %v588 = vadd.f32 %v116, %v587
  %v589 = vpop.f32.mrb[0].mxu0
  %590 = vmatprep.mubr.bf16.mxu0 %v317
  %591 = vmatmul.mubr.bf16.gmra.mrb[0].mxu0 %v316
  %v592 = vpop.f32.mrb[0].mxu0
  %v593 = vadd.f32 %v116, %v592
  %v594 = vpop.f32.mrb[0].mxu0
  %v595 = vpop.f32.mrb[0].mxu0
  %v596 = vadd.f32 %v116, %v595
  %v597 = vpop.f32.mrb[0].mxu0
  %598 = vmatprep.mubr.bf16.mxu0 %v319
  %599 = vmatmul.mubr.bf16.gmra.mrb[0].mxu0 %v318
  %v600 = vpop.f32.mrb[0].mxu0
  %v601 = vadd.f32 %v116, %v600
  %v602 = vpop.f32.mrb[0].mxu0
  %v603 = vpop.f32.mrb[0].mxu0
  %v604 = vadd.f32 %v116, %v603
  %v605 = vpop.f32.mrb[0].mxu0
  %606 = vmatprep.mubr.bf16.mxu0 %v321
  %607 = vmatmul.mubr.bf16.gmra.mrb[0].mxu0 %v320
  %v608 = vpop.f32.mrb[0].mxu0
  %v609 = vadd.f32 %v116, %v608
  %v610 = vpop.f32.mrb[0].mxu0
  %v611 = vpop.f32.mrb[0].mxu0
  %v612 = vadd.f32 %v116, %v611
  %v613 = vpop.f32.mrb[0].mxu0
  %614 = vmatprep.mubr.bf16.mxu0 %v323
  %615 = vmatmul.mubr.bf16.gmra.mrb[0].mxu0 %v322
  %v616 = vpop.f32.mrb[0].mxu0
  %v617 = vadd.f32 %v116, %v616
  %v618 = vpop.f32.mrb[0].mxu0
  %v619 = vpop.f32.mrb[0].mxu0
  %v620 = vadd.f32 %v116, %v619
  %v621 = vpop.f32.mrb[0].mxu0
  %622 = vmatprep.mubr.bf16.mxu0 %v325
  %623 = vmatmul.mubr.bf16.gmra.mrb[0].mxu0 %v324
  %v624 = vpop.f32.mrb[0].mxu0
  %v625 = vadd.f32 %v116, %v624
  %v626 = vpop.f32.mrb[0].mxu0
  %v627 = vpop.f32.mrb[0].mxu0
  %v628 = vadd.f32 %v116, %v627
  %v629 = vpop.f32.mrb[0].mxu0
  %630 = vmatprep.mubr.bf16.mxu0 %v327
  %631 = vmatmul.mubr.bf16.gmra.mrb[0].mxu0 %v326
  %v632 = vpop.f32.mrb[0].mxu0
  %v633 = vadd.f32 %v116, %v632
  %v634 = vpop.f32.mrb[0].mxu0
  %v635 = vpop.f32.mrb[0].mxu0
  %v636 = vadd.f32 %v116, %v635
  %v637 = vpop.f32.mrb[0].mxu0
  %638 = vmatprep.mubr.bf16.mxu0 %v329
  %639 = vmatmul.mubr.bf16.gmra.mrb[0].mxu0 %v328
  %v640 = vpop.f32.mrb[0].mxu0
  %v641 = vadd.f32 %v116, %v640
  %v642 = vpop.f32.mrb[0].mxu0
  %v643 = vpop.f32.mrb[0].mxu0
  %v644 = vadd.f32 %v116, %v643
  %v645 = vpop.f32.mrb[0].mxu0
  %646 = vmatprep.mubr.bf16.mxu0 %v331
  %647 = vmatmul.mubr.bf16.gmra.mrb[0].mxu0 %v330
  %v648 = vpop.f32.mrb[0].mxu0
  %v649 = vadd.f32 %v116, %v648
  %v650 = vpop.f32.mrb[0].mxu0
  %v651 = vpop.f32.mrb[0].mxu0
  %v652 = vadd.f32 %v116, %v651
  %v653 = vpop.f32.mrb[0].mxu0
  %654 = vmatprep.mubr.bf16.mxu0 %v333
  %655 = vmatmul.mubr.bf16.gmra.mrb[0].mxu0 %v332
  %v656 = vpop.f32.mrb[0].mxu0
  %v657 = vadd.f32 %v116, %v656
  %v658 = vpop.f32.mrb[0].mxu0
  %v659 = vpop.f32.mrb[0].mxu0
  %v660 = vadd.f32 %v116, %v659
  %v661 = vpop.f32.mrb[0].mxu0
  %662 = vmatprep.mubr.bf16.mxu0 %v335
  %663 = vmatmul.mubr.bf16.gmra.mrb[0].mxu0 %v334
  %v664 = vpop.f32.mrb[0].mxu0
  %v665 = vadd.f32 %v116, %v664
  %v666 = vpop.f32.mrb[0].mxu0
  %v667 = vpop.f32.mrb[0].mxu0
  %v668 = vadd.f32 %v116, %v667
  %v669 = vpop.f32.mrb[0].mxu0
  %670 = vmatprep.mubr.bf16.mxu0 %v337
  %671 = vmatmul.mubr.bf16.gmra.mrb[0].mxu0 %v336
  %v672 = vpop.f32.mrb[0].mxu0
  %v673 = vadd.f32 %v116, %v672
  %v674 = vpop.f32.mrb[0].mxu0
  %v675 = vpop.f32.mrb[0].mxu0
  %v676 = vadd.f32 %v116, %v675
  %v677 = vpop.f32.mrb[0].mxu0
  %678 = vmatprep.mubr.bf16.mxu0 %v339
  %679 = vmatmul.mubr.bf16.gmra.mrb[0].mxu0 %v338
  %v680 = vpop.f32.mrb[0].mxu0
  %v681 = vadd.f32 %v116, %v680
  %v682 = vpop.f32.mrb[0].mxu0
  %v683 = vpop.f32.mrb[0].mxu0
  %v684 = vadd.f32 %v116, %v683
  %v685 = vpop.f32.mrb[0].mxu0
  %686 = vmatprep.mubr.bf16.mxu0 %v341
  %687 = vmatmul.mubr.bf16.gmra.mrb[0].mxu0 %v340
  %v688 = vpop.f32.mrb[0].mxu0
  %v689 = vadd.f32 %v116, %v688
  %v690 = vpop.f32.mrb[0].mxu0
  %v691 = vpop.f32.mrb[0].mxu0
  %v692 = vadd.f32 %v116, %v691
  %v693 = vpop.f32.mrb[0].mxu0
  %694 = vmatprep.mubr.bf16.mxu0 %v343
  %695 = vmatmul.mubr.bf16.gmra.mrb[0].mxu0 %v342
  %v696 = vpop.f32.mrb[0].mxu0
  %v697 = vadd.f32 %v116, %v696
  %v698 = vpop.f32.mrb[0].mxu0
  %v699 = vpop.f32.mrb[0].mxu0
  %v700 = vadd.f32 %v116, %v699
  %v701 = vpop.f32.mrb[0].mxu0
  %702 = vmatprep.mubr.bf16.mxu0 %v345
  %703 = vmatmul.mubr.bf16.gmra.mrb[0].mxu0 %v344
  %v704 = vpop.f32.mrb[0].mxu0
  %v705 = vadd.f32 %v116, %v704
  %v706 = vpop.f32.mrb[0].mxu0
  %v707 = vpop.f32.mrb[0].mxu0
  %v708 = vadd.f32 %v116, %v707
  %v709 = vpop.f32.mrb[0].mxu0
  %710 = vmatprep.mubr.bf16.mxu0 %v347
  %711 = vmatmul.mubr.bf16.gmra.mrb[0].mxu0 %v346
  %v712 = vpop.f32.mrb[0].mxu0
  %v713 = vadd.f32 %v116, %v712
  %v714 = vpop.f32.mrb[0].mxu0
  %v715 = vpop.f32.mrb[0].mxu0
  %v716 = vadd.f32 %v116, %v715
  %v717 = vpop.f32.mrb[0].mxu0
  %718 = vmatprep.mubr.bf16.mxu0 %v349
  %719 = vmatmul.mubr.bf16.gmra.mrb[0].mxu0 %v348
  %v720 = vpop.f32.mrb[0].mxu0
  %v721 = vadd.f32 %v116, %v720
  %v722 = vpop.f32.mrb[0].mxu0
  %v723 = vpop.f32.mrb[0].mxu0
  %v724 = vadd.f32 %v116, %v723
  %v725 = vpop.f32.mrb[0].mxu0
  %726 = vmatprep.mubr.bf16.mxu0 %v351
  %727 = vmatmul.mubr.bf16.gmra.mrb[0].mxu0 %v350
  %v728 = vpop.f32.mrb[0].mxu0
  %v729 = vadd.f32 %v116, %v728
  %v730 = vpop.f32.mrb[0].mxu0
  %v731 = vpop.f32.mrb[0].mxu0
  %v732 = vadd.f32 %v116, %v731
  %v733 = vpop.f32.mrb[0].mxu0
  %734 = vmatprep.mubr.bf16.mxu0 %v353
  %735 = vmatmul.mubr.bf16.gmra.mrb[0].mxu0 %v352
  %v736 = vpop.f32.mrb[0].mxu0
  %v737 = vadd.f32 %v116, %v736
  %v738 = vpop.f32.mrb[0].mxu0
  %v739 = vpop.f32.mrb[0].mxu0
  %v740 = vadd.f32 %v116, %v739
  %v741 = vpop.f32.mrb[0].mxu0
  %742 = vmatprep.mubr.bf16.mxu0 %v355
  %743 = vmatmul.mubr.bf16.gmra.mrb[0].mxu0 %v354
  %v744 = vpop.f32.mrb[0].mxu0
  %v745 = vadd.f32 %v116, %v744
  %v746 = vpop.f32.mrb[0].mxu0
  %v747 = vpop.f32.mrb[0].mxu0
  %v748 = vadd.f32 %v116, %v747
  %v749 = vpop.f32.mrb[0].mxu0
  %750 = vmatprep.mubr.bf16.mxu0 %v357
  %751 = vmatmul.mubr.bf16.gmra.mrb[0].mxu0 %v356
  %v752 = vpop.f32.mrb[0].mxu0
  %v753 = vadd.f32 %v116, %v752
  %v754 = vpop.f32.mrb[0].mxu0
  %v755 = vpop.f32.mrb[0].mxu0
  %v756 = vadd.f32 %v116, %v755
  %v757 = vpop.f32.mrb[0].mxu0
  %758 = vmatprep.mubr.bf16.mxu0 %v359
  %759 = vmatmul.mubr.bf16.gmra.mrb[0].mxu0 %v358
  %v760 = vpop.f32.mrb[0].mxu0
  %v761 = vadd.f32 %v116, %v760
  %v762 = vpop.f32.mrb[0].mxu0
  %v763 = vpop.f32.mrb[0].mxu0
  %v764 = vadd.f32 %v116, %v763
  %v765 = vpop.f32.mrb[0].mxu0
  %766 = vmatprep.mubr.bf16.mxu0 %v361
  %767 = vmatmul.mubr.bf16.gmra.mrb[0].mxu0 %v360
  %v768 = vpop.f32.mrb[0].mxu0
  %v769 = vadd.f32 %v116, %v768
  %v770 = vpop.f32.mrb[0].mxu0
  %v771 = vpop.f32.mrb[0].mxu0
  %v772 = vadd.f32 %v116, %v771
  %v773 = vpop.f32.mrb[0].mxu0
  %774 = vmatprep.mubr.bf16.mxu0 %v363
  %775 = vmatmul.mubr.bf16.gmra.mrb[0].mxu0 %v362
  %v776 = vpop.f32.mrb[0].mxu0
  %v777 = vadd.f32 %v116, %v776
  %v778 = vpop.f32.mrb[0].mxu0
  %v779 = vpop.f32.mrb[0].mxu0
  %v780 = vadd.f32 %v116, %v779
  %v781 = vpop.f32.mrb[0].mxu0
  %782 = vmatprep.mubr.bf16.mxu0 %v365
  %783 = vmatmul.mubr.bf16.gmra.mrb[0].mxu0 %v364
  %v784 = vpop.f32.mrb[0].mxu0
  %v785 = vadd.f32 %v116, %v784
  %v786 = vpop.f32.mrb[0].mxu0
  %v787 = vpop.f32.mrb[0].mxu0
  %v788 = vadd.f32 %v116, %v787
  %v789 = vpop.f32.mrb[0].mxu0
  %790 = vmatprep.mubr.bf16.mxu0 %v367
  %791 = vmatmul.mubr.bf16.gmra.mrb[0].mxu0 %v366
  %v792 = vpop.f32.mrb[0].mxu0
  %v793 = vadd.f32 %v116, %v792
  %v794 = vpop.f32.mrb[0].mxu0
  %v795 = vpop.f32.mrb[0].mxu0
  %v796 = vadd.f32 %v116, %v795
  %v797 = vpop.f32.mrb[0].mxu0
  %798 = vmatprep.mubr.bf16.mxu0 %v369
  %799 = vmatmul.mubr.bf16.gmra.mrb[0].mxu0 %v368
  %v800 = vpop.f32.mrb[0].mxu0
  %v801 = vadd.f32 %v116, %v800
  %v802 = vpop.f32.mrb[0].mxu0
  %v803 = vpop.f32.mrb[0].mxu0
  %v804 = vadd.f32 %v116, %v803
  %v805 = vpop.f32.mrb[0].mxu0
  %806 = vmatprep.mubr.bf16.mxu0 %v371
  %807 = vmatmul.mubr.bf16.gmra.mrb[0].mxu0 %v370
  %v808 = vpop.f32.mrb[0].mxu0
  %v809 = vadd.f32 %v116, %v808
  %v810 = vpop.f32.mrb[0].mxu0
  %v811 = vpop.f32.mrb[0].mxu0
  %v812 = vadd.f32 %v116, %v811
  %v813 = vpop.f32.mrb[0].mxu0
  %814 = vmatprep.mubr.bf16.mxu0 %v373
  %815 = vmatmul.mubr.bf16.gmra.mrb[0].mxu0 %v372
  %v816 = vpop.f32.mrb[0].mxu0
  %v817 = vadd.f32 %v116, %v816
  %v818 = vpop.f32.mrb[0].mxu0
  %v819 = vpop.f32.mrb[0].mxu0
  %v820 = vadd.f32 %v116, %v819
  %v821 = vpop.f32.mrb[0].mxu0
  %822 = vdwg.mxu0
  %v823 = vmax.f32 %v569, 0.0
  %v824 = vmax.f32 %v572, 0.0
  %v825 = vmax.f32 %v577, 0.0
  %v826 = vmax.f32 %v580, 0.0
  %v827 = vmax.f32 %v585, 0.0
  %v828 = vmax.f32 %v588, 0.0
  %v829 = vmax.f32 %v593, 0.0
  %v830 = vmax.f32 %v596, 0.0
  %v831 = vmax.f32 %v601, 0.0
  %v832 = vmax.f32 %v604, 0.0
  %v833 = vmax.f32 %v609, 0.0
  %v834 = vmax.f32 %v612, 0.0
  %v835 = vmax.f32 %v617, 0.0
  %v836 = vmax.f32 %v620, 0.0
  %v837 = vmax.f32 %v625, 0.0
  %v838 = vmax.f32 %v628, 0.0
  %v839 = vmax.f32 %v633, 0.0
  %v840 = vmax.f32 %v636, 0.0
  %v841 = vmax.f32 %v641, 0.0
  %v842 = vmax.f32 %v644, 0.0
  %v843 = vmax.f32 %v649, 0.0
  %v844 = vmax.f32 %v652, 0.0
  %v845 = vmax.f32 %v657, 0.0
  %v846 = vmax.f32 %v660, 0.0
  %v847 = vmax.f32 %v665, 0.0
  %v848 = vmax.f32 %v668, 0.0
  %v849 = vmax.f32 %v673, 0.0
  %v850 = vmax.f32 %v676, 0.0
  %v851 = vmax.f32 %v681, 0.0
  %v852 = vmax.f32 %v684, 0.0
  %v853 = vmax.f32 %v689, 0.0
  %v854 = vmax.f32 %v692, 0.0
  %v855 = vmax.f32 %v697, 0.0
  %v856 = vmax.f32 %v700, 0.0
  %v857 = vmax.f32 %v705, 0.0
  %v858 = vmax.f32 %v708, 0.0
  %v859 = vmax.f32 %v713, 0.0
  %v860 = vmax.f32 %v716, 0.0
  %v861 = vmax.f32 %v721, 0.0
  %v862 = vmax.f32 %v724, 0.0
  %v863 = vmax.f32 %v729, 0.0
  %v864 = vmax.f32 %v732, 0.0
  %v865 = vmax.f32 %v737, 0.0
  %v866 = vmax.f32 %v740, 0.0
  %v867 = vmax.f32 %v745, 0.0
  %v868 = vmax.f32 %v748, 0.0
  %v869 = vmax.f32 %v753, 0.0
  %v870 = vmax.f32 %v756, 0.0
  %v871 = vmax.f32 %v761, 0.0
  %v872 = vmax.f32 %v764, 0.0
  %v873 = vmax.f32 %v769, 0.0
  %v874 = vmax.f32 %v772, 0.0
  %v875 = vmax.f32 %v777, 0.0
  %v876 = vmax.f32 %v780, 0.0
  %v877 = vmax.f32 %v785, 0.0
  %v878 = vmax.f32 %v788, 0.0
  %v879 = vmax.f32 %v793, 0.0
  %v880 = vmax.f32 %v796, 0.0
  %v881 = vmax.f32 %v801, 0.0
  %v882 = vmax.f32 %v804, 0.0
  %v883 = vmax.f32 %v809, 0.0
  %v884 = vmax.f32 %v812, 0.0
  %v885 = vmax.f32 %v817, 0.0
  %v886 = vmax.f32 %v820, 0.0
  %v887 = vpack.c.bf16 %v824, %v823
  %v888 = vpack.c.bf16 %v826, %v825
  %v889 = vpack.c.bf16 %v828, %v827
  %v890 = vpack.c.bf16 %v830, %v829
  %v891 = vpack.c.bf16 %v832, %v831
  %v892 = vpack.c.bf16 %v834, %v833
  %v893 = vpack.c.bf16 %v836, %v835
  %v894 = vpack.c.bf16 %v838, %v837
  %v895 = vpack.c.bf16 %v840, %v839
  %v896 = vpack.c.bf16 %v842, %v841
  %v897 = vpack.c.bf16 %v844, %v843
  %v898 = vpack.c.bf16 %v846, %v845
  %v899 = vpack.c.bf16 %v848, %v847
  %v900 = vpack.c.bf16 %v850, %v849
  %v901 = vpack.c.bf16 %v852, %v851
  %v902 = vpack.c.bf16 %v854, %v853
  %v903 = vpack.c.bf16 %v856, %v855
  %v904 = vpack.c.bf16 %v858, %v857
  %v905 = vpack.c.bf16 %v860, %v859
  %v906 = vpack.c.bf16 %v862, %v861
  %v907 = vpack.c.bf16 %v864, %v863
  %v908 = vpack.c.bf16 %v866, %v865
  %v909 = vpack.c.bf16 %v868, %v867
  %v910 = vpack.c.bf16 %v870, %v869
  %v911 = vpack.c.bf16 %v872, %v871
  %v912 = vpack.c.bf16 %v874, %v873
  %v913 = vpack.c.bf16 %v876, %v875
  %v914 = vpack.c.bf16 %v878, %v877
  %v915 = vpack.c.bf16 %v880, %v879
  %v916 = vpack.c.bf16 %v882, %v881
  %v917 = vpack.c.bf16 %v884, %v883
  %v918 = vpack.c.bf16 %v886, %v885
  %v951 = vunpack.c.l.b16 %v887
  %v952 = vunpack.c.h.b16 %v887
  %v953 = vunpack.c.l.b16 %v888
  %v954 = vunpack.c.h.b16 %v888
  %v955 = vunpack.c.l.b16 %v889
  %v956 = vunpack.c.h.b16 %v889
  %v957 = vunpack.c.l.b16 %v890
  %v958 = vunpack.c.h.b16 %v890
  %v959 = vunpack.c.l.b16 %v891
  %v960 = vunpack.c.h.b16 %v891
  %v961 = vunpack.c.l.b16 %v892
  %v962 = vunpack.c.h.b16 %v892
  %v963 = vunpack.c.l.b16 %v893
  %v964 = vunpack.c.h.b16 %v893
  %v965 = vunpack.c.l.b16 %v894
  %v966 = vunpack.c.h.b16 %v894
  %v967 = vunpack.c.l.b16 %v895
  %v968 = vunpack.c.h.b16 %v895
  %v969 = vunpack.c.l.b16 %v896
  %v970 = vunpack.c.h.b16 %v896
  %v971 = vunpack.c.l.b16 %v897
  %v972 = vunpack.c.h.b16 %v897
  %v973 = vunpack.c.l.b16 %v898
  %v974 = vunpack.c.h.b16 %v898
  %v975 = vunpack.c.l.b16 %v899
  %v976 = vunpack.c.h.b16 %v899
  %v977 = vunpack.c.l.b16 %v900
  %v978 = vunpack.c.h.b16 %v900
  %v979 = vunpack.c.l.b16 %v901
  %v980 = vunpack.c.h.b16 %v901
  %v981 = vunpack.c.l.b16 %v902
  %v982 = vunpack.c.h.b16 %v902
  %v983 = vunpack.c.l.b16 %v903
  %v984 = vunpack.c.h.b16 %v903
  %v985 = vunpack.c.l.b16 %v904
  %v986 = vunpack.c.h.b16 %v904
  %v987 = vunpack.c.l.b16 %v905
  %v988 = vunpack.c.h.b16 %v905
  %v989 = vunpack.c.l.b16 %v906
  %v990 = vunpack.c.h.b16 %v906
  %v991 = vunpack.c.l.b16 %v907
  %v992 = vunpack.c.h.b16 %v907
  %v993 = vunpack.c.l.b16 %v908
  %v994 = vunpack.c.h.b16 %v908
  %v995 = vunpack.c.l.b16 %v909
  %v996 = vunpack.c.h.b16 %v909
  %v997 = vunpack.c.l.b16 %v910
  %v998 = vunpack.c.h.b16 %v910
  %v999 = vunpack.c.l.b16 %v911
  %v1000 = vunpack.c.h.b16 %v911
  %v1001 = vunpack.c.l.b16 %v912
  %v1002 = vunpack.c.h.b16 %v912
  %v1003 = vunpack.c.l.b16 %v913
  %v1004 = vunpack.c.h.b16 %v913
  %v1005 = vunpack.c.l.b16 %v914
  %v1006 = vunpack.c.h.b16 %v914
  %v1007 = vunpack.c.l.b16 %v915
  %v1008 = vunpack.c.h.b16 %v915
  %v1009 = vunpack.c.l.b16 %v916
  %v1010 = vunpack.c.h.b16 %v916
  %v1011 = vunpack.c.l.b16 %v917
  %v1012 = vunpack.c.h.b16 %v917
  %v1013 = vunpack.c.l.b16 %v918
  %v1014 = vunpack.c.h.b16 %v918
  %v1015 = vpack.c.b16 %v951, %v951
  %v1016 = vpack.c.b16 %v952, %v952
  %v1017 = vpack.c.b16 %v953, %v953
  %v1018 = vpack.c.b16 %v954, %v954
  %v1019 = vpack.c.b16 %v955, %v955
  %v1020 = vpack.c.b16 %v956, %v956
  %v1021 = vpack.c.b16 %v957, %v957
  %v1022 = vpack.c.b16 %v958, %v958
  %v1023 = vpack.c.b16 %v959, %v959
  %v1024 = vpack.c.b16 %v960, %v960
  %v1025 = vpack.c.b16 %v961, %v961
  %v1026 = vpack.c.b16 %v962, %v962
  %v1027 = vpack.c.b16 %v963, %v963
  %v1028 = vpack.c.b16 %v964, %v964
  %v1029 = vpack.c.b16 %v965, %v965
  %v1030 = vpack.c.b16 %v966, %v966
  %v1031 = vpack.c.b16 %v967, %v967
  %v1032 = vpack.c.b16 %v968, %v968
  %v1033 = vpack.c.b16 %v969, %v969
  %v1034 = vpack.c.b16 %v970, %v970
  %v1035 = vpack.c.b16 %v971, %v971
  %v1036 = vpack.c.b16 %v972, %v972
  %v1037 = vpack.c.b16 %v973, %v973
  %v1038 = vpack.c.b16 %v974, %v974
  %v1039 = vpack.c.b16 %v975, %v975
  %v1040 = vpack.c.b16 %v976, %v976
  %v1041 = vpack.c.b16 %v977, %v977
  %v1042 = vpack.c.b16 %v978, %v978
  %v1043 = vpack.c.b16 %v979, %v979
  %v1044 = vpack.c.b16 %v980, %v980
  %v1045 = vpack.c.b16 %v981, %v981
  %v1046 = vpack.c.b16 %v982, %v982
  %v1047 = vpack.c.b16 %v983, %v983
  %v1048 = vpack.c.b16 %v984, %v984
  %v1049 = vpack.c.b16 %v985, %v985
  %v1050 = vpack.c.b16 %v986, %v986
  %v1051 = vpack.c.b16 %v987, %v987
  %v1052 = vpack.c.b16 %v988, %v988
  %v1053 = vpack.c.b16 %v989, %v989
  %v1054 = vpack.c.b16 %v990, %v990
  %v1055 = vpack.c.b16 %v991, %v991
  %v1056 = vpack.c.b16 %v992, %v992
  %v1057 = vpack.c.b16 %v993, %v993
  %v1058 = vpack.c.b16 %v994, %v994
  %v1059 = vpack.c.b16 %v995, %v995
  %v1060 = vpack.c.b16 %v996, %v996
  %v1061 = vpack.c.b16 %v997, %v997
  %v1062 = vpack.c.b16 %v998, %v998
  %v1063 = vpack.c.b16 %v999, %v999
  %v1064 = vpack.c.b16 %v1000, %v1000
  %v1065 = vpack.c.b16 %v1001, %v1001
  %v1066 = vpack.c.b16 %v1002, %v1002
  %v1067 = vpack.c.b16 %v1003, %v1003
  %v1068 = vpack.c.b16 %v1004, %v1004
  %v1069 = vpack.c.b16 %v1005, %v1005
  %v1070 = vpack.c.b16 %v1006, %v1006
  %v1071 = vpack.c.b16 %v1007, %v1007
  %v1072 = vpack.c.b16 %v1008, %v1008
  %v1073 = vpack.c.b16 %v1009, %v1009
  %v1074 = vpack.c.b16 %v1010, %v1010
  %v1075 = vpack.c.b16 %v1011, %v1011
  %v1076 = vpack.c.b16 %v1012, %v1012
  %v1077 = vpack.c.b16 %v1013, %v1013
  %v1078 = vpack.c.b16 %v1014, %v1014
  %1143 = vst [vmem:[%s3] sm:$0xf] %v1015
  %1144 = vst [vmem:[%s3 + $0x4] sm:$0xf] %v1016
  %1145 = vst [vmem:[%s3 + $0x8] sm:$0xf] %v1017
  %1146 = vst [vmem:[%s3 + $0xc] sm:$0xf] %v1018
  %1147 = vst [vmem:[%s3 + $0x10] sm:$0xf] %v1019
  %1148 = vst [vmem:[%s3 + $0x14] sm:$0xf] %v1020
  %1149 = vst [vmem:[%s3 + $0x18] sm:$0xf] %v1021
  %1150 = vst [vmem:[%s3 + $0x1c] sm:$0xf] %v1022
  %1151 = vst [vmem:[%s3 + $0x20] sm:$0xf] %v1023
  %1152 = vst [vmem:[%s3 + $0x24] sm:$0xf] %v1024
  %1153 = vst [vmem:[%s3 + $0x28] sm:$0xf] %v1025
  %1154 = vst [vmem:[%s3 + $0x2c] sm:$0xf] %v1026
  %1155 = vst [vmem:[%s3 + $0x30] sm:$0xf] %v1027
  %1156 = vst [vmem:[%s3 + $0x34] sm:$0xf] %v1028
  %1157 = vst [vmem:[%s3 + $0x38] sm:$0xf] %v1029
  %1158 = vst [vmem:[%s3 + $0x3c] sm:$0xf] %v1030
  %1159 = vst [vmem:[%s3 + $0x40] sm:$0xf] %v1031
  %1160 = vst [vmem:[%s3 + $0x44] sm:$0xf] %v1032
  %1161 = vst [vmem:[%s3 + $0x48] sm:$0xf] %v1033
  %1162 = vst [vmem:[%s3 + $0x4c] sm:$0xf] %v1034
  %1163 = vst [vmem:[%s3 + $0x50] sm:$0xf] %v1035
  %1164 = vst [vmem:[%s3 + $0x54] sm:$0xf] %v1036
  %1165 = vst [vmem:[%s3 + $0x58] sm:$0xf] %v1037
  %1166 = vst [vmem:[%s3 + $0x5c] sm:$0xf] %v1038
  %1167 = vst [vmem:[%s3 + $0x60] sm:$0xf] %v1039
  %1168 = vst [vmem:[%s3 + $0x64] sm:$0xf] %v1040
  %1169 = vst [vmem:[%s3 + $0x68] sm:$0xf] %v1041
  %1170 = vst [vmem:[%s3 + $0x6c] sm:$0xf] %v1042
  %1171 = vst [vmem:[%s3 + $0x70] sm:$0xf] %v1043
  %1172 = vst [vmem:[%s3 + $0x74] sm:$0xf] %v1044
  %1173 = vst [vmem:[%s3 + $0x78] sm:$0xf] %v1045
  %1174 = vst [vmem:[%s3 + $0x7c] sm:$0xf] %v1046
  %1175 = vst [vmem:[%s3 + $0x80] sm:$0xf] %v1047
  %1176 = vst [vmem:[%s3 + $0x84] sm:$0xf] %v1048
  %1177 = vst [vmem:[%s3 + $0x88] sm:$0xf] %v1049
  %1178 = vst [vmem:[%s3 + $0x8c] sm:$0xf] %v1050
  %1179 = vst [vmem:[%s3 + $0x90] sm:$0xf] %v1051
  %1180 = vst [vmem:[%s3 + $0x94] sm:$0xf] %v1052
  %1181 = vst [vmem:[%s3 + $0x98] sm:$0xf] %v1053
  %1182 = vst [vmem:[%s3 + $0x9c] sm:$0xf] %v1054
  %1183 = vst [vmem:[%s3 + $0xa0] sm:$0xf] %v1055
  %1184 = vst [vmem:[%s3 + $0xa4] sm:$0xf] %v1056
  %1185 = vst [vmem:[%s3 + $0xa8] sm:$0xf] %v1057
  %1186 = vst [vmem:[%s3 + $0xac] sm:$0xf] %v1058
  %1187 = vst [vmem:[%s3 + $0xb0] sm:$0xf] %v1059
  %1188 = vst [vmem:[%s3 + $0xb4] sm:$0xf] %v1060
  %1189 = vst [vmem:[%s3 + $0xb8] sm:$0xf] %v1061
  %1190 = vst [vmem:[%s3 + $0xbc] sm:$0xf] %v1062
  %1191 = vst [vmem:[%s3 + $0xc0] sm:$0xf] %v1063
  %1192 = vst [vmem:[%s3 + $0xc4] sm:$0xf] %v1064
  %1193 = vst [vmem:[%s3 + $0xc8] sm:$0xf] %v1065
  %1194 = vst [vmem:[%s3 + $0xcc] sm:$0xf] %v1066
  %1195 = vst [vmem:[%s3 + $0xd0] sm:$0xf] %v1067
  %1196 = vst [vmem:[%s3 + $0xd4] sm:$0xf] %v1068
  %1197 = vst [vmem:[%s3 + $0xd8] sm:$0xf] %v1069
  %1198 = vst [vmem:[%s3 + $0xdc] sm:$0xf] %v1070
  %1199 = vst [vmem:[%s3 + $0xe0] sm:$0xf] %v1071
  %1200 = vst [vmem:[%s3 + $0xe4] sm:$0xf] %v1072
  %1201 = vst [vmem:[%s3 + $0xe8] sm:$0xf] %v1073
  %1202 = vst [vmem:[%s3 + $0xec] sm:$0xf] %v1074
  %1203 = vst [vmem:[%s3 + $0xf0] sm:$0xf] %v1075
  %1204 = vst [vmem:[%s3 + $0xf4] sm:$0xf] %v1076
  %1205 = vst [vmem:[%s3 + $0xf8] sm:$0xf] %v1077
  %1206 = vst [vmem:[%s3 + $0xfc] sm:$0xf] %v1078
  // Predicated region
  $region14: #{pose_resnet_forward.22} parent=0 // pred_check
    _
  $region15: #{pose_resnet_forward.22} parent=0 // pred_check_branch
    %1208 = sbr.rel (0) target = $region17
  $region16: #{pose_resnet_forward.22} parent=0 // pred_region
    _
  $region17: #{pose_resnet_forward.22} parent=0 // pred_fallthru
    _
  // Predicated region
  $region18: #{pose_resnet_forward.22} parent=0 // pred_check
    _
  $region19: #{pose_resnet_forward.22} parent=0 // pred_check_branch
    %1210 = sbr.rel (0) target = $region21
  $region20: #{pose_resnet_forward.22} parent=0 // pred_region
    _
  $region21: #{pose_resnet_forward.22} parent=0 // pred_fallthru
    _

// kernel: pose_resnet_forward.23
$region0: #{pose_resnet_forward.23}
  #allocation0 [shape = 'u32[]', space=smem, size = 0x4, offset = 0x4, fixed_abs, tag = 'smem constant byte address 0x4 - core index']
  #allocation1 [shape = 'u32[144,128]{1,0:T(1,128)}', space=vmem, size = 0x12000, scoped, tag = 'internal scratch']
  %s0 = inlined_call_operand.vmem [shape: bf16[512,256], index: 0, kind: input, shape index: {}]
  %s1 = inlined_call_operand.vmem [shape: bf16[256,128], index: 1, kind: input, shape index: {}]
  %s2 = inlined_call_operand.vmem [shape: f32[1,128], index: 2, kind: input, shape index: {}]
  %s3 = inlined_call_operand.vmem [shape: bf16[512,128], index: 3, kind: input, shape index: {}]
  %s4 = inlined_call_operand.vmem [shape: bf16[512,128], index: 4, kind: output, shape index: {}]
  %s5 = sld [smem:[#allocation0]]
  $region26: #{pose_resnet_forward.23} parent=0
    _
  %s7 = ssub.s32 1, %s5
  %s8 = scalar_select 0, %s7, %s5
  // Predicated region
  $region2: #{pose_resnet_forward.23} parent=0 // pred_check
    _
  $region3: #{pose_resnet_forward.23} parent=0 // pred_check_branch
    %10 = sbr.rel (0) target = $region5
  $region4: #{pose_resnet_forward.23} parent=0 // pred_region
    _
  $region5: #{pose_resnet_forward.23} parent=0 // pred_fallthru
    _
  // Predicated region
  $region6: #{pose_resnet_forward.23} parent=0 // pred_check
    _
  $region7: #{pose_resnet_forward.23} parent=0 // pred_check_branch
    %12 = sbr.rel (0) target = $region9
  $region8: #{pose_resnet_forward.23} parent=0 // pred_region
    _
  $region9: #{pose_resnet_forward.23} parent=0 // pred_fallthru
    _
  // Predicated region
  $region10: #{pose_resnet_forward.23} parent=0 // pred_check
    _
  $region11: #{pose_resnet_forward.23} parent=0 // pred_check_branch
    %14 = sbr.rel (0) target = $region13
  $region12: #{pose_resnet_forward.23} parent=0 // pred_region
    _
  $region13: #{pose_resnet_forward.23} parent=0 // pred_fallthru
    _
  // Predicated region
  $region14: #{pose_resnet_forward.23} parent=0 // pred_check
    _
  $region15: #{pose_resnet_forward.23} parent=0 // pred_check_branch
    %16 = sbr.rel (0) target = $region17
  $region16: #{pose_resnet_forward.23} parent=0 // pred_region
    _
  $region17: #{pose_resnet_forward.23} parent=0 // pred_fallthru
    _
  %v18 = vld [vmem:[%s0] sm:$0xff]
  %v19 = vld [vmem:[%s0 + $0x8] sm:$0xff]
  %v20 = vld [vmem:[%s0 + $0x10] sm:$0xff]
  %v21 = vld [vmem:[%s0 + $0x18] sm:$0xff]
  %v22 = vld [vmem:[%s0 + $0x20] sm:$0xff]
  %v23 = vld [vmem:[%s0 + $0x28] sm:$0xff]
  %v24 = vld [vmem:[%s0 + $0x30] sm:$0xff]
  %v25 = vld [vmem:[%s0 + $0x38] sm:$0xff]
  %v26 = vld [vmem:[%s0 + $0x40] sm:$0xff]
  %v27 = vld [vmem:[%s0 + $0x48] sm:$0xff]
  %v28 = vld [vmem:[%s0 + $0x50] sm:$0xff]
  %v29 = vld [vmem:[%s0 + $0x58] sm:$0xff]
  %v30 = vld [vmem:[%s0 + $0x60] sm:$0xff]
  %v31 = vld [vmem:[%s0 + $0x68] sm:$0xff]
  %v32 = vld [vmem:[%s0 + $0x70] sm:$0xff]
  %v33 = vld [vmem:[%s0 + $0x78] sm:$0xff]
  %v34 = vld [vmem:[%s0 + $0x80] sm:$0xff]
  %v35 = vld [vmem:[%s0 + $0x88] sm:$0xff]
  %v36 = vld [vmem:[%s0 + $0x90] sm:$0xff]
  %v37 = vld [vmem:[%s0 + $0x98] sm:$0xff]
  %v38 = vld [vmem:[%s0 + $0xa0] sm:$0xff]
  %v39 = vld [vmem:[%s0 + $0xa8] sm:$0xff]
  %v40 = vld [vmem:[%s0 + $0xb0] sm:$0xff]
  %v41 = vld [vmem:[%s0 + $0xb8] sm:$0xff]
  %v42 = vld [vmem:[%s0 + $0xc0] sm:$0xff]
  %v43 = vld [vmem:[%s0 + $0xc8] sm:$0xff]
  %v44 = vld [vmem:[%s0 + $0xd0] sm:$0xff]
  %v45 = vld [vmem:[%s0 + $0xd8] sm:$0xff]
  %v46 = vld [vmem:[%s0 + $0xe0] sm:$0xff]
  %v47 = vld [vmem:[%s0 + $0xe8] sm:$0xff]
  %v48 = vld [vmem:[%s0 + $0xf0] sm:$0xff]
  %v49 = vld [vmem:[%s0 + $0xf8] sm:$0xff]
  %v50 = vld [vmem:[%s0 + $0x100] sm:$0xff]
  %v51 = vld [vmem:[%s0 + $0x108] sm:$0xff]
  %v52 = vld [vmem:[%s0 + $0x110] sm:$0xff]
  %v53 = vld [vmem:[%s0 + $0x118] sm:$0xff]
  %v54 = vld [vmem:[%s0 + $0x120] sm:$0xff]
  %v55 = vld [vmem:[%s0 + $0x128] sm:$0xff]
  %v56 = vld [vmem:[%s0 + $0x130] sm:$0xff]
  %v57 = vld [vmem:[%s0 + $0x138] sm:$0xff]
  %v58 = vld [vmem:[%s0 + $0x140] sm:$0xff]
  %v59 = vld [vmem:[%s0 + $0x148] sm:$0xff]
  %v60 = vld [vmem:[%s0 + $0x150] sm:$0xff]
  %v61 = vld [vmem:[%s0 + $0x158] sm:$0xff]
  %v62 = vld [vmem:[%s0 + $0x160] sm:$0xff]
  %v63 = vld [vmem:[%s0 + $0x168] sm:$0xff]
  %v64 = vld [vmem:[%s0 + $0x170] sm:$0xff]
  %v65 = vld [vmem:[%s0 + $0x178] sm:$0xff]
  %v66 = vld [vmem:[%s0 + $0x180] sm:$0xff]
  %v67 = vld [vmem:[%s0 + $0x188] sm:$0xff]
  %v68 = vld [vmem:[%s0 + $0x190] sm:$0xff]
  %v69 = vld [vmem:[%s0 + $0x198] sm:$0xff]
  %v70 = vld [vmem:[%s0 + $0x1a0] sm:$0xff]
  %v71 = vld [vmem:[%s0 + $0x1a8] sm:$0xff]
  %v72 = vld [vmem:[%s0 + $0x1b0] sm:$0xff]
  %v73 = vld [vmem:[%s0 + $0x1b8] sm:$0xff]
  %v74 = vld [vmem:[%s0 + $0x1c0] sm:$0xff]
  %v75 = vld [vmem:[%s0 + $0x1c8] sm:$0xff]
  %v76 = vld [vmem:[%s0 + $0x1d0] sm:$0xff]
  %v77 = vld [vmem:[%s0 + $0x1d8] sm:$0xff]
  %v78 = vld [vmem:[%s0 + $0x1e0] sm:$0xff]
  %v79 = vld [vmem:[%s0 + $0x1e8] sm:$0xff]
  %v80 = vld [vmem:[%s0 + $0x1f0] sm:$0xff]
  %v81 = vld [vmem:[%s0 + $0x1f8] sm:$0xff]
  %v82 = vld [vmem:[%s1] sm:$0xf]
  %v83 = vld [vmem:[%s1 + $0x4] sm:$0xf]
  %v84 = vld [vmem:[%s1 + $0x8] sm:$0xf]
  %v85 = vld [vmem:[%s1 + $0xc] sm:$0xf]
  %v86 = vld [vmem:[%s1 + $0x10] sm:$0xf]
  %v87 = vld [vmem:[%s1 + $0x14] sm:$0xf]
  %v88 = vld [vmem:[%s1 + $0x18] sm:$0xf]
  %v89 = vld [vmem:[%s1 + $0x1c] sm:$0xf]
  %v90 = vld [vmem:[%s1 + $0x20] sm:$0xf]
  %v91 = vld [vmem:[%s1 + $0x24] sm:$0xf]
  %v92 = vld [vmem:[%s1 + $0x28] sm:$0xf]
  %v93 = vld [vmem:[%s1 + $0x2c] sm:$0xf]
  %v94 = vld [vmem:[%s1 + $0x30] sm:$0xf]
  %v95 = vld [vmem:[%s1 + $0x34] sm:$0xf]
  %v96 = vld [vmem:[%s1 + $0x38] sm:$0xf]
  %v97 = vld [vmem:[%s1 + $0x3c] sm:$0xf]
  %v98 = vld [vmem:[%s1 + $0x40] sm:$0xf]
  %v99 = vld [vmem:[%s1 + $0x44] sm:$0xf]
  %v100 = vld [vmem:[%s1 + $0x48] sm:$0xf]
  %v101 = vld [vmem:[%s1 + $0x4c] sm:$0xf]
  %v102 = vld [vmem:[%s1 + $0x50] sm:$0xf]
  %v103 = vld [vmem:[%s1 + $0x54] sm:$0xf]
  %v104 = vld [vmem:[%s1 + $0x58] sm:$0xf]
  %v105 = vld [vmem:[%s1 + $0x5c] sm:$0xf]
  %v106 = vld [vmem:[%s1 + $0x60] sm:$0xf]
  %v107 = vld [vmem:[%s1 + $0x64] sm:$0xf]
  %v108 = vld [vmem:[%s1 + $0x68] sm:$0xf]
  %v109 = vld [vmem:[%s1 + $0x6c] sm:$0xf]
  %v110 = vld [vmem:[%s1 + $0x70] sm:$0xf]
  %v111 = vld [vmem:[%s1 + $0x74] sm:$0xf]
  %v112 = vld [vmem:[%s1 + $0x78] sm:$0xf]
  %v113 = vld [vmem:[%s1 + $0x7c] sm:$0xf]
  %v114 = vld [vmem:[%s2] sm:$0x1]
  %v116 = vlaneseq
  %v117 = vshrl.u32 %v116, 7
  %v118 = vsub.s32 0, %v117
  %v119 = vrot.slane %v114, %v118
  %v185 = vunpack.c.l.b16 %v18
  %v186 = vunpack.c.h.b16 %v18
  %v187 = vunpack.c.l.b16 %v19
  %v188 = vunpack.c.h.b16 %v19
  %v189 = vunpack.c.l.b16 %v20
  %v190 = vunpack.c.h.b16 %v20
  %v191 = vunpack.c.l.b16 %v21
  %v192 = vunpack.c.h.b16 %v21
  %v193 = vunpack.c.l.b16 %v22
  %v194 = vunpack.c.h.b16 %v22
  %v195 = vunpack.c.l.b16 %v23
  %v196 = vunpack.c.h.b16 %v23
  %v197 = vunpack.c.l.b16 %v24
  %v198 = vunpack.c.h.b16 %v24
  %v199 = vunpack.c.l.b16 %v25
  %v200 = vunpack.c.h.b16 %v25
  %v201 = vunpack.c.l.b16 %v26
  %v202 = vunpack.c.h.b16 %v26
  %v203 = vunpack.c.l.b16 %v27
  %v204 = vunpack.c.h.b16 %v27
  %v205 = vunpack.c.l.b16 %v28
  %v206 = vunpack.c.h.b16 %v28
  %v207 = vunpack.c.l.b16 %v29
  %v208 = vunpack.c.h.b16 %v29
  %v209 = vunpack.c.l.b16 %v30
  %v210 = vunpack.c.h.b16 %v30
  %v211 = vunpack.c.l.b16 %v31
  %v212 = vunpack.c.h.b16 %v31
  %v213 = vunpack.c.l.b16 %v32
  %v214 = vunpack.c.h.b16 %v32
  %v215 = vunpack.c.l.b16 %v33
  %v216 = vunpack.c.h.b16 %v33
  %v217 = vunpack.c.l.b16 %v34
  %v218 = vunpack.c.h.b16 %v34
  %v219 = vunpack.c.l.b16 %v35
  %v220 = vunpack.c.h.b16 %v35
  %v221 = vunpack.c.l.b16 %v36
  %v222 = vunpack.c.h.b16 %v36
  %v223 = vunpack.c.l.b16 %v37
  %v224 = vunpack.c.h.b16 %v37
  %v225 = vunpack.c.l.b16 %v38
  %v226 = vunpack.c.h.b16 %v38
  %v227 = vunpack.c.l.b16 %v39
  %v228 = vunpack.c.h.b16 %v39
  %v229 = vunpack.c.l.b16 %v40
  %v230 = vunpack.c.h.b16 %v40
  %v231 = vunpack.c.l.b16 %v41
  %v232 = vunpack.c.h.b16 %v41
  %v233 = vunpack.c.l.b16 %v42
  %v234 = vunpack.c.h.b16 %v42
  %v235 = vunpack.c.l.b16 %v43
  %v236 = vunpack.c.h.b16 %v43
  %v237 = vunpack.c.l.b16 %v44
  %v238 = vunpack.c.h.b16 %v44
  %v239 = vunpack.c.l.b16 %v45
  %v240 = vunpack.c.h.b16 %v45
  %v241 = vunpack.c.l.b16 %v46
  %v242 = vunpack.c.h.b16 %v46
  %v243 = vunpack.c.l.b16 %v47
  %v244 = vunpack.c.h.b16 %v47
  %v245 = vunpack.c.l.b16 %v48
  %v246 = vunpack.c.h.b16 %v48
  %v247 = vunpack.c.l.b16 %v49
  %v248 = vunpack.c.h.b16 %v49
  %v249 = vunpack.c.l.b16 %v50
  %v250 = vunpack.c.h.b16 %v50
  %v251 = vunpack.c.l.b16 %v51
  %v252 = vunpack.c.h.b16 %v51
  %v253 = vunpack.c.l.b16 %v52
  %v254 = vunpack.c.h.b16 %v52
  %v255 = vunpack.c.l.b16 %v53
  %v256 = vunpack.c.h.b16 %v53
  %v257 = vunpack.c.l.b16 %v54
  %v258 = vunpack.c.h.b16 %v54
  %v259 = vunpack.c.l.b16 %v55
  %v260 = vunpack.c.h.b16 %v55
  %v261 = vunpack.c.l.b16 %v56
  %v262 = vunpack.c.h.b16 %v56
  %v263 = vunpack.c.l.b16 %v57
  %v264 = vunpack.c.h.b16 %v57
  %v265 = vunpack.c.l.b16 %v58
  %v266 = vunpack.c.h.b16 %v58
  %v267 = vunpack.c.l.b16 %v59
  %v268 = vunpack.c.h.b16 %v59
  %v269 = vunpack.c.l.b16 %v60
  %v270 = vunpack.c.h.b16 %v60
  %v271 = vunpack.c.l.b16 %v61
  %v272 = vunpack.c.h.b16 %v61
  %v273 = vunpack.c.l.b16 %v62
  %v274 = vunpack.c.h.b16 %v62
  %v275 = vunpack.c.l.b16 %v63
  %v276 = vunpack.c.h.b16 %v63
  %v277 = vunpack.c.l.b16 %v64
  %v278 = vunpack.c.h.b16 %v64
  %v279 = vunpack.c.l.b16 %v65
  %v280 = vunpack.c.h.b16 %v65
  %v281 = vunpack.c.l.b16 %v66
  %v282 = vunpack.c.h.b16 %v66
  %v283 = vunpack.c.l.b16 %v67
  %v284 = vunpack.c.h.b16 %v67
  %v285 = vunpack.c.l.b16 %v68
  %v286 = vunpack.c.h.b16 %v68
  %v287 = vunpack.c.l.b16 %v69
  %v288 = vunpack.c.h.b16 %v69
  %v289 = vunpack.c.l.b16 %v70
  %v290 = vunpack.c.h.b16 %v70
  %v291 = vunpack.c.l.b16 %v71
  %v292 = vunpack.c.h.b16 %v71
  %v293 = vunpack.c.l.b16 %v72
  %v294 = vunpack.c.h.b16 %v72
  %v295 = vunpack.c.l.b16 %v73
  %v296 = vunpack.c.h.b16 %v73
  %v297 = vunpack.c.l.b16 %v74
  %v298 = vunpack.c.h.b16 %v74
  %v299 = vunpack.c.l.b16 %v75
  %v300 = vunpack.c.h.b16 %v75
  %v301 = vunpack.c.l.b16 %v76
  %v302 = vunpack.c.h.b16 %v76
  %v303 = vunpack.c.l.b16 %v77
  %v304 = vunpack.c.h.b16 %v77
  %v305 = vunpack.c.l.b16 %v78
  %v306 = vunpack.c.h.b16 %v78
  %v307 = vunpack.c.l.b16 %v79
  %v308 = vunpack.c.h.b16 %v79
  %v309 = vunpack.c.l.b16 %v80
  %v310 = vunpack.c.h.b16 %v80
  %v311 = vunpack.c.l.b16 %v81
  %v312 = vunpack.c.h.b16 %v81
  %v313 = vpack.c.b16 %v187, %v185
  %v314 = vpack.c.b16 %v188, %v186
  %v315 = vpack.c.b16 %v191, %v189
  %v316 = vpack.c.b16 %v192, %v190
  %v317 = vpack.c.b16 %v195, %v193
  %v318 = vpack.c.b16 %v196, %v194
  %v319 = vpack.c.b16 %v199, %v197
  %v320 = vpack.c.b16 %v200, %v198
  %v321 = vpack.c.b16 %v203, %v201
  %v322 = vpack.c.b16 %v204, %v202
  %v323 = vpack.c.b16 %v207, %v205
  %v324 = vpack.c.b16 %v208, %v206
  %v325 = vpack.c.b16 %v211, %v209
  %v326 = vpack.c.b16 %v212, %v210
  %v327 = vpack.c.b16 %v215, %v213
  %v328 = vpack.c.b16 %v216, %v214
  %v329 = vpack.c.b16 %v219, %v217
  %v330 = vpack.c.b16 %v220, %v218
  %v331 = vpack.c.b16 %v223, %v221
  %v332 = vpack.c.b16 %v224, %v222
  %v333 = vpack.c.b16 %v227, %v225
  %v334 = vpack.c.b16 %v228, %v226
  %v335 = vpack.c.b16 %v231, %v229
  %v336 = vpack.c.b16 %v232, %v230
  %v337 = vpack.c.b16 %v235, %v233
  %v338 = vpack.c.b16 %v236, %v234
  %v339 = vpack.c.b16 %v239, %v237
  %v340 = vpack.c.b16 %v240, %v238
  %v341 = vpack.c.b16 %v243, %v241
  %v342 = vpack.c.b16 %v244, %v242
  %v343 = vpack.c.b16 %v247, %v245
  %v344 = vpack.c.b16 %v248, %v246
  %v345 = vpack.c.b16 %v251, %v249
  %v346 = vpack.c.b16 %v252, %v250
  %v347 = vpack.c.b16 %v255, %v253
  %v348 = vpack.c.b16 %v256, %v254
  %v349 = vpack.c.b16 %v259, %v257
  %v350 = vpack.c.b16 %v260, %v258
  %v351 = vpack.c.b16 %v263, %v261
  %v352 = vpack.c.b16 %v264, %v262
  %v353 = vpack.c.b16 %v267, %v265
  %v354 = vpack.c.b16 %v268, %v266
  %v355 = vpack.c.b16 %v271, %v269
  %v356 = vpack.c.b16 %v272, %v270
  %v357 = vpack.c.b16 %v275, %v273
  %v358 = vpack.c.b16 %v276, %v274
  %v359 = vpack.c.b16 %v279, %v277
  %v360 = vpack.c.b16 %v280, %v278
  %v361 = vpack.c.b16 %v283, %v281
  %v362 = vpack.c.b16 %v284, %v282
  %v363 = vpack.c.b16 %v287, %v285
  %v364 = vpack.c.b16 %v288, %v286
  %v365 = vpack.c.b16 %v291, %v289
  %v366 = vpack.c.b16 %v292, %v290
  %v367 = vpack.c.b16 %v295, %v293
  %v368 = vpack.c.b16 %v296, %v294
  %v369 = vpack.c.b16 %v299, %v297
  %v370 = vpack.c.b16 %v300, %v298
  %v371 = vpack.c.b16 %v303, %v301
  %v372 = vpack.c.b16 %v304, %v302
  %v373 = vpack.c.b16 %v307, %v305
  %v374 = vpack.c.b16 %v308, %v306
  %v375 = vpack.c.b16 %v311, %v309
  %v376 = vpack.c.b16 %v312, %v310
  %v473 = vunpack.c.l.b16 %v82
  %v474 = vunpack.c.l.b16 %v83
  %v475 = vunpack.c.l.b16 %v84
  %v476 = vunpack.c.l.b16 %v85
  %v477 = vunpack.c.l.b16 %v86
  %v478 = vunpack.c.l.b16 %v87
  %v479 = vunpack.c.l.b16 %v88
  %v480 = vunpack.c.l.b16 %v89
  %v481 = vunpack.c.l.b16 %v90
  %v482 = vunpack.c.l.b16 %v91
  %v483 = vunpack.c.l.b16 %v92
  %v484 = vunpack.c.l.b16 %v93
  %v485 = vunpack.c.l.b16 %v94
  %v486 = vunpack.c.l.b16 %v95
  %v487 = vunpack.c.l.b16 %v96
  %v488 = vunpack.c.l.b16 %v97
  %v489 = vunpack.c.l.b16 %v98
  %v490 = vunpack.c.l.b16 %v99
  %v491 = vunpack.c.l.b16 %v100
  %v492 = vunpack.c.l.b16 %v101
  %v493 = vunpack.c.l.b16 %v102
  %v494 = vunpack.c.l.b16 %v103
  %v495 = vunpack.c.l.b16 %v104
  %v496 = vunpack.c.l.b16 %v105
  %v497 = vunpack.c.l.b16 %v106
  %v498 = vunpack.c.l.b16 %v107
  %v499 = vunpack.c.l.b16 %v108
  %v500 = vunpack.c.l.b16 %v109
  %v501 = vunpack.c.l.b16 %v110
  %v502 = vunpack.c.l.b16 %v111
  %v503 = vunpack.c.l.b16 %v112
  %v504 = vunpack.c.l.b16 %v113
  %v505 = vpack.c.b16 %v474, %v473
  %v506 = vpack.c.b16 %v476, %v475
  %v507 = vpack.c.b16 %v478, %v477
  %v508 = vpack.c.b16 %v480, %v479
  %v509 = vpack.c.b16 %v482, %v481
  %v510 = vpack.c.b16 %v484, %v483
  %v511 = vpack.c.b16 %v486, %v485
  %v512 = vpack.c.b16 %v488, %v487
  %v513 = vpack.c.b16 %v490, %v489
  %v514 = vpack.c.b16 %v492, %v491
  %v515 = vpack.c.b16 %v494, %v493
  %v516 = vpack.c.b16 %v496, %v495
  %v517 = vpack.c.b16 %v498, %v497
  %v518 = vpack.c.b16 %v500, %v499
  %v519 = vpack.c.b16 %v502, %v501
  %v520 = vpack.c.b16 %v504, %v503
  %537 = vmatprep.subr.bf16.mxu0 0
  %538 = vmatpush1.bf16.msra.mxu0 %v505
  %539 = vmatprep.subr.bf16.mxu0 0
  %540 = vmatpush1.bf16.msra.mxu0 %v506
  %541 = vmatprep.subr.bf16.mxu0 0
  %542 = vmatpush1.bf16.msra.mxu0 %v507
  %543 = vmatprep.subr.bf16.mxu0 0
  %544 = vmatpush1.bf16.msra.mxu0 %v508
  %545 = vmatprep.subr.bf16.mxu0 0
  %546 = vmatpush1.bf16.msra.mxu0 %v509
  %547 = vmatprep.subr.bf16.mxu0 0
  %548 = vmatpush1.bf16.msra.mxu0 %v510
  %549 = vmatprep.subr.bf16.mxu0 0
  %550 = vmatpush1.bf16.msra.mxu0 %v511
  %551 = vmatprep.subr.bf16.mxu0 0
  %552 = vmatpush1.bf16.msra.mxu0 %v512
  %553 = vmatprep.subr.bf16.mxu0 0
  %554 = vmatpush1.bf16.msra.mxu0 %v513
  %555 = vmatprep.subr.bf16.mxu0 0
  %556 = vmatpush1.bf16.msra.mxu0 %v514
  %557 = vmatprep.subr.bf16.mxu0 0
  %558 = vmatpush1.bf16.msra.mxu0 %v515
  %559 = vmatprep.subr.bf16.mxu0 0
  %560 = vmatpush1.bf16.msra.mxu0 %v516
  %561 = vmatprep.subr.bf16.mxu0 0
  %562 = vmatpush1.bf16.msra.mxu0 %v517
  %563 = vmatprep.subr.bf16.mxu0 0
  %564 = vmatpush1.bf16.msra.mxu0 %v518
  %565 = vmatprep.subr.bf16.mxu0 0
  %566 = vmatpush1.bf16.msra.mxu0 %v519
  %567 = vmatprep.subr.bf16.mxu0 0
  %568 = vmatpush1.bf16.msra.mxu0 %v520
  %569 = vmatprep.mubr.bf16.mxu0 %v314
  %570 = vmatmul.mubr.bf16.gmra.mrb[0].mxu0 %v313
  %v571 = vpop.f32.mrb[0].mxu0
  %v572 = vadd.f32 %v119, %v571
  %v573 = vpop.f32.mrb[0].mxu0
  %v574 = vpop.f32.mrb[0].mxu0
  %v575 = vadd.f32 %v119, %v574
  %v576 = vpop.f32.mrb[0].mxu0
  %577 = vmatprep.mubr.bf16.mxu0 %v316
  %578 = vmatmul.mubr.bf16.gmra.mrb[0].mxu0 %v315
  %v579 = vpop.f32.mrb[0].mxu0
  %v580 = vadd.f32 %v119, %v579
  %v581 = vpop.f32.mrb[0].mxu0
  %v582 = vpop.f32.mrb[0].mxu0
  %v583 = vadd.f32 %v119, %v582
  %v584 = vpop.f32.mrb[0].mxu0
  %585 = vmatprep.mubr.bf16.mxu0 %v318
  %586 = vmatmul.mubr.bf16.gmra.mrb[0].mxu0 %v317
  %v587 = vpop.f32.mrb[0].mxu0
  %v588 = vadd.f32 %v119, %v587
  %v589 = vpop.f32.mrb[0].mxu0
  %v590 = vpop.f32.mrb[0].mxu0
  %v591 = vadd.f32 %v119, %v590
  %v592 = vpop.f32.mrb[0].mxu0
  %593 = vmatprep.mubr.bf16.mxu0 %v320
  %594 = vmatmul.mubr.bf16.gmra.mrb[0].mxu0 %v319
  %v595 = vpop.f32.mrb[0].mxu0
  %v596 = vadd.f32 %v119, %v595
  %v597 = vpop.f32.mrb[0].mxu0
  %v598 = vpop.f32.mrb[0].mxu0
  %v599 = vadd.f32 %v119, %v598
  %v600 = vpop.f32.mrb[0].mxu0
  %601 = vmatprep.mubr.bf16.mxu0 %v322
  %602 = vmatmul.mubr.bf16.gmra.mrb[0].mxu0 %v321
  %v603 = vpop.f32.mrb[0].mxu0
  %v604 = vadd.f32 %v119, %v603
  %v605 = vpop.f32.mrb[0].mxu0
  %v606 = vpop.f32.mrb[0].mxu0
  %v607 = vadd.f32 %v119, %v606
  %v608 = vpop.f32.mrb[0].mxu0
  %609 = vmatprep.mubr.bf16.mxu0 %v324
  %610 = vmatmul.mubr.bf16.gmra.mrb[0].mxu0 %v323
  %v611 = vpop.f32.mrb[0].mxu0
  %v612 = vadd.f32 %v119, %v611
  %v613 = vpop.f32.mrb[0].mxu0
  %v614 = vpop.f32.mrb[0].mxu0
  %v615 = vadd.f32 %v119, %v614
  %v616 = vpop.f32.mrb[0].mxu0
  %617 = vmatprep.mubr.bf16.mxu0 %v326
  %618 = vmatmul.mubr.bf16.gmra.mrb[0].mxu0 %v325
  %v619 = vpop.f32.mrb[0].mxu0
  %v620 = vadd.f32 %v119, %v619
  %v621 = vpop.f32.mrb[0].mxu0
  %v622 = vpop.f32.mrb[0].mxu0
  %v623 = vadd.f32 %v119, %v622
  %v624 = vpop.f32.mrb[0].mxu0
  %625 = vmatprep.mubr.bf16.mxu0 %v328
  %626 = vmatmul.mubr.bf16.gmra.mrb[0].mxu0 %v327
  %v627 = vpop.f32.mrb[0].mxu0
  %v628 = vadd.f32 %v119, %v627
  %v629 = vpop.f32.mrb[0].mxu0
  %v630 = vpop.f32.mrb[0].mxu0
  %v631 = vadd.f32 %v119, %v630
  %v632 = vpop.f32.mrb[0].mxu0
  %633 = vmatprep.mubr.bf16.mxu0 %v330
  %634 = vmatmul.mubr.bf16.gmra.mrb[0].mxu0 %v329
  %v635 = vpop.f32.mrb[0].mxu0
  %v636 = vadd.f32 %v119, %v635
  %v637 = vpop.f32.mrb[0].mxu0
  %v638 = vpop.f32.mrb[0].mxu0
  %v639 = vadd.f32 %v119, %v638
  %v640 = vpop.f32.mrb[0].mxu0
  %641 = vmatprep.mubr.bf16.mxu0 %v332
  %642 = vmatmul.mubr.bf16.gmra.mrb[0].mxu0 %v331
  %v643 = vpop.f32.mrb[0].mxu0
  %v644 = vadd.f32 %v119, %v643
  %v645 = vpop.f32.mrb[0].mxu0
  %v646 = vpop.f32.mrb[0].mxu0
  %v647 = vadd.f32 %v119, %v646
  %v648 = vpop.f32.mrb[0].mxu0
  %649 = vmatprep.mubr.bf16.mxu0 %v334
  %650 = vmatmul.mubr.bf16.gmra.mrb[0].mxu0 %v333
  %v651 = vpop.f32.mrb[0].mxu0
  %v652 = vadd.f32 %v119, %v651
  %v653 = vpop.f32.mrb[0].mxu0
  %v654 = vpop.f32.mrb[0].mxu0
  %v655 = vadd.f32 %v119, %v654
  %v656 = vpop.f32.mrb[0].mxu0
  %657 = vmatprep.mubr.bf16.mxu0 %v336
  %658 = vmatmul.mubr.bf16.gmra.mrb[0].mxu0 %v335
  %v659 = vpop.f32.mrb[0].mxu0
  %v660 = vadd.f32 %v119, %v659
  %v661 = vpop.f32.mrb[0].mxu0
  %v662 = vpop.f32.mrb[0].mxu0
  %v663 = vadd.f32 %v119, %v662
  %v664 = vpop.f32.mrb[0].mxu0
  %665 = vmatprep.mubr.bf16.mxu0 %v338
  %666 = vmatmul.mubr.bf16.gmra.mrb[0].mxu0 %v337
  %v667 = vpop.f32.mrb[0].mxu0
  %v668 = vadd.f32 %v119, %v667
  %v669 = vpop.f32.mrb[0].mxu0
  %v670 = vpop.f32.mrb[0].mxu0
  %v671 = vadd.f32 %v119, %v670
  %v672 = vpop.f32.mrb[0].mxu0
  %673 = vmatprep.mubr.bf16.mxu0 %v340
  %674 = vmatmul.mubr.bf16.gmra.mrb[0].mxu0 %v339
  %v675 = vpop.f32.mrb[0].mxu0
  %v676 = vadd.f32 %v119, %v675
  %v677 = vpop.f32.mrb[0].mxu0
  %v678 = vpop.f32.mrb[0].mxu0
  %v679 = vadd.f32 %v119, %v678
  %v680 = vpop.f32.mrb[0].mxu0
  %681 = vmatprep.mubr.bf16.mxu0 %v342
  %682 = vmatmul.mubr.bf16.gmra.mrb[0].mxu0 %v341
  %v683 = vpop.f32.mrb[0].mxu0
  %v684 = vadd.f32 %v119, %v683
  %v685 = vpop.f32.mrb[0].mxu0
  %v686 = vpop.f32.mrb[0].mxu0
  %v687 = vadd.f32 %v119, %v686
  %v688 = vpop.f32.mrb[0].mxu0
  %689 = vmatprep.mubr.bf16.mxu0 %v344
  %690 = vmatmul.mubr.bf16.gmra.mrb[0].mxu0 %v343
  %v691 = vpop.f32.mrb[0].mxu0
  %v692 = vadd.f32 %v119, %v691
  %v693 = vpop.f32.mrb[0].mxu0
  %v694 = vpop.f32.mrb[0].mxu0
  %v695 = vadd.f32 %v119, %v694
  %v696 = vpop.f32.mrb[0].mxu0
  %697 = vmatprep.mubr.bf16.mxu0 %v346
  %698 = vmatmul.mubr.bf16.gmra.mrb[0].mxu0 %v345
  %v699 = vpop.f32.mrb[0].mxu0
  %v700 = vadd.f32 %v119, %v699
  %v701 = vpop.f32.mrb[0].mxu0
  %v702 = vpop.f32.mrb[0].mxu0
  %v703 = vadd.f32 %v119, %v702
  %v704 = vpop.f32.mrb[0].mxu0
  %705 = vmatprep.mubr.bf16.mxu0 %v348
  %706 = vmatmul.mubr.bf16.gmra.mrb[0].mxu0 %v347
  %v707 = vpop.f32.mrb[0].mxu0
  %v708 = vadd.f32 %v119, %v707
  %v709 = vpop.f32.mrb[0].mxu0
  %v710 = vpop.f32.mrb[0].mxu0
  %v711 = vadd.f32 %v119, %v710
  %v712 = vpop.f32.mrb[0].mxu0
  %713 = vmatprep.mubr.bf16.mxu0 %v350
  %714 = vmatmul.mubr.bf16.gmra.mrb[0].mxu0 %v349
  %v715 = vpop.f32.mrb[0].mxu0
  %v716 = vadd.f32 %v119, %v715
  %v717 = vpop.f32.mrb[0].mxu0
  %v718 = vpop.f32.mrb[0].mxu0
  %v719 = vadd.f32 %v119, %v718
  %v720 = vpop.f32.mrb[0].mxu0
  %721 = vmatprep.mubr.bf16.mxu0 %v352
  %722 = vmatmul.mubr.bf16.gmra.mrb[0].mxu0 %v351
  %v723 = vpop.f32.mrb[0].mxu0
  %v724 = vadd.f32 %v119, %v723
  %v725 = vpop.f32.mrb[0].mxu0
  %v726 = vpop.f32.mrb[0].mxu0
  %v727 = vadd.f32 %v119, %v726
  %v728 = vpop.f32.mrb[0].mxu0
  %729 = vmatprep.mubr.bf16.mxu0 %v354
  %730 = vmatmul.mubr.bf16.gmra.mrb[0].mxu0 %v353
  %v731 = vpop.f32.mrb[0].mxu0
  %v732 = vadd.f32 %v119, %v731
  %v733 = vpop.f32.mrb[0].mxu0
  %v734 = vpop.f32.mrb[0].mxu0
  %v735 = vadd.f32 %v119, %v734
  %v736 = vpop.f32.mrb[0].mxu0
  %737 = vmatprep.mubr.bf16.mxu0 %v356
  %738 = vmatmul.mubr.bf16.gmra.mrb[0].mxu0 %v355
  %v739 = vpop.f32.mrb[0].mxu0
  %v740 = vadd.f32 %v119, %v739
  %v741 = vpop.f32.mrb[0].mxu0
  %v742 = vpop.f32.mrb[0].mxu0
  %v743 = vadd.f32 %v119, %v742
  %v744 = vpop.f32.mrb[0].mxu0
  %745 = vmatprep.mubr.bf16.mxu0 %v358
  %746 = vmatmul.mubr.bf16.gmra.mrb[0].mxu0 %v357
  %v747 = vpop.f32.mrb[0].mxu0
  %v748 = vadd.f32 %v119, %v747
  %v749 = vpop.f32.mrb[0].mxu0
  %v750 = vpop.f32.mrb[0].mxu0
  %v751 = vadd.f32 %v119, %v750
  %v752 = vpop.f32.mrb[0].mxu0
  %753 = vmatprep.mubr.bf16.mxu0 %v360
  %754 = vmatmul.mubr.bf16.gmra.mrb[0].mxu0 %v359
  %v755 = vpop.f32.mrb[0].mxu0
  %v756 = vadd.f32 %v119, %v755
  %v757 = vpop.f32.mrb[0].mxu0
  %v758 = vpop.f32.mrb[0].mxu0
  %v759 = vadd.f32 %v119, %v758
  %v760 = vpop.f32.mrb[0].mxu0
  %761 = vmatprep.mubr.bf16.mxu0 %v362
  %762 = vmatmul.mubr.bf16.gmra.mrb[0].mxu0 %v361
  %v763 = vpop.f32.mrb[0].mxu0
  %v764 = vadd.f32 %v119, %v763
  %v765 = vpop.f32.mrb[0].mxu0
  %v766 = vpop.f32.mrb[0].mxu0
  %v767 = vadd.f32 %v119, %v766
  %v768 = vpop.f32.mrb[0].mxu0
  %769 = vmatprep.mubr.bf16.mxu0 %v364
  %770 = vmatmul.mubr.bf16.gmra.mrb[0].mxu0 %v363
  %v771 = vpop.f32.mrb[0].mxu0
  %v772 = vadd.f32 %v119, %v771
  %v773 = vpop.f32.mrb[0].mxu0
  %v774 = vpop.f32.mrb[0].mxu0
  %v775 = vadd.f32 %v119, %v774
  %v776 = vpop.f32.mrb[0].mxu0
  %777 = vmatprep.mubr.bf16.mxu0 %v366
  %778 = vmatmul.mubr.bf16.gmra.mrb[0].mxu0 %v365
  %v779 = vpop.f32.mrb[0].mxu0
  %v780 = vadd.f32 %v119, %v779
  %v781 = vpop.f32.mrb[0].mxu0
  %v782 = vpop.f32.mrb[0].mxu0
  %v783 = vadd.f32 %v119, %v782
  %v784 = vpop.f32.mrb[0].mxu0
  %785 = vmatprep.mubr.bf16.mxu0 %v368
  %786 = vmatmul.mubr.bf16.gmra.mrb[0].mxu0 %v367
  %v787 = vpop.f32.mrb[0].mxu0
  %v788 = vadd.f32 %v119, %v787
  %v789 = vpop.f32.mrb[0].mxu0
  %v790 = vpop.f32.mrb[0].mxu0
  %v791 = vadd.f32 %v119, %v790
  %v792 = vpop.f32.mrb[0].mxu0
  %793 = vmatprep.mubr.bf16.mxu0 %v370
  %794 = vmatmul.mubr.bf16.gmra.mrb[0].mxu0 %v369
  %v795 = vpop.f32.mrb[0].mxu0
  %v796 = vadd.f32 %v119, %v795
  %v797 = vpop.f32.mrb[0].mxu0
  %v798 = vpop.f32.mrb[0].mxu0
  %v799 = vadd.f32 %v119, %v798
  %v800 = vpop.f32.mrb[0].mxu0
  %801 = vmatprep.mubr.bf16.mxu0 %v372
  %802 = vmatmul.mubr.bf16.gmra.mrb[0].mxu0 %v371
  %v803 = vpop.f32.mrb[0].mxu0
  %v804 = vadd.f32 %v119, %v803
  %v805 = vpop.f32.mrb[0].mxu0
  %v806 = vpop.f32.mrb[0].mxu0
  %v807 = vadd.f32 %v119, %v806
  %v808 = vpop.f32.mrb[0].mxu0
  %809 = vmatprep.mubr.bf16.mxu0 %v374
  %810 = vmatmul.mubr.bf16.gmra.mrb[0].mxu0 %v373
  %v811 = vpop.f32.mrb[0].mxu0
  %v812 = vadd.f32 %v119, %v811
  %v813 = vpop.f32.mrb[0].mxu0
  %v814 = vpop.f32.mrb[0].mxu0
  %v815 = vadd.f32 %v119, %v814
  %v816 = vpop.f32.mrb[0].mxu0
  %817 = vmatprep.mubr.bf16.mxu0 %v376
  %818 = vmatmul.mubr.bf16.gmra.mrb[0].mxu0 %v375
  %v819 = vpop.f32.mrb[0].mxu0
  %v820 = vadd.f32 %v119, %v819
  %v821 = vpop.f32.mrb[0].mxu0
  %v822 = vpop.f32.mrb[0].mxu0
  %v823 = vadd.f32 %v119, %v822
  %v824 = vpop.f32.mrb[0].mxu0
  %825 = vdwg.mxu0
  %v826 = vld [vmem:[%s3] sm:$0xf]
  %v827 = vld [vmem:[%s3 + $0x4] sm:$0xf]
  %v828 = vld [vmem:[%s3 + $0x8] sm:$0xf]
  %v829 = vld [vmem:[%s3 + $0xc] sm:$0xf]
  %v830 = vld [vmem:[%s3 + $0x10] sm:$0xf]
  %v831 = vld [vmem:[%s3 + $0x14] sm:$0xf]
  %v832 = vld [vmem:[%s3 + $0x18] sm:$0xf]
  %v833 = vld [vmem:[%s3 + $0x1c] sm:$0xf]
  %v834 = vld [vmem:[%s3 + $0x20] sm:$0xf]
  %v835 = vld [vmem:[%s3 + $0x24] sm:$0xf]
  %v836 = vld [vmem:[%s3 + $0x28] sm:$0xf]
  %v837 = vld [vmem:[%s3 + $0x2c] sm:$0xf]
  %v838 = vld [vmem:[%s3 + $0x30] sm:$0xf]
  %v839 = vld [vmem:[%s3 + $0x34] sm:$0xf]
  %v840 = vld [vmem:[%s3 + $0x38] sm:$0xf]
  %v841 = vld [vmem:[%s3 + $0x3c] sm:$0xf]
  %v842 = vld [vmem:[%s3 + $0x40] sm:$0xf]
  %v843 = vld [vmem:[%s3 + $0x44] sm:$0xf]
  %v844 = vld [vmem:[%s3 + $0x48] sm:$0xf]
  %v845 = vld [vmem:[%s3 + $0x4c] sm:$0xf]
  %v846 = vld [vmem:[%s3 + $0x50] sm:$0xf]
  %v847 = vld [vmem:[%s3 + $0x54] sm:$0xf]
  %v848 = vld [vmem:[%s3 + $0x58] sm:$0xf]
  %v849 = vld [vmem:[%s3 + $0x5c] sm:$0xf]
  %v850 = vld [vmem:[%s3 + $0x60] sm:$0xf]
  %v851 = vld [vmem:[%s3 + $0x64] sm:$0xf]
  %v852 = vld [vmem:[%s3 + $0x68] sm:$0xf]
  %v853 = vld [vmem:[%s3 + $0x6c] sm:$0xf]
  %v854 = vld [vmem:[%s3 + $0x70] sm:$0xf]
  %v855 = vld [vmem:[%s3 + $0x74] sm:$0xf]
  %v856 = vld [vmem:[%s3 + $0x78] sm:$0xf]
  %v857 = vld [vmem:[%s3 + $0x7c] sm:$0xf]
  %v858 = vld [vmem:[%s3 + $0x80] sm:$0xf]
  %v859 = vld [vmem:[%s3 + $0x84] sm:$0xf]
  %v860 = vld [vmem:[%s3 + $0x88] sm:$0xf]
  %v861 = vld [vmem:[%s3 + $0x8c] sm:$0xf]
  %v862 = vld [vmem:[%s3 + $0x90] sm:$0xf]
  %v863 = vld [vmem:[%s3 + $0x94] sm:$0xf]
  %v864 = vld [vmem:[%s3 + $0x98] sm:$0xf]
  %v865 = vld [vmem:[%s3 + $0x9c] sm:$0xf]
  %v866 = vld [vmem:[%s3 + $0xa0] sm:$0xf]
  %v867 = vld [vmem:[%s3 + $0xa4] sm:$0xf]
  %v868 = vld [vmem:[%s3 + $0xa8] sm:$0xf]
  %v869 = vld [vmem:[%s3 + $0xac] sm:$0xf]
  %v870 = vld [vmem:[%s3 + $0xb0] sm:$0xf]
  %v871 = vld [vmem:[%s3 + $0xb4] sm:$0xf]
  %v872 = vld [vmem:[%s3 + $0xb8] sm:$0xf]
  %v873 = vld [vmem:[%s3 + $0xbc] sm:$0xf]
  %v874 = vld [vmem:[%s3 + $0xc0] sm:$0xf]
  %v875 = vld [vmem:[%s3 + $0xc4] sm:$0xf]
  %v876 = vld [vmem:[%s3 + $0xc8] sm:$0xf]
  %v877 = vld [vmem:[%s3 + $0xcc] sm:$0xf]
  %v878 = vld [vmem:[%s3 + $0xd0] sm:$0xf]
  %v879 = vld [vmem:[%s3 + $0xd4] sm:$0xf]
  %v880 = vld [vmem:[%s3 + $0xd8] sm:$0xf]
  %v881 = vld [vmem:[%s3 + $0xdc] sm:$0xf]
  %v882 = vld [vmem:[%s3 + $0xe0] sm:$0xf]
  %v883 = vld [vmem:[%s3 + $0xe4] sm:$0xf]
  %v884 = vld [vmem:[%s3 + $0xe8] sm:$0xf]
  %v885 = vld [vmem:[%s3 + $0xec] sm:$0xf]
  %v886 = vld [vmem:[%s3 + $0xf0] sm:$0xf]
  %v887 = vld [vmem:[%s3 + $0xf4] sm:$0xf]
  %v888 = vld [vmem:[%s3 + $0xf8] sm:$0xf]
  %v889 = vld [vmem:[%s3 + $0xfc] sm:$0xf]
  %v890 = vunpack.c.l.bf16 %v826
  %v891 = vunpack.c.l.bf16 %v827
  %v892 = vunpack.c.l.bf16 %v828
  %v893 = vunpack.c.l.bf16 %v829
  %v894 = vunpack.c.l.bf16 %v830
  %v895 = vunpack.c.l.bf16 %v831
  %v896 = vunpack.c.l.bf16 %v832
  %v897 = vunpack.c.l.bf16 %v833
  %v898 = vunpack.c.l.bf16 %v834
  %v899 = vunpack.c.l.bf16 %v835
  %v900 = vunpack.c.l.bf16 %v836
  %v901 = vunpack.c.l.bf16 %v837
  %v902 = vunpack.c.l.bf16 %v838
  %v903 = vunpack.c.l.bf16 %v839
  %v904 = vunpack.c.l.bf16 %v840
  %v905 = vunpack.c.l.bf16 %v841
  %v906 = vunpack.c.l.bf16 %v842
  %v907 = vunpack.c.l.bf16 %v843
  %v908 = vunpack.c.l.bf16 %v844
  %v909 = vunpack.c.l.bf16 %v845
  %v910 = vunpack.c.l.bf16 %v846
  %v911 = vunpack.c.l.bf16 %v847
  %v912 = vunpack.c.l.bf16 %v848
  %v913 = vunpack.c.l.bf16 %v849
  %v914 = vunpack.c.l.bf16 %v850
  %v915 = vunpack.c.l.bf16 %v851
  %v916 = vunpack.c.l.bf16 %v852
  %v917 = vunpack.c.l.bf16 %v853
  %v918 = vunpack.c.l.bf16 %v854
  %v919 = vunpack.c.l.bf16 %v855
  %v920 = vunpack.c.l.bf16 %v856
  %v921 = vunpack.c.l.bf16 %v857
  %v922 = vunpack.c.l.bf16 %v858
  %v923 = vunpack.c.l.bf16 %v859
  %v924 = vunpack.c.l.bf16 %v860
  %v925 = vunpack.c.l.bf16 %v861
  %v926 = vunpack.c.l.bf16 %v862
  %v927 = vunpack.c.l.bf16 %v863
  %v928 = vunpack.c.l.bf16 %v864
  %v929 = vunpack.c.l.bf16 %v865
  %v930 = vunpack.c.l.bf16 %v866
  %v931 = vunpack.c.l.bf16 %v867
  %v932 = vunpack.c.l.bf16 %v868
  %v933 = vunpack.c.l.bf16 %v869
  %v934 = vunpack.c.l.bf16 %v870
  %v935 = vunpack.c.l.bf16 %v871
  %v936 = vunpack.c.l.bf16 %v872
  %v937 = vunpack.c.l.bf16 %v873
  %v938 = vunpack.c.l.bf16 %v874
  %v939 = vunpack.c.l.bf16 %v875
  %v940 = vunpack.c.l.bf16 %v876
  %v941 = vunpack.c.l.bf16 %v877
  %v942 = vunpack.c.l.bf16 %v878
  %v943 = vunpack.c.l.bf16 %v879
  %v944 = vunpack.c.l.bf16 %v880
  %v945 = vunpack.c.l.bf16 %v881
  %v946 = vunpack.c.l.bf16 %v882
  %v947 = vunpack.c.l.bf16 %v883
  %v948 = vunpack.c.l.bf16 %v884
  %v949 = vunpack.c.l.bf16 %v885
  %v950 = vunpack.c.l.bf16 %v886
  %v951 = vunpack.c.l.bf16 %v887
  %v952 = vunpack.c.l.bf16 %v888
  %v953 = vunpack.c.l.bf16 %v889
  %v954 = vadd.f32 %v572, %v890
  %v955 = vadd.f32 %v575, %v891
  %v956 = vadd.f32 %v580, %v892
  %v957 = vadd.f32 %v583, %v893
  %v958 = vadd.f32 %v588, %v894
  %v959 = vadd.f32 %v591, %v895
  %v960 = vadd.f32 %v596, %v896
  %v961 = vadd.f32 %v599, %v897
  %v962 = vadd.f32 %v604, %v898
  %v963 = vadd.f32 %v607, %v899
  %v964 = vadd.f32 %v612, %v900
  %v965 = vadd.f32 %v615, %v901
  %v966 = vadd.f32 %v620, %v902
  %v967 = vadd.f32 %v623, %v903
  %v968 = vadd.f32 %v628, %v904
  %v969 = vadd.f32 %v631, %v905
  %v970 = vadd.f32 %v636, %v906
  %v971 = vadd.f32 %v639, %v907
  %v972 = vadd.f32 %v644, %v908
  %v973 = vadd.f32 %v647, %v909
  %v974 = vadd.f32 %v652, %v910
  %v975 = vadd.f32 %v655, %v911
  %v976 = vadd.f32 %v660, %v912
  %v977 = vadd.f32 %v663, %v913
  %v978 = vadd.f32 %v668, %v914
  %v979 = vadd.f32 %v671, %v915
  %v980 = vadd.f32 %v676, %v916
  %v981 = vadd.f32 %v679, %v917
  %v982 = vadd.f32 %v684, %v918
  %v983 = vadd.f32 %v687, %v919
  %v984 = vadd.f32 %v692, %v920
  %v985 = vadd.f32 %v695, %v921
  %v986 = vadd.f32 %v700, %v922
  %v987 = vadd.f32 %v703, %v923
  %v988 = vadd.f32 %v708, %v924
  %v989 = vadd.f32 %v711, %v925
  %v990 = vadd.f32 %v716, %v926
  %v991 = vadd.f32 %v719, %v927
  %v992 = vadd.f32 %v724, %v928
  %v993 = vadd.f32 %v727, %v929
  %v994 = vadd.f32 %v732, %v930
  %v995 = vadd.f32 %v735, %v931
  %v996 = vadd.f32 %v740, %v932
  %v997 = vadd.f32 %v743, %v933
  %v998 = vadd.f32 %v748, %v934
  %v999 = vadd.f32 %v751, %v935
  %v1000 = vadd.f32 %v756, %v936
  %v1001 = vadd.f32 %v759, %v937
  %v1002 = vadd.f32 %v764, %v938
  %v1003 = vadd.f32 %v767, %v939
  %v1004 = vadd.f32 %v772, %v940
  %v1005 = vadd.f32 %v775, %v941
  %v1006 = vadd.f32 %v780, %v942
  %v1007 = vadd.f32 %v783, %v943
  %v1008 = vadd.f32 %v788, %v944
  %v1009 = vadd.f32 %v791, %v945
  %v1010 = vadd.f32 %v796, %v946
  %v1011 = vadd.f32 %v799, %v947
  %v1012 = vadd.f32 %v804, %v948
  %v1013 = vadd.f32 %v807, %v949
  %v1014 = vadd.f32 %v812, %v950
  %v1015 = vadd.f32 %v815, %v951
  %v1016 = vadd.f32 %v820, %v952
  %v1017 = vadd.f32 %v823, %v953
  %v1018 = vmax.f32 %v954, 0.0
  %v1019 = vmax.f32 %v955, 0.0
  %v1020 = vmax.f32 %v956, 0.0
  %v1021 = vmax.f32 %v957, 0.0
  %v1022 = vmax.f32 %v958, 0.0
  %v1023 = vmax.f32 %v959, 0.0
  %v1024 = vmax.f32 %v960, 0.0
  %v1025 = vmax.f32 %v961, 0.0
  %v1026 = vmax.f32 %v962, 0.0
  %v1027 = vmax.f32 %v963, 0.0
  %v1028 = vmax.f32 %v964, 0.0
  %v1029 = vmax.f32 %v965, 0.0
  %v1030 = vmax.f32 %v966, 0.0
  %v1031 = vmax.f32 %v967, 0.0
  %v1032 = vmax.f32 %v968, 0.0
  %v1033 = vmax.f32 %v969, 0.0
  %v1034 = vmax.f32 %v970, 0.0
  %v1035 = vmax.f32 %v971, 0.0
  %v1036 = vmax.f32 %v972, 0.0
  %v1037 = vmax.f32 %v973, 0.0
  %v1038 = vmax.f32 %v974, 0.0
  %v1039 = vmax.f32 %v975, 0.0
  %v1040 = vmax.f32 %v976, 0.0
  %v1041 = vmax.f32 %v977, 0.0
  %v1042 = vmax.f32 %v978, 0.0
  %v1043 = vmax.f32 %v979, 0.0
  %v1044 = vmax.f32 %v980, 0.0
  %v1045 = vmax.f32 %v981, 0.0
  %v1046 = vmax.f32 %v982, 0.0
  %v1047 = vmax.f32 %v983, 0.0
  %v1048 = vmax.f32 %v984, 0.0
  %v1049 = vmax.f32 %v985, 0.0
  %v1050 = vmax.f32 %v986, 0.0
  %v1051 = vmax.f32 %v987, 0.0
  %v1052 = vmax.f32 %v988, 0.0
  %v1053 = vmax.f32 %v989, 0.0
  %v1054 = vmax.f32 %v990, 0.0
  %v1055 = vmax.f32 %v991, 0.0
  %v1056 = vmax.f32 %v992, 0.0
  %v1057 = vmax.f32 %v993, 0.0
  %v1058 = vmax.f32 %v994, 0.0
  %v1059 = vmax.f32 %v995, 0.0
  %v1060 = vmax.f32 %v996, 0.0
  %v1061 = vmax.f32 %v997, 0.0
  %v1062 = vmax.f32 %v998, 0.0
  %v1063 = vmax.f32 %v999, 0.0
  %v1064 = vmax.f32 %v1000, 0.0
  %v1065 = vmax.f32 %v1001, 0.0
  %v1066 = vmax.f32 %v1002, 0.0
  %v1067 = vmax.f32 %v1003, 0.0
  %v1068 = vmax.f32 %v1004, 0.0
  %v1069 = vmax.f32 %v1005, 0.0
  %v1070 = vmax.f32 %v1006, 0.0
  %v1071 = vmax.f32 %v1007, 0.0
  %v1072 = vmax.f32 %v1008, 0.0
  %v1073 = vmax.f32 %v1009, 0.0
  %v1074 = vmax.f32 %v1010, 0.0
  %v1075 = vmax.f32 %v1011, 0.0
  %v1076 = vmax.f32 %v1012, 0.0
  %v1077 = vmax.f32 %v1013, 0.0
  %v1078 = vmax.f32 %v1014, 0.0
  %v1079 = vmax.f32 %v1015, 0.0
  %v1080 = vmax.f32 %v1016, 0.0
  %v1081 = vmax.f32 %v1017, 0.0
  %v1082 = vpack.c.bf16 %v1019, %v1018
  %v1083 = vpack.c.bf16 %v1021, %v1020
  %v1084 = vpack.c.bf16 %v1023, %v1022
  %v1085 = vpack.c.bf16 %v1025, %v1024
  %v1086 = vpack.c.bf16 %v1027, %v1026
  %v1087 = vpack.c.bf16 %v1029, %v1028
  %v1088 = vpack.c.bf16 %v1031, %v1030
  %v1089 = vpack.c.bf16 %v1033, %v1032
  %v1090 = vpack.c.bf16 %v1035, %v1034
  %v1091 = vpack.c.bf16 %v1037, %v1036
  %v1092 = vpack.c.bf16 %v1039, %v1038
  %v1093 = vpack.c.bf16 %v1041, %v1040
  %v1094 = vpack.c.bf16 %v1043, %v1042
  %v1095 = vpack.c.bf16 %v1045, %v1044
  %v1096 = vpack.c.bf16 %v1047, %v1046
  %v1097 = vpack.c.bf16 %v1049, %v1048
  %v1098 = vpack.c.bf16 %v1051, %v1050
  %v1099 = vpack.c.bf16 %v1053, %v1052
  %v1100 = vpack.c.bf16 %v1055, %v1054
  %v1101 = vpack.c.bf16 %v1057, %v1056
  %v1102 = vpack.c.bf16 %v1059, %v1058
  %v1103 = vpack.c.bf16 %v1061, %v1060
  %v1104 = vpack.c.bf16 %v1063, %v1062
  %v1105 = vpack.c.bf16 %v1065, %v1064
  %v1106 = vpack.c.bf16 %v1067, %v1066
  %v1107 = vpack.c.bf16 %v1069, %v1068
  %v1108 = vpack.c.bf16 %v1071, %v1070
  %v1109 = vpack.c.bf16 %v1073, %v1072
  %v1110 = vpack.c.bf16 %v1075, %v1074
  %v1111 = vpack.c.bf16 %v1077, %v1076
  %v1112 = vpack.c.bf16 %v1079, %v1078
  %v1113 = vpack.c.bf16 %v1081, %v1080
  %v1146 = vunpack.c.l.b16 %v1082
  %v1147 = vunpack.c.h.b16 %v1082
  %v1148 = vunpack.c.l.b16 %v1083
  %v1149 = vunpack.c.h.b16 %v1083
  %v1150 = vunpack.c.l.b16 %v1084
  %v1151 = vunpack.c.h.b16 %v1084
  %v1152 = vunpack.c.l.b16 %v1085
  %v1153 = vunpack.c.h.b16 %v1085
  %v1154 = vunpack.c.l.b16 %v1086
  %v1155 = vunpack.c.h.b16 %v1086
  %v1156 = vunpack.c.l.b16 %v1087
  %v1157 = vunpack.c.h.b16 %v1087
  %v1158 = vunpack.c.l.b16 %v1088
  %v1159 = vunpack.c.h.b16 %v1088
  %v1160 = vunpack.c.l.b16 %v1089
  %v1161 = vunpack.c.h.b16 %v1089
  %v1162 = vunpack.c.l.b16 %v1090
  %v1163 = vunpack.c.h.b16 %v1090
  %v1164 = vunpack.c.l.b16 %v1091
  %v1165 = vunpack.c.h.b16 %v1091
  %v1166 = vunpack.c.l.b16 %v1092
  %v1167 = vunpack.c.h.b16 %v1092
  %v1168 = vunpack.c.l.b16 %v1093
  %v1169 = vunpack.c.h.b16 %v1093
  %v1170 = vunpack.c.l.b16 %v1094
  %v1171 = vunpack.c.h.b16 %v1094
  %v1172 = vunpack.c.l.b16 %v1095
  %v1173 = vunpack.c.h.b16 %v1095
  %v1174 = vunpack.c.l.b16 %v1096
  %v1175 = vunpack.c.h.b16 %v1096
  %v1176 = vunpack.c.l.b16 %v1097
  %v1177 = vunpack.c.h.b16 %v1097
  %v1178 = vunpack.c.l.b16 %v1098
  %v1179 = vunpack.c.h.b16 %v1098
  %v1180 = vunpack.c.l.b16 %v1099
  %v1181 = vunpack.c.h.b16 %v1099
  %v1182 = vunpack.c.l.b16 %v1100
  %v1183 = vunpack.c.h.b16 %v1100
  %v1184 = vunpack.c.l.b16 %v1101
  %v1185 = vunpack.c.h.b16 %v1101
  %v1186 = vunpack.c.l.b16 %v1102
  %v1187 = vunpack.c.h.b16 %v1102
  %v1188 = vunpack.c.l.b16 %v1103
  %v1189 = vunpack.c.h.b16 %v1103
  %v1190 = vunpack.c.l.b16 %v1104
  %v1191 = vunpack.c.h.b16 %v1104
  %v1192 = vunpack.c.l.b16 %v1105
  %v1193 = vunpack.c.h.b16 %v1105
  %v1194 = vunpack.c.l.b16 %v1106
  %v1195 = vunpack.c.h.b16 %v1106
  %v1196 = vunpack.c.l.b16 %v1107
  %v1197 = vunpack.c.h.b16 %v1107
  %v1198 = vunpack.c.l.b16 %v1108
  %v1199 = vunpack.c.h.b16 %v1108
  %v1200 = vunpack.c.l.b16 %v1109
  %v1201 = vunpack.c.h.b16 %v1109
  %v1202 = vunpack.c.l.b16 %v1110
  %v1203 = vunpack.c.h.b16 %v1110
  %v1204 = vunpack.c.l.b16 %v1111
  %v1205 = vunpack.c.h.b16 %v1111
  %v1206 = vunpack.c.l.b16 %v1112
  %v1207 = vunpack.c.h.b16 %v1112
  %v1208 = vunpack.c.l.b16 %v1113
  %v1209 = vunpack.c.h.b16 %v1113
  %v1210 = vpack.c.b16 %v1146, %v1146
  %v1211 = vpack.c.b16 %v1147, %v1147
  %v1212 = vpack.c.b16 %v1148, %v1148
  %v1213 = vpack.c.b16 %v1149, %v1149
  %v1214 = vpack.c.b16 %v1150, %v1150
  %v1215 = vpack.c.b16 %v1151, %v1151
  %v1216 = vpack.c.b16 %v1152, %v1152
  %v1217 = vpack.c.b16 %v1153, %v1153
  %v1218 = vpack.c.b16 %v1154, %v1154
  %v1219 = vpack.c.b16 %v1155, %v1155
  %v1220 = vpack.c.b16 %v1156, %v1156
  %v1221 = vpack.c.b16 %v1157, %v1157
  %v1222 = vpack.c.b16 %v1158, %v1158
  %v1223 = vpack.c.b16 %v1159, %v1159
  %v1224 = vpack.c.b16 %v1160, %v1160
  %v1225 = vpack.c.b16 %v1161, %v1161
  %v1226 = vpack.c.b16 %v1162, %v1162
  %v1227 = vpack.c.b16 %v1163, %v1163
  %v1228 = vpack.c.b16 %v1164, %v1164
  %v1229 = vpack.c.b16 %v1165, %v1165
  %v1230 = vpack.c.b16 %v1166, %v1166
  %v1231 = vpack.c.b16 %v1167, %v1167
  %v1232 = vpack.c.b16 %v1168, %v1168
  %v1233 = vpack.c.b16 %v1169, %v1169
  %v1234 = vpack.c.b16 %v1170, %v1170
  %v1235 = vpack.c.b16 %v1171, %v1171
  %v1236 = vpack.c.b16 %v1172, %v1172
  %v1237 = vpack.c.b16 %v1173, %v1173
  %v1238 = vpack.c.b16 %v1174, %v1174
  %v1239 = vpack.c.b16 %v1175, %v1175
  %v1240 = vpack.c.b16 %v1176, %v1176
  %v1241 = vpack.c.b16 %v1177, %v1177
  %v1242 = vpack.c.b16 %v1178, %v1178
  %v1243 = vpack.c.b16 %v1179, %v1179
  %v1244 = vpack.c.b16 %v1180, %v1180
  %v1245 = vpack.c.b16 %v1181, %v1181
  %v1246 = vpack.c.b16 %v1182, %v1182
  %v1247 = vpack.c.b16 %v1183, %v1183
  %v1248 = vpack.c.b16 %v1184, %v1184
  %v1249 = vpack.c.b16 %v1185, %v1185
  %v1250 = vpack.c.b16 %v1186, %v1186
  %v1251 = vpack.c.b16 %v1187, %v1187
  %v1252 = vpack.c.b16 %v1188, %v1188
  %v1253 = vpack.c.b16 %v1189, %v1189
  %v1254 = vpack.c.b16 %v1190, %v1190
  %v1255 = vpack.c.b16 %v1191, %v1191
  %v1256 = vpack.c.b16 %v1192, %v1192
  %v1257 = vpack.c.b16 %v1193, %v1193
  %v1258 = vpack.c.b16 %v1194, %v1194
  %v1259 = vpack.c.b16 %v1195, %v1195
  %v1260 = vpack.c.b16 %v1196, %v1196
  %v1261 = vpack.c.b16 %v1197, %v1197
  %v1262 = vpack.c.b16 %v1198, %v1198
  %v1263 = vpack.c.b16 %v1199, %v1199
  %v1264 = vpack.c.b16 %v1200, %v1200
  %v1265 = vpack.c.b16 %v1201, %v1201
  %v1266 = vpack.c.b16 %v1202, %v1202
  %v1267 = vpack.c.b16 %v1203, %v1203
  %v1268 = vpack.c.b16 %v1204, %v1204
  %v1269 = vpack.c.b16 %v1205, %v1205
  %v1270 = vpack.c.b16 %v1206, %v1206
  %v1271 = vpack.c.b16 %v1207, %v1207
  %v1272 = vpack.c.b16 %v1208, %v1208
  %v1273 = vpack.c.b16 %v1209, %v1209
  %1338 = vst [vmem:[%s4] sm:$0xf] %v1210
  %1339 = vst [vmem:[%s4 + $0x4] sm:$0xf] %v1211
  %1340 = vst [vmem:[%s4 + $0x8] sm:$0xf] %v1212
  %1341 = vst [vmem:[%s4 + $0xc] sm:$0xf] %v1213
  %1342 = vst [vmem:[%s4 + $0x10] sm:$0xf] %v1214
  %1343 = vst [vmem:[%s4 + $0x14] sm:$0xf] %v1215
  %1344 = vst [vmem:[%s4 + $0x18] sm:$0xf] %v1216
  %1345 = vst [vmem:[%s4 + $0x1c] sm:$0xf] %v1217
  %1346 = vst [vmem:[%s4 + $0x20] sm:$0xf] %v1218
  %1347 = vst [vmem:[%s4 + $0x24] sm:$0xf] %v1219
  %1348 = vst [vmem:[%s4 + $0x28] sm:$0xf] %v1220
  %1349 = vst [vmem:[%s4 + $0x2c] sm:$0xf] %v1221
  %1350 = vst [vmem:[%s4 + $0x30] sm:$0xf] %v1222
  %1351 = vst [vmem:[%s4 + $0x34] sm:$0xf] %v1223
  %1352 = vst [vmem:[%s4 + $0x38] sm:$0xf] %v1224
  %1353 = vst [vmem:[%s4 + $0x3c] sm:$0xf] %v1225
  %1354 = vst [vmem:[%s4 + $0x40] sm:$0xf] %v1226
  %1355 = vst [vmem:[%s4 + $0x44] sm:$0xf] %v1227
  %1356 = vst [vmem:[%s4 + $0x48] sm:$0xf] %v1228
  %1357 = vst [vmem:[%s4 + $0x4c] sm:$0xf] %v1229
  %1358 = vst [vmem:[%s4 + $0x50] sm:$0xf] %v1230
  %1359 = vst [vmem:[%s4 + $0x54] sm:$0xf] %v1231
  %1360 = vst [vmem:[%s4 + $0x58] sm:$0xf] %v1232
  %1361 = vst [vmem:[%s4 + $0x5c] sm:$0xf] %v1233
  %1362 = vst [vmem:[%s4 + $0x60] sm:$0xf] %v1234
  %1363 = vst [vmem:[%s4 + $0x64] sm:$0xf] %v1235
  %1364 = vst [vmem:[%s4 + $0x68] sm:$0xf] %v1236
  %1365 = vst [vmem:[%s4 + $0x6c] sm:$0xf] %v1237
  %1366 = vst [vmem:[%s4 + $0x70] sm:$0xf] %v1238
  %1367 = vst [vmem:[%s4 + $0x74] sm:$0xf] %v1239
  %1368 = vst [vmem:[%s4 + $0x78] sm:$0xf] %v1240
  %1369 = vst [vmem:[%s4 + $0x7c] sm:$0xf] %v1241
  %1370 = vst [vmem:[%s4 + $0x80] sm:$0xf] %v1242
  %1371 = vst [vmem:[%s4 + $0x84] sm:$0xf] %v1243
  %1372 = vst [vmem:[%s4 + $0x88] sm:$0xf] %v1244
  %1373 = vst [vmem:[%s4 + $0x8c] sm:$0xf] %v1245
  %1374 = vst [vmem:[%s4 + $0x90] sm:$0xf] %v1246
  %1375 = vst [vmem:[%s4 + $0x94] sm:$0xf] %v1247
  %1376 = vst [vmem:[%s4 + $0x98] sm:$0xf] %v1248
  %1377 = vst [vmem:[%s4 + $0x9c] sm:$0xf] %v1249
  %1378 = vst [vmem:[%s4 + $0xa0] sm:$0xf] %v1250
  %1379 = vst [vmem:[%s4 + $0xa4] sm:$0xf] %v1251
  %1380 = vst [vmem:[%s4 + $0xa8] sm:$0xf] %v1252
  %1381 = vst [vmem:[%s4 + $0xac] sm:$0xf] %v1253
  %1382 = vst [vmem:[%s4 + $0xb0] sm:$0xf] %v1254
  %1383 = vst [vmem:[%s4 + $0xb4] sm:$0xf] %v1255
  %1384 = vst [vmem:[%s4 + $0xb8] sm:$0xf] %v1256
  %1385 = vst [vmem:[%s4 + $0xbc] sm:$0xf] %v1257
  %1386 = vst [vmem:[%s4 + $0xc0] sm:$0xf] %v1258
  %1387 = vst [vmem:[%s4 + $0xc4] sm:$0xf] %v1259
  %1388 = vst [vmem:[%s4 + $0xc8] sm:$0xf] %v1260
  %1389 = vst [vmem:[%s4 + $0xcc] sm:$0xf] %v1261
  %1390 = vst [vmem:[%s4 + $0xd0] sm:$0xf] %v1262
  %1391 = vst [vmem:[%s4 + $0xd4] sm:$0xf] %v1263
  %1392 = vst [vmem:[%s4 + $0xd8] sm:$0xf] %v1264
  %1393 = vst [vmem:[%s4 + $0xdc] sm:$0xf] %v1265
  %1394 = vst [vmem:[%s4 + $0xe0] sm:$0xf] %v1266
  %1395 = vst [vmem:[%s4 + $0xe4] sm:$0xf] %v1267
  %1396 = vst [vmem:[%s4 + $0xe8] sm:$0xf] %v1268
  %1397 = vst [vmem:[%s4 + $0xec] sm:$0xf] %v1269
  %1398 = vst [vmem:[%s4 + $0xf0] sm:$0xf] %v1270
  %1399 = vst [vmem:[%s4 + $0xf4] sm:$0xf] %v1271
  %1400 = vst [vmem:[%s4 + $0xf8] sm:$0xf] %v1272
  %1401 = vst [vmem:[%s4 + $0xfc] sm:$0xf] %v1273
  // Predicated region
  $region18: #{pose_resnet_forward.23} parent=0 // pred_check
    _
  $region19: #{pose_resnet_forward.23} parent=0 // pred_check_branch
    %1403 = sbr.rel (0) target = $region21
  $region20: #{pose_resnet_forward.23} parent=0 // pred_region
    _
  $region21: #{pose_resnet_forward.23} parent=0 // pred_fallthru
    _
  // Predicated region
  $region22: #{pose_resnet_forward.23} parent=0 // pred_check
    _
  $region23: #{pose_resnet_forward.23} parent=0 // pred_check_branch
    %1405 = sbr.rel (0) target = $region25
  $region24: #{pose_resnet_forward.23} parent=0 // pred_region
    _
  $region25: #{pose_resnet_forward.23} parent=0 // pred_fallthru
    _

// kernel: pose_resnet_forward.26
$region0: #{pose_resnet_forward.26}
  #allocation0 [shape = 'u32[]', space=smem, size = 0x4, offset = 0x4, fixed_abs, tag = 'smem constant byte address 0x4 - core index']
  #allocation1 [shape = 'u32[144,128]{1,0:T(1,128)}', space=vmem, size = 0x12000, scoped, tag = 'internal scratch']
  %s0 = inlined_call_operand.vmem [shape: bf16[128,256], index: 0, kind: input, shape index: {}]
  %s1 = inlined_call_operand.vmem [shape: bf16[256,128], index: 1, kind: input, shape index: {}]
  %s2 = inlined_call_operand.vmem [shape: f32[1,128], index: 2, kind: input, shape index: {}]
  %s3 = inlined_call_operand.vmem [shape: f32[1,128], index: 3, kind: input, shape index: {}]
  %s4 = inlined_call_operand.vmem [shape: bf16[128,128], index: 4, kind: output, shape index: {}]
  %s5 = sld [smem:[#allocation0]]
  $region26: #{pose_resnet_forward.26} parent=0
    _
  %s7 = ssub.s32 1, %s5
  %s8 = scalar_select 0, %s7, %s5
  // Predicated region
  $region2: #{pose_resnet_forward.26} parent=0 // pred_check
    _
  $region3: #{pose_resnet_forward.26} parent=0 // pred_check_branch
    %10 = sbr.rel (0) target = $region5
  $region4: #{pose_resnet_forward.26} parent=0 // pred_region
    _
  $region5: #{pose_resnet_forward.26} parent=0 // pred_fallthru
    _
  // Predicated region
  $region6: #{pose_resnet_forward.26} parent=0 // pred_check
    _
  $region7: #{pose_resnet_forward.26} parent=0 // pred_check_branch
    %12 = sbr.rel (0) target = $region9
  $region8: #{pose_resnet_forward.26} parent=0 // pred_region
    _
  $region9: #{pose_resnet_forward.26} parent=0 // pred_fallthru
    _
  // Predicated region
  $region10: #{pose_resnet_forward.26} parent=0 // pred_check
    _
  $region11: #{pose_resnet_forward.26} parent=0 // pred_check_branch
    %14 = sbr.rel (0) target = $region13
  $region12: #{pose_resnet_forward.26} parent=0 // pred_region
    _
  $region13: #{pose_resnet_forward.26} parent=0 // pred_fallthru
    _
  // Predicated region
  $region14: #{pose_resnet_forward.26} parent=0 // pred_check
    _
  $region15: #{pose_resnet_forward.26} parent=0 // pred_check_branch
    %16 = sbr.rel (0) target = $region17
  $region16: #{pose_resnet_forward.26} parent=0 // pred_region
    _
  $region17: #{pose_resnet_forward.26} parent=0 // pred_fallthru
    _
  %v18 = vld [vmem:[%s0] sm:$0xff]
  %v19 = vld [vmem:[%s0 + $0x8] sm:$0xff]
  %v20 = vld [vmem:[%s0 + $0x10] sm:$0xff]
  %v21 = vld [vmem:[%s0 + $0x18] sm:$0xff]
  %v22 = vld [vmem:[%s0 + $0x20] sm:$0xff]
  %v23 = vld [vmem:[%s0 + $0x28] sm:$0xff]
  %v24 = vld [vmem:[%s0 + $0x30] sm:$0xff]
  %v25 = vld [vmem:[%s0 + $0x38] sm:$0xff]
  %v26 = vld [vmem:[%s0 + $0x40] sm:$0xff]
  %v27 = vld [vmem:[%s0 + $0x48] sm:$0xff]
  %v28 = vld [vmem:[%s0 + $0x50] sm:$0xff]
  %v29 = vld [vmem:[%s0 + $0x58] sm:$0xff]
  %v30 = vld [vmem:[%s0 + $0x60] sm:$0xff]
  %v31 = vld [vmem:[%s0 + $0x68] sm:$0xff]
  %v32 = vld [vmem:[%s0 + $0x70] sm:$0xff]
  %v33 = vld [vmem:[%s0 + $0x78] sm:$0xff]
  %v34 = vld [vmem:[%s1] sm:$0xf]
  %v35 = vld [vmem:[%s1 + $0x4] sm:$0xf]
  %v36 = vld [vmem:[%s1 + $0x8] sm:$0xf]
  %v37 = vld [vmem:[%s1 + $0xc] sm:$0xf]
  %v38 = vld [vmem:[%s1 + $0x10] sm:$0xf]
  %v39 = vld [vmem:[%s1 + $0x14] sm:$0xf]
  %v40 = vld [vmem:[%s1 + $0x18] sm:$0xf]
  %v41 = vld [vmem:[%s1 + $0x1c] sm:$0xf]
  %v42 = vld [vmem:[%s1 + $0x20] sm:$0xf]
  %v43 = vld [vmem:[%s1 + $0x24] sm:$0xf]
  %v44 = vld [vmem:[%s1 + $0x28] sm:$0xf]
  %v45 = vld [vmem:[%s1 + $0x2c] sm:$0xf]
  %v46 = vld [vmem:[%s1 + $0x30] sm:$0xf]
  %v47 = vld [vmem:[%s1 + $0x34] sm:$0xf]
  %v48 = vld [vmem:[%s1 + $0x38] sm:$0xf]
  %v49 = vld [vmem:[%s1 + $0x3c] sm:$0xf]
  %v50 = vld [vmem:[%s1 + $0x40] sm:$0xf]
  %v51 = vld [vmem:[%s1 + $0x44] sm:$0xf]
  %v52 = vld [vmem:[%s1 + $0x48] sm:$0xf]
  %v53 = vld [vmem:[%s1 + $0x4c] sm:$0xf]
  %v54 = vld [vmem:[%s1 + $0x50] sm:$0xf]
  %v55 = vld [vmem:[%s1 + $0x54] sm:$0xf]
  %v56 = vld [vmem:[%s1 + $0x58] sm:$0xf]
  %v57 = vld [vmem:[%s1 + $0x5c] sm:$0xf]
  %v58 = vld [vmem:[%s1 + $0x60] sm:$0xf]
  %v59 = vld [vmem:[%s1 + $0x64] sm:$0xf]
  %v60 = vld [vmem:[%s1 + $0x68] sm:$0xf]
  %v61 = vld [vmem:[%s1 + $0x6c] sm:$0xf]
  %v62 = vld [vmem:[%s1 + $0x70] sm:$0xf]
  %v63 = vld [vmem:[%s1 + $0x74] sm:$0xf]
  %v64 = vld [vmem:[%s1 + $0x78] sm:$0xf]
  %v65 = vld [vmem:[%s1 + $0x7c] sm:$0xf]
  %v66 = vld [vmem:[%s2] sm:$0x1]
  %v68 = vlaneseq
  %v69 = vshrl.u32 %v68, 7
  %v70 = vsub.s32 0, %v69
  %v71 = vrot.slane %v66, %v70
  %v89 = vunpack.c.l.b16 %v18
  %v90 = vunpack.c.h.b16 %v18
  %v91 = vunpack.c.l.b16 %v19
  %v92 = vunpack.c.h.b16 %v19
  %v93 = vunpack.c.l.b16 %v20
  %v94 = vunpack.c.h.b16 %v20
  %v95 = vunpack.c.l.b16 %v21
  %v96 = vunpack.c.h.b16 %v21
  %v97 = vunpack.c.l.b16 %v22
  %v98 = vunpack.c.h.b16 %v22
  %v99 = vunpack.c.l.b16 %v23
  %v100 = vunpack.c.h.b16 %v23
  %v101 = vunpack.c.l.b16 %v24
  %v102 = vunpack.c.h.b16 %v24
  %v103 = vunpack.c.l.b16 %v25
  %v104 = vunpack.c.h.b16 %v25
  %v105 = vunpack.c.l.b16 %v26
  %v106 = vunpack.c.h.b16 %v26
  %v107 = vunpack.c.l.b16 %v27
  %v108 = vunpack.c.h.b16 %v27
  %v109 = vunpack.c.l.b16 %v28
  %v110 = vunpack.c.h.b16 %v28
  %v111 = vunpack.c.l.b16 %v29
  %v112 = vunpack.c.h.b16 %v29
  %v113 = vunpack.c.l.b16 %v30
  %v114 = vunpack.c.h.b16 %v30
  %v115 = vunpack.c.l.b16 %v31
  %v116 = vunpack.c.h.b16 %v31
  %v117 = vunpack.c.l.b16 %v32
  %v118 = vunpack.c.h.b16 %v32
  %v119 = vunpack.c.l.b16 %v33
  %v120 = vunpack.c.h.b16 %v33
  %v121 = vpack.c.b16 %v91, %v89
  %v122 = vpack.c.b16 %v92, %v90
  %v123 = vpack.c.b16 %v95, %v93
  %v124 = vpack.c.b16 %v96, %v94
  %v125 = vpack.c.b16 %v99, %v97
  %v126 = vpack.c.b16 %v100, %v98
  %v127 = vpack.c.b16 %v103, %v101
  %v128 = vpack.c.b16 %v104, %v102
  %v129 = vpack.c.b16 %v107, %v105
  %v130 = vpack.c.b16 %v108, %v106
  %v131 = vpack.c.b16 %v111, %v109
  %v132 = vpack.c.b16 %v112, %v110
  %v133 = vpack.c.b16 %v115, %v113
  %v134 = vpack.c.b16 %v116, %v114
  %v135 = vpack.c.b16 %v119, %v117
  %v136 = vpack.c.b16 %v120, %v118
  %v185 = vunpack.c.l.b16 %v34
  %v186 = vunpack.c.l.b16 %v35
  %v187 = vunpack.c.l.b16 %v36
  %v188 = vunpack.c.l.b16 %v37
  %v189 = vunpack.c.l.b16 %v38
  %v190 = vunpack.c.l.b16 %v39
  %v191 = vunpack.c.l.b16 %v40
  %v192 = vunpack.c.l.b16 %v41
  %v193 = vunpack.c.l.b16 %v42
  %v194 = vunpack.c.l.b16 %v43
  %v195 = vunpack.c.l.b16 %v44
  %v196 = vunpack.c.l.b16 %v45
  %v197 = vunpack.c.l.b16 %v46
  %v198 = vunpack.c.l.b16 %v47
  %v199 = vunpack.c.l.b16 %v48
  %v200 = vunpack.c.l.b16 %v49
  %v201 = vunpack.c.l.b16 %v50
  %v202 = vunpack.c.l.b16 %v51
  %v203 = vunpack.c.l.b16 %v52
  %v204 = vunpack.c.l.b16 %v53
  %v205 = vunpack.c.l.b16 %v54
  %v206 = vunpack.c.l.b16 %v55
  %v207 = vunpack.c.l.b16 %v56
  %v208 = vunpack.c.l.b16 %v57
  %v209 = vunpack.c.l.b16 %v58
  %v210 = vunpack.c.l.b16 %v59
  %v211 = vunpack.c.l.b16 %v60
  %v212 = vunpack.c.l.b16 %v61
  %v213 = vunpack.c.l.b16 %v62
  %v214 = vunpack.c.l.b16 %v63
  %v215 = vunpack.c.l.b16 %v64
  %v216 = vunpack.c.l.b16 %v65
  %v217 = vpack.c.b16 %v186, %v185
  %v218 = vpack.c.b16 %v188, %v187
  %v219 = vpack.c.b16 %v190, %v189
  %v220 = vpack.c.b16 %v192, %v191
  %v221 = vpack.c.b16 %v194, %v193
  %v222 = vpack.c.b16 %v196, %v195
  %v223 = vpack.c.b16 %v198, %v197
  %v224 = vpack.c.b16 %v200, %v199
  %v225 = vpack.c.b16 %v202, %v201
  %v226 = vpack.c.b16 %v204, %v203
  %v227 = vpack.c.b16 %v206, %v205
  %v228 = vpack.c.b16 %v208, %v207
  %v229 = vpack.c.b16 %v210, %v209
  %v230 = vpack.c.b16 %v212, %v211
  %v231 = vpack.c.b16 %v214, %v213
  %v232 = vpack.c.b16 %v216, %v215
  %249 = vmatprep.subr.bf16.mxu0 0
  %250 = vmatpush1.bf16.msra.mxu0 %v217
  %251 = vmatprep.subr.bf16.mxu0 0
  %252 = vmatpush1.bf16.msra.mxu0 %v218
  %253 = vmatprep.subr.bf16.mxu0 0
  %254 = vmatpush1.bf16.msra.mxu0 %v219
  %255 = vmatprep.subr.bf16.mxu0 0
  %256 = vmatpush1.bf16.msra.mxu0 %v220
  %257 = vmatprep.subr.bf16.mxu0 0
  %258 = vmatpush1.bf16.msra.mxu0 %v221
  %259 = vmatprep.subr.bf16.mxu0 0
  %260 = vmatpush1.bf16.msra.mxu0 %v222
  %261 = vmatprep.subr.bf16.mxu0 0
  %262 = vmatpush1.bf16.msra.mxu0 %v223
  %263 = vmatprep.subr.bf16.mxu0 0
  %264 = vmatpush1.bf16.msra.mxu0 %v224
  %265 = vmatprep.subr.bf16.mxu0 0
  %266 = vmatpush1.bf16.msra.mxu0 %v225
  %267 = vmatprep.subr.bf16.mxu0 0
  %268 = vmatpush1.bf16.msra.mxu0 %v226
  %269 = vmatprep.subr.bf16.mxu0 0
  %270 = vmatpush1.bf16.msra.mxu0 %v227
  %271 = vmatprep.subr.bf16.mxu0 0
  %272 = vmatpush1.bf16.msra.mxu0 %v228
  %273 = vmatprep.subr.bf16.mxu0 0
  %274 = vmatpush1.bf16.msra.mxu0 %v229
  %275 = vmatprep.subr.bf16.mxu0 0
  %276 = vmatpush1.bf16.msra.mxu0 %v230
  %277 = vmatprep.subr.bf16.mxu0 0
  %278 = vmatpush1.bf16.msra.mxu0 %v231
  %279 = vmatprep.subr.bf16.mxu0 0
  %280 = vmatpush1.bf16.msra.mxu0 %v232
  %281 = vmatprep.mubr.bf16.mxu0 %v122
  %282 = vmatmul.mubr.bf16.gmra.mrb[0].mxu0 %v121
  %v283 = vpop.f32.mrb[0].mxu0
  %v284 = vadd.f32 %v71, %v283
  %v285 = vpop.f32.mrb[0].mxu0
  %v286 = vpop.f32.mrb[0].mxu0
  %v287 = vadd.f32 %v71, %v286
  %v288 = vpop.f32.mrb[0].mxu0
  %289 = vmatprep.mubr.bf16.mxu0 %v124
  %290 = vmatmul.mubr.bf16.gmra.mrb[0].mxu0 %v123
  %v291 = vpop.f32.mrb[0].mxu0
  %v292 = vadd.f32 %v71, %v291
  %v293 = vpop.f32.mrb[0].mxu0
  %v294 = vpop.f32.mrb[0].mxu0
  %v295 = vadd.f32 %v71, %v294
  %v296 = vpop.f32.mrb[0].mxu0
  %297 = vmatprep.mubr.bf16.mxu0 %v126
  %298 = vmatmul.mubr.bf16.gmra.mrb[0].mxu0 %v125
  %v299 = vpop.f32.mrb[0].mxu0
  %v300 = vadd.f32 %v71, %v299
  %v301 = vpop.f32.mrb[0].mxu0
  %v302 = vpop.f32.mrb[0].mxu0
  %v303 = vadd.f32 %v71, %v302
  %v304 = vpop.f32.mrb[0].mxu0
  %305 = vmatprep.mubr.bf16.mxu0 %v128
  %306 = vmatmul.mubr.bf16.gmra.mrb[0].mxu0 %v127
  %v307 = vpop.f32.mrb[0].mxu0
  %v308 = vadd.f32 %v71, %v307
  %v309 = vpop.f32.mrb[0].mxu0
  %v310 = vpop.f32.mrb[0].mxu0
  %v311 = vadd.f32 %v71, %v310
  %v312 = vpop.f32.mrb[0].mxu0
  %313 = vmatprep.mubr.bf16.mxu0 %v130
  %314 = vmatmul.mubr.bf16.gmra.mrb[0].mxu0 %v129
  %v315 = vpop.f32.mrb[0].mxu0
  %v316 = vadd.f32 %v71, %v315
  %v317 = vpop.f32.mrb[0].mxu0
  %v318 = vpop.f32.mrb[0].mxu0
  %v319 = vadd.f32 %v71, %v318
  %v320 = vpop.f32.mrb[0].mxu0
  %321 = vmatprep.mubr.bf16.mxu0 %v132
  %322 = vmatmul.mubr.bf16.gmra.mrb[0].mxu0 %v131
  %v323 = vpop.f32.mrb[0].mxu0
  %v324 = vadd.f32 %v71, %v323
  %v325 = vpop.f32.mrb[0].mxu0
  %v326 = vpop.f32.mrb[0].mxu0
  %v327 = vadd.f32 %v71, %v326
  %v328 = vpop.f32.mrb[0].mxu0
  %329 = vmatprep.mubr.bf16.mxu0 %v134
  %330 = vmatmul.mubr.bf16.gmra.mrb[0].mxu0 %v133
  %v331 = vpop.f32.mrb[0].mxu0
  %v332 = vadd.f32 %v71, %v331
  %v333 = vpop.f32.mrb[0].mxu0
  %v334 = vpop.f32.mrb[0].mxu0
  %v335 = vadd.f32 %v71, %v334
  %v336 = vpop.f32.mrb[0].mxu0
  %337 = vmatprep.mubr.bf16.mxu0 %v136
  %338 = vmatmul.mubr.bf16.gmra.mrb[0].mxu0 %v135
  %v339 = vpop.f32.mrb[0].mxu0
  %v340 = vadd.f32 %v71, %v339
  %v341 = vpop.f32.mrb[0].mxu0
  %v342 = vpop.f32.mrb[0].mxu0
  %v343 = vadd.f32 %v71, %v342
  %v344 = vpop.f32.mrb[0].mxu0
  %345 = vdwg.mxu0
  %v346 = vld [vmem:[%s3] sm:$0x1]
  %v347 = vmax.f32 %v284, 0.0
  %v348 = vmax.f32 %v287, 0.0
  %v349 = vmax.f32 %v292, 0.0
  %v350 = vmax.f32 %v295, 0.0
  %v351 = vmax.f32 %v300, 0.0
  %v352 = vmax.f32 %v303, 0.0
  %v353 = vmax.f32 %v308, 0.0
  %v354 = vmax.f32 %v311, 0.0
  %v355 = vmax.f32 %v316, 0.0
  %v356 = vmax.f32 %v319, 0.0
  %v357 = vmax.f32 %v324, 0.0
  %v358 = vmax.f32 %v327, 0.0
  %v359 = vmax.f32 %v332, 0.0
  %v360 = vmax.f32 %v335, 0.0
  %v361 = vmax.f32 %v340, 0.0
  %v362 = vmax.f32 %v343, 0.0
  %v364 = vlaneseq
  %v365 = vshrl.u32 %v364, 7
  %v366 = vsub.s32 0, %v365
  %v367 = vrot.slane %v346, %v366
  %v369 = vmul.f32 %v347, %v367
  %v370 = vmul.f32 %v348, %v367
  %v371 = vmul.f32 %v349, %v367
  %v372 = vmul.f32 %v350, %v367
  %v373 = vmul.f32 %v351, %v367
  %v374 = vmul.f32 %v352, %v367
  %v375 = vmul.f32 %v353, %v367
  %v376 = vmul.f32 %v354, %v367
  %v377 = vmul.f32 %v355, %v367
  %v378 = vmul.f32 %v356, %v367
  %v379 = vmul.f32 %v357, %v367
  %v380 = vmul.f32 %v358, %v367
  %v381 = vmul.f32 %v359, %v367
  %v382 = vmul.f32 %v360, %v367
  %v383 = vmul.f32 %v361, %v367
  %v384 = vmul.f32 %v362, %v367
  %v385 = vsub.f32 1.0, %v346
  %v387 = vlaneseq
  %v388 = vshrl.u32 %v387, 7
  %v389 = vsub.s32 0, %v388
  %v390 = vrot.slane %v385, %v389
  %v392 = vmul.f32 %v284, %v390
  %v393 = vmul.f32 %v287, %v390
  %v394 = vmul.f32 %v292, %v390
  %v395 = vmul.f32 %v295, %v390
  %v396 = vmul.f32 %v300, %v390
  %v397 = vmul.f32 %v303, %v390
  %v398 = vmul.f32 %v308, %v390
  %v399 = vmul.f32 %v311, %v390
  %v400 = vmul.f32 %v316, %v390
  %v401 = vmul.f32 %v319, %v390
  %v402 = vmul.f32 %v324, %v390
  %v403 = vmul.f32 %v327, %v390
  %v404 = vmul.f32 %v332, %v390
  %v405 = vmul.f32 %v335, %v390
  %v406 = vmul.f32 %v340, %v390
  %v407 = vmul.f32 %v343, %v390
  %v408 = vadd.f32 %v369, %v392
  %v409 = vadd.f32 %v370, %v393
  %v410 = vadd.f32 %v371, %v394
  %v411 = vadd.f32 %v372, %v395
  %v412 = vadd.f32 %v373, %v396
  %v413 = vadd.f32 %v374, %v397
  %v414 = vadd.f32 %v375, %v398
  %v415 = vadd.f32 %v376, %v399
  %v416 = vadd.f32 %v377, %v400
  %v417 = vadd.f32 %v378, %v401
  %v418 = vadd.f32 %v379, %v402
  %v419 = vadd.f32 %v380, %v403
  %v420 = vadd.f32 %v381, %v404
  %v421 = vadd.f32 %v382, %v405
  %v422 = vadd.f32 %v383, %v406
  %v423 = vadd.f32 %v384, %v407
  %v424 = vpack.c.bf16 %v409, %v408
  %v425 = vpack.c.bf16 %v411, %v410
  %v426 = vpack.c.bf16 %v413, %v412
  %v427 = vpack.c.bf16 %v415, %v414
  %v428 = vpack.c.bf16 %v417, %v416
  %v429 = vpack.c.bf16 %v419, %v418
  %v430 = vpack.c.bf16 %v421, %v420
  %v431 = vpack.c.bf16 %v423, %v422
  %v440 = vunpack.c.l.b16 %v424
  %v441 = vunpack.c.h.b16 %v424
  %v442 = vunpack.c.l.b16 %v425
  %v443 = vunpack.c.h.b16 %v425
  %v444 = vunpack.c.l.b16 %v426
  %v445 = vunpack.c.h.b16 %v426
  %v446 = vunpack.c.l.b16 %v427
  %v447 = vunpack.c.h.b16 %v427
  %v448 = vunpack.c.l.b16 %v428
  %v449 = vunpack.c.h.b16 %v428
  %v450 = vunpack.c.l.b16 %v429
  %v451 = vunpack.c.h.b16 %v429
  %v452 = vunpack.c.l.b16 %v430
  %v453 = vunpack.c.h.b16 %v430
  %v454 = vunpack.c.l.b16 %v431
  %v455 = vunpack.c.h.b16 %v431
  %v456 = vpack.c.b16 %v440, %v440
  %v457 = vpack.c.b16 %v441, %v441
  %v458 = vpack.c.b16 %v442, %v442
  %v459 = vpack.c.b16 %v443, %v443
  %v460 = vpack.c.b16 %v444, %v444
  %v461 = vpack.c.b16 %v445, %v445
  %v462 = vpack.c.b16 %v446, %v446
  %v463 = vpack.c.b16 %v447, %v447
  %v464 = vpack.c.b16 %v448, %v448
  %v465 = vpack.c.b16 %v449, %v449
  %v466 = vpack.c.b16 %v450, %v450
  %v467 = vpack.c.b16 %v451, %v451
  %v468 = vpack.c.b16 %v452, %v452
  %v469 = vpack.c.b16 %v453, %v453
  %v470 = vpack.c.b16 %v454, %v454
  %v471 = vpack.c.b16 %v455, %v455
  %488 = vst [vmem:[%s4] sm:$0xf] %v456
  %489 = vst [vmem:[%s4 + $0x4] sm:$0xf] %v457
  %490 = vst [vmem:[%s4 + $0x8] sm:$0xf] %v458
  %491 = vst [vmem:[%s4 + $0xc] sm:$0xf] %v459
  %492 = vst [vmem:[%s4 + $0x10] sm:$0xf] %v460
  %493 = vst [vmem:[%s4 + $0x14] sm:$0xf] %v461
  %494 = vst [vmem:[%s4 + $0x18] sm:$0xf] %v462
  %495 = vst [vmem:[%s4 + $0x1c] sm:$0xf] %v463
  %496 = vst [vmem:[%s4 + $0x20] sm:$0xf] %v464
  %497 = vst [vmem:[%s4 + $0x24] sm:$0xf] %v465
  %498 = vst [vmem:[%s4 + $0x28] sm:$0xf] %v466
  %499 = vst [vmem:[%s4 + $0x2c] sm:$0xf] %v467
  %500 = vst [vmem:[%s4 + $0x30] sm:$0xf] %v468
  %501 = vst [vmem:[%s4 + $0x34] sm:$0xf] %v469
  %502 = vst [vmem:[%s4 + $0x38] sm:$0xf] %v470
  %503 = vst [vmem:[%s4 + $0x3c] sm:$0xf] %v471
  // Predicated region
  $region18: #{pose_resnet_forward.26} parent=0 // pred_check
    _
  $region19: #{pose_resnet_forward.26} parent=0 // pred_check_branch
    %505 = sbr.rel (0) target = $region21
  $region20: #{pose_resnet_forward.26} parent=0 // pred_region
    _
  $region21: #{pose_resnet_forward.26} parent=0 // pred_fallthru
    _
  // Predicated region
  $region22: #{pose_resnet_forward.26} parent=0 // pred_check
    _
  $region23: #{pose_resnet_forward.26} parent=0 // pred_check_branch
    %507 = sbr.rel (0) target = $region25
  $region24: #{pose_resnet_forward.26} parent=0 // pred_region
    _
  $region25: #{pose_resnet_forward.26} parent=0 // pred_fallthru
    _

// kernel: pose_resnet_forward.27
$region0: #{pose_resnet_forward.27}
  #allocation0 [shape = 'u32[]', space=smem, size = 0x4, offset = 0x4, fixed_abs, tag = 'smem constant byte address 0x4 - core index']
  #allocation1 [shape = 'u32[144,128]{1,0:T(1,128)}', space=vmem, size = 0x12000, scoped, tag = 'internal scratch']
  %s0 = inlined_call_operand.vmem [shape: bf16[128,384], index: 0, kind: input, shape index: {}]
  %s1 = inlined_call_operand.vmem [shape: bf16[384,128], index: 1, kind: input, shape index: {}]
  %s2 = inlined_call_operand.vmem [shape: f32[1,128], index: 2, kind: input, shape index: {}]
  %s3 = inlined_call_operand.vmem [shape: bf16[128,128], index: 3, kind: input, shape index: {}]
  %s4 = inlined_call_operand.vmem [shape: bf16[128,128], index: 4, kind: output, shape index: {}]
  %s5 = sld [smem:[#allocation0]]
  $region26: #{pose_resnet_forward.27} parent=0
    _
  %s7 = ssub.s32 1, %s5
  %s8 = scalar_select 0, %s7, %s5
  // Predicated region
  $region2: #{pose_resnet_forward.27} parent=0 // pred_check
    _
  $region3: #{pose_resnet_forward.27} parent=0 // pred_check_branch
    %10 = sbr.rel (0) target = $region5
  $region4: #{pose_resnet_forward.27} parent=0 // pred_region
    _
  $region5: #{pose_resnet_forward.27} parent=0 // pred_fallthru
    _
  // Predicated region
  $region6: #{pose_resnet_forward.27} parent=0 // pred_check
    _
  $region7: #{pose_resnet_forward.27} parent=0 // pred_check_branch
    %12 = sbr.rel (0) target = $region9
  $region8: #{pose_resnet_forward.27} parent=0 // pred_region
    _
  $region9: #{pose_resnet_forward.27} parent=0 // pred_fallthru
    _
  // Predicated region
  $region10: #{pose_resnet_forward.27} parent=0 // pred_check
    _
  $region11: #{pose_resnet_forward.27} parent=0 // pred_check_branch
    %14 = sbr.rel (0) target = $region13
  $region12: #{pose_resnet_forward.27} parent=0 // pred_region
    _
  $region13: #{pose_resnet_forward.27} parent=0 // pred_fallthru
    _
  // Predicated region
  $region14: #{pose_resnet_forward.27} parent=0 // pred_check
    _
  $region15: #{pose_resnet_forward.27} parent=0 // pred_check_branch
    %16 = sbr.rel (0) target = $region17
  $region16: #{pose_resnet_forward.27} parent=0 // pred_region
    _
  $region17: #{pose_resnet_forward.27} parent=0 // pred_fallthru
    _
  %v18 = vld [vmem:[%s0] sm:$0xff]
  %v19 = vld [vmem:[%s0 + $0x8] sm:$0xf]
  %v20 = vld [vmem:[%s0 + $0xc] sm:$0xff]
  %v21 = vld [vmem:[%s0 + $0x14] sm:$0xf]
  %v22 = vld [vmem:[%s0 + $0x18] sm:$0xff]
  %v23 = vld [vmem:[%s0 + $0x20] sm:$0xf]
  %v24 = vld [vmem:[%s0 + $0x24] sm:$0xff]
  %v25 = vld [vmem:[%s0 + $0x2c] sm:$0xf]
  %v26 = vld [vmem:[%s0 + $0x30] sm:$0xff]
  %v27 = vld [vmem:[%s0 + $0x38] sm:$0xf]
  %v28 = vld [vmem:[%s0 + $0x3c] sm:$0xff]
  %v29 = vld [vmem:[%s0 + $0x44] sm:$0xf]
  %v30 = vld [vmem:[%s0 + $0x48] sm:$0xff]
  %v31 = vld [vmem:[%s0 + $0x50] sm:$0xf]
  %v32 = vld [vmem:[%s0 + $0x54] sm:$0xff]
  %v33 = vld [vmem:[%s0 + $0x5c] sm:$0xf]
  %v34 = vld [vmem:[%s0 + $0x60] sm:$0xff]
  %v35 = vld [vmem:[%s0 + $0x68] sm:$0xf]
  %v36 = vld [vmem:[%s0 + $0x6c] sm:$0xff]
  %v37 = vld [vmem:[%s0 + $0x74] sm:$0xf]
  %v38 = vld [vmem:[%s0 + $0x78] sm:$0xff]
  %v39 = vld [vmem:[%s0 + $0x80] sm:$0xf]
  %v40 = vld [vmem:[%s0 + $0x84] sm:$0xff]
  %v41 = vld [vmem:[%s0 + $0x8c] sm:$0xf]
  %v42 = vld [vmem:[%s0 + $0x90] sm:$0xff]
  %v43 = vld [vmem:[%s0 + $0x98] sm:$0xf]
  %v44 = vld [vmem:[%s0 + $0x9c] sm:$0xff]
  %v45 = vld [vmem:[%s0 + $0xa4] sm:$0xf]
  %v46 = vld [vmem:[%s0 + $0xa8] sm:$0xff]
  %v47 = vld [vmem:[%s0 + $0xb0] sm:$0xf]
  %v48 = vld [vmem:[%s0 + $0xb4] sm:$0xff]
  %v49 = vld [vmem:[%s0 + $0xbc] sm:$0xf]
  %v50 = vld [vmem:[%s1] sm:$0xf]
  %v51 = vld [vmem:[%s1 + $0x4] sm:$0xf]
  %v52 = vld [vmem:[%s1 + $0x8] sm:$0xf]
  %v53 = vld [vmem:[%s1 + $0xc] sm:$0xf]
  %v54 = vld [vmem:[%s1 + $0x10] sm:$0xf]
  %v55 = vld [vmem:[%s1 + $0x14] sm:$0xf]
  %v56 = vld [vmem:[%s1 + $0x18] sm:$0xf]
  %v57 = vld [vmem:[%s1 + $0x1c] sm:$0xf]
  %v58 = vld [vmem:[%s1 + $0x20] sm:$0xf]
  %v59 = vld [vmem:[%s1 + $0x24] sm:$0xf]
  %v60 = vld [vmem:[%s1 + $0x28] sm:$0xf]
  %v61 = vld [vmem:[%s1 + $0x2c] sm:$0xf]
  %v62 = vld [vmem:[%s1 + $0x30] sm:$0xf]
  %v63 = vld [vmem:[%s1 + $0x34] sm:$0xf]
  %v64 = vld [vmem:[%s1 + $0x38] sm:$0xf]
  %v65 = vld [vmem:[%s1 + $0x3c] sm:$0xf]
  %v66 = vld [vmem:[%s1 + $0x40] sm:$0xf]
  %v67 = vld [vmem:[%s1 + $0x44] sm:$0xf]
  %v68 = vld [vmem:[%s1 + $0x48] sm:$0xf]
  %v69 = vld [vmem:[%s1 + $0x4c] sm:$0xf]
  %v70 = vld [vmem:[%s1 + $0x50] sm:$0xf]
  %v71 = vld [vmem:[%s1 + $0x54] sm:$0xf]
  %v72 = vld [vmem:[%s1 + $0x58] sm:$0xf]
  %v73 = vld [vmem:[%s1 + $0x5c] sm:$0xf]
  %v74 = vld [vmem:[%s1 + $0x60] sm:$0xf]
  %v75 = vld [vmem:[%s1 + $0x64] sm:$0xf]
  %v76 = vld [vmem:[%s1 + $0x68] sm:$0xf]
  %v77 = vld [vmem:[%s1 + $0x6c] sm:$0xf]
  %v78 = vld [vmem:[%s1 + $0x70] sm:$0xf]
  %v79 = vld [vmem:[%s1 + $0x74] sm:$0xf]
  %v80 = vld [vmem:[%s1 + $0x78] sm:$0xf]
  %v81 = vld [vmem:[%s1 + $0x7c] sm:$0xf]
  %v82 = vld [vmem:[%s1 + $0x80] sm:$0xf]
  %v83 = vld [vmem:[%s1 + $0x84] sm:$0xf]
  %v84 = vld [vmem:[%s1 + $0x88] sm:$0xf]
  %v85 = vld [vmem:[%s1 + $0x8c] sm:$0xf]
  %v86 = vld [vmem:[%s1 + $0x90] sm:$0xf]
  %v87 = vld [vmem:[%s1 + $0x94] sm:$0xf]
  %v88 = vld [vmem:[%s1 + $0x98] sm:$0xf]
  %v89 = vld [vmem:[%s1 + $0x9c] sm:$0xf]
  %v90 = vld [vmem:[%s1 + $0xa0] sm:$0xf]
  %v91 = vld [vmem:[%s1 + $0xa4] sm:$0xf]
  %v92 = vld [vmem:[%s1 + $0xa8] sm:$0xf]
  %v93 = vld [vmem:[%s1 + $0xac] sm:$0xf]
  %v94 = vld [vmem:[%s1 + $0xb0] sm:$0xf]
  %v95 = vld [vmem:[%s1 + $0xb4] sm:$0xf]
  %v96 = vld [vmem:[%s1 + $0xb8] sm:$0xf]
  %v97 = vld [vmem:[%s1 + $0xbc] sm:$0xf]
  %v98 = vld [vmem:[%s2] sm:$0x1]
  %v100 = vlaneseq
  %v101 = vshrl.u32 %v100, 7
  %v102 = vsub.s32 0, %v101
  %v103 = vrot.slane %v98, %v102
  %v137 = vunpack.c.l.b16 %v18
  %v138 = vunpack.c.h.b16 %v18
  %v139 = vunpack.c.l.b16 %v19
  %v140 = vunpack.c.l.b16 %v20
  %v141 = vunpack.c.h.b16 %v20
  %v142 = vunpack.c.l.b16 %v21
  %v143 = vunpack.c.l.b16 %v22
  %v144 = vunpack.c.h.b16 %v22
  %v145 = vunpack.c.l.b16 %v23
  %v146 = vunpack.c.l.b16 %v24
  %v147 = vunpack.c.h.b16 %v24
  %v148 = vunpack.c.l.b16 %v25
  %v149 = vunpack.c.l.b16 %v26
  %v150 = vunpack.c.h.b16 %v26
  %v151 = vunpack.c.l.b16 %v27
  %v152 = vunpack.c.l.b16 %v28
  %v153 = vunpack.c.h.b16 %v28
  %v154 = vunpack.c.l.b16 %v29
  %v155 = vunpack.c.l.b16 %v30
  %v156 = vunpack.c.h.b16 %v30
  %v157 = vunpack.c.l.b16 %v31
  %v158 = vunpack.c.l.b16 %v32
  %v159 = vunpack.c.h.b16 %v32
  %v160 = vunpack.c.l.b16 %v33
  %v161 = vunpack.c.l.b16 %v34
  %v162 = vunpack.c.h.b16 %v34
  %v163 = vunpack.c.l.b16 %v35
  %v164 = vunpack.c.l.b16 %v36
  %v165 = vunpack.c.h.b16 %v36
  %v166 = vunpack.c.l.b16 %v37
  %v167 = vunpack.c.l.b16 %v38
  %v168 = vunpack.c.h.b16 %v38
  %v169 = vunpack.c.l.b16 %v39
  %v170 = vunpack.c.l.b16 %v40
  %v171 = vunpack.c.h.b16 %v40
  %v172 = vunpack.c.l.b16 %v41
  %v173 = vunpack.c.l.b16 %v42
  %v174 = vunpack.c.h.b16 %v42
  %v175 = vunpack.c.l.b16 %v43
  %v176 = vunpack.c.l.b16 %v44
  %v177 = vunpack.c.h.b16 %v44
  %v178 = vunpack.c.l.b16 %v45
  %v179 = vunpack.c.l.b16 %v46
  %v180 = vunpack.c.h.b16 %v46
  %v181 = vunpack.c.l.b16 %v47
  %v182 = vunpack.c.l.b16 %v48
  %v183 = vunpack.c.h.b16 %v48
  %v184 = vunpack.c.l.b16 %v49
  %v185 = vpack.c.b16 %v140, %v137
  %v186 = vpack.c.b16 %v141, %v138
  %v187 = vpack.c.b16 %v142, %v139
  %v188 = vpack.c.b16 %v146, %v143
  %v189 = vpack.c.b16 %v147, %v144
  %v190 = vpack.c.b16 %v148, %v145
  %v191 = vpack.c.b16 %v152, %v149
  %v192 = vpack.c.b16 %v153, %v150
  %v193 = vpack.c.b16 %v154, %v151
  %v194 = vpack.c.b16 %v158, %v155
  %v195 = vpack.c.b16 %v159, %v156
  %v196 = vpack.c.b16 %v160, %v157
  %v197 = vpack.c.b16 %v164, %v161
  %v198 = vpack.c.b16 %v165, %v162
  %v199 = vpack.c.b16 %v166, %v163
  %v200 = vpack.c.b16 %v170, %v167
  %v201 = vpack.c.b16 %v171, %v168
  %v202 = vpack.c.b16 %v172, %v169
  %v203 = vpack.c.b16 %v176, %v173
  %v204 = vpack.c.b16 %v177, %v174
  %v205 = vpack.c.b16 %v178, %v175
  %v206 = vpack.c.b16 %v182, %v179
  %v207 = vpack.c.b16 %v183, %v180
  %v208 = vpack.c.b16 %v184, %v181
  %v281 = vunpack.c.l.b16 %v50
  %v282 = vunpack.c.l.b16 %v51
  %v283 = vunpack.c.l.b16 %v52
  %v284 = vunpack.c.l.b16 %v53
  %v285 = vunpack.c.l.b16 %v54
  %v286 = vunpack.c.l.b16 %v55
  %v287 = vunpack.c.l.b16 %v56
  %v288 = vunpack.c.l.b16 %v57
  %v289 = vunpack.c.l.b16 %v58
  %v290 = vunpack.c.l.b16 %v59
  %v291 = vunpack.c.l.b16 %v60
  %v292 = vunpack.c.l.b16 %v61
  %v293 = vunpack.c.l.b16 %v62
  %v294 = vunpack.c.l.b16 %v63
  %v295 = vunpack.c.l.b16 %v64
  %v296 = vunpack.c.l.b16 %v65
  %v297 = vunpack.c.l.b16 %v66
  %v298 = vunpack.c.l.b16 %v67
  %v299 = vunpack.c.l.b16 %v68
  %v300 = vunpack.c.l.b16 %v69
  %v301 = vunpack.c.l.b16 %v70
  %v302 = vunpack.c.l.b16 %v71
  %v303 = vunpack.c.l.b16 %v72
  %v304 = vunpack.c.l.b16 %v73
  %v305 = vunpack.c.l.b16 %v74
  %v306 = vunpack.c.l.b16 %v75
  %v307 = vunpack.c.l.b16 %v76
  %v308 = vunpack.c.l.b16 %v77
  %v309 = vunpack.c.l.b16 %v78
  %v310 = vunpack.c.l.b16 %v79
  %v311 = vunpack.c.l.b16 %v80
  %v312 = vunpack.c.l.b16 %v81
  %v313 = vunpack.c.l.b16 %v82
  %v314 = vunpack.c.l.b16 %v83
  %v315 = vunpack.c.l.b16 %v84
  %v316 = vunpack.c.l.b16 %v85
  %v317 = vunpack.c.l.b16 %v86
  %v318 = vunpack.c.l.b16 %v87
  %v319 = vunpack.c.l.b16 %v88
  %v320 = vunpack.c.l.b16 %v89
  %v321 = vunpack.c.l.b16 %v90
  %v322 = vunpack.c.l.b16 %v91
  %v323 = vunpack.c.l.b16 %v92
  %v324 = vunpack.c.l.b16 %v93
  %v325 = vunpack.c.l.b16 %v94
  %v326 = vunpack.c.l.b16 %v95
  %v327 = vunpack.c.l.b16 %v96
  %v328 = vunpack.c.l.b16 %v97
  %v329 = vpack.c.b16 %v282, %v281
  %v330 = vpack.c.b16 %v284, %v283
  %v331 = vpack.c.b16 %v286, %v285
  %v332 = vpack.c.b16 %v288, %v287
  %v333 = vpack.c.b16 %v290, %v289
  %v334 = vpack.c.b16 %v292, %v291
  %v335 = vpack.c.b16 %v294, %v293
  %v336 = vpack.c.b16 %v296, %v295
  %v337 = vpack.c.b16 %v298, %v297
  %v338 = vpack.c.b16 %v300, %v299
  %v339 = vpack.c.b16 %v302, %v301
  %v340 = vpack.c.b16 %v304, %v303
  %v341 = vpack.c.b16 %v306, %v305
  %v342 = vpack.c.b16 %v308, %v307
  %v343 = vpack.c.b16 %v310, %v309
  %v344 = vpack.c.b16 %v312, %v311
  %v345 = vpack.c.b16 %v314, %v313
  %v346 = vpack.c.b16 %v316, %v315
  %v347 = vpack.c.b16 %v318, %v317
  %v348 = vpack.c.b16 %v320, %v319
  %v349 = vpack.c.b16 %v322, %v321
  %v350 = vpack.c.b16 %v324, %v323
  %v351 = vpack.c.b16 %v326, %v325
  %v352 = vpack.c.b16 %v328, %v327
  %377 = vmatprep.subr.bf16.mxu0 0
  %378 = vmatpush1.bf16.msra.mxu0 %v329
  %379 = vmatprep.subr.bf16.mxu0 0
  %380 = vmatpush1.bf16.msra.mxu0 %v330
  %381 = vmatprep.subr.bf16.mxu0 0
  %382 = vmatpush1.bf16.msra.mxu0 %v331
  %383 = vmatprep.subr.bf16.mxu0 0
  %384 = vmatpush1.bf16.msra.mxu0 %v332
  %385 = vmatprep.subr.bf16.mxu0 0
  %386 = vmatpush1.bf16.msra.mxu0 %v333
  %387 = vmatprep.subr.bf16.mxu0 0
  %388 = vmatpush1.bf16.msra.mxu0 %v334
  %389 = vmatprep.subr.bf16.mxu0 0
  %390 = vmatpush1.bf16.msra.mxu0 %v335
  %391 = vmatprep.subr.bf16.mxu0 0
  %392 = vmatpush1.bf16.msra.mxu0 %v336
  %393 = vmatprep.subr.bf16.mxu0 0
  %394 = vmatpush1.bf16.msra.mxu0 %v337
  %395 = vmatprep.subr.bf16.mxu0 0
  %396 = vmatpush1.bf16.msra.mxu0 %v338
  %397 = vmatprep.subr.bf16.mxu0 0
  %398 = vmatpush1.bf16.msra.mxu0 %v339
  %399 = vmatprep.subr.bf16.mxu0 0
  %400 = vmatpush1.bf16.msra.mxu0 %v340
  %401 = vmatprep.subr.bf16.mxu0 0
  %402 = vmatpush1.bf16.msra.mxu0 %v341
  %403 = vmatprep.subr.bf16.mxu0 0
  %404 = vmatpush1.bf16.msra.mxu0 %v342
  %405 = vmatprep.subr.bf16.mxu0 0
  %406 = vmatpush1.bf16.msra.mxu0 %v343
  %407 = vmatprep.subr.bf16.mxu0 0
  %408 = vmatpush1.bf16.msra.mxu0 %v344
  %409 = vmatprep.mubr.bf16.mxu0 %v186
  %410 = vmatmul.mubr.bf16.gmra.mrb[0].mxu0 %v185
  %v411 = vpop.f32.mrb[0].mxu0
  %v412 = vadd.f32 %v103, %v411
  %v413 = vpop.f32.mrb[0].mxu0
  %v414 = vpop.f32.mrb[0].mxu0
  %v415 = vadd.f32 %v103, %v414
  %v416 = vpop.f32.mrb[0].mxu0
  %417 = vmatprep.mubr.bf16.mxu0 %v189
  %418 = vmatmul.mubr.bf16.gmra.mrb[0].mxu0 %v188
  %v419 = vpop.f32.mrb[0].mxu0
  %v420 = vadd.f32 %v103, %v419
  %v421 = vpop.f32.mrb[0].mxu0
  %v422 = vpop.f32.mrb[0].mxu0
  %v423 = vadd.f32 %v103, %v422
  %v424 = vpop.f32.mrb[0].mxu0
  %425 = vmatprep.mubr.bf16.mxu0 %v192
  %426 = vmatmul.mubr.bf16.gmra.mrb[0].mxu0 %v191
  %v427 = vpop.f32.mrb[0].mxu0
  %v428 = vadd.f32 %v103, %v427
  %v429 = vpop.f32.mrb[0].mxu0
  %v430 = vpop.f32.mrb[0].mxu0
  %v431 = vadd.f32 %v103, %v430
  %v432 = vpop.f32.mrb[0].mxu0
  %433 = vmatprep.mubr.bf16.mxu0 %v195
  %434 = vmatmul.mubr.bf16.gmra.mrb[0].mxu0 %v194
  %v435 = vpop.f32.mrb[0].mxu0
  %v436 = vadd.f32 %v103, %v435
  %v437 = vpop.f32.mrb[0].mxu0
  %v438 = vpop.f32.mrb[0].mxu0
  %v439 = vadd.f32 %v103, %v438
  %v440 = vpop.f32.mrb[0].mxu0
  %441 = vmatprep.mubr.bf16.mxu0 %v198
  %442 = vmatmul.mubr.bf16.gmra.mrb[0].mxu0 %v197
  %v443 = vpop.f32.mrb[0].mxu0
  %v444 = vadd.f32 %v103, %v443
  %v445 = vpop.f32.mrb[0].mxu0
  %v446 = vpop.f32.mrb[0].mxu0
  %v447 = vadd.f32 %v103, %v446
  %v448 = vpop.f32.mrb[0].mxu0
  %449 = vmatprep.mubr.bf16.mxu0 %v201
  %450 = vmatmul.mubr.bf16.gmra.mrb[0].mxu0 %v200
  %v451 = vpop.f32.mrb[0].mxu0
  %v452 = vadd.f32 %v103, %v451
  %v453 = vpop.f32.mrb[0].mxu0
  %v454 = vpop.f32.mrb[0].mxu0
  %v455 = vadd.f32 %v103, %v454
  %v456 = vpop.f32.mrb[0].mxu0
  %457 = vmatprep.mubr.bf16.mxu0 %v204
  %458 = vmatmul.mubr.bf16.gmra.mrb[0].mxu0 %v203
  %v459 = vpop.f32.mrb[0].mxu0
  %v460 = vadd.f32 %v103, %v459
  %v461 = vpop.f32.mrb[0].mxu0
  %v462 = vpop.f32.mrb[0].mxu0
  %v463 = vadd.f32 %v103, %v462
  %v464 = vpop.f32.mrb[0].mxu0
  %465 = vmatprep.mubr.bf16.mxu0 %v207
  %466 = vmatmul.mubr.bf16.gmra.mrb[0].mxu0 %v206
  %v467 = vpop.f32.mrb[0].mxu0
  %v468 = vadd.f32 %v103, %v467
  %v469 = vpop.f32.mrb[0].mxu0
  %v470 = vpop.f32.mrb[0].mxu0
  %v471 = vadd.f32 %v103, %v470
  %v472 = vpop.f32.mrb[0].mxu0
  %473 = vdwg.mxu0
  %474 = vmatprep.subr.bf16.mxu0 0
  %475 = vmatpush1.bf16.msra.mxu0 %v345
  %476 = vmatprep.subr.bf16.mxu0 0
  %477 = vmatpush1.bf16.msra.mxu0 %v346
  %478 = vmatprep.subr.bf16.mxu0 0
  %479 = vmatpush1.bf16.msra.mxu0 %v347
  %480 = vmatprep.subr.bf16.mxu0 0
  %481 = vmatpush1.bf16.msra.mxu0 %v348
  %482 = vmatprep.subr.bf16.mxu0 0
  %483 = vmatpush1.bf16.msra.mxu0 %v349
  %484 = vmatprep.subr.bf16.mxu0 0
  %485 = vmatpush1.bf16.msra.mxu0 %v350
  %486 = vmatprep.subr.bf16.mxu0 0
  %487 = vmatpush1.bf16.msra.mxu0 %v351
  %488 = vmatprep.subr.bf16.mxu0 0
  %489 = vmatpush1.bf16.msra.mxu0 %v352
  %490 = vmatprep.subr.bf16.mxu0 0
  %491 = vmatpush1.bf16.msra.mxu0 0
  %492 = vmatprep.subr.bf16.mxu0 0
  %493 = vmatpush1.bf16.msra.mxu0 0
  %494 = vmatprep.subr.bf16.mxu0 0
  %495 = vmatpush1.bf16.msra.mxu0 0
  %496 = vmatprep.subr.bf16.mxu0 0
  %497 = vmatpush1.bf16.msra.mxu0 0
  %498 = vmatprep.subr.bf16.mxu0 0
  %499 = vmatpush1.bf16.msra.mxu0 0
  %500 = vmatprep.subr.bf16.mxu0 0
  %501 = vmatpush1.bf16.msra.mxu0 0
  %502 = vmatprep.subr.bf16.mxu0 0
  %503 = vmatpush1.bf16.msra.mxu0 0
  %504 = vmatprep.subr.bf16.mxu0 0
  %505 = vmatpush1.bf16.msra.mxu0 0
  %506 = vmatprep.mubr.bf16.mxu0 0
  %507 = vmatmul.mubr.bf16.gmra.mrb[0].mxu0 %v187
  %v508 = vpop.f32.mrb[0].mxu0
  %v509 = vadd.f32 %v412, %v508
  %v510 = vpop.f32.mrb[0].mxu0
  %v511 = vpop.f32.mrb[0].mxu0
  %v512 = vadd.f32 %v415, %v511
  %v513 = vpop.f32.mrb[0].mxu0
  %514 = vmatprep.mubr.bf16.mxu0 0
  %515 = vmatmul.mubr.bf16.gmra.mrb[0].mxu0 %v190
  %v516 = vpop.f32.mrb[0].mxu0
  %v517 = vadd.f32 %v420, %v516
  %v518 = vpop.f32.mrb[0].mxu0
  %v519 = vpop.f32.mrb[0].mxu0
  %v520 = vadd.f32 %v423, %v519
  %v521 = vpop.f32.mrb[0].mxu0
  %522 = vmatprep.mubr.bf16.mxu0 0
  %523 = vmatmul.mubr.bf16.gmra.mrb[0].mxu0 %v193
  %v524 = vpop.f32.mrb[0].mxu0
  %v525 = vadd.f32 %v428, %v524
  %v526 = vpop.f32.mrb[0].mxu0
  %v527 = vpop.f32.mrb[0].mxu0
  %v528 = vadd.f32 %v431, %v527
  %v529 = vpop.f32.mrb[0].mxu0
  %530 = vmatprep.mubr.bf16.mxu0 0
  %531 = vmatmul.mubr.bf16.gmra.mrb[0].mxu0 %v196
  %v532 = vpop.f32.mrb[0].mxu0
  %v533 = vadd.f32 %v436, %v532
  %v534 = vpop.f32.mrb[0].mxu0
  %v535 = vpop.f32.mrb[0].mxu0
  %v536 = vadd.f32 %v439, %v535
  %v537 = vpop.f32.mrb[0].mxu0
  %538 = vmatprep.mubr.bf16.mxu0 0
  %539 = vmatmul.mubr.bf16.gmra.mrb[0].mxu0 %v199
  %v540 = vpop.f32.mrb[0].mxu0
  %v541 = vadd.f32 %v444, %v540
  %v542 = vpop.f32.mrb[0].mxu0
  %v543 = vpop.f32.mrb[0].mxu0
  %v544 = vadd.f32 %v447, %v543
  %v545 = vpop.f32.mrb[0].mxu0
  %546 = vmatprep.mubr.bf16.mxu0 0
  %547 = vmatmul.mubr.bf16.gmra.mrb[0].mxu0 %v202
  %v548 = vpop.f32.mrb[0].mxu0
  %v549 = vadd.f32 %v452, %v548
  %v550 = vpop.f32.mrb[0].mxu0
  %v551 = vpop.f32.mrb[0].mxu0
  %v552 = vadd.f32 %v455, %v551
  %v553 = vpop.f32.mrb[0].mxu0
  %554 = vmatprep.mubr.bf16.mxu0 0
  %555 = vmatmul.mubr.bf16.gmra.mrb[0].mxu0 %v205
  %v556 = vpop.f32.mrb[0].mxu0
  %v557 = vadd.f32 %v460, %v556
  %v558 = vpop.f32.mrb[0].mxu0
  %v559 = vpop.f32.mrb[0].mxu0
  %v560 = vadd.f32 %v463, %v559
  %v561 = vpop.f32.mrb[0].mxu0
  %562 = vmatprep.mubr.bf16.mxu0 0
  %563 = vmatmul.mubr.bf16.gmra.mrb[0].mxu0 %v208
  %v564 = vpop.f32.mrb[0].mxu0
  %v565 = vadd.f32 %v468, %v564
  %v566 = vpop.f32.mrb[0].mxu0
  %v567 = vpop.f32.mrb[0].mxu0
  %v568 = vadd.f32 %v471, %v567
  %v569 = vpop.f32.mrb[0].mxu0
  %570 = vdwg.mxu0
  %v571 = vld [vmem:[%s3] sm:$0xf]
  %v572 = vld [vmem:[%s3 + $0x4] sm:$0xf]
  %v573 = vld [vmem:[%s3 + $0x8] sm:$0xf]
  %v574 = vld [vmem:[%s3 + $0xc] sm:$0xf]
  %v575 = vld [vmem:[%s3 + $0x10] sm:$0xf]
  %v576 = vld [vmem:[%s3 + $0x14] sm:$0xf]
  %v577 = vld [vmem:[%s3 + $0x18] sm:$0xf]
  %v578 = vld [vmem:[%s3 + $0x1c] sm:$0xf]
  %v579 = vld [vmem:[%s3 + $0x20] sm:$0xf]
  %v580 = vld [vmem:[%s3 + $0x24] sm:$0xf]
  %v581 = vld [vmem:[%s3 + $0x28] sm:$0xf]
  %v582 = vld [vmem:[%s3 + $0x2c] sm:$0xf]
  %v583 = vld [vmem:[%s3 + $0x30] sm:$0xf]
  %v584 = vld [vmem:[%s3 + $0x34] sm:$0xf]
  %v585 = vld [vmem:[%s3 + $0x38] sm:$0xf]
  %v586 = vld [vmem:[%s3 + $0x3c] sm:$0xf]
  %v587 = vunpack.c.l.bf16 %v571
  %v588 = vunpack.c.l.bf16 %v572
  %v589 = vunpack.c.l.bf16 %v573
  %v590 = vunpack.c.l.bf16 %v574
  %v591 = vunpack.c.l.bf16 %v575
  %v592 = vunpack.c.l.bf16 %v576
  %v593 = vunpack.c.l.bf16 %v577
  %v594 = vunpack.c.l.bf16 %v578
  %v595 = vunpack.c.l.bf16 %v579
  %v596 = vunpack.c.l.bf16 %v580
  %v597 = vunpack.c.l.bf16 %v581
  %v598 = vunpack.c.l.bf16 %v582
  %v599 = vunpack.c.l.bf16 %v583
  %v600 = vunpack.c.l.bf16 %v584
  %v601 = vunpack.c.l.bf16 %v585
  %v602 = vunpack.c.l.bf16 %v586
  %v603 = vadd.f32 %v509, %v587
  %v604 = vadd.f32 %v512, %v588
  %v605 = vadd.f32 %v517, %v589
  %v606 = vadd.f32 %v520, %v590
  %v607 = vadd.f32 %v525, %v591
  %v608 = vadd.f32 %v528, %v592
  %v609 = vadd.f32 %v533, %v593
  %v610 = vadd.f32 %v536, %v594
  %v611 = vadd.f32 %v541, %v595
  %v612 = vadd.f32 %v544, %v596
  %v613 = vadd.f32 %v549, %v597
  %v614 = vadd.f32 %v552, %v598
  %v615 = vadd.f32 %v557, %v599
  %v616 = vadd.f32 %v560, %v600
  %v617 = vadd.f32 %v565, %v601
  %v618 = vadd.f32 %v568, %v602
  %v619 = vmax.f32 %v603, 0.0
  %v620 = vmax.f32 %v604, 0.0
  %v621 = vmax.f32 %v605, 0.0
  %v622 = vmax.f32 %v606, 0.0
  %v623 = vmax.f32 %v607, 0.0
  %v624 = vmax.f32 %v608, 0.0
  %v625 = vmax.f32 %v609, 0.0
  %v626 = vmax.f32 %v610, 0.0
  %v627 = vmax.f32 %v611, 0.0
  %v628 = vmax.f32 %v612, 0.0
  %v629 = vmax.f32 %v613, 0.0
  %v630 = vmax.f32 %v614, 0.0
  %v631 = vmax.f32 %v615, 0.0
  %v632 = vmax.f32 %v616, 0.0
  %v633 = vmax.f32 %v617, 0.0
  %v634 = vmax.f32 %v618, 0.0
  %v635 = vpack.c.bf16 %v620, %v619
  %v636 = vpack.c.bf16 %v622, %v621
  %v637 = vpack.c.bf16 %v624, %v623
  %v638 = vpack.c.bf16 %v626, %v625
  %v639 = vpack.c.bf16 %v628, %v627
  %v640 = vpack.c.bf16 %v630, %v629
  %v641 = vpack.c.bf16 %v632, %v631
  %v642 = vpack.c.bf16 %v634, %v633
  %v651 = vunpack.c.l.b16 %v635
  %v652 = vunpack.c.h.b16 %v635
  %v653 = vunpack.c.l.b16 %v636
  %v654 = vunpack.c.h.b16 %v636
  %v655 = vunpack.c.l.b16 %v637
  %v656 = vunpack.c.h.b16 %v637
  %v657 = vunpack.c.l.b16 %v638
  %v658 = vunpack.c.h.b16 %v638
  %v659 = vunpack.c.l.b16 %v639
  %v660 = vunpack.c.h.b16 %v639
  %v661 = vunpack.c.l.b16 %v640
  %v662 = vunpack.c.h.b16 %v640
  %v663 = vunpack.c.l.b16 %v641
  %v664 = vunpack.c.h.b16 %v641
  %v665 = vunpack.c.l.b16 %v642
  %v666 = vunpack.c.h.b16 %v642
  %v667 = vpack.c.b16 %v651, %v651
  %v668 = vpack.c.b16 %v652, %v652
  %v669 = vpack.c.b16 %v653, %v653
  %v670 = vpack.c.b16 %v654, %v654
  %v671 = vpack.c.b16 %v655, %v655
  %v672 = vpack.c.b16 %v656, %v656
  %v673 = vpack.c.b16 %v657, %v657
  %v674 = vpack.c.b16 %v658, %v658
  %v675 = vpack.c.b16 %v659, %v659
  %v676 = vpack.c.b16 %v660, %v660
  %v677 = vpack.c.b16 %v661, %v661
  %v678 = vpack.c.b16 %v662, %v662
  %v679 = vpack.c.b16 %v663, %v663
  %v680 = vpack.c.b16 %v664, %v664
  %v681 = vpack.c.b16 %v665, %v665
  %v682 = vpack.c.b16 %v666, %v666
  %699 = vst [vmem:[%s4] sm:$0xf] %v667
  %700 = vst [vmem:[%s4 + $0x4] sm:$0xf] %v668
  %701 = vst [vmem:[%s4 + $0x8] sm:$0xf] %v669
  %702 = vst [vmem:[%s4 + $0xc] sm:$0xf] %v670
  %703 = vst [vmem:[%s4 + $0x10] sm:$0xf] %v671
  %704 = vst [vmem:[%s4 + $0x14] sm:$0xf] %v672
  %705 = vst [vmem:[%s4 + $0x18] sm:$0xf] %v673
  %706 = vst [vmem:[%s4 + $0x1c] sm:$0xf] %v674
  %707 = vst [vmem:[%s4 + $0x20] sm:$0xf] %v675
  %708 = vst [vmem:[%s4 + $0x24] sm:$0xf] %v676
  %709 = vst [vmem:[%s4 + $0x28] sm:$0xf] %v677
  %710 = vst [vmem:[%s4 + $0x2c] sm:$0xf] %v678
  %711 = vst [vmem:[%s4 + $0x30] sm:$0xf] %v679
  %712 = vst [vmem:[%s4 + $0x34] sm:$0xf] %v680
  %713 = vst [vmem:[%s4 + $0x38] sm:$0xf] %v681
  %714 = vst [vmem:[%s4 + $0x3c] sm:$0xf] %v682
  // Predicated region
  $region18: #{pose_resnet_forward.27} parent=0 // pred_check
    _
  $region19: #{pose_resnet_forward.27} parent=0 // pred_check_branch
    %716 = sbr.rel (0) target = $region21
  $region20: #{pose_resnet_forward.27} parent=0 // pred_region
    _
  $region21: #{pose_resnet_forward.27} parent=0 // pred_fallthru
    _
  // Predicated region
  $region22: #{pose_resnet_forward.27} parent=0 // pred_check
    _
  $region23: #{pose_resnet_forward.27} parent=0 // pred_check_branch
    %718 = sbr.rel (0) target = $region25
  $region24: #{pose_resnet_forward.27} parent=0 // pred_region
    _
  $region25: #{pose_resnet_forward.27} parent=0 // pred_fallthru
    _

// kernel: pose_resnet_forward.28
$region0: #{pose_resnet_forward.28}
  #allocation0 [shape = 'u32[]', space=smem, size = 0x4, offset = 0x4, fixed_abs, tag = 'smem constant byte address 0x4 - core index']
  #allocation1 [shape = 'u32[144,128]{1,0:T(1,128)}', space=vmem, size = 0x12000, scoped, tag = 'internal scratch']
  %s0 = inlined_call_operand.vmem [shape: bf16[128,384], index: 0, kind: input, shape index: {}]
  %s1 = inlined_call_operand.vmem [shape: bf16[384,128], index: 1, kind: input, shape index: {}]
  %s2 = inlined_call_operand.vmem [shape: f32[1,128], index: 2, kind: input, shape index: {}]
  %s3 = inlined_call_operand.vmem [shape: bf16[128,128], index: 3, kind: output, shape index: {}]
  %s4 = sld [smem:[#allocation0]]
  $region22: #{pose_resnet_forward.28} parent=0
    _
  %s6 = ssub.s32 1, %s4
  %s7 = scalar_select 0, %s6, %s4
  // Predicated region
  $region2: #{pose_resnet_forward.28} parent=0 // pred_check
    _
  $region3: #{pose_resnet_forward.28} parent=0 // pred_check_branch
    %9 = sbr.rel (0) target = $region5
  $region4: #{pose_resnet_forward.28} parent=0 // pred_region
    _
  $region5: #{pose_resnet_forward.28} parent=0 // pred_fallthru
    _
  // Predicated region
  $region6: #{pose_resnet_forward.28} parent=0 // pred_check
    _
  $region7: #{pose_resnet_forward.28} parent=0 // pred_check_branch
    %11 = sbr.rel (0) target = $region9
  $region8: #{pose_resnet_forward.28} parent=0 // pred_region
    _
  $region9: #{pose_resnet_forward.28} parent=0 // pred_fallthru
    _
  // Predicated region
  $region10: #{pose_resnet_forward.28} parent=0 // pred_check
    _
  $region11: #{pose_resnet_forward.28} parent=0 // pred_check_branch
    %13 = sbr.rel (0) target = $region13
  $region12: #{pose_resnet_forward.28} parent=0 // pred_region
    _
  $region13: #{pose_resnet_forward.28} parent=0 // pred_fallthru
    _
  %v15 = vld [vmem:[%s0] sm:$0xff]
  %v16 = vld [vmem:[%s0 + $0x8] sm:$0xf]
  %v17 = vld [vmem:[%s0 + $0xc] sm:$0xff]
  %v18 = vld [vmem:[%s0 + $0x14] sm:$0xf]
  %v19 = vld [vmem:[%s0 + $0x18] sm:$0xff]
  %v20 = vld [vmem:[%s0 + $0x20] sm:$0xf]
  %v21 = vld [vmem:[%s0 + $0x24] sm:$0xff]
  %v22 = vld [vmem:[%s0 + $0x2c] sm:$0xf]
  %v23 = vld [vmem:[%s0 + $0x30] sm:$0xff]
  %v24 = vld [vmem:[%s0 + $0x38] sm:$0xf]
  %v25 = vld [vmem:[%s0 + $0x3c] sm:$0xff]
  %v26 = vld [vmem:[%s0 + $0x44] sm:$0xf]
  %v27 = vld [vmem:[%s0 + $0x48] sm:$0xff]
  %v28 = vld [vmem:[%s0 + $0x50] sm:$0xf]
  %v29 = vld [vmem:[%s0 + $0x54] sm:$0xff]
  %v30 = vld [vmem:[%s0 + $0x5c] sm:$0xf]
  %v31 = vld [vmem:[%s0 + $0x60] sm:$0xff]
  %v32 = vld [vmem:[%s0 + $0x68] sm:$0xf]
  %v33 = vld [vmem:[%s0 + $0x6c] sm:$0xff]
  %v34 = vld [vmem:[%s0 + $0x74] sm:$0xf]
  %v35 = vld [vmem:[%s0 + $0x78] sm:$0xff]
  %v36 = vld [vmem:[%s0 + $0x80] sm:$0xf]
  %v37 = vld [vmem:[%s0 + $0x84] sm:$0xff]
  %v38 = vld [vmem:[%s0 + $0x8c] sm:$0xf]
  %v39 = vld [vmem:[%s0 + $0x90] sm:$0xff]
  %v40 = vld [vmem:[%s0 + $0x98] sm:$0xf]
  %v41 = vld [vmem:[%s0 + $0x9c] sm:$0xff]
  %v42 = vld [vmem:[%s0 + $0xa4] sm:$0xf]
  %v43 = vld [vmem:[%s0 + $0xa8] sm:$0xff]
  %v44 = vld [vmem:[%s0 + $0xb0] sm:$0xf]
  %v45 = vld [vmem:[%s0 + $0xb4] sm:$0xff]
  %v46 = vld [vmem:[%s0 + $0xbc] sm:$0xf]
  %v47 = vld [vmem:[%s1] sm:$0xf]
  %v48 = vld [vmem:[%s1 + $0x4] sm:$0xf]
  %v49 = vld [vmem:[%s1 + $0x8] sm:$0xf]
  %v50 = vld [vmem:[%s1 + $0xc] sm:$0xf]
  %v51 = vld [vmem:[%s1 + $0x10] sm:$0xf]
  %v52 = vld [vmem:[%s1 + $0x14] sm:$0xf]
  %v53 = vld [vmem:[%s1 + $0x18] sm:$0xf]
  %v54 = vld [vmem:[%s1 + $0x1c] sm:$0xf]
  %v55 = vld [vmem:[%s1 + $0x20] sm:$0xf]
  %v56 = vld [vmem:[%s1 + $0x24] sm:$0xf]
  %v57 = vld [vmem:[%s1 + $0x28] sm:$0xf]
  %v58 = vld [vmem:[%s1 + $0x2c] sm:$0xf]
  %v59 = vld [vmem:[%s1 + $0x30] sm:$0xf]
  %v60 = vld [vmem:[%s1 + $0x34] sm:$0xf]
  %v61 = vld [vmem:[%s1 + $0x38] sm:$0xf]
  %v62 = vld [vmem:[%s1 + $0x3c] sm:$0xf]
  %v63 = vld [vmem:[%s1 + $0x40] sm:$0xf]
  %v64 = vld [vmem:[%s1 + $0x44] sm:$0xf]
  %v65 = vld [vmem:[%s1 + $0x48] sm:$0xf]
  %v66 = vld [vmem:[%s1 + $0x4c] sm:$0xf]
  %v67 = vld [vmem:[%s1 + $0x50] sm:$0xf]
  %v68 = vld [vmem:[%s1 + $0x54] sm:$0xf]
  %v69 = vld [vmem:[%s1 + $0x58] sm:$0xf]
  %v70 = vld [vmem:[%s1 + $0x5c] sm:$0xf]
  %v71 = vld [vmem:[%s1 + $0x60] sm:$0xf]
  %v72 = vld [vmem:[%s1 + $0x64] sm:$0xf]
  %v73 = vld [vmem:[%s1 + $0x68] sm:$0xf]
  %v74 = vld [vmem:[%s1 + $0x6c] sm:$0xf]
  %v75 = vld [vmem:[%s1 + $0x70] sm:$0xf]
  %v76 = vld [vmem:[%s1 + $0x74] sm:$0xf]
  %v77 = vld [vmem:[%s1 + $0x78] sm:$0xf]
  %v78 = vld [vmem:[%s1 + $0x7c] sm:$0xf]
  %v79 = vld [vmem:[%s1 + $0x80] sm:$0xf]
  %v80 = vld [vmem:[%s1 + $0x84] sm:$0xf]
  %v81 = vld [vmem:[%s1 + $0x88] sm:$0xf]
  %v82 = vld [vmem:[%s1 + $0x8c] sm:$0xf]
  %v83 = vld [vmem:[%s1 + $0x90] sm:$0xf]
  %v84 = vld [vmem:[%s1 + $0x94] sm:$0xf]
  %v85 = vld [vmem:[%s1 + $0x98] sm:$0xf]
  %v86 = vld [vmem:[%s1 + $0x9c] sm:$0xf]
  %v87 = vld [vmem:[%s1 + $0xa0] sm:$0xf]
  %v88 = vld [vmem:[%s1 + $0xa4] sm:$0xf]
  %v89 = vld [vmem:[%s1 + $0xa8] sm:$0xf]
  %v90 = vld [vmem:[%s1 + $0xac] sm:$0xf]
  %v91 = vld [vmem:[%s1 + $0xb0] sm:$0xf]
  %v92 = vld [vmem:[%s1 + $0xb4] sm:$0xf]
  %v93 = vld [vmem:[%s1 + $0xb8] sm:$0xf]
  %v94 = vld [vmem:[%s1 + $0xbc] sm:$0xf]
  %v95 = vld [vmem:[%s2] sm:$0x1]
  %v97 = vlaneseq
  %v98 = vshrl.u32 %v97, 7
  %v99 = vsub.s32 0, %v98
  %v100 = vrot.slane %v95, %v99
  %v134 = vunpack.c.l.b16 %v15
  %v135 = vunpack.c.h.b16 %v15
  %v136 = vunpack.c.l.b16 %v16
  %v137 = vunpack.c.l.b16 %v17
  %v138 = vunpack.c.h.b16 %v17
  %v139 = vunpack.c.l.b16 %v18
  %v140 = vunpack.c.l.b16 %v19
  %v141 = vunpack.c.h.b16 %v19
  %v142 = vunpack.c.l.b16 %v20
  %v143 = vunpack.c.l.b16 %v21
  %v144 = vunpack.c.h.b16 %v21
  %v145 = vunpack.c.l.b16 %v22
  %v146 = vunpack.c.l.b16 %v23
  %v147 = vunpack.c.h.b16 %v23
  %v148 = vunpack.c.l.b16 %v24
  %v149 = vunpack.c.l.b16 %v25
  %v150 = vunpack.c.h.b16 %v25
  %v151 = vunpack.c.l.b16 %v26
  %v152 = vunpack.c.l.b16 %v27
  %v153 = vunpack.c.h.b16 %v27
  %v154 = vunpack.c.l.b16 %v28
  %v155 = vunpack.c.l.b16 %v29
  %v156 = vunpack.c.h.b16 %v29
  %v157 = vunpack.c.l.b16 %v30
  %v158 = vunpack.c.l.b16 %v31
  %v159 = vunpack.c.h.b16 %v31
  %v160 = vunpack.c.l.b16 %v32
  %v161 = vunpack.c.l.b16 %v33
  %v162 = vunpack.c.h.b16 %v33
  %v163 = vunpack.c.l.b16 %v34
  %v164 = vunpack.c.l.b16 %v35
  %v165 = vunpack.c.h.b16 %v35
  %v166 = vunpack.c.l.b16 %v36
  %v167 = vunpack.c.l.b16 %v37
  %v168 = vunpack.c.h.b16 %v37
  %v169 = vunpack.c.l.b16 %v38
  %v170 = vunpack.c.l.b16 %v39
  %v171 = vunpack.c.h.b16 %v39
  %v172 = vunpack.c.l.b16 %v40
  %v173 = vunpack.c.l.b16 %v41
  %v174 = vunpack.c.h.b16 %v41
  %v175 = vunpack.c.l.b16 %v42
  %v176 = vunpack.c.l.b16 %v43
  %v177 = vunpack.c.h.b16 %v43
  %v178 = vunpack.c.l.b16 %v44
  %v179 = vunpack.c.l.b16 %v45
  %v180 = vunpack.c.h.b16 %v45
  %v181 = vunpack.c.l.b16 %v46
  %v182 = vpack.c.b16 %v137, %v134
  %v183 = vpack.c.b16 %v138, %v135
  %v184 = vpack.c.b16 %v139, %v136
  %v185 = vpack.c.b16 %v143, %v140
  %v186 = vpack.c.b16 %v144, %v141
  %v187 = vpack.c.b16 %v145, %v142
  %v188 = vpack.c.b16 %v149, %v146
  %v189 = vpack.c.b16 %v150, %v147
  %v190 = vpack.c.b16 %v151, %v148
  %v191 = vpack.c.b16 %v155, %v152
  %v192 = vpack.c.b16 %v156, %v153
  %v193 = vpack.c.b16 %v157, %v154
  %v194 = vpack.c.b16 %v161, %v158
  %v195 = vpack.c.b16 %v162, %v159
  %v196 = vpack.c.b16 %v163, %v160
  %v197 = vpack.c.b16 %v167, %v164
  %v198 = vpack.c.b16 %v168, %v165
  %v199 = vpack.c.b16 %v169, %v166
  %v200 = vpack.c.b16 %v173, %v170
  %v201 = vpack.c.b16 %v174, %v171
  %v202 = vpack.c.b16 %v175, %v172
  %v203 = vpack.c.b16 %v179, %v176
  %v204 = vpack.c.b16 %v180, %v177
  %v205 = vpack.c.b16 %v181, %v178
  %v278 = vunpack.c.l.b16 %v47
  %v279 = vunpack.c.l.b16 %v48
  %v280 = vunpack.c.l.b16 %v49
  %v281 = vunpack.c.l.b16 %v50
  %v282 = vunpack.c.l.b16 %v51
  %v283 = vunpack.c.l.b16 %v52
  %v284 = vunpack.c.l.b16 %v53
  %v285 = vunpack.c.l.b16 %v54
  %v286 = vunpack.c.l.b16 %v55
  %v287 = vunpack.c.l.b16 %v56
  %v288 = vunpack.c.l.b16 %v57
  %v289 = vunpack.c.l.b16 %v58
  %v290 = vunpack.c.l.b16 %v59
  %v291 = vunpack.c.l.b16 %v60
  %v292 = vunpack.c.l.b16 %v61
  %v293 = vunpack.c.l.b16 %v62
  %v294 = vunpack.c.l.b16 %v63
  %v295 = vunpack.c.l.b16 %v64
  %v296 = vunpack.c.l.b16 %v65
  %v297 = vunpack.c.l.b16 %v66
  %v298 = vunpack.c.l.b16 %v67
  %v299 = vunpack.c.l.b16 %v68
  %v300 = vunpack.c.l.b16 %v69
  %v301 = vunpack.c.l.b16 %v70
  %v302 = vunpack.c.l.b16 %v71
  %v303 = vunpack.c.l.b16 %v72
  %v304 = vunpack.c.l.b16 %v73
  %v305 = vunpack.c.l.b16 %v74
  %v306 = vunpack.c.l.b16 %v75
  %v307 = vunpack.c.l.b16 %v76
  %v308 = vunpack.c.l.b16 %v77
  %v309 = vunpack.c.l.b16 %v78
  %v310 = vunpack.c.l.b16 %v79
  %v311 = vunpack.c.l.b16 %v80
  %v312 = vunpack.c.l.b16 %v81
  %v313 = vunpack.c.l.b16 %v82
  %v314 = vunpack.c.l.b16 %v83
  %v315 = vunpack.c.l.b16 %v84
  %v316 = vunpack.c.l.b16 %v85
  %v317 = vunpack.c.l.b16 %v86
  %v318 = vunpack.c.l.b16 %v87
  %v319 = vunpack.c.l.b16 %v88
  %v320 = vunpack.c.l.b16 %v89
  %v321 = vunpack.c.l.b16 %v90
  %v322 = vunpack.c.l.b16 %v91
  %v323 = vunpack.c.l.b16 %v92
  %v324 = vunpack.c.l.b16 %v93
  %v325 = vunpack.c.l.b16 %v94
  %v326 = vpack.c.b16 %v279, %v278
  %v327 = vpack.c.b16 %v281, %v280
  %v328 = vpack.c.b16 %v283, %v282
  %v329 = vpack.c.b16 %v285, %v284
  %v330 = vpack.c.b16 %v287, %v286
  %v331 = vpack.c.b16 %v289, %v288
  %v332 = vpack.c.b16 %v291, %v290
  %v333 = vpack.c.b16 %v293, %v292
  %v334 = vpack.c.b16 %v295, %v294
  %v335 = vpack.c.b16 %v297, %v296
  %v336 = vpack.c.b16 %v299, %v298
  %v337 = vpack.c.b16 %v301, %v300
  %v338 = vpack.c.b16 %v303, %v302
  %v339 = vpack.c.b16 %v305, %v304
  %v340 = vpack.c.b16 %v307, %v306
  %v341 = vpack.c.b16 %v309, %v308
  %v342 = vpack.c.b16 %v311, %v310
  %v343 = vpack.c.b16 %v313, %v312
  %v344 = vpack.c.b16 %v315, %v314
  %v345 = vpack.c.b16 %v317, %v316
  %v346 = vpack.c.b16 %v319, %v318
  %v347 = vpack.c.b16 %v321, %v320
  %v348 = vpack.c.b16 %v323, %v322
  %v349 = vpack.c.b16 %v325, %v324
  %374 = vmatprep.subr.bf16.mxu0 0
  %375 = vmatpush1.bf16.msra.mxu0 %v326
  %376 = vmatprep.subr.bf16.mxu0 0
  %377 = vmatpush1.bf16.msra.mxu0 %v327
  %378 = vmatprep.subr.bf16.mxu0 0
  %379 = vmatpush1.bf16.msra.mxu0 %v328
  %380 = vmatprep.subr.bf16.mxu0 0
  %381 = vmatpush1.bf16.msra.mxu0 %v329
  %382 = vmatprep.subr.bf16.mxu0 0
  %383 = vmatpush1.bf16.msra.mxu0 %v330
  %384 = vmatprep.subr.bf16.mxu0 0
  %385 = vmatpush1.bf16.msra.mxu0 %v331
  %386 = vmatprep.subr.bf16.mxu0 0
  %387 = vmatpush1.bf16.msra.mxu0 %v332
  %388 = vmatprep.subr.bf16.mxu0 0
  %389 = vmatpush1.bf16.msra.mxu0 %v333
  %390 = vmatprep.subr.bf16.mxu0 0
  %391 = vmatpush1.bf16.msra.mxu0 %v334
  %392 = vmatprep.subr.bf16.mxu0 0
  %393 = vmatpush1.bf16.msra.mxu0 %v335
  %394 = vmatprep.subr.bf16.mxu0 0
  %395 = vmatpush1.bf16.msra.mxu0 %v336
  %396 = vmatprep.subr.bf16.mxu0 0
  %397 = vmatpush1.bf16.msra.mxu0 %v337
  %398 = vmatprep.subr.bf16.mxu0 0
  %399 = vmatpush1.bf16.msra.mxu0 %v338
  %400 = vmatprep.subr.bf16.mxu0 0
  %401 = vmatpush1.bf16.msra.mxu0 %v339
  %402 = vmatprep.subr.bf16.mxu0 0
  %403 = vmatpush1.bf16.msra.mxu0 %v340
  %404 = vmatprep.subr.bf16.mxu0 0
  %405 = vmatpush1.bf16.msra.mxu0 %v341
  %406 = vmatprep.mubr.bf16.mxu0 %v183
  %407 = vmatmul.mubr.bf16.gmra.mrb[0].mxu0 %v182
  %v408 = vpop.f32.mrb[0].mxu0
  %v409 = vadd.f32 %v100, %v408
  %v410 = vpop.f32.mrb[0].mxu0
  %v411 = vpop.f32.mrb[0].mxu0
  %v412 = vadd.f32 %v100, %v411
  %v413 = vpop.f32.mrb[0].mxu0
  %414 = vmatprep.mubr.bf16.mxu0 %v186
  %415 = vmatmul.mubr.bf16.gmra.mrb[0].mxu0 %v185
  %v416 = vpop.f32.mrb[0].mxu0
  %v417 = vadd.f32 %v100, %v416
  %v418 = vpop.f32.mrb[0].mxu0
  %v419 = vpop.f32.mrb[0].mxu0
  %v420 = vadd.f32 %v100, %v419
  %v421 = vpop.f32.mrb[0].mxu0
  %422 = vmatprep.mubr.bf16.mxu0 %v189
  %423 = vmatmul.mubr.bf16.gmra.mrb[0].mxu0 %v188
  %v424 = vpop.f32.mrb[0].mxu0
  %v425 = vadd.f32 %v100, %v424
  %v426 = vpop.f32.mrb[0].mxu0
  %v427 = vpop.f32.mrb[0].mxu0
  %v428 = vadd.f32 %v100, %v427
  %v429 = vpop.f32.mrb[0].mxu0
  %430 = vmatprep.mubr.bf16.mxu0 %v192
  %431 = vmatmul.mubr.bf16.gmra.mrb[0].mxu0 %v191
  %v432 = vpop.f32.mrb[0].mxu0
  %v433 = vadd.f32 %v100, %v432
  %v434 = vpop.f32.mrb[0].mxu0
  %v435 = vpop.f32.mrb[0].mxu0
  %v436 = vadd.f32 %v100, %v435
  %v437 = vpop.f32.mrb[0].mxu0
  %438 = vmatprep.mubr.bf16.mxu0 %v195
  %439 = vmatmul.mubr.bf16.gmra.mrb[0].mxu0 %v194
  %v440 = vpop.f32.mrb[0].mxu0
  %v441 = vadd.f32 %v100, %v440
  %v442 = vpop.f32.mrb[0].mxu0
  %v443 = vpop.f32.mrb[0].mxu0
  %v444 = vadd.f32 %v100, %v443
  %v445 = vpop.f32.mrb[0].mxu0
  %446 = vmatprep.mubr.bf16.mxu0 %v198
  %447 = vmatmul.mubr.bf16.gmra.mrb[0].mxu0 %v197
  %v448 = vpop.f32.mrb[0].mxu0
  %v449 = vadd.f32 %v100, %v448
  %v450 = vpop.f32.mrb[0].mxu0
  %v451 = vpop.f32.mrb[0].mxu0
  %v452 = vadd.f32 %v100, %v451
  %v453 = vpop.f32.mrb[0].mxu0
  %454 = vmatprep.mubr.bf16.mxu0 %v201
  %455 = vmatmul.mubr.bf16.gmra.mrb[0].mxu0 %v200
  %v456 = vpop.f32.mrb[0].mxu0
  %v457 = vadd.f32 %v100, %v456
  %v458 = vpop.f32.mrb[0].mxu0
  %v459 = vpop.f32.mrb[0].mxu0
  %v460 = vadd.f32 %v100, %v459
  %v461 = vpop.f32.mrb[0].mxu0
  %462 = vmatprep.mubr.bf16.mxu0 %v204
  %463 = vmatmul.mubr.bf16.gmra.mrb[0].mxu0 %v203
  %v464 = vpop.f32.mrb[0].mxu0
  %v465 = vadd.f32 %v100, %v464
  %v466 = vpop.f32.mrb[0].mxu0
  %v467 = vpop.f32.mrb[0].mxu0
  %v468 = vadd.f32 %v100, %v467
  %v469 = vpop.f32.mrb[0].mxu0
  %470 = vdwg.mxu0
  %471 = vmatprep.subr.bf16.mxu0 0
  %472 = vmatpush1.bf16.msra.mxu0 %v342
  %473 = vmatprep.subr.bf16.mxu0 0
  %474 = vmatpush1.bf16.msra.mxu0 %v343
  %475 = vmatprep.subr.bf16.mxu0 0
  %476 = vmatpush1.bf16.msra.mxu0 %v344
  %477 = vmatprep.subr.bf16.mxu0 0
  %478 = vmatpush1.bf16.msra.mxu0 %v345
  %479 = vmatprep.subr.bf16.mxu0 0
  %480 = vmatpush1.bf16.msra.mxu0 %v346
  %481 = vmatprep.subr.bf16.mxu0 0
  %482 = vmatpush1.bf16.msra.mxu0 %v347
  %483 = vmatprep.subr.bf16.mxu0 0
  %484 = vmatpush1.bf16.msra.mxu0 %v348
  %485 = vmatprep.subr.bf16.mxu0 0
  %486 = vmatpush1.bf16.msra.mxu0 %v349
  %487 = vmatprep.subr.bf16.mxu0 0
  %488 = vmatpush1.bf16.msra.mxu0 0
  %489 = vmatprep.subr.bf16.mxu0 0
  %490 = vmatpush1.bf16.msra.mxu0 0
  %491 = vmatprep.subr.bf16.mxu0 0
  %492 = vmatpush1.bf16.msra.mxu0 0
  %493 = vmatprep.subr.bf16.mxu0 0
  %494 = vmatpush1.bf16.msra.mxu0 0
  %495 = vmatprep.subr.bf16.mxu0 0
  %496 = vmatpush1.bf16.msra.mxu0 0
  %497 = vmatprep.subr.bf16.mxu0 0
  %498 = vmatpush1.bf16.msra.mxu0 0
  %499 = vmatprep.subr.bf16.mxu0 0
  %500 = vmatpush1.bf16.msra.mxu0 0
  %501 = vmatprep.subr.bf16.mxu0 0
  %502 = vmatpush1.bf16.msra.mxu0 0
  %503 = vmatprep.mubr.bf16.mxu0 0
  %504 = vmatmul.mubr.bf16.gmra.mrb[0].mxu0 %v184
  %v505 = vpop.f32.mrb[0].mxu0
  %v506 = vadd.f32 %v409, %v505
  %v507 = vpop.f32.mrb[0].mxu0
  %v508 = vpop.f32.mrb[0].mxu0
  %v509 = vadd.f32 %v412, %v508
  %v510 = vpop.f32.mrb[0].mxu0
  %511 = vmatprep.mubr.bf16.mxu0 0
  %512 = vmatmul.mubr.bf16.gmra.mrb[0].mxu0 %v187
  %v513 = vpop.f32.mrb[0].mxu0
  %v514 = vadd.f32 %v417, %v513
  %v515 = vpop.f32.mrb[0].mxu0
  %v516 = vpop.f32.mrb[0].mxu0
  %v517 = vadd.f32 %v420, %v516
  %v518 = vpop.f32.mrb[0].mxu0
  %519 = vmatprep.mubr.bf16.mxu0 0
  %520 = vmatmul.mubr.bf16.gmra.mrb[0].mxu0 %v190
  %v521 = vpop.f32.mrb[0].mxu0
  %v522 = vadd.f32 %v425, %v521
  %v523 = vpop.f32.mrb[0].mxu0
  %v524 = vpop.f32.mrb[0].mxu0
  %v525 = vadd.f32 %v428, %v524
  %v526 = vpop.f32.mrb[0].mxu0
  %527 = vmatprep.mubr.bf16.mxu0 0
  %528 = vmatmul.mubr.bf16.gmra.mrb[0].mxu0 %v193
  %v529 = vpop.f32.mrb[0].mxu0
  %v530 = vadd.f32 %v433, %v529
  %v531 = vpop.f32.mrb[0].mxu0
  %v532 = vpop.f32.mrb[0].mxu0
  %v533 = vadd.f32 %v436, %v532
  %v534 = vpop.f32.mrb[0].mxu0
  %535 = vmatprep.mubr.bf16.mxu0 0
  %536 = vmatmul.mubr.bf16.gmra.mrb[0].mxu0 %v196
  %v537 = vpop.f32.mrb[0].mxu0
  %v538 = vadd.f32 %v441, %v537
  %v539 = vpop.f32.mrb[0].mxu0
  %v540 = vpop.f32.mrb[0].mxu0
  %v541 = vadd.f32 %v444, %v540
  %v542 = vpop.f32.mrb[0].mxu0
  %543 = vmatprep.mubr.bf16.mxu0 0
  %544 = vmatmul.mubr.bf16.gmra.mrb[0].mxu0 %v199
  %v545 = vpop.f32.mrb[0].mxu0
  %v546 = vadd.f32 %v449, %v545
  %v547 = vpop.f32.mrb[0].mxu0
  %v548 = vpop.f32.mrb[0].mxu0
  %v549 = vadd.f32 %v452, %v548
  %v550 = vpop.f32.mrb[0].mxu0
  %551 = vmatprep.mubr.bf16.mxu0 0
  %552 = vmatmul.mubr.bf16.gmra.mrb[0].mxu0 %v202
  %v553 = vpop.f32.mrb[0].mxu0
  %v554 = vadd.f32 %v457, %v553
  %v555 = vpop.f32.mrb[0].mxu0
  %v556 = vpop.f32.mrb[0].mxu0
  %v557 = vadd.f32 %v460, %v556
  %v558 = vpop.f32.mrb[0].mxu0
  %559 = vmatprep.mubr.bf16.mxu0 0
  %560 = vmatmul.mubr.bf16.gmra.mrb[0].mxu0 %v205
  %v561 = vpop.f32.mrb[0].mxu0
  %v562 = vadd.f32 %v465, %v561
  %v563 = vpop.f32.mrb[0].mxu0
  %v564 = vpop.f32.mrb[0].mxu0
  %v565 = vadd.f32 %v468, %v564
  %v566 = vpop.f32.mrb[0].mxu0
  %567 = vdwg.mxu0
  %v568 = vmax.f32 %v506, 0.0
  %v569 = vmax.f32 %v509, 0.0
  %v570 = vmax.f32 %v514, 0.0
  %v571 = vmax.f32 %v517, 0.0
  %v572 = vmax.f32 %v522, 0.0
  %v573 = vmax.f32 %v525, 0.0
  %v574 = vmax.f32 %v530, 0.0
  %v575 = vmax.f32 %v533, 0.0
  %v576 = vmax.f32 %v538, 0.0
  %v577 = vmax.f32 %v541, 0.0
  %v578 = vmax.f32 %v546, 0.0
  %v579 = vmax.f32 %v549, 0.0
  %v580 = vmax.f32 %v554, 0.0
  %v581 = vmax.f32 %v557, 0.0
  %v582 = vmax.f32 %v562, 0.0
  %v583 = vmax.f32 %v565, 0.0
  %v584 = vpack.c.bf16 %v569, %v568
  %v585 = vpack.c.bf16 %v571, %v570
  %v586 = vpack.c.bf16 %v573, %v572
  %v587 = vpack.c.bf16 %v575, %v574
  %v588 = vpack.c.bf16 %v577, %v576
  %v589 = vpack.c.bf16 %v579, %v578
  %v590 = vpack.c.bf16 %v581, %v580
  %v591 = vpack.c.bf16 %v583, %v582
  %v600 = vunpack.c.l.b16 %v584
  %v601 = vunpack.c.h.b16 %v584
  %v602 = vunpack.c.l.b16 %v585
  %v603 = vunpack.c.h.b16 %v585
  %v604 = vunpack.c.l.b16 %v586
  %v605 = vunpack.c.h.b16 %v586
  %v606 = vunpack.c.l.b16 %v587
  %v607 = vunpack.c.h.b16 %v587
  %v608 = vunpack.c.l.b16 %v588
  %v609 = vunpack.c.h.b16 %v588
  %v610 = vunpack.c.l.b16 %v589
  %v611 = vunpack.c.h.b16 %v589
  %v612 = vunpack.c.l.b16 %v590
  %v613 = vunpack.c.h.b16 %v590
  %v614 = vunpack.c.l.b16 %v591
  %v615 = vunpack.c.h.b16 %v591
  %v616 = vpack.c.b16 %v600, %v600
  %v617 = vpack.c.b16 %v601, %v601
  %v618 = vpack.c.b16 %v602, %v602
  %v619 = vpack.c.b16 %v603, %v603
  %v620 = vpack.c.b16 %v604, %v604
  %v621 = vpack.c.b16 %v605, %v605
  %v622 = vpack.c.b16 %v606, %v606
  %v623 = vpack.c.b16 %v607, %v607
  %v624 = vpack.c.b16 %v608, %v608
  %v625 = vpack.c.b16 %v609, %v609
  %v626 = vpack.c.b16 %v610, %v610
  %v627 = vpack.c.b16 %v611, %v611
  %v628 = vpack.c.b16 %v612, %v612
  %v629 = vpack.c.b16 %v613, %v613
  %v630 = vpack.c.b16 %v614, %v614
  %v631 = vpack.c.b16 %v615, %v615
  %648 = vst [vmem:[%s3] sm:$0xf] %v616
  %649 = vst [vmem:[%s3 + $0x4] sm:$0xf] %v617
  %650 = vst [vmem:[%s3 + $0x8] sm:$0xf] %v618
  %651 = vst [vmem:[%s3 + $0xc] sm:$0xf] %v619
  %652 = vst [vmem:[%s3 + $0x10] sm:$0xf] %v620
  %653 = vst [vmem:[%s3 + $0x14] sm:$0xf] %v621
  %654 = vst [vmem:[%s3 + $0x18] sm:$0xf] %v622
  %655 = vst [vmem:[%s3 + $0x1c] sm:$0xf] %v623
  %656 = vst [vmem:[%s3 + $0x20] sm:$0xf] %v624
  %657 = vst [vmem:[%s3 + $0x24] sm:$0xf] %v625
  %658 = vst [vmem:[%s3 + $0x28] sm:$0xf] %v626
  %659 = vst [vmem:[%s3 + $0x2c] sm:$0xf] %v627
  %660 = vst [vmem:[%s3 + $0x30] sm:$0xf] %v628
  %661 = vst [vmem:[%s3 + $0x34] sm:$0xf] %v629
  %662 = vst [vmem:[%s3 + $0x38] sm:$0xf] %v630
  %663 = vst [vmem:[%s3 + $0x3c] sm:$0xf] %v631
  // Predicated region
  $region14: #{pose_resnet_forward.28} parent=0 // pred_check
    _
  $region15: #{pose_resnet_forward.28} parent=0 // pred_check_branch
    %665 = sbr.rel (0) target = $region17
  $region16: #{pose_resnet_forward.28} parent=0 // pred_region
    _
  $region17: #{pose_resnet_forward.28} parent=0 // pred_fallthru
    _
  // Predicated region
  $region18: #{pose_resnet_forward.28} parent=0 // pred_check
    _
  $region19: #{pose_resnet_forward.28} parent=0 // pred_check_branch
    %667 = sbr.rel (0) target = $region21
  $region20: #{pose_resnet_forward.28} parent=0 // pred_region
    _
  $region21: #{pose_resnet_forward.28} parent=0 // pred_fallthru
    _

// kernel: pose_resnet_forward.30
$region0: #{pose_resnet_forward.30}
  #allocation0 [shape = 'u32[]', space=smem, size = 0x4, offset = 0x4, fixed_abs, tag = 'smem constant byte address 0x4 - core index']
  #allocation1 [shape = 'u32[144,128]{1,0:T(1,128)}', space=vmem, size = 0x12000, scoped, tag = 'internal scratch']
  %s0 = inlined_call_operand.vmem [shape: bf16[32,384], index: 0, kind: input, shape index: {}]
  %s1 = inlined_call_operand.vmem [shape: bf16[384,128], index: 1, kind: input, shape index: {}]
  %s2 = inlined_call_operand.vmem [shape: f32[1,128], index: 2, kind: input, shape index: {}]
  %s3 = inlined_call_operand.vmem [shape: f32[1,128], index: 3, kind: input, shape index: {}]
  %s4 = inlined_call_operand.vmem [shape: bf16[32,128], index: 4, kind: output, shape index: {}]
  %s5 = sld [smem:[#allocation0]]
  $region26: #{pose_resnet_forward.30} parent=0
    _
  %s7 = ssub.s32 1, %s5
  %s8 = scalar_select 0, %s7, %s5
  // Predicated region
  $region2: #{pose_resnet_forward.30} parent=0 // pred_check
    _
  $region3: #{pose_resnet_forward.30} parent=0 // pred_check_branch
    %10 = sbr.rel (0) target = $region5
  $region4: #{pose_resnet_forward.30} parent=0 // pred_region
    _
  $region5: #{pose_resnet_forward.30} parent=0 // pred_fallthru
    _
  // Predicated region
  $region6: #{pose_resnet_forward.30} parent=0 // pred_check
    _
  $region7: #{pose_resnet_forward.30} parent=0 // pred_check_branch
    %12 = sbr.rel (0) target = $region9
  $region8: #{pose_resnet_forward.30} parent=0 // pred_region
    _
  $region9: #{pose_resnet_forward.30} parent=0 // pred_fallthru
    _
  // Predicated region
  $region10: #{pose_resnet_forward.30} parent=0 // pred_check
    _
  $region11: #{pose_resnet_forward.30} parent=0 // pred_check_branch
    %14 = sbr.rel (0) target = $region13
  $region12: #{pose_resnet_forward.30} parent=0 // pred_region
    _
  $region13: #{pose_resnet_forward.30} parent=0 // pred_fallthru
    _
  // Predicated region
  $region14: #{pose_resnet_forward.30} parent=0 // pred_check
    _
  $region15: #{pose_resnet_forward.30} parent=0 // pred_check_branch
    %16 = sbr.rel (0) target = $region17
  $region16: #{pose_resnet_forward.30} parent=0 // pred_region
    _
  $region17: #{pose_resnet_forward.30} parent=0 // pred_fallthru
    _
  %v18 = vld [vmem:[%s0] sm:$0xff]
  %v19 = vld [vmem:[%s0 + $0x8] sm:$0xf]
  %v20 = vld [vmem:[%s0 + $0xc] sm:$0xff]
  %v21 = vld [vmem:[%s0 + $0x14] sm:$0xf]
  %v22 = vld [vmem:[%s0 + $0x18] sm:$0xff]
  %v23 = vld [vmem:[%s0 + $0x20] sm:$0xf]
  %v24 = vld [vmem:[%s0 + $0x24] sm:$0xff]
  %v25 = vld [vmem:[%s0 + $0x2c] sm:$0xf]
  %v26 = vld [vmem:[%s1] sm:$0xf]
  %v27 = vld [vmem:[%s1 + $0x4] sm:$0xf]
  %v28 = vld [vmem:[%s1 + $0x8] sm:$0xf]
  %v29 = vld [vmem:[%s1 + $0xc] sm:$0xf]
  %v30 = vld [vmem:[%s1 + $0x10] sm:$0xf]
  %v31 = vld [vmem:[%s1 + $0x14] sm:$0xf]
  %v32 = vld [vmem:[%s1 + $0x18] sm:$0xf]
  %v33 = vld [vmem:[%s1 + $0x1c] sm:$0xf]
  %v34 = vld [vmem:[%s1 + $0x20] sm:$0xf]
  %v35 = vld [vmem:[%s1 + $0x24] sm:$0xf]
  %v36 = vld [vmem:[%s1 + $0x28] sm:$0xf]
  %v37 = vld [vmem:[%s1 + $0x2c] sm:$0xf]
  %v38 = vld [vmem:[%s1 + $0x30] sm:$0xf]
  %v39 = vld [vmem:[%s1 + $0x34] sm:$0xf]
  %v40 = vld [vmem:[%s1 + $0x38] sm:$0xf]
  %v41 = vld [vmem:[%s1 + $0x3c] sm:$0xf]
  %v42 = vld [vmem:[%s1 + $0x40] sm:$0xf]
  %v43 = vld [vmem:[%s1 + $0x44] sm:$0xf]
  %v44 = vld [vmem:[%s1 + $0x48] sm:$0xf]
  %v45 = vld [vmem:[%s1 + $0x4c] sm:$0xf]
  %v46 = vld [vmem:[%s1 + $0x50] sm:$0xf]
  %v47 = vld [vmem:[%s1 + $0x54] sm:$0xf]
  %v48 = vld [vmem:[%s1 + $0x58] sm:$0xf]
  %v49 = vld [vmem:[%s1 + $0x5c] sm:$0xf]
  %v50 = vld [vmem:[%s1 + $0x60] sm:$0xf]
  %v51 = vld [vmem:[%s1 + $0x64] sm:$0xf]
  %v52 = vld [vmem:[%s1 + $0x68] sm:$0xf]
  %v53 = vld [vmem:[%s1 + $0x6c] sm:$0xf]
  %v54 = vld [vmem:[%s1 + $0x70] sm:$0xf]
  %v55 = vld [vmem:[%s1 + $0x74] sm:$0xf]
  %v56 = vld [vmem:[%s1 + $0x78] sm:$0xf]
  %v57 = vld [vmem:[%s1 + $0x7c] sm:$0xf]
  %v58 = vld [vmem:[%s1 + $0x80] sm:$0xf]
  %v59 = vld [vmem:[%s1 + $0x84] sm:$0xf]
  %v60 = vld [vmem:[%s1 + $0x88] sm:$0xf]
  %v61 = vld [vmem:[%s1 + $0x8c] sm:$0xf]
  %v62 = vld [vmem:[%s1 + $0x90] sm:$0xf]
  %v63 = vld [vmem:[%s1 + $0x94] sm:$0xf]
  %v64 = vld [vmem:[%s1 + $0x98] sm:$0xf]
  %v65 = vld [vmem:[%s1 + $0x9c] sm:$0xf]
  %v66 = vld [vmem:[%s1 + $0xa0] sm:$0xf]
  %v67 = vld [vmem:[%s1 + $0xa4] sm:$0xf]
  %v68 = vld [vmem:[%s1 + $0xa8] sm:$0xf]
  %v69 = vld [vmem:[%s1 + $0xac] sm:$0xf]
  %v70 = vld [vmem:[%s1 + $0xb0] sm:$0xf]
  %v71 = vld [vmem:[%s1 + $0xb4] sm:$0xf]
  %v72 = vld [vmem:[%s1 + $0xb8] sm:$0xf]
  %v73 = vld [vmem:[%s1 + $0xbc] sm:$0xf]
  %v74 = vld [vmem:[%s2] sm:$0x1]
  %v76 = vlaneseq
  %v77 = vshrl.u32 %v76, 7
  %v78 = vsub.s32 0, %v77
  %v79 = vrot.slane %v74, %v78
  %v89 = vunpack.c.l.b16 %v18
  %v90 = vunpack.c.h.b16 %v18
  %v91 = vunpack.c.l.b16 %v19
  %v92 = vunpack.c.l.b16 %v20
  %v93 = vunpack.c.h.b16 %v20
  %v94 = vunpack.c.l.b16 %v21
  %v95 = vunpack.c.l.b16 %v22
  %v96 = vunpack.c.h.b16 %v22
  %v97 = vunpack.c.l.b16 %v23
  %v98 = vunpack.c.l.b16 %v24
  %v99 = vunpack.c.h.b16 %v24
  %v100 = vunpack.c.l.b16 %v25
  %v101 = vpack.c.b16 %v92, %v89
  %v102 = vpack.c.b16 %v93, %v90
  %v103 = vpack.c.b16 %v94, %v91
  %v104 = vpack.c.b16 %v98, %v95
  %v105 = vpack.c.b16 %v99, %v96
  %v106 = vpack.c.b16 %v100, %v97
  %v161 = vunpack.c.l.b16 %v26
  %v162 = vunpack.c.l.b16 %v27
  %v163 = vunpack.c.l.b16 %v28
  %v164 = vunpack.c.l.b16 %v29
  %v165 = vunpack.c.l.b16 %v30
  %v166 = vunpack.c.l.b16 %v31
  %v167 = vunpack.c.l.b16 %v32
  %v168 = vunpack.c.l.b16 %v33
  %v169 = vunpack.c.l.b16 %v34
  %v170 = vunpack.c.l.b16 %v35
  %v171 = vunpack.c.l.b16 %v36
  %v172 = vunpack.c.l.b16 %v37
  %v173 = vunpack.c.l.b16 %v38
  %v174 = vunpack.c.l.b16 %v39
  %v175 = vunpack.c.l.b16 %v40
  %v176 = vunpack.c.l.b16 %v41
  %v177 = vunpack.c.l.b16 %v42
  %v178 = vunpack.c.l.b16 %v43
  %v179 = vunpack.c.l.b16 %v44
  %v180 = vunpack.c.l.b16 %v45
  %v181 = vunpack.c.l.b16 %v46
  %v182 = vunpack.c.l.b16 %v47
  %v183 = vunpack.c.l.b16 %v48
  %v184 = vunpack.c.l.b16 %v49
  %v185 = vunpack.c.l.b16 %v50
  %v186 = vunpack.c.l.b16 %v51
  %v187 = vunpack.c.l.b16 %v52
  %v188 = vunpack.c.l.b16 %v53
  %v189 = vunpack.c.l.b16 %v54
  %v190 = vunpack.c.l.b16 %v55
  %v191 = vunpack.c.l.b16 %v56
  %v192 = vunpack.c.l.b16 %v57
  %v193 = vunpack.c.l.b16 %v58
  %v194 = vunpack.c.l.b16 %v59
  %v195 = vunpack.c.l.b16 %v60
  %v196 = vunpack.c.l.b16 %v61
  %v197 = vunpack.c.l.b16 %v62
  %v198 = vunpack.c.l.b16 %v63
  %v199 = vunpack.c.l.b16 %v64
  %v200 = vunpack.c.l.b16 %v65
  %v201 = vunpack.c.l.b16 %v66
  %v202 = vunpack.c.l.b16 %v67
  %v203 = vunpack.c.l.b16 %v68
  %v204 = vunpack.c.l.b16 %v69
  %v205 = vunpack.c.l.b16 %v70
  %v206 = vunpack.c.l.b16 %v71
  %v207 = vunpack.c.l.b16 %v72
  %v208 = vunpack.c.l.b16 %v73
  %v209 = vpack.c.b16 %v162, %v161
  %v210 = vpack.c.b16 %v164, %v163
  %v211 = vpack.c.b16 %v166, %v165
  %v212 = vpack.c.b16 %v168, %v167
  %v213 = vpack.c.b16 %v170, %v169
  %v214 = vpack.c.b16 %v172, %v171
  %v215 = vpack.c.b16 %v174, %v173
  %v216 = vpack.c.b16 %v176, %v175
  %v217 = vpack.c.b16 %v178, %v177
  %v218 = vpack.c.b16 %v180, %v179
  %v219 = vpack.c.b16 %v182, %v181
  %v220 = vpack.c.b16 %v184, %v183
  %v221 = vpack.c.b16 %v186, %v185
  %v222 = vpack.c.b16 %v188, %v187
  %v223 = vpack.c.b16 %v190, %v189
  %v224 = vpack.c.b16 %v192, %v191
  %v225 = vpack.c.b16 %v194, %v193
  %v226 = vpack.c.b16 %v196, %v195
  %v227 = vpack.c.b16 %v198, %v197
  %v228 = vpack.c.b16 %v200, %v199
  %v229 = vpack.c.b16 %v202, %v201
  %v230 = vpack.c.b16 %v204, %v203
  %v231 = vpack.c.b16 %v206, %v205
  %v232 = vpack.c.b16 %v208, %v207
  %257 = vmatprep.subr.bf16.mxu0 0
  %258 = vmatpush1.bf16.msra.mxu0 %v209
  %259 = vmatprep.subr.bf16.mxu0 0
  %260 = vmatpush1.bf16.msra.mxu0 %v210
  %261 = vmatprep.subr.bf16.mxu0 0
  %262 = vmatpush1.bf16.msra.mxu0 %v211
  %263 = vmatprep.subr.bf16.mxu0 0
  %264 = vmatpush1.bf16.msra.mxu0 %v212
  %265 = vmatprep.subr.bf16.mxu0 0
  %266 = vmatpush1.bf16.msra.mxu0 %v213
  %267 = vmatprep.subr.bf16.mxu0 0
  %268 = vmatpush1.bf16.msra.mxu0 %v214
  %269 = vmatprep.subr.bf16.mxu0 0
  %270 = vmatpush1.bf16.msra.mxu0 %v215
  %271 = vmatprep.subr.bf16.mxu0 0
  %272 = vmatpush1.bf16.msra.mxu0 %v216
  %273 = vmatprep.subr.bf16.mxu0 0
  %274 = vmatpush1.bf16.msra.mxu0 %v217
  %275 = vmatprep.subr.bf16.mxu0 0
  %276 = vmatpush1.bf16.msra.mxu0 %v218
  %277 = vmatprep.subr.bf16.mxu0 0
  %278 = vmatpush1.bf16.msra.mxu0 %v219
  %279 = vmatprep.subr.bf16.mxu0 0
  %280 = vmatpush1.bf16.msra.mxu0 %v220
  %281 = vmatprep.subr.bf16.mxu0 0
  %282 = vmatpush1.bf16.msra.mxu0 %v221
  %283 = vmatprep.subr.bf16.mxu0 0
  %284 = vmatpush1.bf16.msra.mxu0 %v222
  %285 = vmatprep.subr.bf16.mxu0 0
  %286 = vmatpush1.bf16.msra.mxu0 %v223
  %287 = vmatprep.subr.bf16.mxu0 0
  %288 = vmatpush1.bf16.msra.mxu0 %v224
  %289 = vmatprep.mubr.bf16.mxu0 %v102
  %290 = vmatmul.mubr.bf16.gmra.mrb[0].mxu0 %v101
  %v291 = vpop.f32.mrb[0].mxu0
  %v292 = vadd.f32 %v79, %v291
  %v293 = vpop.f32.mrb[0].mxu0
  %v294 = vpop.f32.mrb[0].mxu0
  %v295 = vadd.f32 %v79, %v294
  %v296 = vpop.f32.mrb[0].mxu0
  %297 = vmatprep.mubr.bf16.mxu0 %v105
  %298 = vmatmul.mubr.bf16.gmra.mrb[0].mxu0 %v104
  %v299 = vpop.f32.mrb[0].mxu0
  %v300 = vadd.f32 %v79, %v299
  %v301 = vpop.f32.mrb[0].mxu0
  %v302 = vpop.f32.mrb[0].mxu0
  %v303 = vadd.f32 %v79, %v302
  %v304 = vpop.f32.mrb[0].mxu0
  %305 = vdwg.mxu0
  %306 = vmatprep.subr.bf16.mxu0 0
  %307 = vmatpush1.bf16.msra.mxu0 %v225
  %308 = vmatprep.subr.bf16.mxu0 0
  %309 = vmatpush1.bf16.msra.mxu0 %v226
  %310 = vmatprep.subr.bf16.mxu0 0
  %311 = vmatpush1.bf16.msra.mxu0 %v227
  %312 = vmatprep.subr.bf16.mxu0 0
  %313 = vmatpush1.bf16.msra.mxu0 %v228
  %314 = vmatprep.subr.bf16.mxu0 0
  %315 = vmatpush1.bf16.msra.mxu0 %v229
  %316 = vmatprep.subr.bf16.mxu0 0
  %317 = vmatpush1.bf16.msra.mxu0 %v230
  %318 = vmatprep.subr.bf16.mxu0 0
  %319 = vmatpush1.bf16.msra.mxu0 %v231
  %320 = vmatprep.subr.bf16.mxu0 0
  %321 = vmatpush1.bf16.msra.mxu0 %v232
  %322 = vmatprep.subr.bf16.mxu0 0
  %323 = vmatpush1.bf16.msra.mxu0 0
  %324 = vmatprep.subr.bf16.mxu0 0
  %325 = vmatpush1.bf16.msra.mxu0 0
  %326 = vmatprep.subr.bf16.mxu0 0
  %327 = vmatpush1.bf16.msra.mxu0 0
  %328 = vmatprep.subr.bf16.mxu0 0
  %329 = vmatpush1.bf16.msra.mxu0 0
  %330 = vmatprep.subr.bf16.mxu0 0
  %331 = vmatpush1.bf16.msra.mxu0 0
  %332 = vmatprep.subr.bf16.mxu0 0
  %333 = vmatpush1.bf16.msra.mxu0 0
  %334 = vmatprep.subr.bf16.mxu0 0
  %335 = vmatpush1.bf16.msra.mxu0 0
  %336 = vmatprep.subr.bf16.mxu0 0
  %337 = vmatpush1.bf16.msra.mxu0 0
  %338 = vmatprep.mubr.bf16.mxu0 0
  %339 = vmatmul.mubr.bf16.gmra.mrb[0].mxu0 %v103
  %v340 = vpop.f32.mrb[0].mxu0
  %v341 = vadd.f32 %v292, %v340
  %v342 = vpop.f32.mrb[0].mxu0
  %v343 = vpop.f32.mrb[0].mxu0
  %v344 = vadd.f32 %v295, %v343
  %v345 = vpop.f32.mrb[0].mxu0
  %346 = vmatprep.mubr.bf16.mxu0 0
  %347 = vmatmul.mubr.bf16.gmra.mrb[0].mxu0 %v106
  %v348 = vpop.f32.mrb[0].mxu0
  %v349 = vadd.f32 %v300, %v348
  %v350 = vpop.f32.mrb[0].mxu0
  %v351 = vpop.f32.mrb[0].mxu0
  %v352 = vadd.f32 %v303, %v351
  %v353 = vpop.f32.mrb[0].mxu0
  %354 = vdwg.mxu0
  %v355 = vld [vmem:[%s3] sm:$0x1]
  %v356 = vmax.f32 %v341, 0.0
  %v357 = vmax.f32 %v344, 0.0
  %v358 = vmax.f32 %v349, 0.0
  %v359 = vmax.f32 %v352, 0.0
  %v361 = vlaneseq
  %v362 = vshrl.u32 %v361, 7
  %v363 = vsub.s32 0, %v362
  %v364 = vrot.slane %v355, %v363
  %v366 = vmul.f32 %v356, %v364
  %v367 = vmul.f32 %v357, %v364
  %v368 = vmul.f32 %v358, %v364
  %v369 = vmul.f32 %v359, %v364
  %v370 = vsub.f32 1.0, %v355
  %v372 = vlaneseq
  %v373 = vshrl.u32 %v372, 7
  %v374 = vsub.s32 0, %v373
  %v375 = vrot.slane %v370, %v374
  %v377 = vmul.f32 %v341, %v375
  %v378 = vmul.f32 %v344, %v375
  %v379 = vmul.f32 %v349, %v375
  %v380 = vmul.f32 %v352, %v375
  %v381 = vadd.f32 %v366, %v377
  %v382 = vadd.f32 %v367, %v378
  %v383 = vadd.f32 %v368, %v379
  %v384 = vadd.f32 %v369, %v380
  %v385 = vpack.c.bf16 %v382, %v381
  %v386 = vpack.c.bf16 %v384, %v383
  %v389 = vunpack.c.l.b16 %v385
  %v390 = vunpack.c.h.b16 %v385
  %v391 = vunpack.c.l.b16 %v386
  %v392 = vunpack.c.h.b16 %v386
  %v393 = vpack.c.b16 %v389, %v389
  %v394 = vpack.c.b16 %v390, %v390
  %v395 = vpack.c.b16 %v391, %v391
  %v396 = vpack.c.b16 %v392, %v392
  %401 = vst [vmem:[%s4] sm:$0xf] %v393
  %402 = vst [vmem:[%s4 + $0x4] sm:$0xf] %v394
  %403 = vst [vmem:[%s4 + $0x8] sm:$0xf] %v395
  %404 = vst [vmem:[%s4 + $0xc] sm:$0xf] %v396
  // Predicated region
  $region18: #{pose_resnet_forward.30} parent=0 // pred_check
    _
  $region19: #{pose_resnet_forward.30} parent=0 // pred_check_branch
    %406 = sbr.rel (0) target = $region21
  $region20: #{pose_resnet_forward.30} parent=0 // pred_region
    _
  $region21: #{pose_resnet_forward.30} parent=0 // pred_fallthru
    _
  // Predicated region
  $region22: #{pose_resnet_forward.30} parent=0 // pred_check
    _
  $region23: #{pose_resnet_forward.30} parent=0 // pred_check_branch
    %408 = sbr.rel (0) target = $region25
  $region24: #{pose_resnet_forward.30} parent=0 // pred_region
    _
  $region25: #{pose_resnet_forward.30} parent=0 // pred_fallthru
    _

// kernel: pose_resnet_forward.31
$region0: #{pose_resnet_forward.31}
  #allocation0 [shape = 'u32[]', space=smem, size = 0x4, offset = 0x4, fixed_abs, tag = 'smem constant byte address 0x4 - core index']
  #allocation1 [shape = 'u32[144,128]{1,0:T(1,128)}', space=vmem, size = 0x12000, scoped, tag = 'internal scratch']
  %s0 = inlined_call_operand.vmem [shape: bf16[32,640], index: 0, kind: input, shape index: {}]
  %s1 = inlined_call_operand.vmem [shape: bf16[640,128], index: 1, kind: input, shape index: {}]
  %s2 = inlined_call_operand.vmem [shape: f32[1,128], index: 2, kind: input, shape index: {}]
  %s3 = inlined_call_operand.vmem [shape: bf16[32,128], index: 3, kind: input, shape index: {}]
  %s4 = inlined_call_operand.vmem [shape: bf16[32,128], index: 4, kind: output, shape index: {}]
  %s5 = sld [smem:[#allocation0]]
  $region26: #{pose_resnet_forward.31} parent=0
    _
  %s7 = ssub.s32 1, %s5
  %s8 = scalar_select 0, %s7, %s5
  // Predicated region
  $region2: #{pose_resnet_forward.31} parent=0 // pred_check
    _
  $region3: #{pose_resnet_forward.31} parent=0 // pred_check_branch
    %10 = sbr.rel (0) target = $region5
  $region4: #{pose_resnet_forward.31} parent=0 // pred_region
    _
  $region5: #{pose_resnet_forward.31} parent=0 // pred_fallthru
    _
  // Predicated region
  $region6: #{pose_resnet_forward.31} parent=0 // pred_check
    _
  $region7: #{pose_resnet_forward.31} parent=0 // pred_check_branch
    %12 = sbr.rel (0) target = $region9
  $region8: #{pose_resnet_forward.31} parent=0 // pred_region
    _
  $region9: #{pose_resnet_forward.31} parent=0 // pred_fallthru
    _
  // Predicated region
  $region10: #{pose_resnet_forward.31} parent=0 // pred_check
    _
  $region11: #{pose_resnet_forward.31} parent=0 // pred_check_branch
    %14 = sbr.rel (0) target = $region13
  $region12: #{pose_resnet_forward.31} parent=0 // pred_region
    _
  $region13: #{pose_resnet_forward.31} parent=0 // pred_fallthru
    _
  // Predicated region
  $region14: #{pose_resnet_forward.31} parent=0 // pred_check
    _
  $region15: #{pose_resnet_forward.31} parent=0 // pred_check_branch
    %16 = sbr.rel (0) target = $region17
  $region16: #{pose_resnet_forward.31} parent=0 // pred_region
    _
  $region17: #{pose_resnet_forward.31} parent=0 // pred_fallthru
    _
  %v18 = vld [vmem:[%s0] sm:$0xff]
  %v19 = vld [vmem:[%s0 + $0x8] sm:$0xff]
  %v20 = vld [vmem:[%s0 + $0x10] sm:$0xf]
  %v21 = vld [vmem:[%s0 + $0x14] sm:$0xff]
  %v22 = vld [vmem:[%s0 + $0x1c] sm:$0xff]
  %v23 = vld [vmem:[%s0 + $0x24] sm:$0xf]
  %v24 = vld [vmem:[%s0 + $0x28] sm:$0xff]
  %v25 = vld [vmem:[%s0 + $0x30] sm:$0xff]
  %v26 = vld [vmem:[%s0 + $0x38] sm:$0xf]
  %v27 = vld [vmem:[%s0 + $0x3c] sm:$0xff]
  %v28 = vld [vmem:[%s0 + $0x44] sm:$0xff]
  %v29 = vld [vmem:[%s0 + $0x4c] sm:$0xf]
  %v30 = vld [vmem:[%s1] sm:$0xf]
  %v31 = vld [vmem:[%s1 + $0x4] sm:$0xf]
  %v32 = vld [vmem:[%s1 + $0x8] sm:$0xf]
  %v33 = vld [vmem:[%s1 + $0xc] sm:$0xf]
  %v34 = vld [vmem:[%s1 + $0x10] sm:$0xf]
  %v35 = vld [vmem:[%s1 + $0x14] sm:$0xf]
  %v36 = vld [vmem:[%s1 + $0x18] sm:$0xf]
  %v37 = vld [vmem:[%s1 + $0x1c] sm:$0xf]
  %v38 = vld [vmem:[%s1 + $0x20] sm:$0xf]
  %v39 = vld [vmem:[%s1 + $0x24] sm:$0xf]
  %v40 = vld [vmem:[%s1 + $0x28] sm:$0xf]
  %v41 = vld [vmem:[%s1 + $0x2c] sm:$0xf]
  %v42 = vld [vmem:[%s1 + $0x30] sm:$0xf]
  %v43 = vld [vmem:[%s1 + $0x34] sm:$0xf]
  %v44 = vld [vmem:[%s1 + $0x38] sm:$0xf]
  %v45 = vld [vmem:[%s1 + $0x3c] sm:$0xf]
  %v46 = vld [vmem:[%s1 + $0x40] sm:$0xf]
  %v47 = vld [vmem:[%s1 + $0x44] sm:$0xf]
  %v48 = vld [vmem:[%s1 + $0x48] sm:$0xf]
  %v49 = vld [vmem:[%s1 + $0x4c] sm:$0xf]
  %v50 = vld [vmem:[%s1 + $0x50] sm:$0xf]
  %v51 = vld [vmem:[%s1 + $0x54] sm:$0xf]
  %v52 = vld [vmem:[%s1 + $0x58] sm:$0xf]
  %v53 = vld [vmem:[%s1 + $0x5c] sm:$0xf]
  %v54 = vld [vmem:[%s1 + $0x60] sm:$0xf]
  %v55 = vld [vmem:[%s1 + $0x64] sm:$0xf]
  %v56 = vld [vmem:[%s1 + $0x68] sm:$0xf]
  %v57 = vld [vmem:[%s1 + $0x6c] sm:$0xf]
  %v58 = vld [vmem:[%s1 + $0x70] sm:$0xf]
  %v59 = vld [vmem:[%s1 + $0x74] sm:$0xf]
  %v60 = vld [vmem:[%s1 + $0x78] sm:$0xf]
  %v61 = vld [vmem:[%s1 + $0x7c] sm:$0xf]
  %v62 = vld [vmem:[%s1 + $0x80] sm:$0xf]
  %v63 = vld [vmem:[%s1 + $0x84] sm:$0xf]
  %v64 = vld [vmem:[%s1 + $0x88] sm:$0xf]
  %v65 = vld [vmem:[%s1 + $0x8c] sm:$0xf]
  %v66 = vld [vmem:[%s1 + $0x90] sm:$0xf]
  %v67 = vld [vmem:[%s1 + $0x94] sm:$0xf]
  %v68 = vld [vmem:[%s1 + $0x98] sm:$0xf]
  %v69 = vld [vmem:[%s1 + $0x9c] sm:$0xf]
  %v70 = vld [vmem:[%s1 + $0xa0] sm:$0xf]
  %v71 = vld [vmem:[%s1 + $0xa4] sm:$0xf]
  %v72 = vld [vmem:[%s1 + $0xa8] sm:$0xf]
  %v73 = vld [vmem:[%s1 + $0xac] sm:$0xf]
  %v74 = vld [vmem:[%s1 + $0xb0] sm:$0xf]
  %v75 = vld [vmem:[%s1 + $0xb4] sm:$0xf]
  %v76 = vld [vmem:[%s1 + $0xb8] sm:$0xf]
  %v77 = vld [vmem:[%s1 + $0xbc] sm:$0xf]
  %v78 = vld [vmem:[%s1 + $0xc0] sm:$0xf]
  %v79 = vld [vmem:[%s1 + $0xc4] sm:$0xf]
  %v80 = vld [vmem:[%s1 + $0xc8] sm:$0xf]
  %v81 = vld [vmem:[%s1 + $0xcc] sm:$0xf]
  %v82 = vld [vmem:[%s1 + $0xd0] sm:$0xf]
  %v83 = vld [vmem:[%s1 + $0xd4] sm:$0xf]
  %v84 = vld [vmem:[%s1 + $0xd8] sm:$0xf]
  %v85 = vld [vmem:[%s1 + $0xdc] sm:$0xf]
  %v86 = vld [vmem:[%s1 + $0xe0] sm:$0xf]
  %v87 = vld [vmem:[%s1 + $0xe4] sm:$0xf]
  %v88 = vld [vmem:[%s1 + $0xe8] sm:$0xf]
  %v89 = vld [vmem:[%s1 + $0xec] sm:$0xf]
  %v90 = vld [vmem:[%s1 + $0xf0] sm:$0xf]
  %v91 = vld [vmem:[%s1 + $0xf4] sm:$0xf]
  %v92 = vld [vmem:[%s1 + $0xf8] sm:$0xf]
  %v93 = vld [vmem:[%s1 + $0xfc] sm:$0xf]
  %v94 = vld [vmem:[%s1 + $0x100] sm:$0xf]
  %v95 = vld [vmem:[%s1 + $0x104] sm:$0xf]
  %v96 = vld [vmem:[%s1 + $0x108] sm:$0xf]
  %v97 = vld [vmem:[%s1 + $0x10c] sm:$0xf]
  %v98 = vld [vmem:[%s1 + $0x110] sm:$0xf]
  %v99 = vld [vmem:[%s1 + $0x114] sm:$0xf]
  %v100 = vld [vmem:[%s1 + $0x118] sm:$0xf]
  %v101 = vld [vmem:[%s1 + $0x11c] sm:$0xf]
  %v102 = vld [vmem:[%s1 + $0x120] sm:$0xf]
  %v103 = vld [vmem:[%s1 + $0x124] sm:$0xf]
  %v104 = vld [vmem:[%s1 + $0x128] sm:$0xf]
  %v105 = vld [vmem:[%s1 + $0x12c] sm:$0xf]
  %v106 = vld [vmem:[%s1 + $0x130] sm:$0xf]
  %v107 = vld [vmem:[%s1 + $0x134] sm:$0xf]
  %v108 = vld [vmem:[%s1 + $0x138] sm:$0xf]
  %v109 = vld [vmem:[%s1 + $0x13c] sm:$0xf]
  %v110 = vld [vmem:[%s2] sm:$0x1]
  %v112 = vlaneseq
  %v113 = vshrl.u32 %v112, 7
  %v114 = vsub.s32 0, %v113
  %v115 = vrot.slane %v110, %v114
  %v129 = vunpack.c.l.b16 %v18
  %v130 = vunpack.c.h.b16 %v18
  %v131 = vunpack.c.l.b16 %v19
  %v132 = vunpack.c.h.b16 %v19
  %v133 = vunpack.c.l.b16 %v20
  %v134 = vunpack.c.l.b16 %v21
  %v135 = vunpack.c.h.b16 %v21
  %v136 = vunpack.c.l.b16 %v22
  %v137 = vunpack.c.h.b16 %v22
  %v138 = vunpack.c.l.b16 %v23
  %v139 = vunpack.c.l.b16 %v24
  %v140 = vunpack.c.h.b16 %v24
  %v141 = vunpack.c.l.b16 %v25
  %v142 = vunpack.c.h.b16 %v25
  %v143 = vunpack.c.l.b16 %v26
  %v144 = vunpack.c.l.b16 %v27
  %v145 = vunpack.c.h.b16 %v27
  %v146 = vunpack.c.l.b16 %v28
  %v147 = vunpack.c.h.b16 %v28
  %v148 = vunpack.c.l.b16 %v29
  %v149 = vpack.c.b16 %v134, %v129
  %v150 = vpack.c.b16 %v135, %v130
  %v151 = vpack.c.b16 %v136, %v131
  %v152 = vpack.c.b16 %v137, %v132
  %v153 = vpack.c.b16 %v138, %v133
  %v154 = vpack.c.b16 %v144, %v139
  %v155 = vpack.c.b16 %v145, %v140
  %v156 = vpack.c.b16 %v146, %v141
  %v157 = vpack.c.b16 %v147, %v142
  %v158 = vpack.c.b16 %v148, %v143
  %v249 = vunpack.c.l.b16 %v30
  %v250 = vunpack.c.l.b16 %v31
  %v251 = vunpack.c.l.b16 %v32
  %v252 = vunpack.c.l.b16 %v33
  %v253 = vunpack.c.l.b16 %v34
  %v254 = vunpack.c.l.b16 %v35
  %v255 = vunpack.c.l.b16 %v36
  %v256 = vunpack.c.l.b16 %v37
  %v257 = vunpack.c.l.b16 %v38
  %v258 = vunpack.c.l.b16 %v39
  %v259 = vunpack.c.l.b16 %v40
  %v260 = vunpack.c.l.b16 %v41
  %v261 = vunpack.c.l.b16 %v42
  %v262 = vunpack.c.l.b16 %v43
  %v263 = vunpack.c.l.b16 %v44
  %v264 = vunpack.c.l.b16 %v45
  %v265 = vunpack.c.l.b16 %v46
  %v266 = vunpack.c.l.b16 %v47
  %v267 = vunpack.c.l.b16 %v48
  %v268 = vunpack.c.l.b16 %v49
  %v269 = vunpack.c.l.b16 %v50
  %v270 = vunpack.c.l.b16 %v51
  %v271 = vunpack.c.l.b16 %v52
  %v272 = vunpack.c.l.b16 %v53
  %v273 = vunpack.c.l.b16 %v54
  %v274 = vunpack.c.l.b16 %v55
  %v275 = vunpack.c.l.b16 %v56
  %v276 = vunpack.c.l.b16 %v57
  %v277 = vunpack.c.l.b16 %v58
  %v278 = vunpack.c.l.b16 %v59
  %v279 = vunpack.c.l.b16 %v60
  %v280 = vunpack.c.l.b16 %v61
  %v281 = vunpack.c.l.b16 %v62
  %v282 = vunpack.c.l.b16 %v63
  %v283 = vunpack.c.l.b16 %v64
  %v284 = vunpack.c.l.b16 %v65
  %v285 = vunpack.c.l.b16 %v66
  %v286 = vunpack.c.l.b16 %v67
  %v287 = vunpack.c.l.b16 %v68
  %v288 = vunpack.c.l.b16 %v69
  %v289 = vunpack.c.l.b16 %v70
  %v290 = vunpack.c.l.b16 %v71
  %v291 = vunpack.c.l.b16 %v72
  %v292 = vunpack.c.l.b16 %v73
  %v293 = vunpack.c.l.b16 %v74
  %v294 = vunpack.c.l.b16 %v75
  %v295 = vunpack.c.l.b16 %v76
  %v296 = vunpack.c.l.b16 %v77
  %v297 = vunpack.c.l.b16 %v78
  %v298 = vunpack.c.l.b16 %v79
  %v299 = vunpack.c.l.b16 %v80
  %v300 = vunpack.c.l.b16 %v81
  %v301 = vunpack.c.l.b16 %v82
  %v302 = vunpack.c.l.b16 %v83
  %v303 = vunpack.c.l.b16 %v84
  %v304 = vunpack.c.l.b16 %v85
  %v305 = vunpack.c.l.b16 %v86
  %v306 = vunpack.c.l.b16 %v87
  %v307 = vunpack.c.l.b16 %v88
  %v308 = vunpack.c.l.b16 %v89
  %v309 = vunpack.c.l.b16 %v90
  %v310 = vunpack.c.l.b16 %v91
  %v311 = vunpack.c.l.b16 %v92
  %v312 = vunpack.c.l.b16 %v93
  %v313 = vunpack.c.l.b16 %v94
  %v314 = vunpack.c.l.b16 %v95
  %v315 = vunpack.c.l.b16 %v96
  %v316 = vunpack.c.l.b16 %v97
  %v317 = vunpack.c.l.b16 %v98
  %v318 = vunpack.c.l.b16 %v99
  %v319 = vunpack.c.l.b16 %v100
  %v320 = vunpack.c.l.b16 %v101
  %v321 = vunpack.c.l.b16 %v102
  %v322 = vunpack.c.l.b16 %v103
  %v323 = vunpack.c.l.b16 %v104
  %v324 = vunpack.c.l.b16 %v105
  %v325 = vunpack.c.l.b16 %v106
  %v326 = vunpack.c.l.b16 %v107
  %v327 = vunpack.c.l.b16 %v108
  %v328 = vunpack.c.l.b16 %v109
  %v329 = vpack.c.b16 %v250, %v249
  %v330 = vpack.c.b16 %v252, %v251
  %v331 = vpack.c.b16 %v254, %v253
  %v332 = vpack.c.b16 %v256, %v255
  %v333 = vpack.c.b16 %v258, %v257
  %v334 = vpack.c.b16 %v260, %v259
  %v335 = vpack.c.b16 %v262, %v261
  %v336 = vpack.c.b16 %v264, %v263
  %v337 = vpack.c.b16 %v266, %v265
  %v338 = vpack.c.b16 %v268, %v267
  %v339 = vpack.c.b16 %v270, %v269
  %v340 = vpack.c.b16 %v272, %v271
  %v341 = vpack.c.b16 %v274, %v273
  %v342 = vpack.c.b16 %v276, %v275
  %v343 = vpack.c.b16 %v278, %v277
  %v344 = vpack.c.b16 %v280, %v279
  %v345 = vpack.c.b16 %v282, %v281
  %v346 = vpack.c.b16 %v284, %v283
  %v347 = vpack.c.b16 %v286, %v285
  %v348 = vpack.c.b16 %v288, %v287
  %v349 = vpack.c.b16 %v290, %v289
  %v350 = vpack.c.b16 %v292, %v291
  %v351 = vpack.c.b16 %v294, %v293
  %v352 = vpack.c.b16 %v296, %v295
  %v353 = vpack.c.b16 %v298, %v297
  %v354 = vpack.c.b16 %v300, %v299
  %v355 = vpack.c.b16 %v302, %v301
  %v356 = vpack.c.b16 %v304, %v303
  %v357 = vpack.c.b16 %v306, %v305
  %v358 = vpack.c.b16 %v308, %v307
  %v359 = vpack.c.b16 %v310, %v309
  %v360 = vpack.c.b16 %v312, %v311
  %v361 = vpack.c.b16 %v314, %v313
  %v362 = vpack.c.b16 %v316, %v315
  %v363 = vpack.c.b16 %v318, %v317
  %v364 = vpack.c.b16 %v320, %v319
  %v365 = vpack.c.b16 %v322, %v321
  %v366 = vpack.c.b16 %v324, %v323
  %v367 = vpack.c.b16 %v326, %v325
  %v368 = vpack.c.b16 %v328, %v327
  %409 = vmatprep.subr.bf16.mxu0 0
  %410 = vmatpush1.bf16.msra.mxu0 %v329
  %411 = vmatprep.subr.bf16.mxu0 0
  %412 = vmatpush1.bf16.msra.mxu0 %v330
  %413 = vmatprep.subr.bf16.mxu0 0
  %414 = vmatpush1.bf16.msra.mxu0 %v331
  %415 = vmatprep.subr.bf16.mxu0 0
  %416 = vmatpush1.bf16.msra.mxu0 %v332
  %417 = vmatprep.subr.bf16.mxu0 0
  %418 = vmatpush1.bf16.msra.mxu0 %v333
  %419 = vmatprep.subr.bf16.mxu0 0
  %420 = vmatpush1.bf16.msra.mxu0 %v334
  %421 = vmatprep.subr.bf16.mxu0 0
  %422 = vmatpush1.bf16.msra.mxu0 %v335
  %423 = vmatprep.subr.bf16.mxu0 0
  %424 = vmatpush1.bf16.msra.mxu0 %v336
  %425 = vmatprep.subr.bf16.mxu0 0
  %426 = vmatpush1.bf16.msra.mxu0 %v337
  %427 = vmatprep.subr.bf16.mxu0 0
  %428 = vmatpush1.bf16.msra.mxu0 %v338
  %429 = vmatprep.subr.bf16.mxu0 0
  %430 = vmatpush1.bf16.msra.mxu0 %v339
  %431 = vmatprep.subr.bf16.mxu0 0
  %432 = vmatpush1.bf16.msra.mxu0 %v340
  %433 = vmatprep.subr.bf16.mxu0 0
  %434 = vmatpush1.bf16.msra.mxu0 %v341
  %435 = vmatprep.subr.bf16.mxu0 0
  %436 = vmatpush1.bf16.msra.mxu0 %v342
  %437 = vmatprep.subr.bf16.mxu0 0
  %438 = vmatpush1.bf16.msra.mxu0 %v343
  %439 = vmatprep.subr.bf16.mxu0 0
  %440 = vmatpush1.bf16.msra.mxu0 %v344
  %441 = vmatprep.mubr.bf16.mxu0 %v150
  %442 = vmatmul.mubr.bf16.gmra.mrb[0].mxu0 %v149
  %v443 = vpop.f32.mrb[0].mxu0
  %v444 = vadd.f32 %v115, %v443
  %v445 = vpop.f32.mrb[0].mxu0
  %v446 = vpop.f32.mrb[0].mxu0
  %v447 = vadd.f32 %v115, %v446
  %v448 = vpop.f32.mrb[0].mxu0
  %449 = vmatprep.mubr.bf16.mxu0 %v155
  %450 = vmatmul.mubr.bf16.gmra.mrb[0].mxu0 %v154
  %v451 = vpop.f32.mrb[0].mxu0
  %v452 = vadd.f32 %v115, %v451
  %v453 = vpop.f32.mrb[0].mxu0
  %v454 = vpop.f32.mrb[0].mxu0
  %v455 = vadd.f32 %v115, %v454
  %v456 = vpop.f32.mrb[0].mxu0
  %457 = vdwg.mxu0
  %458 = vmatprep.subr.bf16.mxu0 0
  %459 = vmatpush1.bf16.msra.mxu0 %v345
  %460 = vmatprep.subr.bf16.mxu0 0
  %461 = vmatpush1.bf16.msra.mxu0 %v346
  %462 = vmatprep.subr.bf16.mxu0 0
  %463 = vmatpush1.bf16.msra.mxu0 %v347
  %464 = vmatprep.subr.bf16.mxu0 0
  %465 = vmatpush1.bf16.msra.mxu0 %v348
  %466 = vmatprep.subr.bf16.mxu0 0
  %467 = vmatpush1.bf16.msra.mxu0 %v349
  %468 = vmatprep.subr.bf16.mxu0 0
  %469 = vmatpush1.bf16.msra.mxu0 %v350
  %470 = vmatprep.subr.bf16.mxu0 0
  %471 = vmatpush1.bf16.msra.mxu0 %v351
  %472 = vmatprep.subr.bf16.mxu0 0
  %473 = vmatpush1.bf16.msra.mxu0 %v352
  %474 = vmatprep.subr.bf16.mxu0 0
  %475 = vmatpush1.bf16.msra.mxu0 %v353
  %476 = vmatprep.subr.bf16.mxu0 0
  %477 = vmatpush1.bf16.msra.mxu0 %v354
  %478 = vmatprep.subr.bf16.mxu0 0
  %479 = vmatpush1.bf16.msra.mxu0 %v355
  %480 = vmatprep.subr.bf16.mxu0 0
  %481 = vmatpush1.bf16.msra.mxu0 %v356
  %482 = vmatprep.subr.bf16.mxu0 0
  %483 = vmatpush1.bf16.msra.mxu0 %v357
  %484 = vmatprep.subr.bf16.mxu0 0
  %485 = vmatpush1.bf16.msra.mxu0 %v358
  %486 = vmatprep.subr.bf16.mxu0 0
  %487 = vmatpush1.bf16.msra.mxu0 %v359
  %488 = vmatprep.subr.bf16.mxu0 0
  %489 = vmatpush1.bf16.msra.mxu0 %v360
  %490 = vmatprep.mubr.bf16.mxu0 %v152
  %491 = vmatmul.mubr.bf16.gmra.mrb[0].mxu0 %v151
  %v492 = vpop.f32.mrb[0].mxu0
  %v493 = vadd.f32 %v444, %v492
  %v494 = vpop.f32.mrb[0].mxu0
  %v495 = vpop.f32.mrb[0].mxu0
  %v496 = vadd.f32 %v447, %v495
  %v497 = vpop.f32.mrb[0].mxu0
  %498 = vmatprep.mubr.bf16.mxu0 %v157
  %499 = vmatmul.mubr.bf16.gmra.mrb[0].mxu0 %v156
  %v500 = vpop.f32.mrb[0].mxu0
  %v501 = vadd.f32 %v452, %v500
  %v502 = vpop.f32.mrb[0].mxu0
  %v503 = vpop.f32.mrb[0].mxu0
  %v504 = vadd.f32 %v455, %v503
  %v505 = vpop.f32.mrb[0].mxu0
  %506 = vdwg.mxu0
  %507 = vmatprep.subr.bf16.mxu0 0
  %508 = vmatpush1.bf16.msra.mxu0 %v361
  %509 = vmatprep.subr.bf16.mxu0 0
  %510 = vmatpush1.bf16.msra.mxu0 %v362
  %511 = vmatprep.subr.bf16.mxu0 0
  %512 = vmatpush1.bf16.msra.mxu0 %v363
  %513 = vmatprep.subr.bf16.mxu0 0
  %514 = vmatpush1.bf16.msra.mxu0 %v364
  %515 = vmatprep.subr.bf16.mxu0 0
  %516 = vmatpush1.bf16.msra.mxu0 %v365
  %517 = vmatprep.subr.bf16.mxu0 0
  %518 = vmatpush1.bf16.msra.mxu0 %v366
  %519 = vmatprep.subr.bf16.mxu0 0
  %520 = vmatpush1.bf16.msra.mxu0 %v367
  %521 = vmatprep.subr.bf16.mxu0 0
  %522 = vmatpush1.bf16.msra.mxu0 %v368
  %523 = vmatprep.subr.bf16.mxu0 0
  %524 = vmatpush1.bf16.msra.mxu0 0
  %525 = vmatprep.subr.bf16.mxu0 0
  %526 = vmatpush1.bf16.msra.mxu0 0
  %527 = vmatprep.subr.bf16.mxu0 0
  %528 = vmatpush1.bf16.msra.mxu0 0
  %529 = vmatprep.subr.bf16.mxu0 0
  %530 = vmatpush1.bf16.msra.mxu0 0
  %531 = vmatprep.subr.bf16.mxu0 0
  %532 = vmatpush1.bf16.msra.mxu0 0
  %533 = vmatprep.subr.bf16.mxu0 0
  %534 = vmatpush1.bf16.msra.mxu0 0
  %535 = vmatprep.subr.bf16.mxu0 0
  %536 = vmatpush1.bf16.msra.mxu0 0
  %537 = vmatprep.subr.bf16.mxu0 0
  %538 = vmatpush1.bf16.msra.mxu0 0
  %539 = vmatprep.mubr.bf16.mxu0 0
  %540 = vmatmul.mubr.bf16.gmra.mrb[0].mxu0 %v153
  %v541 = vpop.f32.mrb[0].mxu0
  %v542 = vadd.f32 %v493, %v541
  %v543 = vpop.f32.mrb[0].mxu0
  %v544 = vpop.f32.mrb[0].mxu0
  %v545 = vadd.f32 %v496, %v544
  %v546 = vpop.f32.mrb[0].mxu0
  %547 = vmatprep.mubr.bf16.mxu0 0
  %548 = vmatmul.mubr.bf16.gmra.mrb[0].mxu0 %v158
  %v549 = vpop.f32.mrb[0].mxu0
  %v550 = vadd.f32 %v501, %v549
  %v551 = vpop.f32.mrb[0].mxu0
  %v552 = vpop.f32.mrb[0].mxu0
  %v553 = vadd.f32 %v504, %v552
  %v554 = vpop.f32.mrb[0].mxu0
  %555 = vdwg.mxu0
  %v556 = vld [vmem:[%s3] sm:$0xf]
  %v557 = vld [vmem:[%s3 + $0x4] sm:$0xf]
  %v558 = vld [vmem:[%s3 + $0x8] sm:$0xf]
  %v559 = vld [vmem:[%s3 + $0xc] sm:$0xf]
  %v560 = vunpack.c.l.bf16 %v556
  %v561 = vunpack.c.l.bf16 %v557
  %v562 = vunpack.c.l.bf16 %v558
  %v563 = vunpack.c.l.bf16 %v559
  %v564 = vadd.f32 %v542, %v560
  %v565 = vadd.f32 %v545, %v561
  %v566 = vadd.f32 %v550, %v562
  %v567 = vadd.f32 %v553, %v563
  %v568 = vmax.f32 %v564, 0.0
  %v569 = vmax.f32 %v565, 0.0
  %v570 = vmax.f32 %v566, 0.0
  %v571 = vmax.f32 %v567, 0.0
  %v572 = vpack.c.bf16 %v569, %v568
  %v573 = vpack.c.bf16 %v571, %v570
  %v576 = vunpack.c.l.b16 %v572
  %v577 = vunpack.c.h.b16 %v572
  %v578 = vunpack.c.l.b16 %v573
  %v579 = vunpack.c.h.b16 %v573
  %v580 = vpack.c.b16 %v576, %v576
  %v581 = vpack.c.b16 %v577, %v577
  %v582 = vpack.c.b16 %v578, %v578
  %v583 = vpack.c.b16 %v579, %v579
  %588 = vst [vmem:[%s4] sm:$0xf] %v580
  %589 = vst [vmem:[%s4 + $0x4] sm:$0xf] %v581
  %590 = vst [vmem:[%s4 + $0x8] sm:$0xf] %v582
  %591 = vst [vmem:[%s4 + $0xc] sm:$0xf] %v583
  // Predicated region
  $region18: #{pose_resnet_forward.31} parent=0 // pred_check
    _
  $region19: #{pose_resnet_forward.31} parent=0 // pred_check_branch
    %593 = sbr.rel (0) target = $region21
  $region20: #{pose_resnet_forward.31} parent=0 // pred_region
    _
  $region21: #{pose_resnet_forward.31} parent=0 // pred_fallthru
    _
  // Predicated region
  $region22: #{pose_resnet_forward.31} parent=0 // pred_check
    _
  $region23: #{pose_resnet_forward.31} parent=0 // pred_check_branch
    %595 = sbr.rel (0) target = $region25
  $region24: #{pose_resnet_forward.31} parent=0 // pred_region
    _
  $region25: #{pose_resnet_forward.31} parent=0 // pred_fallthru
    _

// kernel: pose_resnet_forward.32
$region0: #{pose_resnet_forward.32}
  #allocation0 [shape = 'u32[]', space=smem, size = 0x4, offset = 0x4, fixed_abs, tag = 'smem constant byte address 0x4 - core index']
  #allocation1 [shape = 'u32[144,128]{1,0:T(1,128)}', space=vmem, size = 0x12000, scoped, tag = 'internal scratch']
  %s0 = inlined_call_operand.vmem [shape: bf16[32,640], index: 0, kind: input, shape index: {}]
  %s1 = inlined_call_operand.vmem [shape: bf16[640,128], index: 1, kind: input, shape index: {}]
  %s2 = inlined_call_operand.vmem [shape: f32[1,128], index: 2, kind: input, shape index: {}]
  %s3 = inlined_call_operand.vmem [shape: bf16[32,128], index: 3, kind: output, shape index: {}]
  %s4 = sld [smem:[#allocation0]]
  $region22: #{pose_resnet_forward.32} parent=0
    _
  %s6 = ssub.s32 1, %s4
  %s7 = scalar_select 0, %s6, %s4
  // Predicated region
  $region2: #{pose_resnet_forward.32} parent=0 // pred_check
    _
  $region3: #{pose_resnet_forward.32} parent=0 // pred_check_branch
    %9 = sbr.rel (0) target = $region5
  $region4: #{pose_resnet_forward.32} parent=0 // pred_region
    _
  $region5: #{pose_resnet_forward.32} parent=0 // pred_fallthru
    _
  // Predicated region
  $region6: #{pose_resnet_forward.32} parent=0 // pred_check
    _
  $region7: #{pose_resnet_forward.32} parent=0 // pred_check_branch
    %11 = sbr.rel (0) target = $region9
  $region8: #{pose_resnet_forward.32} parent=0 // pred_region
    _
  $region9: #{pose_resnet_forward.32} parent=0 // pred_fallthru
    _
  // Predicated region
  $region10: #{pose_resnet_forward.32} parent=0 // pred_check
    _
  $region11: #{pose_resnet_forward.32} parent=0 // pred_check_branch
    %13 = sbr.rel (0) target = $region13
  $region12: #{pose_resnet_forward.32} parent=0 // pred_region
    _
  $region13: #{pose_resnet_forward.32} parent=0 // pred_fallthru
    _
  %v15 = vld [vmem:[%s0] sm:$0xff]
  %v16 = vld [vmem:[%s0 + $0x8] sm:$0xff]
  %v17 = vld [vmem:[%s0 + $0x10] sm:$0xf]
  %v18 = vld [vmem:[%s0 + $0x14] sm:$0xff]
  %v19 = vld [vmem:[%s0 + $0x1c] sm:$0xff]
  %v20 = vld [vmem:[%s0 + $0x24] sm:$0xf]
  %v21 = vld [vmem:[%s0 + $0x28] sm:$0xff]
  %v22 = vld [vmem:[%s0 + $0x30] sm:$0xff]
  %v23 = vld [vmem:[%s0 + $0x38] sm:$0xf]
  %v24 = vld [vmem:[%s0 + $0x3c] sm:$0xff]
  %v25 = vld [vmem:[%s0 + $0x44] sm:$0xff]
  %v26 = vld [vmem:[%s0 + $0x4c] sm:$0xf]
  %v27 = vld [vmem:[%s1] sm:$0xf]
  %v28 = vld [vmem:[%s1 + $0x4] sm:$0xf]
  %v29 = vld [vmem:[%s1 + $0x8] sm:$0xf]
  %v30 = vld [vmem:[%s1 + $0xc] sm:$0xf]
  %v31 = vld [vmem:[%s1 + $0x10] sm:$0xf]
  %v32 = vld [vmem:[%s1 + $0x14] sm:$0xf]
  %v33 = vld [vmem:[%s1 + $0x18] sm:$0xf]
  %v34 = vld [vmem:[%s1 + $0x1c] sm:$0xf]
  %v35 = vld [vmem:[%s1 + $0x20] sm:$0xf]
  %v36 = vld [vmem:[%s1 + $0x24] sm:$0xf]
  %v37 = vld [vmem:[%s1 + $0x28] sm:$0xf]
  %v38 = vld [vmem:[%s1 + $0x2c] sm:$0xf]
  %v39 = vld [vmem:[%s1 + $0x30] sm:$0xf]
  %v40 = vld [vmem:[%s1 + $0x34] sm:$0xf]
  %v41 = vld [vmem:[%s1 + $0x38] sm:$0xf]
  %v42 = vld [vmem:[%s1 + $0x3c] sm:$0xf]
  %v43 = vld [vmem:[%s1 + $0x40] sm:$0xf]
  %v44 = vld [vmem:[%s1 + $0x44] sm:$0xf]
  %v45 = vld [vmem:[%s1 + $0x48] sm:$0xf]
  %v46 = vld [vmem:[%s1 + $0x4c] sm:$0xf]
  %v47 = vld [vmem:[%s1 + $0x50] sm:$0xf]
  %v48 = vld [vmem:[%s1 + $0x54] sm:$0xf]
  %v49 = vld [vmem:[%s1 + $0x58] sm:$0xf]
  %v50 = vld [vmem:[%s1 + $0x5c] sm:$0xf]
  %v51 = vld [vmem:[%s1 + $0x60] sm:$0xf]
  %v52 = vld [vmem:[%s1 + $0x64] sm:$0xf]
  %v53 = vld [vmem:[%s1 + $0x68] sm:$0xf]
  %v54 = vld [vmem:[%s1 + $0x6c] sm:$0xf]
  %v55 = vld [vmem:[%s1 + $0x70] sm:$0xf]
  %v56 = vld [vmem:[%s1 + $0x74] sm:$0xf]
  %v57 = vld [vmem:[%s1 + $0x78] sm:$0xf]
  %v58 = vld [vmem:[%s1 + $0x7c] sm:$0xf]
  %v59 = vld [vmem:[%s1 + $0x80] sm:$0xf]
  %v60 = vld [vmem:[%s1 + $0x84] sm:$0xf]
  %v61 = vld [vmem:[%s1 + $0x88] sm:$0xf]
  %v62 = vld [vmem:[%s1 + $0x8c] sm:$0xf]
  %v63 = vld [vmem:[%s1 + $0x90] sm:$0xf]
  %v64 = vld [vmem:[%s1 + $0x94] sm:$0xf]
  %v65 = vld [vmem:[%s1 + $0x98] sm:$0xf]
  %v66 = vld [vmem:[%s1 + $0x9c] sm:$0xf]
  %v67 = vld [vmem:[%s1 + $0xa0] sm:$0xf]
  %v68 = vld [vmem:[%s1 + $0xa4] sm:$0xf]
  %v69 = vld [vmem:[%s1 + $0xa8] sm:$0xf]
  %v70 = vld [vmem:[%s1 + $0xac] sm:$0xf]
  %v71 = vld [vmem:[%s1 + $0xb0] sm:$0xf]
  %v72 = vld [vmem:[%s1 + $0xb4] sm:$0xf]
  %v73 = vld [vmem:[%s1 + $0xb8] sm:$0xf]
  %v74 = vld [vmem:[%s1 + $0xbc] sm:$0xf]
  %v75 = vld [vmem:[%s1 + $0xc0] sm:$0xf]
  %v76 = vld [vmem:[%s1 + $0xc4] sm:$0xf]
  %v77 = vld [vmem:[%s1 + $0xc8] sm:$0xf]
  %v78 = vld [vmem:[%s1 + $0xcc] sm:$0xf]
  %v79 = vld [vmem:[%s1 + $0xd0] sm:$0xf]
  %v80 = vld [vmem:[%s1 + $0xd4] sm:$0xf]
  %v81 = vld [vmem:[%s1 + $0xd8] sm:$0xf]
  %v82 = vld [vmem:[%s1 + $0xdc] sm:$0xf]
  %v83 = vld [vmem:[%s1 + $0xe0] sm:$0xf]
  %v84 = vld [vmem:[%s1 + $0xe4] sm:$0xf]
  %v85 = vld [vmem:[%s1 + $0xe8] sm:$0xf]
  %v86 = vld [vmem:[%s1 + $0xec] sm:$0xf]
  %v87 = vld [vmem:[%s1 + $0xf0] sm:$0xf]
  %v88 = vld [vmem:[%s1 + $0xf4] sm:$0xf]
  %v89 = vld [vmem:[%s1 + $0xf8] sm:$0xf]
  %v90 = vld [vmem:[%s1 + $0xfc] sm:$0xf]
  %v91 = vld [vmem:[%s1 + $0x100] sm:$0xf]
  %v92 = vld [vmem:[%s1 + $0x104] sm:$0xf]
  %v93 = vld [vmem:[%s1 + $0x108] sm:$0xf]
  %v94 = vld [vmem:[%s1 + $0x10c] sm:$0xf]
  %v95 = vld [vmem:[%s1 + $0x110] sm:$0xf]
  %v96 = vld [vmem:[%s1 + $0x114] sm:$0xf]
  %v97 = vld [vmem:[%s1 + $0x118] sm:$0xf]
  %v98 = vld [vmem:[%s1 + $0x11c] sm:$0xf]
  %v99 = vld [vmem:[%s1 + $0x120] sm:$0xf]
  %v100 = vld [vmem:[%s1 + $0x124] sm:$0xf]
  %v101 = vld [vmem:[%s1 + $0x128] sm:$0xf]
  %v102 = vld [vmem:[%s1 + $0x12c] sm:$0xf]
  %v103 = vld [vmem:[%s1 + $0x130] sm:$0xf]
  %v104 = vld [vmem:[%s1 + $0x134] sm:$0xf]
  %v105 = vld [vmem:[%s1 + $0x138] sm:$0xf]
  %v106 = vld [vmem:[%s1 + $0x13c] sm:$0xf]
  %v107 = vld [vmem:[%s2] sm:$0x1]
  %v109 = vlaneseq
  %v110 = vshrl.u32 %v109, 7
  %v111 = vsub.s32 0, %v110
  %v112 = vrot.slane %v107, %v111
  %v126 = vunpack.c.l.b16 %v15
  %v127 = vunpack.c.h.b16 %v15
  %v128 = vunpack.c.l.b16 %v16
  %v129 = vunpack.c.h.b16 %v16
  %v130 = vunpack.c.l.b16 %v17
  %v131 = vunpack.c.l.b16 %v18
  %v132 = vunpack.c.h.b16 %v18
  %v133 = vunpack.c.l.b16 %v19
  %v134 = vunpack.c.h.b16 %v19
  %v135 = vunpack.c.l.b16 %v20
  %v136 = vunpack.c.l.b16 %v21
  %v137 = vunpack.c.h.b16 %v21
  %v138 = vunpack.c.l.b16 %v22
  %v139 = vunpack.c.h.b16 %v22
  %v140 = vunpack.c.l.b16 %v23
  %v141 = vunpack.c.l.b16 %v24
  %v142 = vunpack.c.h.b16 %v24
  %v143 = vunpack.c.l.b16 %v25
  %v144 = vunpack.c.h.b16 %v25
  %v145 = vunpack.c.l.b16 %v26
  %v146 = vpack.c.b16 %v131, %v126
  %v147 = vpack.c.b16 %v132, %v127
  %v148 = vpack.c.b16 %v133, %v128
  %v149 = vpack.c.b16 %v134, %v129
  %v150 = vpack.c.b16 %v135, %v130
  %v151 = vpack.c.b16 %v141, %v136
  %v152 = vpack.c.b16 %v142, %v137
  %v153 = vpack.c.b16 %v143, %v138
  %v154 = vpack.c.b16 %v144, %v139
  %v155 = vpack.c.b16 %v145, %v140
  %v246 = vunpack.c.l.b16 %v27
  %v247 = vunpack.c.l.b16 %v28
  %v248 = vunpack.c.l.b16 %v29
  %v249 = vunpack.c.l.b16 %v30
  %v250 = vunpack.c.l.b16 %v31
  %v251 = vunpack.c.l.b16 %v32
  %v252 = vunpack.c.l.b16 %v33
  %v253 = vunpack.c.l.b16 %v34
  %v254 = vunpack.c.l.b16 %v35
  %v255 = vunpack.c.l.b16 %v36
  %v256 = vunpack.c.l.b16 %v37
  %v257 = vunpack.c.l.b16 %v38
  %v258 = vunpack.c.l.b16 %v39
  %v259 = vunpack.c.l.b16 %v40
  %v260 = vunpack.c.l.b16 %v41
  %v261 = vunpack.c.l.b16 %v42
  %v262 = vunpack.c.l.b16 %v43
  %v263 = vunpack.c.l.b16 %v44
  %v264 = vunpack.c.l.b16 %v45
  %v265 = vunpack.c.l.b16 %v46
  %v266 = vunpack.c.l.b16 %v47
  %v267 = vunpack.c.l.b16 %v48
  %v268 = vunpack.c.l.b16 %v49
  %v269 = vunpack.c.l.b16 %v50
  %v270 = vunpack.c.l.b16 %v51
  %v271 = vunpack.c.l.b16 %v52
  %v272 = vunpack.c.l.b16 %v53
  %v273 = vunpack.c.l.b16 %v54
  %v274 = vunpack.c.l.b16 %v55
  %v275 = vunpack.c.l.b16 %v56
  %v276 = vunpack.c.l.b16 %v57
  %v277 = vunpack.c.l.b16 %v58
  %v278 = vunpack.c.l.b16 %v59
  %v279 = vunpack.c.l.b16 %v60
  %v280 = vunpack.c.l.b16 %v61
  %v281 = vunpack.c.l.b16 %v62
  %v282 = vunpack.c.l.b16 %v63
  %v283 = vunpack.c.l.b16 %v64
  %v284 = vunpack.c.l.b16 %v65
  %v285 = vunpack.c.l.b16 %v66
  %v286 = vunpack.c.l.b16 %v67
  %v287 = vunpack.c.l.b16 %v68
  %v288 = vunpack.c.l.b16 %v69
  %v289 = vunpack.c.l.b16 %v70
  %v290 = vunpack.c.l.b16 %v71
  %v291 = vunpack.c.l.b16 %v72
  %v292 = vunpack.c.l.b16 %v73
  %v293 = vunpack.c.l.b16 %v74
  %v294 = vunpack.c.l.b16 %v75
  %v295 = vunpack.c.l.b16 %v76
  %v296 = vunpack.c.l.b16 %v77
  %v297 = vunpack.c.l.b16 %v78
  %v298 = vunpack.c.l.b16 %v79
  %v299 = vunpack.c.l.b16 %v80
  %v300 = vunpack.c.l.b16 %v81
  %v301 = vunpack.c.l.b16 %v82
  %v302 = vunpack.c.l.b16 %v83
  %v303 = vunpack.c.l.b16 %v84
  %v304 = vunpack.c.l.b16 %v85
  %v305 = vunpack.c.l.b16 %v86
  %v306 = vunpack.c.l.b16 %v87
  %v307 = vunpack.c.l.b16 %v88
  %v308 = vunpack.c.l.b16 %v89
  %v309 = vunpack.c.l.b16 %v90
  %v310 = vunpack.c.l.b16 %v91
  %v311 = vunpack.c.l.b16 %v92
  %v312 = vunpack.c.l.b16 %v93
  %v313 = vunpack.c.l.b16 %v94
  %v314 = vunpack.c.l.b16 %v95
  %v315 = vunpack.c.l.b16 %v96
  %v316 = vunpack.c.l.b16 %v97
  %v317 = vunpack.c.l.b16 %v98
  %v318 = vunpack.c.l.b16 %v99
  %v319 = vunpack.c.l.b16 %v100
  %v320 = vunpack.c.l.b16 %v101
  %v321 = vunpack.c.l.b16 %v102
  %v322 = vunpack.c.l.b16 %v103
  %v323 = vunpack.c.l.b16 %v104
  %v324 = vunpack.c.l.b16 %v105
  %v325 = vunpack.c.l.b16 %v106
  %v326 = vpack.c.b16 %v247, %v246
  %v327 = vpack.c.b16 %v249, %v248
  %v328 = vpack.c.b16 %v251, %v250
  %v329 = vpack.c.b16 %v253, %v252
  %v330 = vpack.c.b16 %v255, %v254
  %v331 = vpack.c.b16 %v257, %v256
  %v332 = vpack.c.b16 %v259, %v258
  %v333 = vpack.c.b16 %v261, %v260
  %v334 = vpack.c.b16 %v263, %v262
  %v335 = vpack.c.b16 %v265, %v264
  %v336 = vpack.c.b16 %v267, %v266
  %v337 = vpack.c.b16 %v269, %v268
  %v338 = vpack.c.b16 %v271, %v270
  %v339 = vpack.c.b16 %v273, %v272
  %v340 = vpack.c.b16 %v275, %v274
  %v341 = vpack.c.b16 %v277, %v276
  %v342 = vpack.c.b16 %v279, %v278
  %v343 = vpack.c.b16 %v281, %v280
  %v344 = vpack.c.b16 %v283, %v282
  %v345 = vpack.c.b16 %v285, %v284
  %v346 = vpack.c.b16 %v287, %v286
  %v347 = vpack.c.b16 %v289, %v288
  %v348 = vpack.c.b16 %v291, %v290
  %v349 = vpack.c.b16 %v293, %v292
  %v350 = vpack.c.b16 %v295, %v294
  %v351 = vpack.c.b16 %v297, %v296
  %v352 = vpack.c.b16 %v299, %v298
  %v353 = vpack.c.b16 %v301, %v300
  %v354 = vpack.c.b16 %v303, %v302
  %v355 = vpack.c.b16 %v305, %v304
  %v356 = vpack.c.b16 %v307, %v306
  %v357 = vpack.c.b16 %v309, %v308
  %v358 = vpack.c.b16 %v311, %v310
  %v359 = vpack.c.b16 %v313, %v312
  %v360 = vpack.c.b16 %v315, %v314
  %v361 = vpack.c.b16 %v317, %v316
  %v362 = vpack.c.b16 %v319, %v318
  %v363 = vpack.c.b16 %v321, %v320
  %v364 = vpack.c.b16 %v323, %v322
  %v365 = vpack.c.b16 %v325, %v324
  %406 = vmatprep.subr.bf16.mxu0 0
  %407 = vmatpush1.bf16.msra.mxu0 %v326
  %408 = vmatprep.subr.bf16.mxu0 0
  %409 = vmatpush1.bf16.msra.mxu0 %v327
  %410 = vmatprep.subr.bf16.mxu0 0
  %411 = vmatpush1.bf16.msra.mxu0 %v328
  %412 = vmatprep.subr.bf16.mxu0 0
  %413 = vmatpush1.bf16.msra.mxu0 %v329
  %414 = vmatprep.subr.bf16.mxu0 0
  %415 = vmatpush1.bf16.msra.mxu0 %v330
  %416 = vmatprep.subr.bf16.mxu0 0
  %417 = vmatpush1.bf16.msra.mxu0 %v331
  %418 = vmatprep.subr.bf16.mxu0 0
  %419 = vmatpush1.bf16.msra.mxu0 %v332
  %420 = vmatprep.subr.bf16.mxu0 0
  %421 = vmatpush1.bf16.msra.mxu0 %v333
  %422 = vmatprep.subr.bf16.mxu0 0
  %423 = vmatpush1.bf16.msra.mxu0 %v334
  %424 = vmatprep.subr.bf16.mxu0 0
  %425 = vmatpush1.bf16.msra.mxu0 %v335
  %426 = vmatprep.subr.bf16.mxu0 0
  %427 = vmatpush1.bf16.msra.mxu0 %v336
  %428 = vmatprep.subr.bf16.mxu0 0
  %429 = vmatpush1.bf16.msra.mxu0 %v337
  %430 = vmatprep.subr.bf16.mxu0 0
  %431 = vmatpush1.bf16.msra.mxu0 %v338
  %432 = vmatprep.subr.bf16.mxu0 0
  %433 = vmatpush1.bf16.msra.mxu0 %v339
  %434 = vmatprep.subr.bf16.mxu0 0
  %435 = vmatpush1.bf16.msra.mxu0 %v340
  %436 = vmatprep.subr.bf16.mxu0 0
  %437 = vmatpush1.bf16.msra.mxu0 %v341
  %438 = vmatprep.mubr.bf16.mxu0 %v147
  %439 = vmatmul.mubr.bf16.gmra.mrb[0].mxu0 %v146
  %v440 = vpop.f32.mrb[0].mxu0
  %v441 = vadd.f32 %v112, %v440
  %v442 = vpop.f32.mrb[0].mxu0
  %v443 = vpop.f32.mrb[0].mxu0
  %v444 = vadd.f32 %v112, %v443
  %v445 = vpop.f32.mrb[0].mxu0
  %446 = vmatprep.mubr.bf16.mxu0 %v152
  %447 = vmatmul.mubr.bf16.gmra.mrb[0].mxu0 %v151
  %v448 = vpop.f32.mrb[0].mxu0
  %v449 = vadd.f32 %v112, %v448
  %v450 = vpop.f32.mrb[0].mxu0
  %v451 = vpop.f32.mrb[0].mxu0
  %v452 = vadd.f32 %v112, %v451
  %v453 = vpop.f32.mrb[0].mxu0
  %454 = vdwg.mxu0
  %455 = vmatprep.subr.bf16.mxu0 0
  %456 = vmatpush1.bf16.msra.mxu0 %v342
  %457 = vmatprep.subr.bf16.mxu0 0
  %458 = vmatpush1.bf16.msra.mxu0 %v343
  %459 = vmatprep.subr.bf16.mxu0 0
  %460 = vmatpush1.bf16.msra.mxu0 %v344
  %461 = vmatprep.subr.bf16.mxu0 0
  %462 = vmatpush1.bf16.msra.mxu0 %v345
  %463 = vmatprep.subr.bf16.mxu0 0
  %464 = vmatpush1.bf16.msra.mxu0 %v346
  %465 = vmatprep.subr.bf16.mxu0 0
  %466 = vmatpush1.bf16.msra.mxu0 %v347
  %467 = vmatprep.subr.bf16.mxu0 0
  %468 = vmatpush1.bf16.msra.mxu0 %v348
  %469 = vmatprep.subr.bf16.mxu0 0
  %470 = vmatpush1.bf16.msra.mxu0 %v349
  %471 = vmatprep.subr.bf16.mxu0 0
  %472 = vmatpush1.bf16.msra.mxu0 %v350
  %473 = vmatprep.subr.bf16.mxu0 0
  %474 = vmatpush1.bf16.msra.mxu0 %v351
  %475 = vmatprep.subr.bf16.mxu0 0
  %476 = vmatpush1.bf16.msra.mxu0 %v352
  %477 = vmatprep.subr.bf16.mxu0 0
  %478 = vmatpush1.bf16.msra.mxu0 %v353
  %479 = vmatprep.subr.bf16.mxu0 0
  %480 = vmatpush1.bf16.msra.mxu0 %v354
  %481 = vmatprep.subr.bf16.mxu0 0
  %482 = vmatpush1.bf16.msra.mxu0 %v355
  %483 = vmatprep.subr.bf16.mxu0 0
  %484 = vmatpush1.bf16.msra.mxu0 %v356
  %485 = vmatprep.subr.bf16.mxu0 0
  %486 = vmatpush1.bf16.msra.mxu0 %v357
  %487 = vmatprep.mubr.bf16.mxu0 %v149
  %488 = vmatmul.mubr.bf16.gmra.mrb[0].mxu0 %v148
  %v489 = vpop.f32.mrb[0].mxu0
  %v490 = vadd.f32 %v441, %v489
  %v491 = vpop.f32.mrb[0].mxu0
  %v492 = vpop.f32.mrb[0].mxu0
  %v493 = vadd.f32 %v444, %v492
  %v494 = vpop.f32.mrb[0].mxu0
  %495 = vmatprep.mubr.bf16.mxu0 %v154
  %496 = vmatmul.mubr.bf16.gmra.mrb[0].mxu0 %v153
  %v497 = vpop.f32.mrb[0].mxu0
  %v498 = vadd.f32 %v449, %v497
  %v499 = vpop.f32.mrb[0].mxu0
  %v500 = vpop.f32.mrb[0].mxu0
  %v501 = vadd.f32 %v452, %v500
  %v502 = vpop.f32.mrb[0].mxu0
  %503 = vdwg.mxu0
  %504 = vmatprep.subr.bf16.mxu0 0
  %505 = vmatpush1.bf16.msra.mxu0 %v358
  %506 = vmatprep.subr.bf16.mxu0 0
  %507 = vmatpush1.bf16.msra.mxu0 %v359
  %508 = vmatprep.subr.bf16.mxu0 0
  %509 = vmatpush1.bf16.msra.mxu0 %v360
  %510 = vmatprep.subr.bf16.mxu0 0
  %511 = vmatpush1.bf16.msra.mxu0 %v361
  %512 = vmatprep.subr.bf16.mxu0 0
  %513 = vmatpush1.bf16.msra.mxu0 %v362
  %514 = vmatprep.subr.bf16.mxu0 0
  %515 = vmatpush1.bf16.msra.mxu0 %v363
  %516 = vmatprep.subr.bf16.mxu0 0
  %517 = vmatpush1.bf16.msra.mxu0 %v364
  %518 = vmatprep.subr.bf16.mxu0 0
  %519 = vmatpush1.bf16.msra.mxu0 %v365
  %520 = vmatprep.subr.bf16.mxu0 0
  %521 = vmatpush1.bf16.msra.mxu0 0
  %522 = vmatprep.subr.bf16.mxu0 0
  %523 = vmatpush1.bf16.msra.mxu0 0
  %524 = vmatprep.subr.bf16.mxu0 0
  %525 = vmatpush1.bf16.msra.mxu0 0
  %526 = vmatprep.subr.bf16.mxu0 0
  %527 = vmatpush1.bf16.msra.mxu0 0
  %528 = vmatprep.subr.bf16.mxu0 0
  %529 = vmatpush1.bf16.msra.mxu0 0
  %530 = vmatprep.subr.bf16.mxu0 0
  %531 = vmatpush1.bf16.msra.mxu0 0
  %532 = vmatprep.subr.bf16.mxu0 0
  %533 = vmatpush1.bf16.msra.mxu0 0
  %534 = vmatprep.subr.bf16.mxu0 0
  %535 = vmatpush1.bf16.msra.mxu0 0
  %536 = vmatprep.mubr.bf16.mxu0 0
  %537 = vmatmul.mubr.bf16.gmra.mrb[0].mxu0 %v150
  %v538 = vpop.f32.mrb[0].mxu0
  %v539 = vadd.f32 %v490, %v538
  %v540 = vpop.f32.mrb[0].mxu0
  %v541 = vpop.f32.mrb[0].mxu0
  %v542 = vadd.f32 %v493, %v541
  %v543 = vpop.f32.mrb[0].mxu0
  %544 = vmatprep.mubr.bf16.mxu0 0
  %545 = vmatmul.mubr.bf16.gmra.mrb[0].mxu0 %v155
  %v546 = vpop.f32.mrb[0].mxu0
  %v547 = vadd.f32 %v498, %v546
  %v548 = vpop.f32.mrb[0].mxu0
  %v549 = vpop.f32.mrb[0].mxu0
  %v550 = vadd.f32 %v501, %v549
  %v551 = vpop.f32.mrb[0].mxu0
  %552 = vdwg.mxu0
  %v553 = vmax.f32 %v539, 0.0
  %v554 = vmax.f32 %v542, 0.0
  %v555 = vmax.f32 %v547, 0.0
  %v556 = vmax.f32 %v550, 0.0
  %v557 = vpack.c.bf16 %v554, %v553
  %v558 = vpack.c.bf16 %v556, %v555
  %v561 = vunpack.c.l.b16 %v557
  %v562 = vunpack.c.h.b16 %v557
  %v563 = vunpack.c.l.b16 %v558
  %v564 = vunpack.c.h.b16 %v558
  %v565 = vpack.c.b16 %v561, %v561
  %v566 = vpack.c.b16 %v562, %v562
  %v567 = vpack.c.b16 %v563, %v563
  %v568 = vpack.c.b16 %v564, %v564
  %573 = vst [vmem:[%s3] sm:$0xf] %v565
  %574 = vst [vmem:[%s3 + $0x4] sm:$0xf] %v566
  %575 = vst [vmem:[%s3 + $0x8] sm:$0xf] %v567
  %576 = vst [vmem:[%s3 + $0xc] sm:$0xf] %v568
  // Predicated region
  $region14: #{pose_resnet_forward.32} parent=0 // pred_check
    _
  $region15: #{pose_resnet_forward.32} parent=0 // pred_check_branch
    %578 = sbr.rel (0) target = $region17
  $region16: #{pose_resnet_forward.32} parent=0 // pred_region
    _
  $region17: #{pose_resnet_forward.32} parent=0 // pred_fallthru
    _
  // Predicated region
  $region18: #{pose_resnet_forward.32} parent=0 // pred_check
    _
  $region19: #{pose_resnet_forward.32} parent=0 // pred_check_branch
    %580 = sbr.rel (0) target = $region21
  $region20: #{pose_resnet_forward.32} parent=0 // pred_region
    _
  $region21: #{pose_resnet_forward.32} parent=0 // pred_fallthru
    _

// kernel: pose_resnet_forward.34
$region0: #{pose_resnet_forward.34}
  #allocation0 [shape = 'u32[]', space=smem, size = 0x4, offset = 0x4, fixed_abs, tag = 'smem constant byte address 0x4 - core index']
  #allocation1 [shape = 'u32[144,128]{1,0:T(1,128)}', space=vmem, size = 0x12000, scoped, tag = 'internal scratch']
  %s0 = inlined_call_operand.vmem [shape: bf16[16,640], index: 0, kind: input, shape index: {}]
  %s1 = inlined_call_operand.vmem [shape: bf16[640,256], index: 1, kind: input, shape index: {}]
  %s2 = inlined_call_operand.vmem [shape: f32[1,256], index: 2, kind: input, shape index: {}]
  %s3 = inlined_call_operand.vmem [shape: f32[1,256], index: 3, kind: input, shape index: {}]
  %s4 = inlined_call_operand.vmem [shape: bf16[16,256], index: 4, kind: output, shape index: {}]
  %s5 = sld [smem:[#allocation0]]
  $region26: #{pose_resnet_forward.34} parent=0
    _
  %s7 = ssub.s32 1, %s5
  %s8 = scalar_select 0, %s7, %s5
  // Predicated region
  $region2: #{pose_resnet_forward.34} parent=0 // pred_check
    _
  $region3: #{pose_resnet_forward.34} parent=0 // pred_check_branch
    %10 = sbr.rel (0) target = $region5
  $region4: #{pose_resnet_forward.34} parent=0 // pred_region
    _
  $region5: #{pose_resnet_forward.34} parent=0 // pred_fallthru
    _
  // Predicated region
  $region6: #{pose_resnet_forward.34} parent=0 // pred_check
    _
  $region7: #{pose_resnet_forward.34} parent=0 // pred_check_branch
    %12 = sbr.rel (0) target = $region9
  $region8: #{pose_resnet_forward.34} parent=0 // pred_region
    _
  $region9: #{pose_resnet_forward.34} parent=0 // pred_fallthru
    _
  // Predicated region
  $region10: #{pose_resnet_forward.34} parent=0 // pred_check
    _
  $region11: #{pose_resnet_forward.34} parent=0 // pred_check_branch
    %14 = sbr.rel (0) target = $region13
  $region12: #{pose_resnet_forward.34} parent=0 // pred_region
    _
  $region13: #{pose_resnet_forward.34} parent=0 // pred_fallthru
    _
  // Predicated region
  $region14: #{pose_resnet_forward.34} parent=0 // pred_check
    _
  $region15: #{pose_resnet_forward.34} parent=0 // pred_check_branch
    %16 = sbr.rel (0) target = $region17
  $region16: #{pose_resnet_forward.34} parent=0 // pred_region
    _
  $region17: #{pose_resnet_forward.34} parent=0 // pred_fallthru
    _
  %v18 = vld [vmem:[%s0] sm:$0xff]
  %v19 = vld [vmem:[%s0 + $0x8] sm:$0xff]
  %v20 = vld [vmem:[%s0 + $0x10] sm:$0xf]
  %v21 = vld [vmem:[%s0 + $0x14] sm:$0xff]
  %v22 = vld [vmem:[%s0 + $0x1c] sm:$0xff]
  %v23 = vld [vmem:[%s0 + $0x24] sm:$0xf]
  %v24 = vld [vmem:[%s1] sm:$0xff]
  %v25 = vld [vmem:[%s1 + $0x8] sm:$0xff]
  %v26 = vld [vmem:[%s1 + $0x10] sm:$0xff]
  %v27 = vld [vmem:[%s1 + $0x18] sm:$0xff]
  %v28 = vld [vmem:[%s1 + $0x20] sm:$0xff]
  %v29 = vld [vmem:[%s1 + $0x28] sm:$0xff]
  %v30 = vld [vmem:[%s1 + $0x30] sm:$0xff]
  %v31 = vld [vmem:[%s1 + $0x38] sm:$0xff]
  %v32 = vld [vmem:[%s1 + $0x40] sm:$0xff]
  %v33 = vld [vmem:[%s1 + $0x48] sm:$0xff]
  %v34 = vld [vmem:[%s1 + $0x50] sm:$0xff]
  %v35 = vld [vmem:[%s1 + $0x58] sm:$0xff]
  %v36 = vld [vmem:[%s1 + $0x60] sm:$0xff]
  %v37 = vld [vmem:[%s1 + $0x68] sm:$0xff]
  %v38 = vld [vmem:[%s1 + $0x70] sm:$0xff]
  %v39 = vld [vmem:[%s1 + $0x78] sm:$0xff]
  %v40 = vld [vmem:[%s1 + $0x80] sm:$0xff]
  %v41 = vld [vmem:[%s1 + $0x88] sm:$0xff]
  %v42 = vld [vmem:[%s1 + $0x90] sm:$0xff]
  %v43 = vld [vmem:[%s1 + $0x98] sm:$0xff]
  %v44 = vld [vmem:[%s1 + $0xa0] sm:$0xff]
  %v45 = vld [vmem:[%s1 + $0xa8] sm:$0xff]
  %v46 = vld [vmem:[%s1 + $0xb0] sm:$0xff]
  %v47 = vld [vmem:[%s1 + $0xb8] sm:$0xff]
  %v48 = vld [vmem:[%s1 + $0xc0] sm:$0xff]
  %v49 = vld [vmem:[%s1 + $0xc8] sm:$0xff]
  %v50 = vld [vmem:[%s1 + $0xd0] sm:$0xff]
  %v51 = vld [vmem:[%s1 + $0xd8] sm:$0xff]
  %v52 = vld [vmem:[%s1 + $0xe0] sm:$0xff]
  %v53 = vld [vmem:[%s1 + $0xe8] sm:$0xff]
  %v54 = vld [vmem:[%s1 + $0xf0] sm:$0xff]
  %v55 = vld [vmem:[%s1 + $0xf8] sm:$0xff]
  %v56 = vld [vmem:[%s1 + $0x100] sm:$0xff]
  %v57 = vld [vmem:[%s1 + $0x108] sm:$0xff]
  %v58 = vld [vmem:[%s1 + $0x110] sm:$0xff]
  %v59 = vld [vmem:[%s1 + $0x118] sm:$0xff]
  %v60 = vld [vmem:[%s1 + $0x120] sm:$0xff]
  %v61 = vld [vmem:[%s1 + $0x128] sm:$0xff]
  %v62 = vld [vmem:[%s1 + $0x130] sm:$0xff]
  %v63 = vld [vmem:[%s1 + $0x138] sm:$0xff]
  %v64 = vld [vmem:[%s1 + $0x140] sm:$0xff]
  %v65 = vld [vmem:[%s1 + $0x148] sm:$0xff]
  %v66 = vld [vmem:[%s1 + $0x150] sm:$0xff]
  %v67 = vld [vmem:[%s1 + $0x158] sm:$0xff]
  %v68 = vld [vmem:[%s1 + $0x160] sm:$0xff]
  %v69 = vld [vmem:[%s1 + $0x168] sm:$0xff]
  %v70 = vld [vmem:[%s1 + $0x170] sm:$0xff]
  %v71 = vld [vmem:[%s1 + $0x178] sm:$0xff]
  %v72 = vld [vmem:[%s1 + $0x180] sm:$0xff]
  %v73 = vld [vmem:[%s1 + $0x188] sm:$0xff]
  %v74 = vld [vmem:[%s1 + $0x190] sm:$0xff]
  %v75 = vld [vmem:[%s1 + $0x198] sm:$0xff]
  %v76 = vld [vmem:[%s1 + $0x1a0] sm:$0xff]
  %v77 = vld [vmem:[%s1 + $0x1a8] sm:$0xff]
  %v78 = vld [vmem:[%s1 + $0x1b0] sm:$0xff]
  %v79 = vld [vmem:[%s1 + $0x1b8] sm:$0xff]
  %v80 = vld [vmem:[%s1 + $0x1c0] sm:$0xff]
  %v81 = vld [vmem:[%s1 + $0x1c8] sm:$0xff]
  %v82 = vld [vmem:[%s1 + $0x1d0] sm:$0xff]
  %v83 = vld [vmem:[%s1 + $0x1d8] sm:$0xff]
  %v84 = vld [vmem:[%s1 + $0x1e0] sm:$0xff]
  %v85 = vld [vmem:[%s1 + $0x1e8] sm:$0xff]
  %v86 = vld [vmem:[%s1 + $0x1f0] sm:$0xff]
  %v87 = vld [vmem:[%s1 + $0x1f8] sm:$0xff]
  %v88 = vld [vmem:[%s1 + $0x200] sm:$0xff]
  %v89 = vld [vmem:[%s1 + $0x208] sm:$0xff]
  %v90 = vld [vmem:[%s1 + $0x210] sm:$0xff]
  %v91 = vld [vmem:[%s1 + $0x218] sm:$0xff]
  %v92 = vld [vmem:[%s1 + $0x220] sm:$0xff]
  %v93 = vld [vmem:[%s1 + $0x228] sm:$0xff]
  %v94 = vld [vmem:[%s1 + $0x230] sm:$0xff]
  %v95 = vld [vmem:[%s1 + $0x238] sm:$0xff]
  %v96 = vld [vmem:[%s1 + $0x240] sm:$0xff]
  %v97 = vld [vmem:[%s1 + $0x248] sm:$0xff]
  %v98 = vld [vmem:[%s1 + $0x250] sm:$0xff]
  %v99 = vld [vmem:[%s1 + $0x258] sm:$0xff]
  %v100 = vld [vmem:[%s1 + $0x260] sm:$0xff]
  %v101 = vld [vmem:[%s1 + $0x268] sm:$0xff]
  %v102 = vld [vmem:[%s1 + $0x270] sm:$0xff]
  %v103 = vld [vmem:[%s1 + $0x278] sm:$0xff]
  %v104 = vld [vmem:[%s2] sm:$0x3]
  %v106 = vlaneseq
  %v107 = vshrl.u32 %v106, 7
  %v108 = vsub.s32 0, %v107
  %v109 = vrot.slane %v104, %v108
  %v110 = vlaneseq
  %v111 = vshrl.u32 %v110, 7
  %v112 = vsub.s32 1, %v111
  %v113 = vrot.slane %v104, %v112
  %v122 = vunpack.c.l.b16 %v18
  %v123 = vunpack.c.h.b16 %v18
  %v124 = vunpack.c.l.b16 %v19
  %v125 = vunpack.c.h.b16 %v19
  %v126 = vunpack.c.l.b16 %v20
  %v127 = vunpack.c.l.b16 %v21
  %v128 = vunpack.c.h.b16 %v21
  %v129 = vunpack.c.l.b16 %v22
  %v130 = vunpack.c.h.b16 %v22
  %v131 = vunpack.c.l.b16 %v23
  %v132 = vpack.c.b16 %v127, %v122
  %v133 = vpack.c.b16 %v128, %v123
  %v134 = vpack.c.b16 %v129, %v124
  %v135 = vpack.c.b16 %v130, %v125
  %v136 = vpack.c.b16 %v131, %v126
  %v222 = vunpack.c.l.b16 %v24
  %v223 = vunpack.c.h.b16 %v24
  %v224 = vunpack.c.l.b16 %v25
  %v225 = vunpack.c.h.b16 %v25
  %v226 = vunpack.c.l.b16 %v26
  %v227 = vunpack.c.h.b16 %v26
  %v228 = vunpack.c.l.b16 %v27
  %v229 = vunpack.c.h.b16 %v27
  %v230 = vunpack.c.l.b16 %v28
  %v231 = vunpack.c.h.b16 %v28
  %v232 = vunpack.c.l.b16 %v29
  %v233 = vunpack.c.h.b16 %v29
  %v234 = vunpack.c.l.b16 %v30
  %v235 = vunpack.c.h.b16 %v30
  %v236 = vunpack.c.l.b16 %v31
  %v237 = vunpack.c.h.b16 %v31
  %v238 = vunpack.c.l.b16 %v32
  %v239 = vunpack.c.h.b16 %v32
  %v240 = vunpack.c.l.b16 %v33
  %v241 = vunpack.c.h.b16 %v33
  %v242 = vunpack.c.l.b16 %v34
  %v243 = vunpack.c.h.b16 %v34
  %v244 = vunpack.c.l.b16 %v35
  %v245 = vunpack.c.h.b16 %v35
  %v246 = vunpack.c.l.b16 %v36
  %v247 = vunpack.c.h.b16 %v36
  %v248 = vunpack.c.l.b16 %v37
  %v249 = vunpack.c.h.b16 %v37
  %v250 = vunpack.c.l.b16 %v38
  %v251 = vunpack.c.h.b16 %v38
  %v252 = vunpack.c.l.b16 %v39
  %v253 = vunpack.c.h.b16 %v39
  %v254 = vunpack.c.l.b16 %v40
  %v255 = vunpack.c.h.b16 %v40
  %v256 = vunpack.c.l.b16 %v41
  %v257 = vunpack.c.h.b16 %v41
  %v258 = vunpack.c.l.b16 %v42
  %v259 = vunpack.c.h.b16 %v42
  %v260 = vunpack.c.l.b16 %v43
  %v261 = vunpack.c.h.b16 %v43
  %v262 = vunpack.c.l.b16 %v44
  %v263 = vunpack.c.h.b16 %v44
  %v264 = vunpack.c.l.b16 %v45
  %v265 = vunpack.c.h.b16 %v45
  %v266 = vunpack.c.l.b16 %v46
  %v267 = vunpack.c.h.b16 %v46
  %v268 = vunpack.c.l.b16 %v47
  %v269 = vunpack.c.h.b16 %v47
  %v270 = vunpack.c.l.b16 %v48
  %v271 = vunpack.c.h.b16 %v48
  %v272 = vunpack.c.l.b16 %v49
  %v273 = vunpack.c.h.b16 %v49
  %v274 = vunpack.c.l.b16 %v50
  %v275 = vunpack.c.h.b16 %v50
  %v276 = vunpack.c.l.b16 %v51
  %v277 = vunpack.c.h.b16 %v51
  %v278 = vunpack.c.l.b16 %v52
  %v279 = vunpack.c.h.b16 %v52
  %v280 = vunpack.c.l.b16 %v53
  %v281 = vunpack.c.h.b16 %v53
  %v282 = vunpack.c.l.b16 %v54
  %v283 = vunpack.c.h.b16 %v54
  %v284 = vunpack.c.l.b16 %v55
  %v285 = vunpack.c.h.b16 %v55
  %v286 = vunpack.c.l.b16 %v56
  %v287 = vunpack.c.h.b16 %v56
  %v288 = vunpack.c.l.b16 %v57
  %v289 = vunpack.c.h.b16 %v57
  %v290 = vunpack.c.l.b16 %v58
  %v291 = vunpack.c.h.b16 %v58
  %v292 = vunpack.c.l.b16 %v59
  %v293 = vunpack.c.h.b16 %v59
  %v294 = vunpack.c.l.b16 %v60
  %v295 = vunpack.c.h.b16 %v60
  %v296 = vunpack.c.l.b16 %v61
  %v297 = vunpack.c.h.b16 %v61
  %v298 = vunpack.c.l.b16 %v62
  %v299 = vunpack.c.h.b16 %v62
  %v300 = vunpack.c.l.b16 %v63
  %v301 = vunpack.c.h.b16 %v63
  %v302 = vunpack.c.l.b16 %v64
  %v303 = vunpack.c.h.b16 %v64
  %v304 = vunpack.c.l.b16 %v65
  %v305 = vunpack.c.h.b16 %v65
  %v306 = vunpack.c.l.b16 %v66
  %v307 = vunpack.c.h.b16 %v66
  %v308 = vunpack.c.l.b16 %v67
  %v309 = vunpack.c.h.b16 %v67
  %v310 = vunpack.c.l.b16 %v68
  %v311 = vunpack.c.h.b16 %v68
  %v312 = vunpack.c.l.b16 %v69
  %v313 = vunpack.c.h.b16 %v69
  %v314 = vunpack.c.l.b16 %v70
  %v315 = vunpack.c.h.b16 %v70
  %v316 = vunpack.c.l.b16 %v71
  %v317 = vunpack.c.h.b16 %v71
  %v318 = vunpack.c.l.b16 %v72
  %v319 = vunpack.c.h.b16 %v72
  %v320 = vunpack.c.l.b16 %v73
  %v321 = vunpack.c.h.b16 %v73
  %v322 = vunpack.c.l.b16 %v74
  %v323 = vunpack.c.h.b16 %v74
  %v324 = vunpack.c.l.b16 %v75
  %v325 = vunpack.c.h.b16 %v75
  %v326 = vunpack.c.l.b16 %v76
  %v327 = vunpack.c.h.b16 %v76
  %v328 = vunpack.c.l.b16 %v77
  %v329 = vunpack.c.h.b16 %v77
  %v330 = vunpack.c.l.b16 %v78
  %v331 = vunpack.c.h.b16 %v78
  %v332 = vunpack.c.l.b16 %v79
  %v333 = vunpack.c.h.b16 %v79
  %v334 = vunpack.c.l.b16 %v80
  %v335 = vunpack.c.h.b16 %v80
  %v336 = vunpack.c.l.b16 %v81
  %v337 = vunpack.c.h.b16 %v81
  %v338 = vunpack.c.l.b16 %v82
  %v339 = vunpack.c.h.b16 %v82
  %v340 = vunpack.c.l.b16 %v83
  %v341 = vunpack.c.h.b16 %v83
  %v342 = vunpack.c.l.b16 %v84
  %v343 = vunpack.c.h.b16 %v84
  %v344 = vunpack.c.l.b16 %v85
  %v345 = vunpack.c.h.b16 %v85
  %v346 = vunpack.c.l.b16 %v86
  %v347 = vunpack.c.h.b16 %v86
  %v348 = vunpack.c.l.b16 %v87
  %v349 = vunpack.c.h.b16 %v87
  %v350 = vunpack.c.l.b16 %v88
  %v351 = vunpack.c.h.b16 %v88
  %v352 = vunpack.c.l.b16 %v89
  %v353 = vunpack.c.h.b16 %v89
  %v354 = vunpack.c.l.b16 %v90
  %v355 = vunpack.c.h.b16 %v90
  %v356 = vunpack.c.l.b16 %v91
  %v357 = vunpack.c.h.b16 %v91
  %v358 = vunpack.c.l.b16 %v92
  %v359 = vunpack.c.h.b16 %v92
  %v360 = vunpack.c.l.b16 %v93
  %v361 = vunpack.c.h.b16 %v93
  %v362 = vunpack.c.l.b16 %v94
  %v363 = vunpack.c.h.b16 %v94
  %v364 = vunpack.c.l.b16 %v95
  %v365 = vunpack.c.h.b16 %v95
  %v366 = vunpack.c.l.b16 %v96
  %v367 = vunpack.c.h.b16 %v96
  %v368 = vunpack.c.l.b16 %v97
  %v369 = vunpack.c.h.b16 %v97
  %v370 = vunpack.c.l.b16 %v98
  %v371 = vunpack.c.h.b16 %v98
  %v372 = vunpack.c.l.b16 %v99
  %v373 = vunpack.c.h.b16 %v99
  %v374 = vunpack.c.l.b16 %v100
  %v375 = vunpack.c.h.b16 %v100
  %v376 = vunpack.c.l.b16 %v101
  %v377 = vunpack.c.h.b16 %v101
  %v378 = vunpack.c.l.b16 %v102
  %v379 = vunpack.c.h.b16 %v102
  %v380 = vunpack.c.l.b16 %v103
  %v381 = vunpack.c.h.b16 %v103
  %v382 = vpack.c.b16 %v224, %v222
  %v383 = vpack.c.b16 %v225, %v223
  %v384 = vpack.c.b16 %v228, %v226
  %v385 = vpack.c.b16 %v229, %v227
  %v386 = vpack.c.b16 %v232, %v230
  %v387 = vpack.c.b16 %v233, %v231
  %v388 = vpack.c.b16 %v236, %v234
  %v389 = vpack.c.b16 %v237, %v235
  %v390 = vpack.c.b16 %v240, %v238
  %v391 = vpack.c.b16 %v241, %v239
  %v392 = vpack.c.b16 %v244, %v242
  %v393 = vpack.c.b16 %v245, %v243
  %v394 = vpack.c.b16 %v248, %v246
  %v395 = vpack.c.b16 %v249, %v247
  %v396 = vpack.c.b16 %v252, %v250
  %v397 = vpack.c.b16 %v253, %v251
  %v398 = vpack.c.b16 %v256, %v254
  %v399 = vpack.c.b16 %v257, %v255
  %v400 = vpack.c.b16 %v260, %v258
  %v401 = vpack.c.b16 %v261, %v259
  %v402 = vpack.c.b16 %v264, %v262
  %v403 = vpack.c.b16 %v265, %v263
  %v404 = vpack.c.b16 %v268, %v266
  %v405 = vpack.c.b16 %v269, %v267
  %v406 = vpack.c.b16 %v272, %v270
  %v407 = vpack.c.b16 %v273, %v271
  %v408 = vpack.c.b16 %v276, %v274
  %v409 = vpack.c.b16 %v277, %v275
  %v410 = vpack.c.b16 %v280, %v278
  %v411 = vpack.c.b16 %v281, %v279
  %v412 = vpack.c.b16 %v284, %v282
  %v413 = vpack.c.b16 %v285, %v283
  %v414 = vpack.c.b16 %v288, %v286
  %v415 = vpack.c.b16 %v289, %v287
  %v416 = vpack.c.b16 %v292, %v290
  %v417 = vpack.c.b16 %v293, %v291
  %v418 = vpack.c.b16 %v296, %v294
  %v419 = vpack.c.b16 %v297, %v295
  %v420 = vpack.c.b16 %v300, %v298
  %v421 = vpack.c.b16 %v301, %v299
  %v422 = vpack.c.b16 %v304, %v302
  %v423 = vpack.c.b16 %v305, %v303
  %v424 = vpack.c.b16 %v308, %v306
  %v425 = vpack.c.b16 %v309, %v307
  %v426 = vpack.c.b16 %v312, %v310
  %v427 = vpack.c.b16 %v313, %v311
  %v428 = vpack.c.b16 %v316, %v314
  %v429 = vpack.c.b16 %v317, %v315
  %v430 = vpack.c.b16 %v320, %v318
  %v431 = vpack.c.b16 %v321, %v319
  %v432 = vpack.c.b16 %v324, %v322
  %v433 = vpack.c.b16 %v325, %v323
  %v434 = vpack.c.b16 %v328, %v326
  %v435 = vpack.c.b16 %v329, %v327
  %v436 = vpack.c.b16 %v332, %v330
  %v437 = vpack.c.b16 %v333, %v331
  %v438 = vpack.c.b16 %v336, %v334
  %v439 = vpack.c.b16 %v337, %v335
  %v440 = vpack.c.b16 %v340, %v338
  %v441 = vpack.c.b16 %v341, %v339
  %v442 = vpack.c.b16 %v344, %v342
  %v443 = vpack.c.b16 %v345, %v343
  %v444 = vpack.c.b16 %v348, %v346
  %v445 = vpack.c.b16 %v349, %v347
  %v446 = vpack.c.b16 %v352, %v350
  %v447 = vpack.c.b16 %v353, %v351
  %v448 = vpack.c.b16 %v356, %v354
  %v449 = vpack.c.b16 %v357, %v355
  %v450 = vpack.c.b16 %v360, %v358
  %v451 = vpack.c.b16 %v361, %v359
  %v452 = vpack.c.b16 %v364, %v362
  %v453 = vpack.c.b16 %v365, %v363
  %v454 = vpack.c.b16 %v368, %v366
  %v455 = vpack.c.b16 %v369, %v367
  %v456 = vpack.c.b16 %v372, %v370
  %v457 = vpack.c.b16 %v373, %v371
  %v458 = vpack.c.b16 %v376, %v374
  %v459 = vpack.c.b16 %v377, %v375
  %v460 = vpack.c.b16 %v380, %v378
  %v461 = vpack.c.b16 %v381, %v379
  %542 = vmatprep.subr.bf16.mxu0 %v383
  %543 = vmatpush1.bf16.msra.mxu0 %v382
  %544 = vmatprep.subr.bf16.mxu0 %v385
  %545 = vmatpush1.bf16.msra.mxu0 %v384
  %546 = vmatprep.subr.bf16.mxu0 %v387
  %547 = vmatpush1.bf16.msra.mxu0 %v386
  %548 = vmatprep.subr.bf16.mxu0 %v389
  %549 = vmatpush1.bf16.msra.mxu0 %v388
  %550 = vmatprep.subr.bf16.mxu0 %v391
  %551 = vmatpush1.bf16.msra.mxu0 %v390
  %552 = vmatprep.subr.bf16.mxu0 %v393
  %553 = vmatpush1.bf16.msra.mxu0 %v392
  %554 = vmatprep.subr.bf16.mxu0 %v395
  %555 = vmatpush1.bf16.msra.mxu0 %v394
  %556 = vmatprep.subr.bf16.mxu0 %v397
  %557 = vmatpush1.bf16.msra.mxu0 %v396
  %558 = vmatprep.subr.bf16.mxu0 %v399
  %559 = vmatpush1.bf16.msra.mxu0 %v398
  %560 = vmatprep.subr.bf16.mxu0 %v401
  %561 = vmatpush1.bf16.msra.mxu0 %v400
  %562 = vmatprep.subr.bf16.mxu0 %v403
  %563 = vmatpush1.bf16.msra.mxu0 %v402
  %564 = vmatprep.subr.bf16.mxu0 %v405
  %565 = vmatpush1.bf16.msra.mxu0 %v404
  %566 = vmatprep.subr.bf16.mxu0 %v407
  %567 = vmatpush1.bf16.msra.mxu0 %v406
  %568 = vmatprep.subr.bf16.mxu0 %v409
  %569 = vmatpush1.bf16.msra.mxu0 %v408
  %570 = vmatprep.subr.bf16.mxu0 %v411
  %571 = vmatpush1.bf16.msra.mxu0 %v410
  %572 = vmatprep.subr.bf16.mxu0 %v413
  %573 = vmatpush1.bf16.msra.mxu0 %v412
  %574 = vmatprep.mubr.bf16.mxu0 %v133
  %575 = vmatmul.mubr.bf16.gmra.mrb[0].mxu0 %v132
  %v576 = vpop.f32.mrb[0].mxu0
  %v577 = vadd.f32 %v109, %v576
  %v578 = vpop.f32.mrb[0].mxu0
  %v579 = vadd.f32 %v113, %v578
  %v580 = vpop.f32.mrb[0].mxu0
  %v581 = vadd.f32 %v109, %v580
  %v582 = vpop.f32.mrb[0].mxu0
  %v583 = vadd.f32 %v113, %v582
  %584 = vdwg.mxu0
  %585 = vmatprep.subr.bf16.mxu0 %v415
  %586 = vmatpush1.bf16.msra.mxu0 %v414
  %587 = vmatprep.subr.bf16.mxu0 %v417
  %588 = vmatpush1.bf16.msra.mxu0 %v416
  %589 = vmatprep.subr.bf16.mxu0 %v419
  %590 = vmatpush1.bf16.msra.mxu0 %v418
  %591 = vmatprep.subr.bf16.mxu0 %v421
  %592 = vmatpush1.bf16.msra.mxu0 %v420
  %593 = vmatprep.subr.bf16.mxu0 %v423
  %594 = vmatpush1.bf16.msra.mxu0 %v422
  %595 = vmatprep.subr.bf16.mxu0 %v425
  %596 = vmatpush1.bf16.msra.mxu0 %v424
  %597 = vmatprep.subr.bf16.mxu0 %v427
  %598 = vmatpush1.bf16.msra.mxu0 %v426
  %599 = vmatprep.subr.bf16.mxu0 %v429
  %600 = vmatpush1.bf16.msra.mxu0 %v428
  %601 = vmatprep.subr.bf16.mxu0 %v431
  %602 = vmatpush1.bf16.msra.mxu0 %v430
  %603 = vmatprep.subr.bf16.mxu0 %v433
  %604 = vmatpush1.bf16.msra.mxu0 %v432
  %605 = vmatprep.subr.bf16.mxu0 %v435
  %606 = vmatpush1.bf16.msra.mxu0 %v434
  %607 = vmatprep.subr.bf16.mxu0 %v437
  %608 = vmatpush1.bf16.msra.mxu0 %v436
  %609 = vmatprep.subr.bf16.mxu0 %v439
  %610 = vmatpush1.bf16.msra.mxu0 %v438
  %611 = vmatprep.subr.bf16.mxu0 %v441
  %612 = vmatpush1.bf16.msra.mxu0 %v440
  %613 = vmatprep.subr.bf16.mxu0 %v443
  %614 = vmatpush1.bf16.msra.mxu0 %v442
  %615 = vmatprep.subr.bf16.mxu0 %v445
  %616 = vmatpush1.bf16.msra.mxu0 %v444
  %617 = vmatprep.mubr.bf16.mxu0 %v135
  %618 = vmatmul.mubr.bf16.gmra.mrb[0].mxu0 %v134
  %v619 = vpop.f32.mrb[0].mxu0
  %v620 = vadd.f32 %v577, %v619
  %v621 = vpop.f32.mrb[0].mxu0
  %v622 = vadd.f32 %v579, %v621
  %v623 = vpop.f32.mrb[0].mxu0
  %v624 = vadd.f32 %v581, %v623
  %v625 = vpop.f32.mrb[0].mxu0
  %v626 = vadd.f32 %v583, %v625
  %627 = vdwg.mxu0
  %628 = vmatprep.subr.bf16.mxu0 %v447
  %629 = vmatpush1.bf16.msra.mxu0 %v446
  %630 = vmatprep.subr.bf16.mxu0 %v449
  %631 = vmatpush1.bf16.msra.mxu0 %v448
  %632 = vmatprep.subr.bf16.mxu0 %v451
  %633 = vmatpush1.bf16.msra.mxu0 %v450
  %634 = vmatprep.subr.bf16.mxu0 %v453
  %635 = vmatpush1.bf16.msra.mxu0 %v452
  %636 = vmatprep.subr.bf16.mxu0 %v455
  %637 = vmatpush1.bf16.msra.mxu0 %v454
  %638 = vmatprep.subr.bf16.mxu0 %v457
  %639 = vmatpush1.bf16.msra.mxu0 %v456
  %640 = vmatprep.subr.bf16.mxu0 %v459
  %641 = vmatpush1.bf16.msra.mxu0 %v458
  %642 = vmatprep.subr.bf16.mxu0 %v461
  %643 = vmatpush1.bf16.msra.mxu0 %v460
  %644 = vmatprep.subr.bf16.mxu0 0
  %645 = vmatpush1.bf16.msra.mxu0 0
  %646 = vmatprep.subr.bf16.mxu0 0
  %647 = vmatpush1.bf16.msra.mxu0 0
  %648 = vmatprep.subr.bf16.mxu0 0
  %649 = vmatpush1.bf16.msra.mxu0 0
  %650 = vmatprep.subr.bf16.mxu0 0
  %651 = vmatpush1.bf16.msra.mxu0 0
  %652 = vmatprep.subr.bf16.mxu0 0
  %653 = vmatpush1.bf16.msra.mxu0 0
  %654 = vmatprep.subr.bf16.mxu0 0
  %655 = vmatpush1.bf16.msra.mxu0 0
  %656 = vmatprep.subr.bf16.mxu0 0
  %657 = vmatpush1.bf16.msra.mxu0 0
  %658 = vmatprep.subr.bf16.mxu0 0
  %659 = vmatpush1.bf16.msra.mxu0 0
  %660 = vmatprep.mubr.bf16.mxu0 0
  %661 = vmatmul.mubr.bf16.gmra.mrb[0].mxu0 %v136
  %v662 = vpop.f32.mrb[0].mxu0
  %v663 = vadd.f32 %v620, %v662
  %v664 = vpop.f32.mrb[0].mxu0
  %v665 = vadd.f32 %v622, %v664
  %v666 = vpop.f32.mrb[0].mxu0
  %v667 = vadd.f32 %v624, %v666
  %v668 = vpop.f32.mrb[0].mxu0
  %v669 = vadd.f32 %v626, %v668
  %670 = vdwg.mxu0
  %v671 = vld [vmem:[%s3] sm:$0x3]
  %v672 = vmax.f32 %v663, 0.0
  %v673 = vmax.f32 %v665, 0.0
  %v674 = vmax.f32 %v667, 0.0
  %v675 = vmax.f32 %v669, 0.0
  %v677 = vlaneseq
  %v678 = vshrl.u32 %v677, 7
  %v679 = vsub.s32 0, %v678
  %v680 = vrot.slane %v671, %v679
  %v681 = vlaneseq
  %v682 = vshrl.u32 %v681, 7
  %v683 = vsub.s32 1, %v682
  %v684 = vrot.slane %v671, %v683
  %v687 = vmul.f32 %v672, %v680
  %v688 = vmul.f32 %v673, %v684
  %v689 = vmul.f32 %v674, %v680
  %v690 = vmul.f32 %v675, %v684
  %v691 = vsub.f32 1.0, %v671
  %v693 = vlaneseq
  %v694 = vshrl.u32 %v693, 7
  %v695 = vsub.s32 0, %v694
  %v696 = vrot.slane %v691, %v695
  %v697 = vlaneseq
  %v698 = vshrl.u32 %v697, 7
  %v699 = vsub.s32 1, %v698
  %v700 = vrot.slane %v691, %v699
  %v703 = vmul.f32 %v663, %v696
  %v704 = vmul.f32 %v665, %v700
  %v705 = vmul.f32 %v667, %v696
  %v706 = vmul.f32 %v669, %v700
  %v707 = vadd.f32 %v687, %v703
  %v708 = vadd.f32 %v688, %v704
  %v709 = vadd.f32 %v689, %v705
  %v710 = vadd.f32 %v690, %v706
  %v711 = vpack.c.bf16 %v709, %v707
  %v712 = vpack.c.bf16 %v710, %v708
  %v715 = vunpack.c.l.b16 %v711
  %v716 = vunpack.c.l.b16 %v712
  %v717 = vunpack.c.h.b16 %v711
  %v718 = vunpack.c.h.b16 %v712
  %v719 = vpack.c.b16 %v716, %v715
  %v720 = vpack.c.b16 %v718, %v717
  %723 = vst [vmem:[%s4] sm:$0xff] %v719
  %724 = vst [vmem:[%s4 + $0x8] sm:$0xff] %v720
  // Predicated region
  $region18: #{pose_resnet_forward.34} parent=0 // pred_check
    _
  $region19: #{pose_resnet_forward.34} parent=0 // pred_check_branch
    %726 = sbr.rel (0) target = $region21
  $region20: #{pose_resnet_forward.34} parent=0 // pred_region
    _
  $region21: #{pose_resnet_forward.34} parent=0 // pred_fallthru
    _
  // Predicated region
  $region22: #{pose_resnet_forward.34} parent=0 // pred_check
    _
  $region23: #{pose_resnet_forward.34} parent=0 // pred_check_branch
    %728 = sbr.rel (0) target = $region25
  $region24: #{pose_resnet_forward.34} parent=0 // pred_region
    _
  $region25: #{pose_resnet_forward.34} parent=0 // pred_fallthru
    _

// kernel: pose_resnet_forward.35
$region0: #{pose_resnet_forward.35}
  #allocation0 [shape = 'u32[]', space=smem, size = 0x4, offset = 0x4, fixed_abs, tag = 'smem constant byte address 0x4 - core index']
  #allocation1 [shape = 'u32[144,128]{1,0:T(1,128)}', space=vmem, size = 0x12000, scoped, tag = 'internal scratch']
  %s0 = inlined_call_operand.vmem [shape: bf16[16,1152], index: 0, kind: input, shape index: {}]
  %s1 = inlined_call_operand.vmem [shape: bf16[1152,128], index: 1, kind: input, shape index: {}]
  %s2 = inlined_call_operand.vmem [shape: f32[1,128], index: 2, kind: input, shape index: {}]
  %s3 = inlined_call_operand.vmem [shape: bf16[16,128], index: 3, kind: input, shape index: {}]
  %s4 = inlined_call_operand.vmem [shape: bf16[16,128], index: 4, kind: output, shape index: {}]
  %s5 = sld [smem:[#allocation0]]
  $region26: #{pose_resnet_forward.35} parent=0
    _
  %s7 = ssub.s32 1, %s5
  %s8 = scalar_select 0, %s7, %s5
  // Predicated region
  $region2: #{pose_resnet_forward.35} parent=0 // pred_check
    _
  $region3: #{pose_resnet_forward.35} parent=0 // pred_check_branch
    %10 = sbr.rel (0) target = $region5
  $region4: #{pose_resnet_forward.35} parent=0 // pred_region
    _
  $region5: #{pose_resnet_forward.35} parent=0 // pred_fallthru
    _
  // Predicated region
  $region6: #{pose_resnet_forward.35} parent=0 // pred_check
    _
  $region7: #{pose_resnet_forward.35} parent=0 // pred_check_branch
    %12 = sbr.rel (0) target = $region9
  $region8: #{pose_resnet_forward.35} parent=0 // pred_region
    _
  $region9: #{pose_resnet_forward.35} parent=0 // pred_fallthru
    _
  // Predicated region
  $region10: #{pose_resnet_forward.35} parent=0 // pred_check
    _
  $region11: #{pose_resnet_forward.35} parent=0 // pred_check_branch
    %14 = sbr.rel (0) target = $region13
  $region12: #{pose_resnet_forward.35} parent=0 // pred_region
    _
  $region13: #{pose_resnet_forward.35} parent=0 // pred_fallthru
    _
  // Predicated region
  $region14: #{pose_resnet_forward.35} parent=0 // pred_check
    _
  $region15: #{pose_resnet_forward.35} parent=0 // pred_check_branch
    %16 = sbr.rel (0) target = $region17
  $region16: #{pose_resnet_forward.35} parent=0 // pred_region
    _
  $region17: #{pose_resnet_forward.35} parent=0 // pred_fallthru
    _
  %v18 = vld [vmem:[%s0] sm:$0xff]
  %v19 = vld [vmem:[%s0 + $0x8] sm:$0xff]
  %v20 = vld [vmem:[%s0 + $0x10] sm:$0xff]
  %v21 = vld [vmem:[%s0 + $0x18] sm:$0xff]
  %v22 = vld [vmem:[%s0 + $0x20] sm:$0xf]
  %v23 = vld [vmem:[%s0 + $0x24] sm:$0xff]
  %v24 = vld [vmem:[%s0 + $0x2c] sm:$0xff]
  %v25 = vld [vmem:[%s0 + $0x34] sm:$0xff]
  %v26 = vld [vmem:[%s0 + $0x3c] sm:$0xff]
  %v27 = vld [vmem:[%s0 + $0x44] sm:$0xf]
  %v28 = vld [vmem:[%s1] sm:$0xf]
  %v29 = vld [vmem:[%s1 + $0x4] sm:$0xf]
  %v30 = vld [vmem:[%s1 + $0x8] sm:$0xf]
  %v31 = vld [vmem:[%s1 + $0xc] sm:$0xf]
  %v32 = vld [vmem:[%s1 + $0x10] sm:$0xf]
  %v33 = vld [vmem:[%s1 + $0x14] sm:$0xf]
  %v34 = vld [vmem:[%s1 + $0x18] sm:$0xf]
  %v35 = vld [vmem:[%s1 + $0x1c] sm:$0xf]
  %v36 = vld [vmem:[%s1 + $0x20] sm:$0xf]
  %v37 = vld [vmem:[%s1 + $0x24] sm:$0xf]
  %v38 = vld [vmem:[%s1 + $0x28] sm:$0xf]
  %v39 = vld [vmem:[%s1 + $0x2c] sm:$0xf]
  %v40 = vld [vmem:[%s1 + $0x30] sm:$0xf]
  %v41 = vld [vmem:[%s1 + $0x34] sm:$0xf]
  %v42 = vld [vmem:[%s1 + $0x38] sm:$0xf]
  %v43 = vld [vmem:[%s1 + $0x3c] sm:$0xf]
  %v44 = vld [vmem:[%s1 + $0x40] sm:$0xf]
  %v45 = vld [vmem:[%s1 + $0x44] sm:$0xf]
  %v46 = vld [vmem:[%s1 + $0x48] sm:$0xf]
  %v47 = vld [vmem:[%s1 + $0x4c] sm:$0xf]
  %v48 = vld [vmem:[%s1 + $0x50] sm:$0xf]
  %v49 = vld [vmem:[%s1 + $0x54] sm:$0xf]
  %v50 = vld [vmem:[%s1 + $0x58] sm:$0xf]
  %v51 = vld [vmem:[%s1 + $0x5c] sm:$0xf]
  %v52 = vld [vmem:[%s1 + $0x60] sm:$0xf]
  %v53 = vld [vmem:[%s1 + $0x64] sm:$0xf]
  %v54 = vld [vmem:[%s1 + $0x68] sm:$0xf]
  %v55 = vld [vmem:[%s1 + $0x6c] sm:$0xf]
  %v56 = vld [vmem:[%s1 + $0x70] sm:$0xf]
  %v57 = vld [vmem:[%s1 + $0x74] sm:$0xf]
  %v58 = vld [vmem:[%s1 + $0x78] sm:$0xf]
  %v59 = vld [vmem:[%s1 + $0x7c] sm:$0xf]
  %v60 = vld [vmem:[%s1 + $0x80] sm:$0xf]
  %v61 = vld [vmem:[%s1 + $0x84] sm:$0xf]
  %v62 = vld [vmem:[%s1 + $0x88] sm:$0xf]
  %v63 = vld [vmem:[%s1 + $0x8c] sm:$0xf]
  %v64 = vld [vmem:[%s1 + $0x90] sm:$0xf]
  %v65 = vld [vmem:[%s1 + $0x94] sm:$0xf]
  %v66 = vld [vmem:[%s1 + $0x98] sm:$0xf]
  %v67 = vld [vmem:[%s1 + $0x9c] sm:$0xf]
  %v68 = vld [vmem:[%s1 + $0xa0] sm:$0xf]
  %v69 = vld [vmem:[%s1 + $0xa4] sm:$0xf]
  %v70 = vld [vmem:[%s1 + $0xa8] sm:$0xf]
  %v71 = vld [vmem:[%s1 + $0xac] sm:$0xf]
  %v72 = vld [vmem:[%s1 + $0xb0] sm:$0xf]
  %v73 = vld [vmem:[%s1 + $0xb4] sm:$0xf]
  %v74 = vld [vmem:[%s1 + $0xb8] sm:$0xf]
  %v75 = vld [vmem:[%s1 + $0xbc] sm:$0xf]
  %v76 = vld [vmem:[%s1 + $0xc0] sm:$0xf]
  %v77 = vld [vmem:[%s1 + $0xc4] sm:$0xf]
  %v78 = vld [vmem:[%s1 + $0xc8] sm:$0xf]
  %v79 = vld [vmem:[%s1 + $0xcc] sm:$0xf]
  %v80 = vld [vmem:[%s1 + $0xd0] sm:$0xf]
  %v81 = vld [vmem:[%s1 + $0xd4] sm:$0xf]
  %v82 = vld [vmem:[%s1 + $0xd8] sm:$0xf]
  %v83 = vld [vmem:[%s1 + $0xdc] sm:$0xf]
  %v84 = vld [vmem:[%s1 + $0xe0] sm:$0xf]
  %v85 = vld [vmem:[%s1 + $0xe4] sm:$0xf]
  %v86 = vld [vmem:[%s1 + $0xe8] sm:$0xf]
  %v87 = vld [vmem:[%s1 + $0xec] sm:$0xf]
  %v88 = vld [vmem:[%s1 + $0xf0] sm:$0xf]
  %v89 = vld [vmem:[%s1 + $0xf4] sm:$0xf]
  %v90 = vld [vmem:[%s1 + $0xf8] sm:$0xf]
  %v91 = vld [vmem:[%s1 + $0xfc] sm:$0xf]
  %v92 = vld [vmem:[%s1 + $0x100] sm:$0xf]
  %v93 = vld [vmem:[%s1 + $0x104] sm:$0xf]
  %v94 = vld [vmem:[%s1 + $0x108] sm:$0xf]
  %v95 = vld [vmem:[%s1 + $0x10c] sm:$0xf]
  %v96 = vld [vmem:[%s1 + $0x110] sm:$0xf]
  %v97 = vld [vmem:[%s1 + $0x114] sm:$0xf]
  %v98 = vld [vmem:[%s1 + $0x118] sm:$0xf]
  %v99 = vld [vmem:[%s1 + $0x11c] sm:$0xf]
  %v100 = vld [vmem:[%s1 + $0x120] sm:$0xf]
  %v101 = vld [vmem:[%s1 + $0x124] sm:$0xf]
  %v102 = vld [vmem:[%s1 + $0x128] sm:$0xf]
  %v103 = vld [vmem:[%s1 + $0x12c] sm:$0xf]
  %v104 = vld [vmem:[%s1 + $0x130] sm:$0xf]
  %v105 = vld [vmem:[%s1 + $0x134] sm:$0xf]
  %v106 = vld [vmem:[%s1 + $0x138] sm:$0xf]
  %v107 = vld [vmem:[%s1 + $0x13c] sm:$0xf]
  %v108 = vld [vmem:[%s1 + $0x140] sm:$0xf]
  %v109 = vld [vmem:[%s1 + $0x144] sm:$0xf]
  %v110 = vld [vmem:[%s1 + $0x148] sm:$0xf]
  %v111 = vld [vmem:[%s1 + $0x14c] sm:$0xf]
  %v112 = vld [vmem:[%s1 + $0x150] sm:$0xf]
  %v113 = vld [vmem:[%s1 + $0x154] sm:$0xf]
  %v114 = vld [vmem:[%s1 + $0x158] sm:$0xf]
  %v115 = vld [vmem:[%s1 + $0x15c] sm:$0xf]
  %v116 = vld [vmem:[%s1 + $0x160] sm:$0xf]
  %v117 = vld [vmem:[%s1 + $0x164] sm:$0xf]
  %v118 = vld [vmem:[%s1 + $0x168] sm:$0xf]
  %v119 = vld [vmem:[%s1 + $0x16c] sm:$0xf]
  %v120 = vld [vmem:[%s1 + $0x170] sm:$0xf]
  %v121 = vld [vmem:[%s1 + $0x174] sm:$0xf]
  %v122 = vld [vmem:[%s1 + $0x178] sm:$0xf]
  %v123 = vld [vmem:[%s1 + $0x17c] sm:$0xf]
  %v124 = vld [vmem:[%s1 + $0x180] sm:$0xf]
  %v125 = vld [vmem:[%s1 + $0x184] sm:$0xf]
  %v126 = vld [vmem:[%s1 + $0x188] sm:$0xf]
  %v127 = vld [vmem:[%s1 + $0x18c] sm:$0xf]
  %v128 = vld [vmem:[%s1 + $0x190] sm:$0xf]
  %v129 = vld [vmem:[%s1 + $0x194] sm:$0xf]
  %v130 = vld [vmem:[%s1 + $0x198] sm:$0xf]
  %v131 = vld [vmem:[%s1 + $0x19c] sm:$0xf]
  %v132 = vld [vmem:[%s1 + $0x1a0] sm:$0xf]
  %v133 = vld [vmem:[%s1 + $0x1a4] sm:$0xf]
  %v134 = vld [vmem:[%s1 + $0x1a8] sm:$0xf]
  %v135 = vld [vmem:[%s1 + $0x1ac] sm:$0xf]
  %v136 = vld [vmem:[%s1 + $0x1b0] sm:$0xf]
  %v137 = vld [vmem:[%s1 + $0x1b4] sm:$0xf]
  %v138 = vld [vmem:[%s1 + $0x1b8] sm:$0xf]
  %v139 = vld [vmem:[%s1 + $0x1bc] sm:$0xf]
  %v140 = vld [vmem:[%s1 + $0x1c0] sm:$0xf]
  %v141 = vld [vmem:[%s1 + $0x1c4] sm:$0xf]
  %v142 = vld [vmem:[%s1 + $0x1c8] sm:$0xf]
  %v143 = vld [vmem:[%s1 + $0x1cc] sm:$0xf]
  %v144 = vld [vmem:[%s1 + $0x1d0] sm:$0xf]
  %v145 = vld [vmem:[%s1 + $0x1d4] sm:$0xf]
  %v146 = vld [vmem:[%s1 + $0x1d8] sm:$0xf]
  %v147 = vld [vmem:[%s1 + $0x1dc] sm:$0xf]
  %v148 = vld [vmem:[%s1 + $0x1e0] sm:$0xf]
  %v149 = vld [vmem:[%s1 + $0x1e4] sm:$0xf]
  %v150 = vld [vmem:[%s1 + $0x1e8] sm:$0xf]
  %v151 = vld [vmem:[%s1 + $0x1ec] sm:$0xf]
  %v152 = vld [vmem:[%s1 + $0x1f0] sm:$0xf]
  %v153 = vld [vmem:[%s1 + $0x1f4] sm:$0xf]
  %v154 = vld [vmem:[%s1 + $0x1f8] sm:$0xf]
  %v155 = vld [vmem:[%s1 + $0x1fc] sm:$0xf]
  %v156 = vld [vmem:[%s1 + $0x200] sm:$0xf]
  %v157 = vld [vmem:[%s1 + $0x204] sm:$0xf]
  %v158 = vld [vmem:[%s1 + $0x208] sm:$0xf]
  %v159 = vld [vmem:[%s1 + $0x20c] sm:$0xf]
  %v160 = vld [vmem:[%s1 + $0x210] sm:$0xf]
  %v161 = vld [vmem:[%s1 + $0x214] sm:$0xf]
  %v162 = vld [vmem:[%s1 + $0x218] sm:$0xf]
  %v163 = vld [vmem:[%s1 + $0x21c] sm:$0xf]
  %v164 = vld [vmem:[%s1 + $0x220] sm:$0xf]
  %v165 = vld [vmem:[%s1 + $0x224] sm:$0xf]
  %v166 = vld [vmem:[%s1 + $0x228] sm:$0xf]
  %v167 = vld [vmem:[%s1 + $0x22c] sm:$0xf]
  %v168 = vld [vmem:[%s1 + $0x230] sm:$0xf]
  %v169 = vld [vmem:[%s1 + $0x234] sm:$0xf]
  %v170 = vld [vmem:[%s1 + $0x238] sm:$0xf]
  %v171 = vld [vmem:[%s1 + $0x23c] sm:$0xf]
  %v172 = vld [vmem:[%s2] sm:$0x1]
  %v174 = vlaneseq
  %v175 = vshrl.u32 %v174, 7
  %v176 = vsub.s32 0, %v175
  %v177 = vrot.slane %v172, %v176
  %v189 = vunpack.c.l.b16 %v18
  %v190 = vunpack.c.h.b16 %v18
  %v191 = vunpack.c.l.b16 %v19
  %v192 = vunpack.c.h.b16 %v19
  %v193 = vunpack.c.l.b16 %v20
  %v194 = vunpack.c.h.b16 %v20
  %v195 = vunpack.c.l.b16 %v21
  %v196 = vunpack.c.h.b16 %v21
  %v197 = vunpack.c.l.b16 %v22
  %v198 = vunpack.c.l.b16 %v23
  %v199 = vunpack.c.h.b16 %v23
  %v200 = vunpack.c.l.b16 %v24
  %v201 = vunpack.c.h.b16 %v24
  %v202 = vunpack.c.l.b16 %v25
  %v203 = vunpack.c.h.b16 %v25
  %v204 = vunpack.c.l.b16 %v26
  %v205 = vunpack.c.h.b16 %v26
  %v206 = vunpack.c.l.b16 %v27
  %v207 = vpack.c.b16 %v198, %v189
  %v208 = vpack.c.b16 %v199, %v190
  %v209 = vpack.c.b16 %v200, %v191
  %v210 = vpack.c.b16 %v201, %v192
  %v211 = vpack.c.b16 %v202, %v193
  %v212 = vpack.c.b16 %v203, %v194
  %v213 = vpack.c.b16 %v204, %v195
  %v214 = vpack.c.b16 %v205, %v196
  %v215 = vpack.c.b16 %v206, %v197
  %v369 = vunpack.c.l.b16 %v28
  %v370 = vunpack.c.l.b16 %v29
  %v371 = vunpack.c.l.b16 %v30
  %v372 = vunpack.c.l.b16 %v31
  %v373 = vunpack.c.l.b16 %v32
  %v374 = vunpack.c.l.b16 %v33
  %v375 = vunpack.c.l.b16 %v34
  %v376 = vunpack.c.l.b16 %v35
  %v377 = vunpack.c.l.b16 %v36
  %v378 = vunpack.c.l.b16 %v37
  %v379 = vunpack.c.l.b16 %v38
  %v380 = vunpack.c.l.b16 %v39
  %v381 = vunpack.c.l.b16 %v40
  %v382 = vunpack.c.l.b16 %v41
  %v383 = vunpack.c.l.b16 %v42
  %v384 = vunpack.c.l.b16 %v43
  %v385 = vunpack.c.l.b16 %v44
  %v386 = vunpack.c.l.b16 %v45
  %v387 = vunpack.c.l.b16 %v46
  %v388 = vunpack.c.l.b16 %v47
  %v389 = vunpack.c.l.b16 %v48
  %v390 = vunpack.c.l.b16 %v49
  %v391 = vunpack.c.l.b16 %v50
  %v392 = vunpack.c.l.b16 %v51
  %v393 = vunpack.c.l.b16 %v52
  %v394 = vunpack.c.l.b16 %v53
  %v395 = vunpack.c.l.b16 %v54
  %v396 = vunpack.c.l.b16 %v55
  %v397 = vunpack.c.l.b16 %v56
  %v398 = vunpack.c.l.b16 %v57
  %v399 = vunpack.c.l.b16 %v58
  %v400 = vunpack.c.l.b16 %v59
  %v401 = vunpack.c.l.b16 %v60
  %v402 = vunpack.c.l.b16 %v61
  %v403 = vunpack.c.l.b16 %v62
  %v404 = vunpack.c.l.b16 %v63
  %v405 = vunpack.c.l.b16 %v64
  %v406 = vunpack.c.l.b16 %v65
  %v407 = vunpack.c.l.b16 %v66
  %v408 = vunpack.c.l.b16 %v67
  %v409 = vunpack.c.l.b16 %v68
  %v410 = vunpack.c.l.b16 %v69
  %v411 = vunpack.c.l.b16 %v70
  %v412 = vunpack.c.l.b16 %v71
  %v413 = vunpack.c.l.b16 %v72
  %v414 = vunpack.c.l.b16 %v73
  %v415 = vunpack.c.l.b16 %v74
  %v416 = vunpack.c.l.b16 %v75
  %v417 = vunpack.c.l.b16 %v76
  %v418 = vunpack.c.l.b16 %v77
  %v419 = vunpack.c.l.b16 %v78
  %v420 = vunpack.c.l.b16 %v79
  %v421 = vunpack.c.l.b16 %v80
  %v422 = vunpack.c.l.b16 %v81
  %v423 = vunpack.c.l.b16 %v82
  %v424 = vunpack.c.l.b16 %v83
  %v425 = vunpack.c.l.b16 %v84
  %v426 = vunpack.c.l.b16 %v85
  %v427 = vunpack.c.l.b16 %v86
  %v428 = vunpack.c.l.b16 %v87
  %v429 = vunpack.c.l.b16 %v88
  %v430 = vunpack.c.l.b16 %v89
  %v431 = vunpack.c.l.b16 %v90
  %v432 = vunpack.c.l.b16 %v91
  %v433 = vunpack.c.l.b16 %v92
  %v434 = vunpack.c.l.b16 %v93
  %v435 = vunpack.c.l.b16 %v94
  %v436 = vunpack.c.l.b16 %v95
  %v437 = vunpack.c.l.b16 %v96
  %v438 = vunpack.c.l.b16 %v97
  %v439 = vunpack.c.l.b16 %v98
  %v440 = vunpack.c.l.b16 %v99
  %v441 = vunpack.c.l.b16 %v100
  %v442 = vunpack.c.l.b16 %v101
  %v443 = vunpack.c.l.b16 %v102
  %v444 = vunpack.c.l.b16 %v103
  %v445 = vunpack.c.l.b16 %v104
  %v446 = vunpack.c.l.b16 %v105
  %v447 = vunpack.c.l.b16 %v106
  %v448 = vunpack.c.l.b16 %v107
  %v449 = vunpack.c.l.b16 %v108
  %v450 = vunpack.c.l.b16 %v109
  %v451 = vunpack.c.l.b16 %v110
  %v452 = vunpack.c.l.b16 %v111
  %v453 = vunpack.c.l.b16 %v112
  %v454 = vunpack.c.l.b16 %v113
  %v455 = vunpack.c.l.b16 %v114
  %v456 = vunpack.c.l.b16 %v115
  %v457 = vunpack.c.l.b16 %v116
  %v458 = vunpack.c.l.b16 %v117
  %v459 = vunpack.c.l.b16 %v118
  %v460 = vunpack.c.l.b16 %v119
  %v461 = vunpack.c.l.b16 %v120
  %v462 = vunpack.c.l.b16 %v121
  %v463 = vunpack.c.l.b16 %v122
  %v464 = vunpack.c.l.b16 %v123
  %v465 = vunpack.c.l.b16 %v124
  %v466 = vunpack.c.l.b16 %v125
  %v467 = vunpack.c.l.b16 %v126
  %v468 = vunpack.c.l.b16 %v127
  %v469 = vunpack.c.l.b16 %v128
  %v470 = vunpack.c.l.b16 %v129
  %v471 = vunpack.c.l.b16 %v130
  %v472 = vunpack.c.l.b16 %v131
  %v473 = vunpack.c.l.b16 %v132
  %v474 = vunpack.c.l.b16 %v133
  %v475 = vunpack.c.l.b16 %v134
  %v476 = vunpack.c.l.b16 %v135
  %v477 = vunpack.c.l.b16 %v136
  %v478 = vunpack.c.l.b16 %v137
  %v479 = vunpack.c.l.b16 %v138
  %v480 = vunpack.c.l.b16 %v139
  %v481 = vunpack.c.l.b16 %v140
  %v482 = vunpack.c.l.b16 %v141
  %v483 = vunpack.c.l.b16 %v142
  %v484 = vunpack.c.l.b16 %v143
  %v485 = vunpack.c.l.b16 %v144
  %v486 = vunpack.c.l.b16 %v145
  %v487 = vunpack.c.l.b16 %v146
  %v488 = vunpack.c.l.b16 %v147
  %v489 = vunpack.c.l.b16 %v148
  %v490 = vunpack.c.l.b16 %v149
  %v491 = vunpack.c.l.b16 %v150
  %v492 = vunpack.c.l.b16 %v151
  %v493 = vunpack.c.l.b16 %v152
  %v494 = vunpack.c.l.b16 %v153
  %v495 = vunpack.c.l.b16 %v154
  %v496 = vunpack.c.l.b16 %v155
  %v497 = vunpack.c.l.b16 %v156
  %v498 = vunpack.c.l.b16 %v157
  %v499 = vunpack.c.l.b16 %v158
  %v500 = vunpack.c.l.b16 %v159
  %v501 = vunpack.c.l.b16 %v160
  %v502 = vunpack.c.l.b16 %v161
  %v503 = vunpack.c.l.b16 %v162
  %v504 = vunpack.c.l.b16 %v163
  %v505 = vunpack.c.l.b16 %v164
  %v506 = vunpack.c.l.b16 %v165
  %v507 = vunpack.c.l.b16 %v166
  %v508 = vunpack.c.l.b16 %v167
  %v509 = vunpack.c.l.b16 %v168
  %v510 = vunpack.c.l.b16 %v169
  %v511 = vunpack.c.l.b16 %v170
  %v512 = vunpack.c.l.b16 %v171
  %v513 = vpack.c.b16 %v370, %v369
  %v514 = vpack.c.b16 %v372, %v371
  %v515 = vpack.c.b16 %v374, %v373
  %v516 = vpack.c.b16 %v376, %v375
  %v517 = vpack.c.b16 %v378, %v377
  %v518 = vpack.c.b16 %v380, %v379
  %v519 = vpack.c.b16 %v382, %v381
  %v520 = vpack.c.b16 %v384, %v383
  %v521 = vpack.c.b16 %v386, %v385
  %v522 = vpack.c.b16 %v388, %v387
  %v523 = vpack.c.b16 %v390, %v389
  %v524 = vpack.c.b16 %v392, %v391
  %v525 = vpack.c.b16 %v394, %v393
  %v526 = vpack.c.b16 %v396, %v395
  %v527 = vpack.c.b16 %v398, %v397
  %v528 = vpack.c.b16 %v400, %v399
  %v529 = vpack.c.b16 %v402, %v401
  %v530 = vpack.c.b16 %v404, %v403
  %v531 = vpack.c.b16 %v406, %v405
  %v532 = vpack.c.b16 %v408, %v407
  %v533 = vpack.c.b16 %v410, %v409
  %v534 = vpack.c.b16 %v412, %v411
  %v535 = vpack.c.b16 %v414, %v413
  %v536 = vpack.c.b16 %v416, %v415
  %v537 = vpack.c.b16 %v418, %v417
  %v538 = vpack.c.b16 %v420, %v419
  %v539 = vpack.c.b16 %v422, %v421
  %v540 = vpack.c.b16 %v424, %v423
  %v541 = vpack.c.b16 %v426, %v425
  %v542 = vpack.c.b16 %v428, %v427
  %v543 = vpack.c.b16 %v430, %v429
  %v544 = vpack.c.b16 %v432, %v431
  %v545 = vpack.c.b16 %v434, %v433
  %v546 = vpack.c.b16 %v436, %v435
  %v547 = vpack.c.b16 %v438, %v437
  %v548 = vpack.c.b16 %v440, %v439
  %v549 = vpack.c.b16 %v442, %v441
  %v550 = vpack.c.b16 %v444, %v443
  %v551 = vpack.c.b16 %v446, %v445
  %v552 = vpack.c.b16 %v448, %v447
  %v553 = vpack.c.b16 %v450, %v449
  %v554 = vpack.c.b16 %v452, %v451
  %v555 = vpack.c.b16 %v454, %v453
  %v556 = vpack.c.b16 %v456, %v455
  %v557 = vpack.c.b16 %v458, %v457
  %v558 = vpack.c.b16 %v460, %v459
  %v559 = vpack.c.b16 %v462, %v461
  %v560 = vpack.c.b16 %v464, %v463
  %v561 = vpack.c.b16 %v466, %v465
  %v562 = vpack.c.b16 %v468, %v467
  %v563 = vpack.c.b16 %v470, %v469
  %v564 = vpack.c.b16 %v472, %v471
  %v565 = vpack.c.b16 %v474, %v473
  %v566 = vpack.c.b16 %v476, %v475
  %v567 = vpack.c.b16 %v478, %v477
  %v568 = vpack.c.b16 %v480, %v479
  %v569 = vpack.c.b16 %v482, %v481
  %v570 = vpack.c.b16 %v484, %v483
  %v571 = vpack.c.b16 %v486, %v485
  %v572 = vpack.c.b16 %v488, %v487
  %v573 = vpack.c.b16 %v490, %v489
  %v574 = vpack.c.b16 %v492, %v491
  %v575 = vpack.c.b16 %v494, %v493
  %v576 = vpack.c.b16 %v496, %v495
  %v577 = vpack.c.b16 %v498, %v497
  %v578 = vpack.c.b16 %v500, %v499
  %v579 = vpack.c.b16 %v502, %v501
  %v580 = vpack.c.b16 %v504, %v503
  %v581 = vpack.c.b16 %v506, %v505
  %v582 = vpack.c.b16 %v508, %v507
  %v583 = vpack.c.b16 %v510, %v509
  %v584 = vpack.c.b16 %v512, %v511
  %657 = vmatprep.subr.bf16.mxu0 0
  %658 = vmatpush1.bf16.msra.mxu0 %v513
  %659 = vmatprep.subr.bf16.mxu0 0
  %660 = vmatpush1.bf16.msra.mxu0 %v514
  %661 = vmatprep.subr.bf16.mxu0 0
  %662 = vmatpush1.bf16.msra.mxu0 %v515
  %663 = vmatprep.subr.bf16.mxu0 0
  %664 = vmatpush1.bf16.msra.mxu0 %v516
  %665 = vmatprep.subr.bf16.mxu0 0
  %666 = vmatpush1.bf16.msra.mxu0 %v517
  %667 = vmatprep.subr.bf16.mxu0 0
  %668 = vmatpush1.bf16.msra.mxu0 %v518
  %669 = vmatprep.subr.bf16.mxu0 0
  %670 = vmatpush1.bf16.msra.mxu0 %v519
  %671 = vmatprep.subr.bf16.mxu0 0
  %672 = vmatpush1.bf16.msra.mxu0 %v520
  %673 = vmatprep.subr.bf16.mxu0 0
  %674 = vmatpush1.bf16.msra.mxu0 %v521
  %675 = vmatprep.subr.bf16.mxu0 0
  %676 = vmatpush1.bf16.msra.mxu0 %v522
  %677 = vmatprep.subr.bf16.mxu0 0
  %678 = vmatpush1.bf16.msra.mxu0 %v523
  %679 = vmatprep.subr.bf16.mxu0 0
  %680 = vmatpush1.bf16.msra.mxu0 %v524
  %681 = vmatprep.subr.bf16.mxu0 0
  %682 = vmatpush1.bf16.msra.mxu0 %v525
  %683 = vmatprep.subr.bf16.mxu0 0
  %684 = vmatpush1.bf16.msra.mxu0 %v526
  %685 = vmatprep.subr.bf16.mxu0 0
  %686 = vmatpush1.bf16.msra.mxu0 %v527
  %687 = vmatprep.subr.bf16.mxu0 0
  %688 = vmatpush1.bf16.msra.mxu0 %v528
  %689 = vmatprep.mubr.bf16.mxu0 %v208
  %690 = vmatmul.mubr.bf16.gmra.mrb[0].mxu0 %v207
  %v691 = vpop.f32.mrb[0].mxu0
  %v692 = vadd.f32 %v177, %v691
  %v693 = vpop.f32.mrb[0].mxu0
  %v694 = vpop.f32.mrb[0].mxu0
  %v695 = vadd.f32 %v177, %v694
  %v696 = vpop.f32.mrb[0].mxu0
  %697 = vdwg.mxu0
  %698 = vmatprep.subr.bf16.mxu0 0
  %699 = vmatpush1.bf16.msra.mxu0 %v529
  %700 = vmatprep.subr.bf16.mxu0 0
  %701 = vmatpush1.bf16.msra.mxu0 %v530
  %702 = vmatprep.subr.bf16.mxu0 0
  %703 = vmatpush1.bf16.msra.mxu0 %v531
  %704 = vmatprep.subr.bf16.mxu0 0
  %705 = vmatpush1.bf16.msra.mxu0 %v532
  %706 = vmatprep.subr.bf16.mxu0 0
  %707 = vmatpush1.bf16.msra.mxu0 %v533
  %708 = vmatprep.subr.bf16.mxu0 0
  %709 = vmatpush1.bf16.msra.mxu0 %v534
  %710 = vmatprep.subr.bf16.mxu0 0
  %711 = vmatpush1.bf16.msra.mxu0 %v535
  %712 = vmatprep.subr.bf16.mxu0 0
  %713 = vmatpush1.bf16.msra.mxu0 %v536
  %714 = vmatprep.subr.bf16.mxu0 0
  %715 = vmatpush1.bf16.msra.mxu0 %v537
  %716 = vmatprep.subr.bf16.mxu0 0
  %717 = vmatpush1.bf16.msra.mxu0 %v538
  %718 = vmatprep.subr.bf16.mxu0 0
  %719 = vmatpush1.bf16.msra.mxu0 %v539
  %720 = vmatprep.subr.bf16.mxu0 0
  %721 = vmatpush1.bf16.msra.mxu0 %v540
  %722 = vmatprep.subr.bf16.mxu0 0
  %723 = vmatpush1.bf16.msra.mxu0 %v541
  %724 = vmatprep.subr.bf16.mxu0 0
  %725 = vmatpush1.bf16.msra.mxu0 %v542
  %726 = vmatprep.subr.bf16.mxu0 0
  %727 = vmatpush1.bf16.msra.mxu0 %v543
  %728 = vmatprep.subr.bf16.mxu0 0
  %729 = vmatpush1.bf16.msra.mxu0 %v544
  %730 = vmatprep.mubr.bf16.mxu0 %v210
  %731 = vmatmul.mubr.bf16.gmra.mrb[0].mxu0 %v209
  %v732 = vpop.f32.mrb[0].mxu0
  %v733 = vadd.f32 %v692, %v732
  %v734 = vpop.f32.mrb[0].mxu0
  %v735 = vpop.f32.mrb[0].mxu0
  %v736 = vadd.f32 %v695, %v735
  %v737 = vpop.f32.mrb[0].mxu0
  %738 = vdwg.mxu0
  %739 = vmatprep.subr.bf16.mxu0 0
  %740 = vmatpush1.bf16.msra.mxu0 %v545
  %741 = vmatprep.subr.bf16.mxu0 0
  %742 = vmatpush1.bf16.msra.mxu0 %v546
  %743 = vmatprep.subr.bf16.mxu0 0
  %744 = vmatpush1.bf16.msra.mxu0 %v547
  %745 = vmatprep.subr.bf16.mxu0 0
  %746 = vmatpush1.bf16.msra.mxu0 %v548
  %747 = vmatprep.subr.bf16.mxu0 0
  %748 = vmatpush1.bf16.msra.mxu0 %v549
  %749 = vmatprep.subr.bf16.mxu0 0
  %750 = vmatpush1.bf16.msra.mxu0 %v550
  %751 = vmatprep.subr.bf16.mxu0 0
  %752 = vmatpush1.bf16.msra.mxu0 %v551
  %753 = vmatprep.subr.bf16.mxu0 0
  %754 = vmatpush1.bf16.msra.mxu0 %v552
  %755 = vmatprep.subr.bf16.mxu0 0
  %756 = vmatpush1.bf16.msra.mxu0 %v553
  %757 = vmatprep.subr.bf16.mxu0 0
  %758 = vmatpush1.bf16.msra.mxu0 %v554
  %759 = vmatprep.subr.bf16.mxu0 0
  %760 = vmatpush1.bf16.msra.mxu0 %v555
  %761 = vmatprep.subr.bf16.mxu0 0
  %762 = vmatpush1.bf16.msra.mxu0 %v556
  %763 = vmatprep.subr.bf16.mxu0 0
  %764 = vmatpush1.bf16.msra.mxu0 %v557
  %765 = vmatprep.subr.bf16.mxu0 0
  %766 = vmatpush1.bf16.msra.mxu0 %v558
  %767 = vmatprep.subr.bf16.mxu0 0
  %768 = vmatpush1.bf16.msra.mxu0 %v559
  %769 = vmatprep.subr.bf16.mxu0 0
  %770 = vmatpush1.bf16.msra.mxu0 %v560
  %771 = vmatprep.mubr.bf16.mxu0 %v212
  %772 = vmatmul.mubr.bf16.gmra.mrb[0].mxu0 %v211
  %v773 = vpop.f32.mrb[0].mxu0
  %v774 = vadd.f32 %v733, %v773
  %v775 = vpop.f32.mrb[0].mxu0
  %v776 = vpop.f32.mrb[0].mxu0
  %v777 = vadd.f32 %v736, %v776
  %v778 = vpop.f32.mrb[0].mxu0
  %779 = vdwg.mxu0
  %780 = vmatprep.subr.bf16.mxu0 0
  %781 = vmatpush1.bf16.msra.mxu0 %v561
  %782 = vmatprep.subr.bf16.mxu0 0
  %783 = vmatpush1.bf16.msra.mxu0 %v562
  %784 = vmatprep.subr.bf16.mxu0 0
  %785 = vmatpush1.bf16.msra.mxu0 %v563
  %786 = vmatprep.subr.bf16.mxu0 0
  %787 = vmatpush1.bf16.msra.mxu0 %v564
  %788 = vmatprep.subr.bf16.mxu0 0
  %789 = vmatpush1.bf16.msra.mxu0 %v565
  %790 = vmatprep.subr.bf16.mxu0 0
  %791 = vmatpush1.bf16.msra.mxu0 %v566
  %792 = vmatprep.subr.bf16.mxu0 0
  %793 = vmatpush1.bf16.msra.mxu0 %v567
  %794 = vmatprep.subr.bf16.mxu0 0
  %795 = vmatpush1.bf16.msra.mxu0 %v568
  %796 = vmatprep.subr.bf16.mxu0 0
  %797 = vmatpush1.bf16.msra.mxu0 %v569
  %798 = vmatprep.subr.bf16.mxu0 0
  %799 = vmatpush1.bf16.msra.mxu0 %v570
  %800 = vmatprep.subr.bf16.mxu0 0
  %801 = vmatpush1.bf16.msra.mxu0 %v571
  %802 = vmatprep.subr.bf16.mxu0 0
  %803 = vmatpush1.bf16.msra.mxu0 %v572
  %804 = vmatprep.subr.bf16.mxu0 0
  %805 = vmatpush1.bf16.msra.mxu0 %v573
  %806 = vmatprep.subr.bf16.mxu0 0
  %807 = vmatpush1.bf16.msra.mxu0 %v574
  %808 = vmatprep.subr.bf16.mxu0 0
  %809 = vmatpush1.bf16.msra.mxu0 %v575
  %810 = vmatprep.subr.bf16.mxu0 0
  %811 = vmatpush1.bf16.msra.mxu0 %v576
  %812 = vmatprep.mubr.bf16.mxu0 %v214
  %813 = vmatmul.mubr.bf16.gmra.mrb[0].mxu0 %v213
  %v814 = vpop.f32.mrb[0].mxu0
  %v815 = vadd.f32 %v774, %v814
  %v816 = vpop.f32.mrb[0].mxu0
  %v817 = vpop.f32.mrb[0].mxu0
  %v818 = vadd.f32 %v777, %v817
  %v819 = vpop.f32.mrb[0].mxu0
  %820 = vdwg.mxu0
  %821 = vmatprep.subr.bf16.mxu0 0
  %822 = vmatpush1.bf16.msra.mxu0 %v577
  %823 = vmatprep.subr.bf16.mxu0 0
  %824 = vmatpush1.bf16.msra.mxu0 %v578
  %825 = vmatprep.subr.bf16.mxu0 0
  %826 = vmatpush1.bf16.msra.mxu0 %v579
  %827 = vmatprep.subr.bf16.mxu0 0
  %828 = vmatpush1.bf16.msra.mxu0 %v580
  %829 = vmatprep.subr.bf16.mxu0 0
  %830 = vmatpush1.bf16.msra.mxu0 %v581
  %831 = vmatprep.subr.bf16.mxu0 0
  %832 = vmatpush1.bf16.msra.mxu0 %v582
  %833 = vmatprep.subr.bf16.mxu0 0
  %834 = vmatpush1.bf16.msra.mxu0 %v583
  %835 = vmatprep.subr.bf16.mxu0 0
  %836 = vmatpush1.bf16.msra.mxu0 %v584
  %837 = vmatprep.subr.bf16.mxu0 0
  %838 = vmatpush1.bf16.msra.mxu0 0
  %839 = vmatprep.subr.bf16.mxu0 0
  %840 = vmatpush1.bf16.msra.mxu0 0
  %841 = vmatprep.subr.bf16.mxu0 0
  %842 = vmatpush1.bf16.msra.mxu0 0
  %843 = vmatprep.subr.bf16.mxu0 0
  %844 = vmatpush1.bf16.msra.mxu0 0
  %845 = vmatprep.subr.bf16.mxu0 0
  %846 = vmatpush1.bf16.msra.mxu0 0
  %847 = vmatprep.subr.bf16.mxu0 0
  %848 = vmatpush1.bf16.msra.mxu0 0
  %849 = vmatprep.subr.bf16.mxu0 0
  %850 = vmatpush1.bf16.msra.mxu0 0
  %851 = vmatprep.subr.bf16.mxu0 0
  %852 = vmatpush1.bf16.msra.mxu0 0
  %853 = vmatprep.mubr.bf16.mxu0 0
  %854 = vmatmul.mubr.bf16.gmra.mrb[0].mxu0 %v215
  %v855 = vpop.f32.mrb[0].mxu0
  %v856 = vadd.f32 %v815, %v855
  %v857 = vpop.f32.mrb[0].mxu0
  %v858 = vpop.f32.mrb[0].mxu0
  %v859 = vadd.f32 %v818, %v858
  %v860 = vpop.f32.mrb[0].mxu0
  %861 = vdwg.mxu0
  %v862 = vld [vmem:[%s3] sm:$0xf]
  %v863 = vld [vmem:[%s3 + $0x4] sm:$0xf]
  %v864 = vunpack.c.l.bf16 %v862
  %v865 = vunpack.c.l.bf16 %v863
  %v866 = vadd.f32 %v856, %v864
  %v867 = vadd.f32 %v859, %v865
  %v868 = vmax.f32 %v866, 0.0
  %v869 = vmax.f32 %v867, 0.0
  %v870 = vpack.c.bf16 %v869, %v868
  %v872 = vunpack.c.l.b16 %v870
  %v873 = vunpack.c.h.b16 %v870
  %v874 = vpack.c.b16 %v872, %v872
  %v875 = vpack.c.b16 %v873, %v873
  %878 = vst [vmem:[%s4] sm:$0xf] %v874
  %879 = vst [vmem:[%s4 + $0x4] sm:$0xf] %v875
  // Predicated region
  $region18: #{pose_resnet_forward.35} parent=0 // pred_check
    _
  $region19: #{pose_resnet_forward.35} parent=0 // pred_check_branch
    %881 = sbr.rel (0) target = $region21
  $region20: #{pose_resnet_forward.35} parent=0 // pred_region
    _
  $region21: #{pose_resnet_forward.35} parent=0 // pred_fallthru
    _
  // Predicated region
  $region22: #{pose_resnet_forward.35} parent=0 // pred_check
    _
  $region23: #{pose_resnet_forward.35} parent=0 // pred_check_branch
    %883 = sbr.rel (0) target = $region25
  $region24: #{pose_resnet_forward.35} parent=0 // pred_region
    _
  $region25: #{pose_resnet_forward.35} parent=0 // pred_fallthru
    _

// kernel: pose_resnet_forward.36
$region0: #{pose_resnet_forward.36}
  #allocation0 [shape = 'u32[]', space=smem, size = 0x4, offset = 0x4, fixed_abs, tag = 'smem constant byte address 0x4 - core index']
  #allocation1 [shape = 'u32[144,128]{1,0:T(1,128)}', space=vmem, size = 0x12000, scoped, tag = 'internal scratch']
  %s0 = inlined_call_operand.vmem [shape: bf16[16,1152], index: 0, kind: input, shape index: {}]
  %s1 = inlined_call_operand.vmem [shape: bf16[1152,128], index: 1, kind: input, shape index: {}]
  %s2 = inlined_call_operand.vmem [shape: f32[1,128], index: 2, kind: input, shape index: {}]
  %s3 = inlined_call_operand.vmem [shape: bf16[16,128], index: 3, kind: output, shape index: {}]
  %s4 = sld [smem:[#allocation0]]
  $region22: #{pose_resnet_forward.36} parent=0
    _
  %s6 = ssub.s32 1, %s4
  %s7 = scalar_select 0, %s6, %s4
  // Predicated region
  $region2: #{pose_resnet_forward.36} parent=0 // pred_check
    _
  $region3: #{pose_resnet_forward.36} parent=0 // pred_check_branch
    %9 = sbr.rel (0) target = $region5
  $region4: #{pose_resnet_forward.36} parent=0 // pred_region
    _
  $region5: #{pose_resnet_forward.36} parent=0 // pred_fallthru
    _
  // Predicated region
  $region6: #{pose_resnet_forward.36} parent=0 // pred_check
    _
  $region7: #{pose_resnet_forward.36} parent=0 // pred_check_branch
    %11 = sbr.rel (0) target = $region9
  $region8: #{pose_resnet_forward.36} parent=0 // pred_region
    _
  $region9: #{pose_resnet_forward.36} parent=0 // pred_fallthru
    _
  // Predicated region
  $region10: #{pose_resnet_forward.36} parent=0 // pred_check
    _
  $region11: #{pose_resnet_forward.36} parent=0 // pred_check_branch
    %13 = sbr.rel (0) target = $region13
  $region12: #{pose_resnet_forward.36} parent=0 // pred_region
    _
  $region13: #{pose_resnet_forward.36} parent=0 // pred_fallthru
    _
  %v15 = vld [vmem:[%s0] sm:$0xff]
  %v16 = vld [vmem:[%s0 + $0x8] sm:$0xff]
  %v17 = vld [vmem:[%s0 + $0x10] sm:$0xff]
  %v18 = vld [vmem:[%s0 + $0x18] sm:$0xff]
  %v19 = vld [vmem:[%s0 + $0x20] sm:$0xf]
  %v20 = vld [vmem:[%s0 + $0x24] sm:$0xff]
  %v21 = vld [vmem:[%s0 + $0x2c] sm:$0xff]
  %v22 = vld [vmem:[%s0 + $0x34] sm:$0xff]
  %v23 = vld [vmem:[%s0 + $0x3c] sm:$0xff]
  %v24 = vld [vmem:[%s0 + $0x44] sm:$0xf]
  %v25 = vld [vmem:[%s1] sm:$0xf]
  %v26 = vld [vmem:[%s1 + $0x4] sm:$0xf]
  %v27 = vld [vmem:[%s1 + $0x8] sm:$0xf]
  %v28 = vld [vmem:[%s1 + $0xc] sm:$0xf]
  %v29 = vld [vmem:[%s1 + $0x10] sm:$0xf]
  %v30 = vld [vmem:[%s1 + $0x14] sm:$0xf]
  %v31 = vld [vmem:[%s1 + $0x18] sm:$0xf]
  %v32 = vld [vmem:[%s1 + $0x1c] sm:$0xf]
  %v33 = vld [vmem:[%s1 + $0x20] sm:$0xf]
  %v34 = vld [vmem:[%s1 + $0x24] sm:$0xf]
  %v35 = vld [vmem:[%s1 + $0x28] sm:$0xf]
  %v36 = vld [vmem:[%s1 + $0x2c] sm:$0xf]
  %v37 = vld [vmem:[%s1 + $0x30] sm:$0xf]
  %v38 = vld [vmem:[%s1 + $0x34] sm:$0xf]
  %v39 = vld [vmem:[%s1 + $0x38] sm:$0xf]
  %v40 = vld [vmem:[%s1 + $0x3c] sm:$0xf]
  %v41 = vld [vmem:[%s1 + $0x40] sm:$0xf]
  %v42 = vld [vmem:[%s1 + $0x44] sm:$0xf]
  %v43 = vld [vmem:[%s1 + $0x48] sm:$0xf]
  %v44 = vld [vmem:[%s1 + $0x4c] sm:$0xf]
  %v45 = vld [vmem:[%s1 + $0x50] sm:$0xf]
  %v46 = vld [vmem:[%s1 + $0x54] sm:$0xf]
  %v47 = vld [vmem:[%s1 + $0x58] sm:$0xf]
  %v48 = vld [vmem:[%s1 + $0x5c] sm:$0xf]
  %v49 = vld [vmem:[%s1 + $0x60] sm:$0xf]
  %v50 = vld [vmem:[%s1 + $0x64] sm:$0xf]
  %v51 = vld [vmem:[%s1 + $0x68] sm:$0xf]
  %v52 = vld [vmem:[%s1 + $0x6c] sm:$0xf]
  %v53 = vld [vmem:[%s1 + $0x70] sm:$0xf]
  %v54 = vld [vmem:[%s1 + $0x74] sm:$0xf]
  %v55 = vld [vmem:[%s1 + $0x78] sm:$0xf]
  %v56 = vld [vmem:[%s1 + $0x7c] sm:$0xf]
  %v57 = vld [vmem:[%s1 + $0x80] sm:$0xf]
  %v58 = vld [vmem:[%s1 + $0x84] sm:$0xf]
  %v59 = vld [vmem:[%s1 + $0x88] sm:$0xf]
  %v60 = vld [vmem:[%s1 + $0x8c] sm:$0xf]
  %v61 = vld [vmem:[%s1 + $0x90] sm:$0xf]
  %v62 = vld [vmem:[%s1 + $0x94] sm:$0xf]
  %v63 = vld [vmem:[%s1 + $0x98] sm:$0xf]
  %v64 = vld [vmem:[%s1 + $0x9c] sm:$0xf]
  %v65 = vld [vmem:[%s1 + $0xa0] sm:$0xf]
  %v66 = vld [vmem:[%s1 + $0xa4] sm:$0xf]
  %v67 = vld [vmem:[%s1 + $0xa8] sm:$0xf]
  %v68 = vld [vmem:[%s1 + $0xac] sm:$0xf]
  %v69 = vld [vmem:[%s1 + $0xb0] sm:$0xf]
  %v70 = vld [vmem:[%s1 + $0xb4] sm:$0xf]
  %v71 = vld [vmem:[%s1 + $0xb8] sm:$0xf]
  %v72 = vld [vmem:[%s1 + $0xbc] sm:$0xf]
  %v73 = vld [vmem:[%s1 + $0xc0] sm:$0xf]
  %v74 = vld [vmem:[%s1 + $0xc4] sm:$0xf]
  %v75 = vld [vmem:[%s1 + $0xc8] sm:$0xf]
  %v76 = vld [vmem:[%s1 + $0xcc] sm:$0xf]
  %v77 = vld [vmem:[%s1 + $0xd0] sm:$0xf]
  %v78 = vld [vmem:[%s1 + $0xd4] sm:$0xf]
  %v79 = vld [vmem:[%s1 + $0xd8] sm:$0xf]
  %v80 = vld [vmem:[%s1 + $0xdc] sm:$0xf]
  %v81 = vld [vmem:[%s1 + $0xe0] sm:$0xf]
  %v82 = vld [vmem:[%s1 + $0xe4] sm:$0xf]
  %v83 = vld [vmem:[%s1 + $0xe8] sm:$0xf]
  %v84 = vld [vmem:[%s1 + $0xec] sm:$0xf]
  %v85 = vld [vmem:[%s1 + $0xf0] sm:$0xf]
  %v86 = vld [vmem:[%s1 + $0xf4] sm:$0xf]
  %v87 = vld [vmem:[%s1 + $0xf8] sm:$0xf]
  %v88 = vld [vmem:[%s1 + $0xfc] sm:$0xf]
  %v89 = vld [vmem:[%s1 + $0x100] sm:$0xf]
  %v90 = vld [vmem:[%s1 + $0x104] sm:$0xf]
  %v91 = vld [vmem:[%s1 + $0x108] sm:$0xf]
  %v92 = vld [vmem:[%s1 + $0x10c] sm:$0xf]
  %v93 = vld [vmem:[%s1 + $0x110] sm:$0xf]
  %v94 = vld [vmem:[%s1 + $0x114] sm:$0xf]
  %v95 = vld [vmem:[%s1 + $0x118] sm:$0xf]
  %v96 = vld [vmem:[%s1 + $0x11c] sm:$0xf]
  %v97 = vld [vmem:[%s1 + $0x120] sm:$0xf]
  %v98 = vld [vmem:[%s1 + $0x124] sm:$0xf]
  %v99 = vld [vmem:[%s1 + $0x128] sm:$0xf]
  %v100 = vld [vmem:[%s1 + $0x12c] sm:$0xf]
  %v101 = vld [vmem:[%s1 + $0x130] sm:$0xf]
  %v102 = vld [vmem:[%s1 + $0x134] sm:$0xf]
  %v103 = vld [vmem:[%s1 + $0x138] sm:$0xf]
  %v104 = vld [vmem:[%s1 + $0x13c] sm:$0xf]
  %v105 = vld [vmem:[%s1 + $0x140] sm:$0xf]
  %v106 = vld [vmem:[%s1 + $0x144] sm:$0xf]
  %v107 = vld [vmem:[%s1 + $0x148] sm:$0xf]
  %v108 = vld [vmem:[%s1 + $0x14c] sm:$0xf]
  %v109 = vld [vmem:[%s1 + $0x150] sm:$0xf]
  %v110 = vld [vmem:[%s1 + $0x154] sm:$0xf]
  %v111 = vld [vmem:[%s1 + $0x158] sm:$0xf]
  %v112 = vld [vmem:[%s1 + $0x15c] sm:$0xf]
  %v113 = vld [vmem:[%s1 + $0x160] sm:$0xf]
  %v114 = vld [vmem:[%s1 + $0x164] sm:$0xf]
  %v115 = vld [vmem:[%s1 + $0x168] sm:$0xf]
  %v116 = vld [vmem:[%s1 + $0x16c] sm:$0xf]
  %v117 = vld [vmem:[%s1 + $0x170] sm:$0xf]
  %v118 = vld [vmem:[%s1 + $0x174] sm:$0xf]
  %v119 = vld [vmem:[%s1 + $0x178] sm:$0xf]
  %v120 = vld [vmem:[%s1 + $0x17c] sm:$0xf]
  %v121 = vld [vmem:[%s1 + $0x180] sm:$0xf]
  %v122 = vld [vmem:[%s1 + $0x184] sm:$0xf]
  %v123 = vld [vmem:[%s1 + $0x188] sm:$0xf]
  %v124 = vld [vmem:[%s1 + $0x18c] sm:$0xf]
  %v125 = vld [vmem:[%s1 + $0x190] sm:$0xf]
  %v126 = vld [vmem:[%s1 + $0x194] sm:$0xf]
  %v127 = vld [vmem:[%s1 + $0x198] sm:$0xf]
  %v128 = vld [vmem:[%s1 + $0x19c] sm:$0xf]
  %v129 = vld [vmem:[%s1 + $0x1a0] sm:$0xf]
  %v130 = vld [vmem:[%s1 + $0x1a4] sm:$0xf]
  %v131 = vld [vmem:[%s1 + $0x1a8] sm:$0xf]
  %v132 = vld [vmem:[%s1 + $0x1ac] sm:$0xf]
  %v133 = vld [vmem:[%s1 + $0x1b0] sm:$0xf]
  %v134 = vld [vmem:[%s1 + $0x1b4] sm:$0xf]
  %v135 = vld [vmem:[%s1 + $0x1b8] sm:$0xf]
  %v136 = vld [vmem:[%s1 + $0x1bc] sm:$0xf]
  %v137 = vld [vmem:[%s1 + $0x1c0] sm:$0xf]
  %v138 = vld [vmem:[%s1 + $0x1c4] sm:$0xf]
  %v139 = vld [vmem:[%s1 + $0x1c8] sm:$0xf]
  %v140 = vld [vmem:[%s1 + $0x1cc] sm:$0xf]
  %v141 = vld [vmem:[%s1 + $0x1d0] sm:$0xf]
  %v142 = vld [vmem:[%s1 + $0x1d4] sm:$0xf]
  %v143 = vld [vmem:[%s1 + $0x1d8] sm:$0xf]
  %v144 = vld [vmem:[%s1 + $0x1dc] sm:$0xf]
  %v145 = vld [vmem:[%s1 + $0x1e0] sm:$0xf]
  %v146 = vld [vmem:[%s1 + $0x1e4] sm:$0xf]
  %v147 = vld [vmem:[%s1 + $0x1e8] sm:$0xf]
  %v148 = vld [vmem:[%s1 + $0x1ec] sm:$0xf]
  %v149 = vld [vmem:[%s1 + $0x1f0] sm:$0xf]
  %v150 = vld [vmem:[%s1 + $0x1f4] sm:$0xf]
  %v151 = vld [vmem:[%s1 + $0x1f8] sm:$0xf]
  %v152 = vld [vmem:[%s1 + $0x1fc] sm:$0xf]
  %v153 = vld [vmem:[%s1 + $0x200] sm:$0xf]
  %v154 = vld [vmem:[%s1 + $0x204] sm:$0xf]
  %v155 = vld [vmem:[%s1 + $0x208] sm:$0xf]
  %v156 = vld [vmem:[%s1 + $0x20c] sm:$0xf]
  %v157 = vld [vmem:[%s1 + $0x210] sm:$0xf]
  %v158 = vld [vmem:[%s1 + $0x214] sm:$0xf]
  %v159 = vld [vmem:[%s1 + $0x218] sm:$0xf]
  %v160 = vld [vmem:[%s1 + $0x21c] sm:$0xf]
  %v161 = vld [vmem:[%s1 + $0x220] sm:$0xf]
  %v162 = vld [vmem:[%s1 + $0x224] sm:$0xf]
  %v163 = vld [vmem:[%s1 + $0x228] sm:$0xf]
  %v164 = vld [vmem:[%s1 + $0x22c] sm:$0xf]
  %v165 = vld [vmem:[%s1 + $0x230] sm:$0xf]
  %v166 = vld [vmem:[%s1 + $0x234] sm:$0xf]
  %v167 = vld [vmem:[%s1 + $0x238] sm:$0xf]
  %v168 = vld [vmem:[%s1 + $0x23c] sm:$0xf]
  %v169 = vld [vmem:[%s2] sm:$0x1]
  %v171 = vlaneseq
  %v172 = vshrl.u32 %v171, 7
  %v173 = vsub.s32 0, %v172
  %v174 = vrot.slane %v169, %v173
  %v186 = vunpack.c.l.b16 %v15
  %v187 = vunpack.c.h.b16 %v15
  %v188 = vunpack.c.l.b16 %v16
  %v189 = vunpack.c.h.b16 %v16
  %v190 = vunpack.c.l.b16 %v17
  %v191 = vunpack.c.h.b16 %v17
  %v192 = vunpack.c.l.b16 %v18
  %v193 = vunpack.c.h.b16 %v18
  %v194 = vunpack.c.l.b16 %v19
  %v195 = vunpack.c.l.b16 %v20
  %v196 = vunpack.c.h.b16 %v20
  %v197 = vunpack.c.l.b16 %v21
  %v198 = vunpack.c.h.b16 %v21
  %v199 = vunpack.c.l.b16 %v22
  %v200 = vunpack.c.h.b16 %v22
  %v201 = vunpack.c.l.b16 %v23
  %v202 = vunpack.c.h.b16 %v23
  %v203 = vunpack.c.l.b16 %v24
  %v204 = vpack.c.b16 %v195, %v186
  %v205 = vpack.c.b16 %v196, %v187
  %v206 = vpack.c.b16 %v197, %v188
  %v207 = vpack.c.b16 %v198, %v189
  %v208 = vpack.c.b16 %v199, %v190
  %v209 = vpack.c.b16 %v200, %v191
  %v210 = vpack.c.b16 %v201, %v192
  %v211 = vpack.c.b16 %v202, %v193
  %v212 = vpack.c.b16 %v203, %v194
  %v366 = vunpack.c.l.b16 %v25
  %v367 = vunpack.c.l.b16 %v26
  %v368 = vunpack.c.l.b16 %v27
  %v369 = vunpack.c.l.b16 %v28
  %v370 = vunpack.c.l.b16 %v29
  %v371 = vunpack.c.l.b16 %v30
  %v372 = vunpack.c.l.b16 %v31
  %v373 = vunpack.c.l.b16 %v32
  %v374 = vunpack.c.l.b16 %v33
  %v375 = vunpack.c.l.b16 %v34
  %v376 = vunpack.c.l.b16 %v35
  %v377 = vunpack.c.l.b16 %v36
  %v378 = vunpack.c.l.b16 %v37
  %v379 = vunpack.c.l.b16 %v38
  %v380 = vunpack.c.l.b16 %v39
  %v381 = vunpack.c.l.b16 %v40
  %v382 = vunpack.c.l.b16 %v41
  %v383 = vunpack.c.l.b16 %v42
  %v384 = vunpack.c.l.b16 %v43
  %v385 = vunpack.c.l.b16 %v44
  %v386 = vunpack.c.l.b16 %v45
  %v387 = vunpack.c.l.b16 %v46
  %v388 = vunpack.c.l.b16 %v47
  %v389 = vunpack.c.l.b16 %v48
  %v390 = vunpack.c.l.b16 %v49
  %v391 = vunpack.c.l.b16 %v50
  %v392 = vunpack.c.l.b16 %v51
  %v393 = vunpack.c.l.b16 %v52
  %v394 = vunpack.c.l.b16 %v53
  %v395 = vunpack.c.l.b16 %v54
  %v396 = vunpack.c.l.b16 %v55
  %v397 = vunpack.c.l.b16 %v56
  %v398 = vunpack.c.l.b16 %v57
  %v399 = vunpack.c.l.b16 %v58
  %v400 = vunpack.c.l.b16 %v59
  %v401 = vunpack.c.l.b16 %v60
  %v402 = vunpack.c.l.b16 %v61
  %v403 = vunpack.c.l.b16 %v62
  %v404 = vunpack.c.l.b16 %v63
  %v405 = vunpack.c.l.b16 %v64
  %v406 = vunpack.c.l.b16 %v65
  %v407 = vunpack.c.l.b16 %v66
  %v408 = vunpack.c.l.b16 %v67
  %v409 = vunpack.c.l.b16 %v68
  %v410 = vunpack.c.l.b16 %v69
  %v411 = vunpack.c.l.b16 %v70
  %v412 = vunpack.c.l.b16 %v71
  %v413 = vunpack.c.l.b16 %v72
  %v414 = vunpack.c.l.b16 %v73
  %v415 = vunpack.c.l.b16 %v74
  %v416 = vunpack.c.l.b16 %v75
  %v417 = vunpack.c.l.b16 %v76
  %v418 = vunpack.c.l.b16 %v77
  %v419 = vunpack.c.l.b16 %v78
  %v420 = vunpack.c.l.b16 %v79
  %v421 = vunpack.c.l.b16 %v80
  %v422 = vunpack.c.l.b16 %v81
  %v423 = vunpack.c.l.b16 %v82
  %v424 = vunpack.c.l.b16 %v83
  %v425 = vunpack.c.l.b16 %v84
  %v426 = vunpack.c.l.b16 %v85
  %v427 = vunpack.c.l.b16 %v86
  %v428 = vunpack.c.l.b16 %v87
  %v429 = vunpack.c.l.b16 %v88
  %v430 = vunpack.c.l.b16 %v89
  %v431 = vunpack.c.l.b16 %v90
  %v432 = vunpack.c.l.b16 %v91
  %v433 = vunpack.c.l.b16 %v92
  %v434 = vunpack.c.l.b16 %v93
  %v435 = vunpack.c.l.b16 %v94
  %v436 = vunpack.c.l.b16 %v95
  %v437 = vunpack.c.l.b16 %v96
  %v438 = vunpack.c.l.b16 %v97
  %v439 = vunpack.c.l.b16 %v98
  %v440 = vunpack.c.l.b16 %v99
  %v441 = vunpack.c.l.b16 %v100
  %v442 = vunpack.c.l.b16 %v101
  %v443 = vunpack.c.l.b16 %v102
  %v444 = vunpack.c.l.b16 %v103
  %v445 = vunpack.c.l.b16 %v104
  %v446 = vunpack.c.l.b16 %v105
  %v447 = vunpack.c.l.b16 %v106
  %v448 = vunpack.c.l.b16 %v107
  %v449 = vunpack.c.l.b16 %v108
  %v450 = vunpack.c.l.b16 %v109
  %v451 = vunpack.c.l.b16 %v110
  %v452 = vunpack.c.l.b16 %v111
  %v453 = vunpack.c.l.b16 %v112
  %v454 = vunpack.c.l.b16 %v113
  %v455 = vunpack.c.l.b16 %v114
  %v456 = vunpack.c.l.b16 %v115
  %v457 = vunpack.c.l.b16 %v116
  %v458 = vunpack.c.l.b16 %v117
  %v459 = vunpack.c.l.b16 %v118
  %v460 = vunpack.c.l.b16 %v119
  %v461 = vunpack.c.l.b16 %v120
  %v462 = vunpack.c.l.b16 %v121
  %v463 = vunpack.c.l.b16 %v122
  %v464 = vunpack.c.l.b16 %v123
  %v465 = vunpack.c.l.b16 %v124
  %v466 = vunpack.c.l.b16 %v125
  %v467 = vunpack.c.l.b16 %v126
  %v468 = vunpack.c.l.b16 %v127
  %v469 = vunpack.c.l.b16 %v128
  %v470 = vunpack.c.l.b16 %v129
  %v471 = vunpack.c.l.b16 %v130
  %v472 = vunpack.c.l.b16 %v131
  %v473 = vunpack.c.l.b16 %v132
  %v474 = vunpack.c.l.b16 %v133
  %v475 = vunpack.c.l.b16 %v134
  %v476 = vunpack.c.l.b16 %v135
  %v477 = vunpack.c.l.b16 %v136
  %v478 = vunpack.c.l.b16 %v137
  %v479 = vunpack.c.l.b16 %v138
  %v480 = vunpack.c.l.b16 %v139
  %v481 = vunpack.c.l.b16 %v140
  %v482 = vunpack.c.l.b16 %v141
  %v483 = vunpack.c.l.b16 %v142
  %v484 = vunpack.c.l.b16 %v143
  %v485 = vunpack.c.l.b16 %v144
  %v486 = vunpack.c.l.b16 %v145
  %v487 = vunpack.c.l.b16 %v146
  %v488 = vunpack.c.l.b16 %v147
  %v489 = vunpack.c.l.b16 %v148
  %v490 = vunpack.c.l.b16 %v149
  %v491 = vunpack.c.l.b16 %v150
  %v492 = vunpack.c.l.b16 %v151
  %v493 = vunpack.c.l.b16 %v152
  %v494 = vunpack.c.l.b16 %v153
  %v495 = vunpack.c.l.b16 %v154
  %v496 = vunpack.c.l.b16 %v155
  %v497 = vunpack.c.l.b16 %v156
  %v498 = vunpack.c.l.b16 %v157
  %v499 = vunpack.c.l.b16 %v158
  %v500 = vunpack.c.l.b16 %v159
  %v501 = vunpack.c.l.b16 %v160
  %v502 = vunpack.c.l.b16 %v161
  %v503 = vunpack.c.l.b16 %v162
  %v504 = vunpack.c.l.b16 %v163
  %v505 = vunpack.c.l.b16 %v164
  %v506 = vunpack.c.l.b16 %v165
  %v507 = vunpack.c.l.b16 %v166
  %v508 = vunpack.c.l.b16 %v167
  %v509 = vunpack.c.l.b16 %v168
  %v510 = vpack.c.b16 %v367, %v366
  %v511 = vpack.c.b16 %v369, %v368
  %v512 = vpack.c.b16 %v371, %v370
  %v513 = vpack.c.b16 %v373, %v372
  %v514 = vpack.c.b16 %v375, %v374
  %v515 = vpack.c.b16 %v377, %v376
  %v516 = vpack.c.b16 %v379, %v378
  %v517 = vpack.c.b16 %v381, %v380
  %v518 = vpack.c.b16 %v383, %v382
  %v519 = vpack.c.b16 %v385, %v384
  %v520 = vpack.c.b16 %v387, %v386
  %v521 = vpack.c.b16 %v389, %v388
  %v522 = vpack.c.b16 %v391, %v390
  %v523 = vpack.c.b16 %v393, %v392
  %v524 = vpack.c.b16 %v395, %v394
  %v525 = vpack.c.b16 %v397, %v396
  %v526 = vpack.c.b16 %v399, %v398
  %v527 = vpack.c.b16 %v401, %v400
  %v528 = vpack.c.b16 %v403, %v402
  %v529 = vpack.c.b16 %v405, %v404
  %v530 = vpack.c.b16 %v407, %v406
  %v531 = vpack.c.b16 %v409, %v408
  %v532 = vpack.c.b16 %v411, %v410
  %v533 = vpack.c.b16 %v413, %v412
  %v534 = vpack.c.b16 %v415, %v414
  %v535 = vpack.c.b16 %v417, %v416
  %v536 = vpack.c.b16 %v419, %v418
  %v537 = vpack.c.b16 %v421, %v420
  %v538 = vpack.c.b16 %v423, %v422
  %v539 = vpack.c.b16 %v425, %v424
  %v540 = vpack.c.b16 %v427, %v426
  %v541 = vpack.c.b16 %v429, %v428
  %v542 = vpack.c.b16 %v431, %v430
  %v543 = vpack.c.b16 %v433, %v432
  %v544 = vpack.c.b16 %v435, %v434
  %v545 = vpack.c.b16 %v437, %v436
  %v546 = vpack.c.b16 %v439, %v438
  %v547 = vpack.c.b16 %v441, %v440
  %v548 = vpack.c.b16 %v443, %v442
  %v549 = vpack.c.b16 %v445, %v444
  %v550 = vpack.c.b16 %v447, %v446
  %v551 = vpack.c.b16 %v449, %v448
  %v552 = vpack.c.b16 %v451, %v450
  %v553 = vpack.c.b16 %v453, %v452
  %v554 = vpack.c.b16 %v455, %v454
  %v555 = vpack.c.b16 %v457, %v456
  %v556 = vpack.c.b16 %v459, %v458
  %v557 = vpack.c.b16 %v461, %v460
  %v558 = vpack.c.b16 %v463, %v462
  %v559 = vpack.c.b16 %v465, %v464
  %v560 = vpack.c.b16 %v467, %v466
  %v561 = vpack.c.b16 %v469, %v468
  %v562 = vpack.c.b16 %v471, %v470
  %v563 = vpack.c.b16 %v473, %v472
  %v564 = vpack.c.b16 %v475, %v474
  %v565 = vpack.c.b16 %v477, %v476
  %v566 = vpack.c.b16 %v479, %v478
  %v567 = vpack.c.b16 %v481, %v480
  %v568 = vpack.c.b16 %v483, %v482
  %v569 = vpack.c.b16 %v485, %v484
  %v570 = vpack.c.b16 %v487, %v486
  %v571 = vpack.c.b16 %v489, %v488
  %v572 = vpack.c.b16 %v491, %v490
  %v573 = vpack.c.b16 %v493, %v492
  %v574 = vpack.c.b16 %v495, %v494
  %v575 = vpack.c.b16 %v497, %v496
  %v576 = vpack.c.b16 %v499, %v498
  %v577 = vpack.c.b16 %v501, %v500
  %v578 = vpack.c.b16 %v503, %v502
  %v579 = vpack.c.b16 %v505, %v504
  %v580 = vpack.c.b16 %v507, %v506
  %v581 = vpack.c.b16 %v509, %v508
  %654 = vmatprep.subr.bf16.mxu0 0
  %655 = vmatpush1.bf16.msra.mxu0 %v510
  %656 = vmatprep.subr.bf16.mxu0 0
  %657 = vmatpush1.bf16.msra.mxu0 %v511
  %658 = vmatprep.subr.bf16.mxu0 0
  %659 = vmatpush1.bf16.msra.mxu0 %v512
  %660 = vmatprep.subr.bf16.mxu0 0
  %661 = vmatpush1.bf16.msra.mxu0 %v513
  %662 = vmatprep.subr.bf16.mxu0 0
  %663 = vmatpush1.bf16.msra.mxu0 %v514
  %664 = vmatprep.subr.bf16.mxu0 0
  %665 = vmatpush1.bf16.msra.mxu0 %v515
  %666 = vmatprep.subr.bf16.mxu0 0
  %667 = vmatpush1.bf16.msra.mxu0 %v516
  %668 = vmatprep.subr.bf16.mxu0 0
  %669 = vmatpush1.bf16.msra.mxu0 %v517
  %670 = vmatprep.subr.bf16.mxu0 0
  %671 = vmatpush1.bf16.msra.mxu0 %v518
  %672 = vmatprep.subr.bf16.mxu0 0
  %673 = vmatpush1.bf16.msra.mxu0 %v519
  %674 = vmatprep.subr.bf16.mxu0 0
  %675 = vmatpush1.bf16.msra.mxu0 %v520
  %676 = vmatprep.subr.bf16.mxu0 0
  %677 = vmatpush1.bf16.msra.mxu0 %v521
  %678 = vmatprep.subr.bf16.mxu0 0
  %679 = vmatpush1.bf16.msra.mxu0 %v522
  %680 = vmatprep.subr.bf16.mxu0 0
  %681 = vmatpush1.bf16.msra.mxu0 %v523
  %682 = vmatprep.subr.bf16.mxu0 0
  %683 = vmatpush1.bf16.msra.mxu0 %v524
  %684 = vmatprep.subr.bf16.mxu0 0
  %685 = vmatpush1.bf16.msra.mxu0 %v525
  %686 = vmatprep.mubr.bf16.mxu0 %v205
  %687 = vmatmul.mubr.bf16.gmra.mrb[0].mxu0 %v204
  %v688 = vpop.f32.mrb[0].mxu0
  %v689 = vadd.f32 %v174, %v688
  %v690 = vpop.f32.mrb[0].mxu0
  %v691 = vpop.f32.mrb[0].mxu0
  %v692 = vadd.f32 %v174, %v691
  %v693 = vpop.f32.mrb[0].mxu0
  %694 = vdwg.mxu0
  %695 = vmatprep.subr.bf16.mxu0 0
  %696 = vmatpush1.bf16.msra.mxu0 %v526
  %697 = vmatprep.subr.bf16.mxu0 0
  %698 = vmatpush1.bf16.msra.mxu0 %v527
  %699 = vmatprep.subr.bf16.mxu0 0
  %700 = vmatpush1.bf16.msra.mxu0 %v528
  %701 = vmatprep.subr.bf16.mxu0 0
  %702 = vmatpush1.bf16.msra.mxu0 %v529
  %703 = vmatprep.subr.bf16.mxu0 0
  %704 = vmatpush1.bf16.msra.mxu0 %v530
  %705 = vmatprep.subr.bf16.mxu0 0
  %706 = vmatpush1.bf16.msra.mxu0 %v531
  %707 = vmatprep.subr.bf16.mxu0 0
  %708 = vmatpush1.bf16.msra.mxu0 %v532
  %709 = vmatprep.subr.bf16.mxu0 0
  %710 = vmatpush1.bf16.msra.mxu0 %v533
  %711 = vmatprep.subr.bf16.mxu0 0
  %712 = vmatpush1.bf16.msra.mxu0 %v534
  %713 = vmatprep.subr.bf16.mxu0 0
  %714 = vmatpush1.bf16.msra.mxu0 %v535
  %715 = vmatprep.subr.bf16.mxu0 0
  %716 = vmatpush1.bf16.msra.mxu0 %v536
  %717 = vmatprep.subr.bf16.mxu0 0
  %718 = vmatpush1.bf16.msra.mxu0 %v537
  %719 = vmatprep.subr.bf16.mxu0 0
  %720 = vmatpush1.bf16.msra.mxu0 %v538
  %721 = vmatprep.subr.bf16.mxu0 0
  %722 = vmatpush1.bf16.msra.mxu0 %v539
  %723 = vmatprep.subr.bf16.mxu0 0
  %724 = vmatpush1.bf16.msra.mxu0 %v540
  %725 = vmatprep.subr.bf16.mxu0 0
  %726 = vmatpush1.bf16.msra.mxu0 %v541
  %727 = vmatprep.mubr.bf16.mxu0 %v207
  %728 = vmatmul.mubr.bf16.gmra.mrb[0].mxu0 %v206
  %v729 = vpop.f32.mrb[0].mxu0
  %v730 = vadd.f32 %v689, %v729
  %v731 = vpop.f32.mrb[0].mxu0
  %v732 = vpop.f32.mrb[0].mxu0
  %v733 = vadd.f32 %v692, %v732
  %v734 = vpop.f32.mrb[0].mxu0
  %735 = vdwg.mxu0
  %736 = vmatprep.subr.bf16.mxu0 0
  %737 = vmatpush1.bf16.msra.mxu0 %v542
  %738 = vmatprep.subr.bf16.mxu0 0
  %739 = vmatpush1.bf16.msra.mxu0 %v543
  %740 = vmatprep.subr.bf16.mxu0 0
  %741 = vmatpush1.bf16.msra.mxu0 %v544
  %742 = vmatprep.subr.bf16.mxu0 0
  %743 = vmatpush1.bf16.msra.mxu0 %v545
  %744 = vmatprep.subr.bf16.mxu0 0
  %745 = vmatpush1.bf16.msra.mxu0 %v546
  %746 = vmatprep.subr.bf16.mxu0 0
  %747 = vmatpush1.bf16.msra.mxu0 %v547
  %748 = vmatprep.subr.bf16.mxu0 0
  %749 = vmatpush1.bf16.msra.mxu0 %v548
  %750 = vmatprep.subr.bf16.mxu0 0
  %751 = vmatpush1.bf16.msra.mxu0 %v549
  %752 = vmatprep.subr.bf16.mxu0 0
  %753 = vmatpush1.bf16.msra.mxu0 %v550
  %754 = vmatprep.subr.bf16.mxu0 0
  %755 = vmatpush1.bf16.msra.mxu0 %v551
  %756 = vmatprep.subr.bf16.mxu0 0
  %757 = vmatpush1.bf16.msra.mxu0 %v552
  %758 = vmatprep.subr.bf16.mxu0 0
  %759 = vmatpush1.bf16.msra.mxu0 %v553
  %760 = vmatprep.subr.bf16.mxu0 0
  %761 = vmatpush1.bf16.msra.mxu0 %v554
  %762 = vmatprep.subr.bf16.mxu0 0
  %763 = vmatpush1.bf16.msra.mxu0 %v555
  %764 = vmatprep.subr.bf16.mxu0 0
  %765 = vmatpush1.bf16.msra.mxu0 %v556
  %766 = vmatprep.subr.bf16.mxu0 0
  %767 = vmatpush1.bf16.msra.mxu0 %v557
  %768 = vmatprep.mubr.bf16.mxu0 %v209
  %769 = vmatmul.mubr.bf16.gmra.mrb[0].mxu0 %v208
  %v770 = vpop.f32.mrb[0].mxu0
  %v771 = vadd.f32 %v730, %v770
  %v772 = vpop.f32.mrb[0].mxu0
  %v773 = vpop.f32.mrb[0].mxu0
  %v774 = vadd.f32 %v733, %v773
  %v775 = vpop.f32.mrb[0].mxu0
  %776 = vdwg.mxu0
  %777 = vmatprep.subr.bf16.mxu0 0
  %778 = vmatpush1.bf16.msra.mxu0 %v558
  %779 = vmatprep.subr.bf16.mxu0 0
  %780 = vmatpush1.bf16.msra.mxu0 %v559
  %781 = vmatprep.subr.bf16.mxu0 0
  %782 = vmatpush1.bf16.msra.mxu0 %v560
  %783 = vmatprep.subr.bf16.mxu0 0
  %784 = vmatpush1.bf16.msra.mxu0 %v561
  %785 = vmatprep.subr.bf16.mxu0 0
  %786 = vmatpush1.bf16.msra.mxu0 %v562
  %787 = vmatprep.subr.bf16.mxu0 0
  %788 = vmatpush1.bf16.msra.mxu0 %v563
  %789 = vmatprep.subr.bf16.mxu0 0
  %790 = vmatpush1.bf16.msra.mxu0 %v564
  %791 = vmatprep.subr.bf16.mxu0 0
  %792 = vmatpush1.bf16.msra.mxu0 %v565
  %793 = vmatprep.subr.bf16.mxu0 0
  %794 = vmatpush1.bf16.msra.mxu0 %v566
  %795 = vmatprep.subr.bf16.mxu0 0
  %796 = vmatpush1.bf16.msra.mxu0 %v567
  %797 = vmatprep.subr.bf16.mxu0 0
  %798 = vmatpush1.bf16.msra.mxu0 %v568
  %799 = vmatprep.subr.bf16.mxu0 0
  %800 = vmatpush1.bf16.msra.mxu0 %v569
  %801 = vmatprep.subr.bf16.mxu0 0
  %802 = vmatpush1.bf16.msra.mxu0 %v570
  %803 = vmatprep.subr.bf16.mxu0 0
  %804 = vmatpush1.bf16.msra.mxu0 %v571
  %805 = vmatprep.subr.bf16.mxu0 0
  %806 = vmatpush1.bf16.msra.mxu0 %v572
  %807 = vmatprep.subr.bf16.mxu0 0
  %808 = vmatpush1.bf16.msra.mxu0 %v573
  %809 = vmatprep.mubr.bf16.mxu0 %v211
  %810 = vmatmul.mubr.bf16.gmra.mrb[0].mxu0 %v210
  %v811 = vpop.f32.mrb[0].mxu0
  %v812 = vadd.f32 %v771, %v811
  %v813 = vpop.f32.mrb[0].mxu0
  %v814 = vpop.f32.mrb[0].mxu0
  %v815 = vadd.f32 %v774, %v814
  %v816 = vpop.f32.mrb[0].mxu0
  %817 = vdwg.mxu0
  %818 = vmatprep.subr.bf16.mxu0 0
  %819 = vmatpush1.bf16.msra.mxu0 %v574
  %820 = vmatprep.subr.bf16.mxu0 0
  %821 = vmatpush1.bf16.msra.mxu0 %v575
  %822 = vmatprep.subr.bf16.mxu0 0
  %823 = vmatpush1.bf16.msra.mxu0 %v576
  %824 = vmatprep.subr.bf16.mxu0 0
  %825 = vmatpush1.bf16.msra.mxu0 %v577
  %826 = vmatprep.subr.bf16.mxu0 0
  %827 = vmatpush1.bf16.msra.mxu0 %v578
  %828 = vmatprep.subr.bf16.mxu0 0
  %829 = vmatpush1.bf16.msra.mxu0 %v579
  %830 = vmatprep.subr.bf16.mxu0 0
  %831 = vmatpush1.bf16.msra.mxu0 %v580
  %832 = vmatprep.subr.bf16.mxu0 0
  %833 = vmatpush1.bf16.msra.mxu0 %v581
  %834 = vmatprep.subr.bf16.mxu0 0
  %835 = vmatpush1.bf16.msra.mxu0 0
  %836 = vmatprep.subr.bf16.mxu0 0
  %837 = vmatpush1.bf16.msra.mxu0 0
  %838 = vmatprep.subr.bf16.mxu0 0
  %839 = vmatpush1.bf16.msra.mxu0 0
  %840 = vmatprep.subr.bf16.mxu0 0
  %841 = vmatpush1.bf16.msra.mxu0 0
  %842 = vmatprep.subr.bf16.mxu0 0
  %843 = vmatpush1.bf16.msra.mxu0 0
  %844 = vmatprep.subr.bf16.mxu0 0
  %845 = vmatpush1.bf16.msra.mxu0 0
  %846 = vmatprep.subr.bf16.mxu0 0
  %847 = vmatpush1.bf16.msra.mxu0 0
  %848 = vmatprep.subr.bf16.mxu0 0
  %849 = vmatpush1.bf16.msra.mxu0 0
  %850 = vmatprep.mubr.bf16.mxu0 0
  %851 = vmatmul.mubr.bf16.gmra.mrb[0].mxu0 %v212
  %v852 = vpop.f32.mrb[0].mxu0
  %v853 = vadd.f32 %v812, %v852
  %v854 = vpop.f32.mrb[0].mxu0
  %v855 = vpop.f32.mrb[0].mxu0
  %v856 = vadd.f32 %v815, %v855
  %v857 = vpop.f32.mrb[0].mxu0
  %858 = vdwg.mxu0
  %v859 = vmax.f32 %v853, 0.0
  %v860 = vmax.f32 %v856, 0.0
  %v861 = vpack.c.bf16 %v860, %v859
  %v863 = vunpack.c.l.b16 %v861
  %v864 = vunpack.c.h.b16 %v861
  %v865 = vpack.c.b16 %v863, %v863
  %v866 = vpack.c.b16 %v864, %v864
  %869 = vst [vmem:[%s3] sm:$0xf] %v865
  %870 = vst [vmem:[%s3 + $0x4] sm:$0xf] %v866
  // Predicated region
  $region14: #{pose_resnet_forward.36} parent=0 // pred_check
    _
  $region15: #{pose_resnet_forward.36} parent=0 // pred_check_branch
    %872 = sbr.rel (0) target = $region17
  $region16: #{pose_resnet_forward.36} parent=0 // pred_region
    _
  $region17: #{pose_resnet_forward.36} parent=0 // pred_fallthru
    _
  // Predicated region
  $region18: #{pose_resnet_forward.36} parent=0 // pred_check
    _
  $region19: #{pose_resnet_forward.36} parent=0 // pred_check_branch
    %874 = sbr.rel (0) target = $region21
  $region20: #{pose_resnet_forward.36} parent=0 // pred_region
    _
  $region21: #{pose_resnet_forward.36} parent=0 // pred_fallthru
    _

// kernel: pose_resnet_forward.39
$region0: #{pose_resnet_forward.39}
  #allocation0 [shape = 'u32[]', space=smem, size = 0x4, offset = 0x4, fixed_abs, tag = 'smem constant byte address 0x4 - core index']
  #allocation1 [shape = 'u32[144,128]{1,0:T(1,128)}', space=vmem, size = 0x12000, scoped, tag = 'internal scratch']
  %s0 = inlined_call_operand.vmem [shape: bf16[32,384], index: 0, kind: input, shape index: {}]
  %s1 = inlined_call_operand.vmem [shape: bf16[384,128], index: 1, kind: input, shape index: {}]
  %s2 = inlined_call_operand.vmem [shape: f32[1,128], index: 2, kind: input, shape index: {}]
  %s3 = inlined_call_operand.vmem [shape: bf16[32,128], index: 3, kind: output, shape index: {}]
  %s4 = sld [smem:[#allocation0]]
  $region22: #{pose_resnet_forward.39} parent=0
    _
  %s6 = ssub.s32 1, %s4
  %s7 = scalar_select 0, %s6, %s4
  // Predicated region
  $region2: #{pose_resnet_forward.39} parent=0 // pred_check
    _
  $region3: #{pose_resnet_forward.39} parent=0 // pred_check_branch
    %9 = sbr.rel (0) target = $region5
  $region4: #{pose_resnet_forward.39} parent=0 // pred_region
    _
  $region5: #{pose_resnet_forward.39} parent=0 // pred_fallthru
    _
  // Predicated region
  $region6: #{pose_resnet_forward.39} parent=0 // pred_check
    _
  $region7: #{pose_resnet_forward.39} parent=0 // pred_check_branch
    %11 = sbr.rel (0) target = $region9
  $region8: #{pose_resnet_forward.39} parent=0 // pred_region
    _
  $region9: #{pose_resnet_forward.39} parent=0 // pred_fallthru
    _
  // Predicated region
  $region10: #{pose_resnet_forward.39} parent=0 // pred_check
    _
  $region11: #{pose_resnet_forward.39} parent=0 // pred_check_branch
    %13 = sbr.rel (0) target = $region13
  $region12: #{pose_resnet_forward.39} parent=0 // pred_region
    _
  $region13: #{pose_resnet_forward.39} parent=0 // pred_fallthru
    _
  %v15 = vld [vmem:[%s0] sm:$0xff]
  %v16 = vld [vmem:[%s0 + $0x8] sm:$0xf]
  %v17 = vld [vmem:[%s0 + $0xc] sm:$0xff]
  %v18 = vld [vmem:[%s0 + $0x14] sm:$0xf]
  %v19 = vld [vmem:[%s0 + $0x18] sm:$0xff]
  %v20 = vld [vmem:[%s0 + $0x20] sm:$0xf]
  %v21 = vld [vmem:[%s0 + $0x24] sm:$0xff]
  %v22 = vld [vmem:[%s0 + $0x2c] sm:$0xf]
  %v23 = vld [vmem:[%s1] sm:$0xf]
  %v24 = vld [vmem:[%s1 + $0x4] sm:$0xf]
  %v25 = vld [vmem:[%s1 + $0x8] sm:$0xf]
  %v26 = vld [vmem:[%s1 + $0xc] sm:$0xf]
  %v27 = vld [vmem:[%s1 + $0x10] sm:$0xf]
  %v28 = vld [vmem:[%s1 + $0x14] sm:$0xf]
  %v29 = vld [vmem:[%s1 + $0x18] sm:$0xf]
  %v30 = vld [vmem:[%s1 + $0x1c] sm:$0xf]
  %v31 = vld [vmem:[%s1 + $0x20] sm:$0xf]
  %v32 = vld [vmem:[%s1 + $0x24] sm:$0xf]
  %v33 = vld [vmem:[%s1 + $0x28] sm:$0xf]
  %v34 = vld [vmem:[%s1 + $0x2c] sm:$0xf]
  %v35 = vld [vmem:[%s1 + $0x30] sm:$0xf]
  %v36 = vld [vmem:[%s1 + $0x34] sm:$0xf]
  %v37 = vld [vmem:[%s1 + $0x38] sm:$0xf]
  %v38 = vld [vmem:[%s1 + $0x3c] sm:$0xf]
  %v39 = vld [vmem:[%s1 + $0x40] sm:$0xf]
  %v40 = vld [vmem:[%s1 + $0x44] sm:$0xf]
  %v41 = vld [vmem:[%s1 + $0x48] sm:$0xf]
  %v42 = vld [vmem:[%s1 + $0x4c] sm:$0xf]
  %v43 = vld [vmem:[%s1 + $0x50] sm:$0xf]
  %v44 = vld [vmem:[%s1 + $0x54] sm:$0xf]
  %v45 = vld [vmem:[%s1 + $0x58] sm:$0xf]
  %v46 = vld [vmem:[%s1 + $0x5c] sm:$0xf]
  %v47 = vld [vmem:[%s1 + $0x60] sm:$0xf]
  %v48 = vld [vmem:[%s1 + $0x64] sm:$0xf]
  %v49 = vld [vmem:[%s1 + $0x68] sm:$0xf]
  %v50 = vld [vmem:[%s1 + $0x6c] sm:$0xf]
  %v51 = vld [vmem:[%s1 + $0x70] sm:$0xf]
  %v52 = vld [vmem:[%s1 + $0x74] sm:$0xf]
  %v53 = vld [vmem:[%s1 + $0x78] sm:$0xf]
  %v54 = vld [vmem:[%s1 + $0x7c] sm:$0xf]
  %v55 = vld [vmem:[%s1 + $0x80] sm:$0xf]
  %v56 = vld [vmem:[%s1 + $0x84] sm:$0xf]
  %v57 = vld [vmem:[%s1 + $0x88] sm:$0xf]
  %v58 = vld [vmem:[%s1 + $0x8c] sm:$0xf]
  %v59 = vld [vmem:[%s1 + $0x90] sm:$0xf]
  %v60 = vld [vmem:[%s1 + $0x94] sm:$0xf]
  %v61 = vld [vmem:[%s1 + $0x98] sm:$0xf]
  %v62 = vld [vmem:[%s1 + $0x9c] sm:$0xf]
  %v63 = vld [vmem:[%s1 + $0xa0] sm:$0xf]
  %v64 = vld [vmem:[%s1 + $0xa4] sm:$0xf]
  %v65 = vld [vmem:[%s1 + $0xa8] sm:$0xf]
  %v66 = vld [vmem:[%s1 + $0xac] sm:$0xf]
  %v67 = vld [vmem:[%s1 + $0xb0] sm:$0xf]
  %v68 = vld [vmem:[%s1 + $0xb4] sm:$0xf]
  %v69 = vld [vmem:[%s1 + $0xb8] sm:$0xf]
  %v70 = vld [vmem:[%s1 + $0xbc] sm:$0xf]
  %v71 = vld [vmem:[%s2] sm:$0x1]
  %v73 = vlaneseq
  %v74 = vshrl.u32 %v73, 7
  %v75 = vsub.s32 0, %v74
  %v76 = vrot.slane %v71, %v75
  %v86 = vunpack.c.l.b16 %v15
  %v87 = vunpack.c.h.b16 %v15
  %v88 = vunpack.c.l.b16 %v16
  %v89 = vunpack.c.l.b16 %v17
  %v90 = vunpack.c.h.b16 %v17
  %v91 = vunpack.c.l.b16 %v18
  %v92 = vunpack.c.l.b16 %v19
  %v93 = vunpack.c.h.b16 %v19
  %v94 = vunpack.c.l.b16 %v20
  %v95 = vunpack.c.l.b16 %v21
  %v96 = vunpack.c.h.b16 %v21
  %v97 = vunpack.c.l.b16 %v22
  %v98 = vpack.c.b16 %v89, %v86
  %v99 = vpack.c.b16 %v90, %v87
  %v100 = vpack.c.b16 %v91, %v88
  %v101 = vpack.c.b16 %v95, %v92
  %v102 = vpack.c.b16 %v96, %v93
  %v103 = vpack.c.b16 %v97, %v94
  %v158 = vunpack.c.l.b16 %v23
  %v159 = vunpack.c.l.b16 %v24
  %v160 = vunpack.c.l.b16 %v25
  %v161 = vunpack.c.l.b16 %v26
  %v162 = vunpack.c.l.b16 %v27
  %v163 = vunpack.c.l.b16 %v28
  %v164 = vunpack.c.l.b16 %v29
  %v165 = vunpack.c.l.b16 %v30
  %v166 = vunpack.c.l.b16 %v31
  %v167 = vunpack.c.l.b16 %v32
  %v168 = vunpack.c.l.b16 %v33
  %v169 = vunpack.c.l.b16 %v34
  %v170 = vunpack.c.l.b16 %v35
  %v171 = vunpack.c.l.b16 %v36
  %v172 = vunpack.c.l.b16 %v37
  %v173 = vunpack.c.l.b16 %v38
  %v174 = vunpack.c.l.b16 %v39
  %v175 = vunpack.c.l.b16 %v40
  %v176 = vunpack.c.l.b16 %v41
  %v177 = vunpack.c.l.b16 %v42
  %v178 = vunpack.c.l.b16 %v43
  %v179 = vunpack.c.l.b16 %v44
  %v180 = vunpack.c.l.b16 %v45
  %v181 = vunpack.c.l.b16 %v46
  %v182 = vunpack.c.l.b16 %v47
  %v183 = vunpack.c.l.b16 %v48
  %v184 = vunpack.c.l.b16 %v49
  %v185 = vunpack.c.l.b16 %v50
  %v186 = vunpack.c.l.b16 %v51
  %v187 = vunpack.c.l.b16 %v52
  %v188 = vunpack.c.l.b16 %v53
  %v189 = vunpack.c.l.b16 %v54
  %v190 = vunpack.c.l.b16 %v55
  %v191 = vunpack.c.l.b16 %v56
  %v192 = vunpack.c.l.b16 %v57
  %v193 = vunpack.c.l.b16 %v58
  %v194 = vunpack.c.l.b16 %v59
  %v195 = vunpack.c.l.b16 %v60
  %v196 = vunpack.c.l.b16 %v61
  %v197 = vunpack.c.l.b16 %v62
  %v198 = vunpack.c.l.b16 %v63
  %v199 = vunpack.c.l.b16 %v64
  %v200 = vunpack.c.l.b16 %v65
  %v201 = vunpack.c.l.b16 %v66
  %v202 = vunpack.c.l.b16 %v67
  %v203 = vunpack.c.l.b16 %v68
  %v204 = vunpack.c.l.b16 %v69
  %v205 = vunpack.c.l.b16 %v70
  %v206 = vpack.c.b16 %v159, %v158
  %v207 = vpack.c.b16 %v161, %v160
  %v208 = vpack.c.b16 %v163, %v162
  %v209 = vpack.c.b16 %v165, %v164
  %v210 = vpack.c.b16 %v167, %v166
  %v211 = vpack.c.b16 %v169, %v168
  %v212 = vpack.c.b16 %v171, %v170
  %v213 = vpack.c.b16 %v173, %v172
  %v214 = vpack.c.b16 %v175, %v174
  %v215 = vpack.c.b16 %v177, %v176
  %v216 = vpack.c.b16 %v179, %v178
  %v217 = vpack.c.b16 %v181, %v180
  %v218 = vpack.c.b16 %v183, %v182
  %v219 = vpack.c.b16 %v185, %v184
  %v220 = vpack.c.b16 %v187, %v186
  %v221 = vpack.c.b16 %v189, %v188
  %v222 = vpack.c.b16 %v191, %v190
  %v223 = vpack.c.b16 %v193, %v192
  %v224 = vpack.c.b16 %v195, %v194
  %v225 = vpack.c.b16 %v197, %v196
  %v226 = vpack.c.b16 %v199, %v198
  %v227 = vpack.c.b16 %v201, %v200
  %v228 = vpack.c.b16 %v203, %v202
  %v229 = vpack.c.b16 %v205, %v204
  %254 = vmatprep.subr.bf16.mxu0 0
  %255 = vmatpush1.bf16.msra.mxu0 %v206
  %256 = vmatprep.subr.bf16.mxu0 0
  %257 = vmatpush1.bf16.msra.mxu0 %v207
  %258 = vmatprep.subr.bf16.mxu0 0
  %259 = vmatpush1.bf16.msra.mxu0 %v208
  %260 = vmatprep.subr.bf16.mxu0 0
  %261 = vmatpush1.bf16.msra.mxu0 %v209
  %262 = vmatprep.subr.bf16.mxu0 0
  %263 = vmatpush1.bf16.msra.mxu0 %v210
  %264 = vmatprep.subr.bf16.mxu0 0
  %265 = vmatpush1.bf16.msra.mxu0 %v211
  %266 = vmatprep.subr.bf16.mxu0 0
  %267 = vmatpush1.bf16.msra.mxu0 %v212
  %268 = vmatprep.subr.bf16.mxu0 0
  %269 = vmatpush1.bf16.msra.mxu0 %v213
  %270 = vmatprep.subr.bf16.mxu0 0
  %271 = vmatpush1.bf16.msra.mxu0 %v214
  %272 = vmatprep.subr.bf16.mxu0 0
  %273 = vmatpush1.bf16.msra.mxu0 %v215
  %274 = vmatprep.subr.bf16.mxu0 0
  %275 = vmatpush1.bf16.msra.mxu0 %v216
  %276 = vmatprep.subr.bf16.mxu0 0
  %277 = vmatpush1.bf16.msra.mxu0 %v217
  %278 = vmatprep.subr.bf16.mxu0 0
  %279 = vmatpush1.bf16.msra.mxu0 %v218
  %280 = vmatprep.subr.bf16.mxu0 0
  %281 = vmatpush1.bf16.msra.mxu0 %v219
  %282 = vmatprep.subr.bf16.mxu0 0
  %283 = vmatpush1.bf16.msra.mxu0 %v220
  %284 = vmatprep.subr.bf16.mxu0 0
  %285 = vmatpush1.bf16.msra.mxu0 %v221
  %286 = vmatprep.mubr.bf16.mxu0 %v99
  %287 = vmatmul.mubr.bf16.gmra.mrb[0].mxu0 %v98
  %v288 = vpop.f32.mrb[0].mxu0
  %v289 = vadd.f32 %v76, %v288
  %v290 = vpop.f32.mrb[0].mxu0
  %v291 = vpop.f32.mrb[0].mxu0
  %v292 = vadd.f32 %v76, %v291
  %v293 = vpop.f32.mrb[0].mxu0
  %294 = vmatprep.mubr.bf16.mxu0 %v102
  %295 = vmatmul.mubr.bf16.gmra.mrb[0].mxu0 %v101
  %v296 = vpop.f32.mrb[0].mxu0
  %v297 = vadd.f32 %v76, %v296
  %v298 = vpop.f32.mrb[0].mxu0
  %v299 = vpop.f32.mrb[0].mxu0
  %v300 = vadd.f32 %v76, %v299
  %v301 = vpop.f32.mrb[0].mxu0
  %302 = vdwg.mxu0
  %303 = vmatprep.subr.bf16.mxu0 0
  %304 = vmatpush1.bf16.msra.mxu0 %v222
  %305 = vmatprep.subr.bf16.mxu0 0
  %306 = vmatpush1.bf16.msra.mxu0 %v223
  %307 = vmatprep.subr.bf16.mxu0 0
  %308 = vmatpush1.bf16.msra.mxu0 %v224
  %309 = vmatprep.subr.bf16.mxu0 0
  %310 = vmatpush1.bf16.msra.mxu0 %v225
  %311 = vmatprep.subr.bf16.mxu0 0
  %312 = vmatpush1.bf16.msra.mxu0 %v226
  %313 = vmatprep.subr.bf16.mxu0 0
  %314 = vmatpush1.bf16.msra.mxu0 %v227
  %315 = vmatprep.subr.bf16.mxu0 0
  %316 = vmatpush1.bf16.msra.mxu0 %v228
  %317 = vmatprep.subr.bf16.mxu0 0
  %318 = vmatpush1.bf16.msra.mxu0 %v229
  %319 = vmatprep.subr.bf16.mxu0 0
  %320 = vmatpush1.bf16.msra.mxu0 0
  %321 = vmatprep.subr.bf16.mxu0 0
  %322 = vmatpush1.bf16.msra.mxu0 0
  %323 = vmatprep.subr.bf16.mxu0 0
  %324 = vmatpush1.bf16.msra.mxu0 0
  %325 = vmatprep.subr.bf16.mxu0 0
  %326 = vmatpush1.bf16.msra.mxu0 0
  %327 = vmatprep.subr.bf16.mxu0 0
  %328 = vmatpush1.bf16.msra.mxu0 0
  %329 = vmatprep.subr.bf16.mxu0 0
  %330 = vmatpush1.bf16.msra.mxu0 0
  %331 = vmatprep.subr.bf16.mxu0 0
  %332 = vmatpush1.bf16.msra.mxu0 0
  %333 = vmatprep.subr.bf16.mxu0 0
  %334 = vmatpush1.bf16.msra.mxu0 0
  %335 = vmatprep.mubr.bf16.mxu0 0
  %336 = vmatmul.mubr.bf16.gmra.mrb[0].mxu0 %v100
  %v337 = vpop.f32.mrb[0].mxu0
  %v338 = vadd.f32 %v289, %v337
  %v339 = vpop.f32.mrb[0].mxu0
  %v340 = vpop.f32.mrb[0].mxu0
  %v341 = vadd.f32 %v292, %v340
  %v342 = vpop.f32.mrb[0].mxu0
  %343 = vmatprep.mubr.bf16.mxu0 0
  %344 = vmatmul.mubr.bf16.gmra.mrb[0].mxu0 %v103
  %v345 = vpop.f32.mrb[0].mxu0
  %v346 = vadd.f32 %v297, %v345
  %v347 = vpop.f32.mrb[0].mxu0
  %v348 = vpop.f32.mrb[0].mxu0
  %v349 = vadd.f32 %v300, %v348
  %v350 = vpop.f32.mrb[0].mxu0
  %351 = vdwg.mxu0
  %v352 = vmax.f32 %v338, 0.0
  %v353 = vmax.f32 %v341, 0.0
  %v354 = vmax.f32 %v346, 0.0
  %v355 = vmax.f32 %v349, 0.0
  %v356 = vpack.c.bf16 %v353, %v352
  %v357 = vpack.c.bf16 %v355, %v354
  %v360 = vunpack.c.l.b16 %v356
  %v361 = vunpack.c.h.b16 %v356
  %v362 = vunpack.c.l.b16 %v357
  %v363 = vunpack.c.h.b16 %v357
  %v364 = vpack.c.b16 %v360, %v360
  %v365 = vpack.c.b16 %v361, %v361
  %v366 = vpack.c.b16 %v362, %v362
  %v367 = vpack.c.b16 %v363, %v363
  %372 = vst [vmem:[%s3] sm:$0xf] %v364
  %373 = vst [vmem:[%s3 + $0x4] sm:$0xf] %v365
  %374 = vst [vmem:[%s3 + $0x8] sm:$0xf] %v366
  %375 = vst [vmem:[%s3 + $0xc] sm:$0xf] %v367
  // Predicated region
  $region14: #{pose_resnet_forward.39} parent=0 // pred_check
    _
  $region15: #{pose_resnet_forward.39} parent=0 // pred_check_branch
    %377 = sbr.rel (0) target = $region17
  $region16: #{pose_resnet_forward.39} parent=0 // pred_region
    _
  $region17: #{pose_resnet_forward.39} parent=0 // pred_fallthru
    _
  // Predicated region
  $region18: #{pose_resnet_forward.39} parent=0 // pred_check
    _
  $region19: #{pose_resnet_forward.39} parent=0 // pred_check_branch
    %379 = sbr.rel (0) target = $region21
  $region20: #{pose_resnet_forward.39} parent=0 // pred_region
    _
  $region21: #{pose_resnet_forward.39} parent=0 // pred_fallthru
    _

// kernel: pose_resnet_forward.41
$region0: #{pose_resnet_forward.41}
  #allocation0 [shape = 'u32[]', space=smem, size = 0x4, offset = 0x4, fixed_abs, tag = 'smem constant byte address 0x4 - core index']
  #allocation1 [shape = 'u32[144,128]{1,0:T(1,128)}', space=vmem, size = 0x12000, scoped, tag = 'internal scratch']
  %s0 = inlined_call_operand.vmem [shape: bf16[512,128], index: 0, kind: input, shape index: {}]
  %s1 = inlined_call_operand.vmem [shape: bf16[128,128], index: 1, kind: input, shape index: {}]
  %s2 = inlined_call_operand.vmem [shape: f32[1,128], index: 2, kind: input, shape index: {}]
  %s3 = inlined_call_operand.vmem [shape: bf16[512,128], index: 3, kind: output, shape index: {}]
  %s4 = sld [smem:[#allocation0]]
  $region22: #{pose_resnet_forward.41} parent=0
    _
  %s6 = ssub.s32 1, %s4
  %s7 = scalar_select 0, %s6, %s4
  // Predicated region
  $region2: #{pose_resnet_forward.41} parent=0 // pred_check
    _
  $region3: #{pose_resnet_forward.41} parent=0 // pred_check_branch
    %9 = sbr.rel (0) target = $region5
  $region4: #{pose_resnet_forward.41} parent=0 // pred_region
    _
  $region5: #{pose_resnet_forward.41} parent=0 // pred_fallthru
    _
  // Predicated region
  $region6: #{pose_resnet_forward.41} parent=0 // pred_check
    _
  $region7: #{pose_resnet_forward.41} parent=0 // pred_check_branch
    %11 = sbr.rel (0) target = $region9
  $region8: #{pose_resnet_forward.41} parent=0 // pred_region
    _
  $region9: #{pose_resnet_forward.41} parent=0 // pred_fallthru
    _
  // Predicated region
  $region10: #{pose_resnet_forward.41} parent=0 // pred_check
    _
  $region11: #{pose_resnet_forward.41} parent=0 // pred_check_branch
    %13 = sbr.rel (0) target = $region13
  $region12: #{pose_resnet_forward.41} parent=0 // pred_region
    _
  $region13: #{pose_resnet_forward.41} parent=0 // pred_fallthru
    _
  %v15 = vld [vmem:[%s0] sm:$0xf]
  %v16 = vld [vmem:[%s0 + $0x4] sm:$0xf]
  %v17 = vld [vmem:[%s0 + $0x8] sm:$0xf]
  %v18 = vld [vmem:[%s0 + $0xc] sm:$0xf]
  %v19 = vld [vmem:[%s0 + $0x10] sm:$0xf]
  %v20 = vld [vmem:[%s0 + $0x14] sm:$0xf]
  %v21 = vld [vmem:[%s0 + $0x18] sm:$0xf]
  %v22 = vld [vmem:[%s0 + $0x1c] sm:$0xf]
  %v23 = vld [vmem:[%s0 + $0x20] sm:$0xf]
  %v24 = vld [vmem:[%s0 + $0x24] sm:$0xf]
  %v25 = vld [vmem:[%s0 + $0x28] sm:$0xf]
  %v26 = vld [vmem:[%s0 + $0x2c] sm:$0xf]
  %v27 = vld [vmem:[%s0 + $0x30] sm:$0xf]
  %v28 = vld [vmem:[%s0 + $0x34] sm:$0xf]
  %v29 = vld [vmem:[%s0 + $0x38] sm:$0xf]
  %v30 = vld [vmem:[%s0 + $0x3c] sm:$0xf]
  %v31 = vld [vmem:[%s0 + $0x40] sm:$0xf]
  %v32 = vld [vmem:[%s0 + $0x44] sm:$0xf]
  %v33 = vld [vmem:[%s0 + $0x48] sm:$0xf]
  %v34 = vld [vmem:[%s0 + $0x4c] sm:$0xf]
  %v35 = vld [vmem:[%s0 + $0x50] sm:$0xf]
  %v36 = vld [vmem:[%s0 + $0x54] sm:$0xf]
  %v37 = vld [vmem:[%s0 + $0x58] sm:$0xf]
  %v38 = vld [vmem:[%s0 + $0x5c] sm:$0xf]
  %v39 = vld [vmem:[%s0 + $0x60] sm:$0xf]
  %v40 = vld [vmem:[%s0 + $0x64] sm:$0xf]
  %v41 = vld [vmem:[%s0 + $0x68] sm:$0xf]
  %v42 = vld [vmem:[%s0 + $0x6c] sm:$0xf]
  %v43 = vld [vmem:[%s0 + $0x70] sm:$0xf]
  %v44 = vld [vmem:[%s0 + $0x74] sm:$0xf]
  %v45 = vld [vmem:[%s0 + $0x78] sm:$0xf]
  %v46 = vld [vmem:[%s0 + $0x7c] sm:$0xf]
  %v47 = vld [vmem:[%s0 + $0x80] sm:$0xf]
  %v48 = vld [vmem:[%s0 + $0x84] sm:$0xf]
  %v49 = vld [vmem:[%s0 + $0x88] sm:$0xf]
  %v50 = vld [vmem:[%s0 + $0x8c] sm:$0xf]
  %v51 = vld [vmem:[%s0 + $0x90] sm:$0xf]
  %v52 = vld [vmem:[%s0 + $0x94] sm:$0xf]
  %v53 = vld [vmem:[%s0 + $0x98] sm:$0xf]
  %v54 = vld [vmem:[%s0 + $0x9c] sm:$0xf]
  %v55 = vld [vmem:[%s0 + $0xa0] sm:$0xf]
  %v56 = vld [vmem:[%s0 + $0xa4] sm:$0xf]
  %v57 = vld [vmem:[%s0 + $0xa8] sm:$0xf]
  %v58 = vld [vmem:[%s0 + $0xac] sm:$0xf]
  %v59 = vld [vmem:[%s0 + $0xb0] sm:$0xf]
  %v60 = vld [vmem:[%s0 + $0xb4] sm:$0xf]
  %v61 = vld [vmem:[%s0 + $0xb8] sm:$0xf]
  %v62 = vld [vmem:[%s0 + $0xbc] sm:$0xf]
  %v63 = vld [vmem:[%s0 + $0xc0] sm:$0xf]
  %v64 = vld [vmem:[%s0 + $0xc4] sm:$0xf]
  %v65 = vld [vmem:[%s0 + $0xc8] sm:$0xf]
  %v66 = vld [vmem:[%s0 + $0xcc] sm:$0xf]
  %v67 = vld [vmem:[%s0 + $0xd0] sm:$0xf]
  %v68 = vld [vmem:[%s0 + $0xd4] sm:$0xf]
  %v69 = vld [vmem:[%s0 + $0xd8] sm:$0xf]
  %v70 = vld [vmem:[%s0 + $0xdc] sm:$0xf]
  %v71 = vld [vmem:[%s0 + $0xe0] sm:$0xf]
  %v72 = vld [vmem:[%s0 + $0xe4] sm:$0xf]
  %v73 = vld [vmem:[%s0 + $0xe8] sm:$0xf]
  %v74 = vld [vmem:[%s0 + $0xec] sm:$0xf]
  %v75 = vld [vmem:[%s0 + $0xf0] sm:$0xf]
  %v76 = vld [vmem:[%s0 + $0xf4] sm:$0xf]
  %v77 = vld [vmem:[%s0 + $0xf8] sm:$0xf]
  %v78 = vld [vmem:[%s0 + $0xfc] sm:$0xf]
  %v79 = vld [vmem:[%s1] sm:$0xf]
  %v80 = vld [vmem:[%s1 + $0x4] sm:$0xf]
  %v81 = vld [vmem:[%s1 + $0x8] sm:$0xf]
  %v82 = vld [vmem:[%s1 + $0xc] sm:$0xf]
  %v83 = vld [vmem:[%s1 + $0x10] sm:$0xf]
  %v84 = vld [vmem:[%s1 + $0x14] sm:$0xf]
  %v85 = vld [vmem:[%s1 + $0x18] sm:$0xf]
  %v86 = vld [vmem:[%s1 + $0x1c] sm:$0xf]
  %v87 = vld [vmem:[%s1 + $0x20] sm:$0xf]
  %v88 = vld [vmem:[%s1 + $0x24] sm:$0xf]
  %v89 = vld [vmem:[%s1 + $0x28] sm:$0xf]
  %v90 = vld [vmem:[%s1 + $0x2c] sm:$0xf]
  %v91 = vld [vmem:[%s1 + $0x30] sm:$0xf]
  %v92 = vld [vmem:[%s1 + $0x34] sm:$0xf]
  %v93 = vld [vmem:[%s1 + $0x38] sm:$0xf]
  %v94 = vld [vmem:[%s1 + $0x3c] sm:$0xf]
  %v95 = vld [vmem:[%s2] sm:$0x1]
  %v97 = vlaneseq
  %v98 = vshrl.u32 %v97, 7
  %v99 = vsub.s32 0, %v98
  %v100 = vrot.slane %v95, %v99
  %v166 = vunpack.c.l.b16 %v15
  %v167 = vunpack.c.l.b16 %v16
  %v168 = vunpack.c.l.b16 %v17
  %v169 = vunpack.c.l.b16 %v18
  %v170 = vunpack.c.l.b16 %v19
  %v171 = vunpack.c.l.b16 %v20
  %v172 = vunpack.c.l.b16 %v21
  %v173 = vunpack.c.l.b16 %v22
  %v174 = vunpack.c.l.b16 %v23
  %v175 = vunpack.c.l.b16 %v24
  %v176 = vunpack.c.l.b16 %v25
  %v177 = vunpack.c.l.b16 %v26
  %v178 = vunpack.c.l.b16 %v27
  %v179 = vunpack.c.l.b16 %v28
  %v180 = vunpack.c.l.b16 %v29
  %v181 = vunpack.c.l.b16 %v30
  %v182 = vunpack.c.l.b16 %v31
  %v183 = vunpack.c.l.b16 %v32
  %v184 = vunpack.c.l.b16 %v33
  %v185 = vunpack.c.l.b16 %v34
  %v186 = vunpack.c.l.b16 %v35
  %v187 = vunpack.c.l.b16 %v36
  %v188 = vunpack.c.l.b16 %v37
  %v189 = vunpack.c.l.b16 %v38
  %v190 = vunpack.c.l.b16 %v39
  %v191 = vunpack.c.l.b16 %v40
  %v192 = vunpack.c.l.b16 %v41
  %v193 = vunpack.c.l.b16 %v42
  %v194 = vunpack.c.l.b16 %v43
  %v195 = vunpack.c.l.b16 %v44
  %v196 = vunpack.c.l.b16 %v45
  %v197 = vunpack.c.l.b16 %v46
  %v198 = vunpack.c.l.b16 %v47
  %v199 = vunpack.c.l.b16 %v48
  %v200 = vunpack.c.l.b16 %v49
  %v201 = vunpack.c.l.b16 %v50
  %v202 = vunpack.c.l.b16 %v51
  %v203 = vunpack.c.l.b16 %v52
  %v204 = vunpack.c.l.b16 %v53
  %v205 = vunpack.c.l.b16 %v54
  %v206 = vunpack.c.l.b16 %v55
  %v207 = vunpack.c.l.b16 %v56
  %v208 = vunpack.c.l.b16 %v57
  %v209 = vunpack.c.l.b16 %v58
  %v210 = vunpack.c.l.b16 %v59
  %v211 = vunpack.c.l.b16 %v60
  %v212 = vunpack.c.l.b16 %v61
  %v213 = vunpack.c.l.b16 %v62
  %v214 = vunpack.c.l.b16 %v63
  %v215 = vunpack.c.l.b16 %v64
  %v216 = vunpack.c.l.b16 %v65
  %v217 = vunpack.c.l.b16 %v66
  %v218 = vunpack.c.l.b16 %v67
  %v219 = vunpack.c.l.b16 %v68
  %v220 = vunpack.c.l.b16 %v69
  %v221 = vunpack.c.l.b16 %v70
  %v222 = vunpack.c.l.b16 %v71
  %v223 = vunpack.c.l.b16 %v72
  %v224 = vunpack.c.l.b16 %v73
  %v225 = vunpack.c.l.b16 %v74
  %v226 = vunpack.c.l.b16 %v75
  %v227 = vunpack.c.l.b16 %v76
  %v228 = vunpack.c.l.b16 %v77
  %v229 = vunpack.c.l.b16 %v78
  %v230 = vpack.c.b16 %v167, %v166
  %v231 = vpack.c.b16 %v169, %v168
  %v232 = vpack.c.b16 %v171, %v170
  %v233 = vpack.c.b16 %v173, %v172
  %v234 = vpack.c.b16 %v175, %v174
  %v235 = vpack.c.b16 %v177, %v176
  %v236 = vpack.c.b16 %v179, %v178
  %v237 = vpack.c.b16 %v181, %v180
  %v238 = vpack.c.b16 %v183, %v182
  %v239 = vpack.c.b16 %v185, %v184
  %v240 = vpack.c.b16 %v187, %v186
  %v241 = vpack.c.b16 %v189, %v188
  %v242 = vpack.c.b16 %v191, %v190
  %v243 = vpack.c.b16 %v193, %v192
  %v244 = vpack.c.b16 %v195, %v194
  %v245 = vpack.c.b16 %v197, %v196
  %v246 = vpack.c.b16 %v199, %v198
  %v247 = vpack.c.b16 %v201, %v200
  %v248 = vpack.c.b16 %v203, %v202
  %v249 = vpack.c.b16 %v205, %v204
  %v250 = vpack.c.b16 %v207, %v206
  %v251 = vpack.c.b16 %v209, %v208
  %v252 = vpack.c.b16 %v211, %v210
  %v253 = vpack.c.b16 %v213, %v212
  %v254 = vpack.c.b16 %v215, %v214
  %v255 = vpack.c.b16 %v217, %v216
  %v256 = vpack.c.b16 %v219, %v218
  %v257 = vpack.c.b16 %v221, %v220
  %v258 = vpack.c.b16 %v223, %v222
  %v259 = vpack.c.b16 %v225, %v224
  %v260 = vpack.c.b16 %v227, %v226
  %v261 = vpack.c.b16 %v229, %v228
  %v310 = vunpack.c.l.b16 %v79
  %v311 = vunpack.c.l.b16 %v80
  %v312 = vunpack.c.l.b16 %v81
  %v313 = vunpack.c.l.b16 %v82
  %v314 = vunpack.c.l.b16 %v83
  %v315 = vunpack.c.l.b16 %v84
  %v316 = vunpack.c.l.b16 %v85
  %v317 = vunpack.c.l.b16 %v86
  %v318 = vunpack.c.l.b16 %v87
  %v319 = vunpack.c.l.b16 %v88
  %v320 = vunpack.c.l.b16 %v89
  %v321 = vunpack.c.l.b16 %v90
  %v322 = vunpack.c.l.b16 %v91
  %v323 = vunpack.c.l.b16 %v92
  %v324 = vunpack.c.l.b16 %v93
  %v325 = vunpack.c.l.b16 %v94
  %v326 = vpack.c.b16 %v311, %v310
  %v327 = vpack.c.b16 %v313, %v312
  %v328 = vpack.c.b16 %v315, %v314
  %v329 = vpack.c.b16 %v317, %v316
  %v330 = vpack.c.b16 %v319, %v318
  %v331 = vpack.c.b16 %v321, %v320
  %v332 = vpack.c.b16 %v323, %v322
  %v333 = vpack.c.b16 %v325, %v324
  %342 = vmatprep.subr.bf16.mxu0 0
  %343 = vmatpush1.bf16.msra.mxu0 %v326
  %344 = vmatprep.subr.bf16.mxu0 0
  %345 = vmatpush1.bf16.msra.mxu0 %v327
  %346 = vmatprep.subr.bf16.mxu0 0
  %347 = vmatpush1.bf16.msra.mxu0 %v328
  %348 = vmatprep.subr.bf16.mxu0 0
  %349 = vmatpush1.bf16.msra.mxu0 %v329
  %350 = vmatprep.subr.bf16.mxu0 0
  %351 = vmatpush1.bf16.msra.mxu0 %v330
  %352 = vmatprep.subr.bf16.mxu0 0
  %353 = vmatpush1.bf16.msra.mxu0 %v331
  %354 = vmatprep.subr.bf16.mxu0 0
  %355 = vmatpush1.bf16.msra.mxu0 %v332
  %356 = vmatprep.subr.bf16.mxu0 0
  %357 = vmatpush1.bf16.msra.mxu0 %v333
  %358 = vmatprep.subr.bf16.mxu0 0
  %359 = vmatpush1.bf16.msra.mxu0 0
  %360 = vmatprep.subr.bf16.mxu0 0
  %361 = vmatpush1.bf16.msra.mxu0 0
  %362 = vmatprep.subr.bf16.mxu0 0
  %363 = vmatpush1.bf16.msra.mxu0 0
  %364 = vmatprep.subr.bf16.mxu0 0
  %365 = vmatpush1.bf16.msra.mxu0 0
  %366 = vmatprep.subr.bf16.mxu0 0
  %367 = vmatpush1.bf16.msra.mxu0 0
  %368 = vmatprep.subr.bf16.mxu0 0
  %369 = vmatpush1.bf16.msra.mxu0 0
  %370 = vmatprep.subr.bf16.mxu0 0
  %371 = vmatpush1.bf16.msra.mxu0 0
  %372 = vmatprep.subr.bf16.mxu0 0
  %373 = vmatpush1.bf16.msra.mxu0 0
  %374 = vmatprep.mubr.bf16.mxu0 0
  %375 = vmatmul.mubr.bf16.gmra.mrb[0].mxu0 %v230
  %v376 = vpop.f32.mrb[0].mxu0
  %v377 = vadd.f32 %v100, %v376
  %v378 = vpop.f32.mrb[0].mxu0
  %v379 = vpop.f32.mrb[0].mxu0
  %v380 = vadd.f32 %v100, %v379
  %v381 = vpop.f32.mrb[0].mxu0
  %382 = vmatprep.mubr.bf16.mxu0 0
  %383 = vmatmul.mubr.bf16.gmra.mrb[0].mxu0 %v231
  %v384 = vpop.f32.mrb[0].mxu0
  %v385 = vadd.f32 %v100, %v384
  %v386 = vpop.f32.mrb[0].mxu0
  %v387 = vpop.f32.mrb[0].mxu0
  %v388 = vadd.f32 %v100, %v387
  %v389 = vpop.f32.mrb[0].mxu0
  %390 = vmatprep.mubr.bf16.mxu0 0
  %391 = vmatmul.mubr.bf16.gmra.mrb[0].mxu0 %v232
  %v392 = vpop.f32.mrb[0].mxu0
  %v393 = vadd.f32 %v100, %v392
  %v394 = vpop.f32.mrb[0].mxu0
  %v395 = vpop.f32.mrb[0].mxu0
  %v396 = vadd.f32 %v100, %v395
  %v397 = vpop.f32.mrb[0].mxu0
  %398 = vmatprep.mubr.bf16.mxu0 0
  %399 = vmatmul.mubr.bf16.gmra.mrb[0].mxu0 %v233
  %v400 = vpop.f32.mrb[0].mxu0
  %v401 = vadd.f32 %v100, %v400
  %v402 = vpop.f32.mrb[0].mxu0
  %v403 = vpop.f32.mrb[0].mxu0
  %v404 = vadd.f32 %v100, %v403
  %v405 = vpop.f32.mrb[0].mxu0
  %406 = vmatprep.mubr.bf16.mxu0 0
  %407 = vmatmul.mubr.bf16.gmra.mrb[0].mxu0 %v234
  %v408 = vpop.f32.mrb[0].mxu0
  %v409 = vadd.f32 %v100, %v408
  %v410 = vpop.f32.mrb[0].mxu0
  %v411 = vpop.f32.mrb[0].mxu0
  %v412 = vadd.f32 %v100, %v411
  %v413 = vpop.f32.mrb[0].mxu0
  %414 = vmatprep.mubr.bf16.mxu0 0
  %415 = vmatmul.mubr.bf16.gmra.mrb[0].mxu0 %v235
  %v416 = vpop.f32.mrb[0].mxu0
  %v417 = vadd.f32 %v100, %v416
  %v418 = vpop.f32.mrb[0].mxu0
  %v419 = vpop.f32.mrb[0].mxu0
  %v420 = vadd.f32 %v100, %v419
  %v421 = vpop.f32.mrb[0].mxu0
  %422 = vmatprep.mubr.bf16.mxu0 0
  %423 = vmatmul.mubr.bf16.gmra.mrb[0].mxu0 %v236
  %v424 = vpop.f32.mrb[0].mxu0
  %v425 = vadd.f32 %v100, %v424
  %v426 = vpop.f32.mrb[0].mxu0
  %v427 = vpop.f32.mrb[0].mxu0
  %v428 = vadd.f32 %v100, %v427
  %v429 = vpop.f32.mrb[0].mxu0
  %430 = vmatprep.mubr.bf16.mxu0 0
  %431 = vmatmul.mubr.bf16.gmra.mrb[0].mxu0 %v237
  %v432 = vpop.f32.mrb[0].mxu0
  %v433 = vadd.f32 %v100, %v432
  %v434 = vpop.f32.mrb[0].mxu0
  %v435 = vpop.f32.mrb[0].mxu0
  %v436 = vadd.f32 %v100, %v435
  %v437 = vpop.f32.mrb[0].mxu0
  %438 = vmatprep.mubr.bf16.mxu0 0
  %439 = vmatmul.mubr.bf16.gmra.mrb[0].mxu0 %v238
  %v440 = vpop.f32.mrb[0].mxu0
  %v441 = vadd.f32 %v100, %v440
  %v442 = vpop.f32.mrb[0].mxu0
  %v443 = vpop.f32.mrb[0].mxu0
  %v444 = vadd.f32 %v100, %v443
  %v445 = vpop.f32.mrb[0].mxu0
  %446 = vmatprep.mubr.bf16.mxu0 0
  %447 = vmatmul.mubr.bf16.gmra.mrb[0].mxu0 %v239
  %v448 = vpop.f32.mrb[0].mxu0
  %v449 = vadd.f32 %v100, %v448
  %v450 = vpop.f32.mrb[0].mxu0
  %v451 = vpop.f32.mrb[0].mxu0
  %v452 = vadd.f32 %v100, %v451
  %v453 = vpop.f32.mrb[0].mxu0
  %454 = vmatprep.mubr.bf16.mxu0 0
  %455 = vmatmul.mubr.bf16.gmra.mrb[0].mxu0 %v240
  %v456 = vpop.f32.mrb[0].mxu0
  %v457 = vadd.f32 %v100, %v456
  %v458 = vpop.f32.mrb[0].mxu0
  %v459 = vpop.f32.mrb[0].mxu0
  %v460 = vadd.f32 %v100, %v459
  %v461 = vpop.f32.mrb[0].mxu0
  %462 = vmatprep.mubr.bf16.mxu0 0
  %463 = vmatmul.mubr.bf16.gmra.mrb[0].mxu0 %v241
  %v464 = vpop.f32.mrb[0].mxu0
  %v465 = vadd.f32 %v100, %v464
  %v466 = vpop.f32.mrb[0].mxu0
  %v467 = vpop.f32.mrb[0].mxu0
  %v468 = vadd.f32 %v100, %v467
  %v469 = vpop.f32.mrb[0].mxu0
  %470 = vmatprep.mubr.bf16.mxu0 0
  %471 = vmatmul.mubr.bf16.gmra.mrb[0].mxu0 %v242
  %v472 = vpop.f32.mrb[0].mxu0
  %v473 = vadd.f32 %v100, %v472
  %v474 = vpop.f32.mrb[0].mxu0
  %v475 = vpop.f32.mrb[0].mxu0
  %v476 = vadd.f32 %v100, %v475
  %v477 = vpop.f32.mrb[0].mxu0
  %478 = vmatprep.mubr.bf16.mxu0 0
  %479 = vmatmul.mubr.bf16.gmra.mrb[0].mxu0 %v243
  %v480 = vpop.f32.mrb[0].mxu0
  %v481 = vadd.f32 %v100, %v480
  %v482 = vpop.f32.mrb[0].mxu0
  %v483 = vpop.f32.mrb[0].mxu0
  %v484 = vadd.f32 %v100, %v483
  %v485 = vpop.f32.mrb[0].mxu0
  %486 = vmatprep.mubr.bf16.mxu0 0
  %487 = vmatmul.mubr.bf16.gmra.mrb[0].mxu0 %v244
  %v488 = vpop.f32.mrb[0].mxu0
  %v489 = vadd.f32 %v100, %v488
  %v490 = vpop.f32.mrb[0].mxu0
  %v491 = vpop.f32.mrb[0].mxu0
  %v492 = vadd.f32 %v100, %v491
  %v493 = vpop.f32.mrb[0].mxu0
  %494 = vmatprep.mubr.bf16.mxu0 0
  %495 = vmatmul.mubr.bf16.gmra.mrb[0].mxu0 %v245
  %v496 = vpop.f32.mrb[0].mxu0
  %v497 = vadd.f32 %v100, %v496
  %v498 = vpop.f32.mrb[0].mxu0
  %v499 = vpop.f32.mrb[0].mxu0
  %v500 = vadd.f32 %v100, %v499
  %v501 = vpop.f32.mrb[0].mxu0
  %502 = vmatprep.mubr.bf16.mxu0 0
  %503 = vmatmul.mubr.bf16.gmra.mrb[0].mxu0 %v246
  %v504 = vpop.f32.mrb[0].mxu0
  %v505 = vadd.f32 %v100, %v504
  %v506 = vpop.f32.mrb[0].mxu0
  %v507 = vpop.f32.mrb[0].mxu0
  %v508 = vadd.f32 %v100, %v507
  %v509 = vpop.f32.mrb[0].mxu0
  %510 = vmatprep.mubr.bf16.mxu0 0
  %511 = vmatmul.mubr.bf16.gmra.mrb[0].mxu0 %v247
  %v512 = vpop.f32.mrb[0].mxu0
  %v513 = vadd.f32 %v100, %v512
  %v514 = vpop.f32.mrb[0].mxu0
  %v515 = vpop.f32.mrb[0].mxu0
  %v516 = vadd.f32 %v100, %v515
  %v517 = vpop.f32.mrb[0].mxu0
  %518 = vmatprep.mubr.bf16.mxu0 0
  %519 = vmatmul.mubr.bf16.gmra.mrb[0].mxu0 %v248
  %v520 = vpop.f32.mrb[0].mxu0
  %v521 = vadd.f32 %v100, %v520
  %v522 = vpop.f32.mrb[0].mxu0
  %v523 = vpop.f32.mrb[0].mxu0
  %v524 = vadd.f32 %v100, %v523
  %v525 = vpop.f32.mrb[0].mxu0
  %526 = vmatprep.mubr.bf16.mxu0 0
  %527 = vmatmul.mubr.bf16.gmra.mrb[0].mxu0 %v249
  %v528 = vpop.f32.mrb[0].mxu0
  %v529 = vadd.f32 %v100, %v528
  %v530 = vpop.f32.mrb[0].mxu0
  %v531 = vpop.f32.mrb[0].mxu0
  %v532 = vadd.f32 %v100, %v531
  %v533 = vpop.f32.mrb[0].mxu0
  %534 = vmatprep.mubr.bf16.mxu0 0
  %535 = vmatmul.mubr.bf16.gmra.mrb[0].mxu0 %v250
  %v536 = vpop.f32.mrb[0].mxu0
  %v537 = vadd.f32 %v100, %v536
  %v538 = vpop.f32.mrb[0].mxu0
  %v539 = vpop.f32.mrb[0].mxu0
  %v540 = vadd.f32 %v100, %v539
  %v541 = vpop.f32.mrb[0].mxu0
  %542 = vmatprep.mubr.bf16.mxu0 0
  %543 = vmatmul.mubr.bf16.gmra.mrb[0].mxu0 %v251
  %v544 = vpop.f32.mrb[0].mxu0
  %v545 = vadd.f32 %v100, %v544
  %v546 = vpop.f32.mrb[0].mxu0
  %v547 = vpop.f32.mrb[0].mxu0
  %v548 = vadd.f32 %v100, %v547
  %v549 = vpop.f32.mrb[0].mxu0
  %550 = vmatprep.mubr.bf16.mxu0 0
  %551 = vmatmul.mubr.bf16.gmra.mrb[0].mxu0 %v252
  %v552 = vpop.f32.mrb[0].mxu0
  %v553 = vadd.f32 %v100, %v552
  %v554 = vpop.f32.mrb[0].mxu0
  %v555 = vpop.f32.mrb[0].mxu0
  %v556 = vadd.f32 %v100, %v555
  %v557 = vpop.f32.mrb[0].mxu0
  %558 = vmatprep.mubr.bf16.mxu0 0
  %559 = vmatmul.mubr.bf16.gmra.mrb[0].mxu0 %v253
  %v560 = vpop.f32.mrb[0].mxu0
  %v561 = vadd.f32 %v100, %v560
  %v562 = vpop.f32.mrb[0].mxu0
  %v563 = vpop.f32.mrb[0].mxu0
  %v564 = vadd.f32 %v100, %v563
  %v565 = vpop.f32.mrb[0].mxu0
  %566 = vmatprep.mubr.bf16.mxu0 0
  %567 = vmatmul.mubr.bf16.gmra.mrb[0].mxu0 %v254
  %v568 = vpop.f32.mrb[0].mxu0
  %v569 = vadd.f32 %v100, %v568
  %v570 = vpop.f32.mrb[0].mxu0
  %v571 = vpop.f32.mrb[0].mxu0
  %v572 = vadd.f32 %v100, %v571
  %v573 = vpop.f32.mrb[0].mxu0
  %574 = vmatprep.mubr.bf16.mxu0 0
  %575 = vmatmul.mubr.bf16.gmra.mrb[0].mxu0 %v255
  %v576 = vpop.f32.mrb[0].mxu0
  %v577 = vadd.f32 %v100, %v576
  %v578 = vpop.f32.mrb[0].mxu0
  %v579 = vpop.f32.mrb[0].mxu0
  %v580 = vadd.f32 %v100, %v579
  %v581 = vpop.f32.mrb[0].mxu0
  %582 = vmatprep.mubr.bf16.mxu0 0
  %583 = vmatmul.mubr.bf16.gmra.mrb[0].mxu0 %v256
  %v584 = vpop.f32.mrb[0].mxu0
  %v585 = vadd.f32 %v100, %v584
  %v586 = vpop.f32.mrb[0].mxu0
  %v587 = vpop.f32.mrb[0].mxu0
  %v588 = vadd.f32 %v100, %v587
  %v589 = vpop.f32.mrb[0].mxu0
  %590 = vmatprep.mubr.bf16.mxu0 0
  %591 = vmatmul.mubr.bf16.gmra.mrb[0].mxu0 %v257
  %v592 = vpop.f32.mrb[0].mxu0
  %v593 = vadd.f32 %v100, %v592
  %v594 = vpop.f32.mrb[0].mxu0
  %v595 = vpop.f32.mrb[0].mxu0
  %v596 = vadd.f32 %v100, %v595
  %v597 = vpop.f32.mrb[0].mxu0
  %598 = vmatprep.mubr.bf16.mxu0 0
  %599 = vmatmul.mubr.bf16.gmra.mrb[0].mxu0 %v258
  %v600 = vpop.f32.mrb[0].mxu0
  %v601 = vadd.f32 %v100, %v600
  %v602 = vpop.f32.mrb[0].mxu0
  %v603 = vpop.f32.mrb[0].mxu0
  %v604 = vadd.f32 %v100, %v603
  %v605 = vpop.f32.mrb[0].mxu0
  %606 = vmatprep.mubr.bf16.mxu0 0
  %607 = vmatmul.mubr.bf16.gmra.mrb[0].mxu0 %v259
  %v608 = vpop.f32.mrb[0].mxu0
  %v609 = vadd.f32 %v100, %v608
  %v610 = vpop.f32.mrb[0].mxu0
  %v611 = vpop.f32.mrb[0].mxu0
  %v612 = vadd.f32 %v100, %v611
  %v613 = vpop.f32.mrb[0].mxu0
  %614 = vmatprep.mubr.bf16.mxu0 0
  %615 = vmatmul.mubr.bf16.gmra.mrb[0].mxu0 %v260
  %v616 = vpop.f32.mrb[0].mxu0
  %v617 = vadd.f32 %v100, %v616
  %v618 = vpop.f32.mrb[0].mxu0
  %v619 = vpop.f32.mrb[0].mxu0
  %v620 = vadd.f32 %v100, %v619
  %v621 = vpop.f32.mrb[0].mxu0
  %622 = vmatprep.mubr.bf16.mxu0 0
  %623 = vmatmul.mubr.bf16.gmra.mrb[0].mxu0 %v261
  %v624 = vpop.f32.mrb[0].mxu0
  %v625 = vadd.f32 %v100, %v624
  %v626 = vpop.f32.mrb[0].mxu0
  %v627 = vpop.f32.mrb[0].mxu0
  %v628 = vadd.f32 %v100, %v627
  %v629 = vpop.f32.mrb[0].mxu0
  %630 = vdwg.mxu0
  %v631 = vpack.c.bf16 %v380, %v377
  %v632 = vpack.c.bf16 %v388, %v385
  %v633 = vpack.c.bf16 %v396, %v393
  %v634 = vpack.c.bf16 %v404, %v401
  %v635 = vpack.c.bf16 %v412, %v409
  %v636 = vpack.c.bf16 %v420, %v417
  %v637 = vpack.c.bf16 %v428, %v425
  %v638 = vpack.c.bf16 %v436, %v433
  %v639 = vpack.c.bf16 %v444, %v441
  %v640 = vpack.c.bf16 %v452, %v449
  %v641 = vpack.c.bf16 %v460, %v457
  %v642 = vpack.c.bf16 %v468, %v465
  %v643 = vpack.c.bf16 %v476, %v473
  %v644 = vpack.c.bf16 %v484, %v481
  %v645 = vpack.c.bf16 %v492, %v489
  %v646 = vpack.c.bf16 %v500, %v497
  %v647 = vpack.c.bf16 %v508, %v505
  %v648 = vpack.c.bf16 %v516, %v513
  %v649 = vpack.c.bf16 %v524, %v521
  %v650 = vpack.c.bf16 %v532, %v529
  %v651 = vpack.c.bf16 %v540, %v537
  %v652 = vpack.c.bf16 %v548, %v545
  %v653 = vpack.c.bf16 %v556, %v553
  %v654 = vpack.c.bf16 %v564, %v561
  %v655 = vpack.c.bf16 %v572, %v569
  %v656 = vpack.c.bf16 %v580, %v577
  %v657 = vpack.c.bf16 %v588, %v585
  %v658 = vpack.c.bf16 %v596, %v593
  %v659 = vpack.c.bf16 %v604, %v601
  %v660 = vpack.c.bf16 %v612, %v609
  %v661 = vpack.c.bf16 %v620, %v617
  %v662 = vpack.c.bf16 %v628, %v625
  %v695 = vunpack.c.l.b16 %v631
  %v696 = vunpack.c.h.b16 %v631
  %v697 = vunpack.c.l.b16 %v632
  %v698 = vunpack.c.h.b16 %v632
  %v699 = vunpack.c.l.b16 %v633
  %v700 = vunpack.c.h.b16 %v633
  %v701 = vunpack.c.l.b16 %v634
  %v702 = vunpack.c.h.b16 %v634
  %v703 = vunpack.c.l.b16 %v635
  %v704 = vunpack.c.h.b16 %v635
  %v705 = vunpack.c.l.b16 %v636
  %v706 = vunpack.c.h.b16 %v636
  %v707 = vunpack.c.l.b16 %v637
  %v708 = vunpack.c.h.b16 %v637
  %v709 = vunpack.c.l.b16 %v638
  %v710 = vunpack.c.h.b16 %v638
  %v711 = vunpack.c.l.b16 %v639
  %v712 = vunpack.c.h.b16 %v639
  %v713 = vunpack.c.l.b16 %v640
  %v714 = vunpack.c.h.b16 %v640
  %v715 = vunpack.c.l.b16 %v641
  %v716 = vunpack.c.h.b16 %v641
  %v717 = vunpack.c.l.b16 %v642
  %v718 = vunpack.c.h.b16 %v642
  %v719 = vunpack.c.l.b16 %v643
  %v720 = vunpack.c.h.b16 %v643
  %v721 = vunpack.c.l.b16 %v644
  %v722 = vunpack.c.h.b16 %v644
  %v723 = vunpack.c.l.b16 %v645
  %v724 = vunpack.c.h.b16 %v645
  %v725 = vunpack.c.l.b16 %v646
  %v726 = vunpack.c.h.b16 %v646
  %v727 = vunpack.c.l.b16 %v647
  %v728 = vunpack.c.h.b16 %v647
  %v729 = vunpack.c.l.b16 %v648
  %v730 = vunpack.c.h.b16 %v648
  %v731 = vunpack.c.l.b16 %v649
  %v732 = vunpack.c.h.b16 %v649
  %v733 = vunpack.c.l.b16 %v650
  %v734 = vunpack.c.h.b16 %v650
  %v735 = vunpack.c.l.b16 %v651
  %v736 = vunpack.c.h.b16 %v651
  %v737 = vunpack.c.l.b16 %v652
  %v738 = vunpack.c.h.b16 %v652
  %v739 = vunpack.c.l.b16 %v653
  %v740 = vunpack.c.h.b16 %v653
  %v741 = vunpack.c.l.b16 %v654
  %v742 = vunpack.c.h.b16 %v654
  %v743 = vunpack.c.l.b16 %v655
  %v744 = vunpack.c.h.b16 %v655
  %v745 = vunpack.c.l.b16 %v656
  %v746 = vunpack.c.h.b16 %v656
  %v747 = vunpack.c.l.b16 %v657
  %v748 = vunpack.c.h.b16 %v657
  %v749 = vunpack.c.l.b16 %v658
  %v750 = vunpack.c.h.b16 %v658
  %v751 = vunpack.c.l.b16 %v659
  %v752 = vunpack.c.h.b16 %v659
  %v753 = vunpack.c.l.b16 %v660
  %v754 = vunpack.c.h.b16 %v660
  %v755 = vunpack.c.l.b16 %v661
  %v756 = vunpack.c.h.b16 %v661
  %v757 = vunpack.c.l.b16 %v662
  %v758 = vunpack.c.h.b16 %v662
  %v759 = vpack.c.b16 %v695, %v695
  %v760 = vpack.c.b16 %v696, %v696
  %v761 = vpack.c.b16 %v697, %v697
  %v762 = vpack.c.b16 %v698, %v698
  %v763 = vpack.c.b16 %v699, %v699
  %v764 = vpack.c.b16 %v700, %v700
  %v765 = vpack.c.b16 %v701, %v701
  %v766 = vpack.c.b16 %v702, %v702
  %v767 = vpack.c.b16 %v703, %v703
  %v768 = vpack.c.b16 %v704, %v704
  %v769 = vpack.c.b16 %v705, %v705
  %v770 = vpack.c.b16 %v706, %v706
  %v771 = vpack.c.b16 %v707, %v707
  %v772 = vpack.c.b16 %v708, %v708
  %v773 = vpack.c.b16 %v709, %v709
  %v774 = vpack.c.b16 %v710, %v710
  %v775 = vpack.c.b16 %v711, %v711
  %v776 = vpack.c.b16 %v712, %v712
  %v777 = vpack.c.b16 %v713, %v713
  %v778 = vpack.c.b16 %v714, %v714
  %v779 = vpack.c.b16 %v715, %v715
  %v780 = vpack.c.b16 %v716, %v716
  %v781 = vpack.c.b16 %v717, %v717
  %v782 = vpack.c.b16 %v718, %v718
  %v783 = vpack.c.b16 %v719, %v719
  %v784 = vpack.c.b16 %v720, %v720
  %v785 = vpack.c.b16 %v721, %v721
  %v786 = vpack.c.b16 %v722, %v722
  %v787 = vpack.c.b16 %v723, %v723
  %v788 = vpack.c.b16 %v724, %v724
  %v789 = vpack.c.b16 %v725, %v725
  %v790 = vpack.c.b16 %v726, %v726
  %v791 = vpack.c.b16 %v727, %v727
  %v792 = vpack.c.b16 %v728, %v728
  %v793 = vpack.c.b16 %v729, %v729
  %v794 = vpack.c.b16 %v730, %v730
  %v795 = vpack.c.b16 %v731, %v731
  %v796 = vpack.c.b16 %v732, %v732
  %v797 = vpack.c.b16 %v733, %v733
  %v798 = vpack.c.b16 %v734, %v734
  %v799 = vpack.c.b16 %v735, %v735
  %v800 = vpack.c.b16 %v736, %v736
  %v801 = vpack.c.b16 %v737, %v737
  %v802 = vpack.c.b16 %v738, %v738
  %v803 = vpack.c.b16 %v739, %v739
  %v804 = vpack.c.b16 %v740, %v740
  %v805 = vpack.c.b16 %v741, %v741
  %v806 = vpack.c.b16 %v742, %v742
  %v807 = vpack.c.b16 %v743, %v743
  %v808 = vpack.c.b16 %v744, %v744
  %v809 = vpack.c.b16 %v745, %v745
  %v810 = vpack.c.b16 %v746, %v746
  %v811 = vpack.c.b16 %v747, %v747
  %v812 = vpack.c.b16 %v748, %v748
  %v813 = vpack.c.b16 %v749, %v749
  %v814 = vpack.c.b16 %v750, %v750
  %v815 = vpack.c.b16 %v751, %v751
  %v816 = vpack.c.b16 %v752, %v752
  %v817 = vpack.c.b16 %v753, %v753
  %v818 = vpack.c.b16 %v754, %v754
  %v819 = vpack.c.b16 %v755, %v755
  %v820 = vpack.c.b16 %v756, %v756
  %v821 = vpack.c.b16 %v757, %v757
  %v822 = vpack.c.b16 %v758, %v758
  %887 = vst [vmem:[%s3] sm:$0xf] %v759
  %888 = vst [vmem:[%s3 + $0x4] sm:$0xf] %v760
  %889 = vst [vmem:[%s3 + $0x8] sm:$0xf] %v761
  %890 = vst [vmem:[%s3 + $0xc] sm:$0xf] %v762
  %891 = vst [vmem:[%s3 + $0x10] sm:$0xf] %v763
  %892 = vst [vmem:[%s3 + $0x14] sm:$0xf] %v764
  %893 = vst [vmem:[%s3 + $0x18] sm:$0xf] %v765
  %894 = vst [vmem:[%s3 + $0x1c] sm:$0xf] %v766
  %895 = vst [vmem:[%s3 + $0x20] sm:$0xf] %v767
  %896 = vst [vmem:[%s3 + $0x24] sm:$0xf] %v768
  %897 = vst [vmem:[%s3 + $0x28] sm:$0xf] %v769
  %898 = vst [vmem:[%s3 + $0x2c] sm:$0xf] %v770
  %899 = vst [vmem:[%s3 + $0x30] sm:$0xf] %v771
  %900 = vst [vmem:[%s3 + $0x34] sm:$0xf] %v772
  %901 = vst [vmem:[%s3 + $0x38] sm:$0xf] %v773
  %902 = vst [vmem:[%s3 + $0x3c] sm:$0xf] %v774
  %903 = vst [vmem:[%s3 + $0x40] sm:$0xf] %v775
  %904 = vst [vmem:[%s3 + $0x44] sm:$0xf] %v776
  %905 = vst [vmem:[%s3 + $0x48] sm:$0xf] %v777
  %906 = vst [vmem:[%s3 + $0x4c] sm:$0xf] %v778
  %907 = vst [vmem:[%s3 + $0x50] sm:$0xf] %v779
  %908 = vst [vmem:[%s3 + $0x54] sm:$0xf] %v780
  %909 = vst [vmem:[%s3 + $0x58] sm:$0xf] %v781
  %910 = vst [vmem:[%s3 + $0x5c] sm:$0xf] %v782
  %911 = vst [vmem:[%s3 + $0x60] sm:$0xf] %v783
  %912 = vst [vmem:[%s3 + $0x64] sm:$0xf] %v784
  %913 = vst [vmem:[%s3 + $0x68] sm:$0xf] %v785
  %914 = vst [vmem:[%s3 + $0x6c] sm:$0xf] %v786
  %915 = vst [vmem:[%s3 + $0x70] sm:$0xf] %v787
  %916 = vst [vmem:[%s3 + $0x74] sm:$0xf] %v788
  %917 = vst [vmem:[%s3 + $0x78] sm:$0xf] %v789
  %918 = vst [vmem:[%s3 + $0x7c] sm:$0xf] %v790
  %919 = vst [vmem:[%s3 + $0x80] sm:$0xf] %v791
  %920 = vst [vmem:[%s3 + $0x84] sm:$0xf] %v792
  %921 = vst [vmem:[%s3 + $0x88] sm:$0xf] %v793
  %922 = vst [vmem:[%s3 + $0x8c] sm:$0xf] %v794
  %923 = vst [vmem:[%s3 + $0x90] sm:$0xf] %v795
  %924 = vst [vmem:[%s3 + $0x94] sm:$0xf] %v796
  %925 = vst [vmem:[%s3 + $0x98] sm:$0xf] %v797
  %926 = vst [vmem:[%s3 + $0x9c] sm:$0xf] %v798
  %927 = vst [vmem:[%s3 + $0xa0] sm:$0xf] %v799
  %928 = vst [vmem:[%s3 + $0xa4] sm:$0xf] %v800
  %929 = vst [vmem:[%s3 + $0xa8] sm:$0xf] %v801
  %930 = vst [vmem:[%s3 + $0xac] sm:$0xf] %v802
  %931 = vst [vmem:[%s3 + $0xb0] sm:$0xf] %v803
  %932 = vst [vmem:[%s3 + $0xb4] sm:$0xf] %v804
  %933 = vst [vmem:[%s3 + $0xb8] sm:$0xf] %v805
  %934 = vst [vmem:[%s3 + $0xbc] sm:$0xf] %v806
  %935 = vst [vmem:[%s3 + $0xc0] sm:$0xf] %v807
  %936 = vst [vmem:[%s3 + $0xc4] sm:$0xf] %v808
  %937 = vst [vmem:[%s3 + $0xc8] sm:$0xf] %v809
  %938 = vst [vmem:[%s3 + $0xcc] sm:$0xf] %v810
  %939 = vst [vmem:[%s3 + $0xd0] sm:$0xf] %v811
  %940 = vst [vmem:[%s3 + $0xd4] sm:$0xf] %v812
  %941 = vst [vmem:[%s3 + $0xd8] sm:$0xf] %v813
  %942 = vst [vmem:[%s3 + $0xdc] sm:$0xf] %v814
  %943 = vst [vmem:[%s3 + $0xe0] sm:$0xf] %v815
  %944 = vst [vmem:[%s3 + $0xe4] sm:$0xf] %v816
  %945 = vst [vmem:[%s3 + $0xe8] sm:$0xf] %v817
  %946 = vst [vmem:[%s3 + $0xec] sm:$0xf] %v818
  %947 = vst [vmem:[%s3 + $0xf0] sm:$0xf] %v819
  %948 = vst [vmem:[%s3 + $0xf4] sm:$0xf] %v820
  %949 = vst [vmem:[%s3 + $0xf8] sm:$0xf] %v821
  %950 = vst [vmem:[%s3 + $0xfc] sm:$0xf] %v822
  // Predicated region
  $region14: #{pose_resnet_forward.41} parent=0 // pred_check
    _
  $region15: #{pose_resnet_forward.41} parent=0 // pred_check_branch
    %952 = sbr.rel (0) target = $region17
  $region16: #{pose_resnet_forward.41} parent=0 // pred_region
    _
  $region17: #{pose_resnet_forward.41} parent=0 // pred_fallthru
    _
  // Predicated region
  $region18: #{pose_resnet_forward.41} parent=0 // pred_check
    _
  $region19: #{pose_resnet_forward.41} parent=0 // pred_check_branch
    %954 = sbr.rel (0) target = $region21
  $region20: #{pose_resnet_forward.41} parent=0 // pred_region
    _
  $region21: #{pose_resnet_forward.41} parent=0 // pred_fallthru
    _

</llo_original>
